<compile_context>
chip_gen: v5e
topology: v5e:2x2
jax: 0.10.0
libtpu: 0.0.40
codegen_flags: <defaults>
</compile_context>

<pallas_src>
import functools

import jax
import jax.numpy as jnp
from jax import lax
from jax.experimental import pallas as pl
from jax.experimental.pallas import tpu as pltpu

EPS = 1e-5
NCP = 128     # lane-padded num_classes (lane-dense output stores)
CW_MAX = 16   # pooled positions per time chunk (even)


def _round_up(x, m):
    return (x + m - 1) // m * m


def audio_cnn_kernel(xwin_ref, c1w_ref, w2_ref, t2_ref,
                     wfc1_ref, bfc1_ref, wfc2_ref, bfc2_ref,
                     out_ref, acc_ref, *, cw, l4):
    c = pl.program_id(1)          # time-chunk index (reduction axis, innermost)
    nc = pl.num_programs(1)

    @pl.when(c == 0)
    def _():
        acc_ref[...] = jnp.zeros_like(acc_ref)

    xw = xwin_ref[...]            # (BT, WIN) f32 lane-dense raw-signal window (+halo)
    c1w = c1w_ref[...]            # (4, 64): rows 0..2 = conv1 taps * bn1 scale, row 3 = shift
    w1s = (c1w[0:1, :], c1w[1:2, :], c1w[2:3, :])
    t1 = c1w[3:4, :]
    w2 = w2_ref[...]              # (192, 128) bf16: 3 conv2 taps stacked (K=192), bn2-scaled
    t2 = t2_ref[...]              # (1, 128) f32

    def conv1_at(u):              # conv1 + BN1 + ReLU on the VPU (broadcast FMAs, no MXU)
        h = (xw[:, u - 1:u] * w1s[0] + xw[:, u:u + 1] * w1s[1]
             + xw[:, u + 1:u + 2] * w1s[2] + t1)
        return jnp.maximum(h, 0.0)                       # (BT, 64)

    def conv2_at(p_cat):          # conv2 + BN2 + ReLU: one K=192 bf16 MXU matmul
        h = jnp.dot(p_cat, w2, preferred_element_type=jnp.float32)
        return jnp.maximum(h + t2, 0.0)                  # (BT, 128)

    acc = acc_ref[...]            # FC1 partial sum carried in registers this chunk
    h2_prev = None
    for j in range(cw):           # static unroll bounded to CW per grid step
        u0 = 4 * j + 3            # window-local lane of conv1 position t = 4*w
        w_glob = c * cw + j
        # pool1 at 2w-1 .. 2w+2 (phase-split maxes, no strided access)
        p1m1 = jnp.maximum(conv1_at(u0 - 2), conv1_at(u0 - 1))
        p10 = jnp.maximum(conv1_at(u0), conv1_at(u0 + 1))
        p11 = jnp.maximum(conv1_at(u0 + 2), conv1_at(u0 + 3))
        p12 = jnp.maximum(conv1_at(u0 + 4), conv1_at(u0 + 5))
        # conv2 has padding=1 over the pooled sequence -> zero the out-of-range taps
        p1m1 = p1m1 * (w_glob > 0).astype(jnp.float32)
        p12 = p12 * (w_glob < l4 - 1).astype(jnp.float32)
        # hoisted bf16 casts (each slab cast once, reused by both conv2 phases)
        p1m1 = p1m1.astype(jnp.bfloat16)
        p10 = p10.astype(jnp.bfloat16)
        p11 = p11.astype(jnp.bfloat16)
        p12 = p12.astype(jnp.bfloat16)
        h2_even = conv2_at(jnp.concatenate([p1m1, p10, p11], axis=1))   # conv2 at 2w
        h2_odd = conv2_at(jnp.concatenate([p10, p11, p12], axis=1))     # conv2 at 2w+1
        h2p = jnp.maximum(h2_even, h2_odd)               # pool2 output at w, (BT, 128) f32
        if j % 2 == 0:
            h2_prev = h2p
        else:
            # FC1: pair two pooled positions -> K=256 MXU matmul
            pair = jnp.concatenate([h2_prev, h2p], axis=1).astype(jnp.bfloat16)
            acc = acc + jnp.dot(pair, wfc1_ref[j // 2],
                                preferred_element_type=jnp.float32)
    acc_ref[...] = acc

    @pl.when(c == nc - 1)
    def _():
        # Dropout(0.3): identity in eval mode.
        # TODO(synk): training-mode dropout mask / BN batch statistics not implemented.
        f1 = jnp.maximum(acc + bfc1_ref[...], 0.0)
        out_ref[...] = (jnp.dot(f1.astype(jnp.bfloat16), wfc2_ref[...],
                                preferred_element_type=jnp.float32) + bfc2_ref[...])


def audio_cnn_forward(x, p, b_tile=None):
    """x: (B, 1, L) float32 (PyTorch NCL).  Returns (B, num_classes)."""
    B, cin, L = x.shape
    assert cin == 1 and L % 4 == 0
    L4 = L // 4
    n_cls = p["fc2_w"].shape[0]
    assert n_cls <= NCP

    # Batch tiling: aim for >=2 parallel grid steps when the batch allows (v7x 2 TCs).
    if b_tile is None:
        b_tile = max(8, min(64, _round_up(-(-B // 2), 8)))
    b_tile = _round_up(b_tile, 8)
    B_pad = _round_up(B, b_tile)
    G = B_pad // b_tile

    # Time chunking: CW pooled positions per grid step.
    CW = min(CW_MAX, _round_up(L4, 2))
    L4p = _round_up(L4, CW)
    NC = L4p // CW
    WIN = _round_up(4 * CW + 8, 128)     # lane-dense window (halo 3 left)

    # ---- lane-dense raw-signal windows (zero padding == conv1 padding=1) ------
    xb = x[:, 0, :]
    if B_pad != B:
        xb = jnp.pad(xb, ((0, B_pad - B), (0, 0)))
    Ltot = 4 * (NC - 1) * CW + WIN
    xp = jnp.pad(xb, ((0, 0), (3, Ltot - 3 - L)))                       # (B_pad, Ltot)
    xwin = jnp.stack([xp[:, 4 * c * CW: 4 * c * CW + WIN]
                      for c in range(NC)], axis=1)                      # (B_pad, NC, WIN)
    xwin = xwin.reshape(G, b_tile, NC, WIN).transpose(0, 2, 1, 3)       # (G, NC, BT, WIN)

    # ---- fold BN into weights; stack conv2 taps (K=192); pair FC1 (K=256) -----
    s1 = p["bn1_g"] / jnp.sqrt(p["bn1_v"] + EPS)
    t1 = (p["conv1_b"] - p["bn1_m"]) * s1 + p["bn1_b"]
    w1s = p["conv1_w"][:, 0, :].T * s1[None, :]                          # (3, 64)
    c1w = jnp.concatenate([w1s, t1[None, :]], axis=0)                    # (4, 64) f32

    s2 = p["bn2_g"] / jnp.sqrt(p["bn2_v"] + EPS)
    t2 = (p["conv2_b"] - p["bn2_m"]) * s2 + p["bn2_b"]
    w2cat = (jnp.transpose(p["conv2_w"], (2, 1, 0)).reshape(192, 128)    # [k*64+cin, cout]
             * s2[None, :]).astype(jnp.bfloat16)

    # PyTorch flatten is channel-major: feat[c*L4 + w] = h[c, w]
    wfc1 = jnp.transpose(p["fc1_w"].reshape(128, 128, L4), (2, 1, 0))    # (L4, cin, f)
    wfc1 = jnp.pad(wfc1, ((0, L4p - L4), (0, 0), (0, 0)))
    wfc1p = wfc1.reshape(L4p // 2, 256, 128).astype(jnp.bfloat16)        # paired K=256
    bfc1 = p["fc1_b"][None, :]                                           # (1, 128)

    wfc2 = jnp.zeros((128, NCP), jnp.float32).at[:, :n_cls].set(p["fc2_w"].T)
    wfc2 = wfc2.astype(jnp.bfloat16)                                     # (128, 128)
    bfc2 = jnp.zeros((1, NCP), jnp.float32).at[:, :n_cls].set(p["fc2_b"])

    kernel = functools.partial(audio_cnn_kernel, cw=CW, l4=L4)

    out = pl.pallas_call(
        kernel,
        out_shape=jax.ShapeDtypeStruct((B_pad, NCP), jnp.float32),
        grid_spec=pltpu.PrefetchScalarGridSpec(
            num_scalar_prefetch=0,
            grid=(G, NC),
            in_specs=[
                pl.BlockSpec((None, None, b_tile, WIN), lambda g, c: (g, c, 0, 0)),  # x windows
                pl.BlockSpec((4, 64), lambda g, c: (0, 0)),              # conv1 taps + shift
                pl.BlockSpec((192, 128), lambda g, c: (0, 0)),           # conv2 (K=192, bf16)
                pl.BlockSpec((1, 128), lambda g, c: (0, 0)),             # bn2 shift
                pl.BlockSpec((CW // 2, 256, 128), lambda g, c: (c, 0, 0)),  # wfc1 (tiled, bf16)
                pl.BlockSpec((1, 128), lambda g, c: (0, 0)),             # bfc1
                pl.BlockSpec((128, NCP), lambda g, c: (0, 0)),           # wfc2 (bf16)
                pl.BlockSpec((1, NCP), lambda g, c: (0, 0)),             # bfc2
            ],
            out_specs=pl.BlockSpec((b_tile, NCP), lambda g, c: (g, 0)),
            scratch_shapes=[pltpu.VMEM((b_tile, 128), jnp.float32)],     # FC1 accumulator
        ),
        compiler_params=pltpu.CompilerParams(
            dimension_semantics=("parallel", "arbitrary"),
            vmem_limit_bytes=32 * 1024 * 1024),
    )(xwin, c1w, w2cat, t2[None, :], wfc1p, bfc1, wfc2, bfc2)
    return out[:B, :n_cls]


# ---------------------------- pure-JAX reference -----------------------------
def reference_forward(x, p):
    B, _, L = x.shape

    def bn(h, g, b, m, v):
        return (h - m[None, :, None]) / jnp.sqrt(v + EPS)[None, :, None] \
            * g[None, :, None] + b[None, :, None]

    h = lax.conv_general_dilated(x, p["conv1_w"], (1,), [(1, 1)],
                                 dimension_numbers=("NCH", "OIH", "NCH"))
    h = h + p["conv1_b"][None, :, None]
    h = jax.nn.relu(bn(h, p["bn1_g"], p["bn1_b"], p["bn1_m"], p["bn1_v"]))
    h = h.reshape(B, 64, L // 2, 2).max(axis=-1)

    h = lax.conv_general_dilated(h, p["conv2_w"], (1,), [(1, 1)],
                                 dimension_numbers=("NCH", "OIH", "NCH"))
    h = h + p["conv2_b"][None, :, None]
    h = jax.nn.relu(bn(h, p["bn2_g"], p["bn2_b"], p["bn2_m"], p["bn2_v"]))
    h = h.reshape(B, 128, L // 4, 2).max(axis=-1)

    flat = h.reshape(B, -1)
    f1 = jax.nn.relu(flat @ p["fc1_w"].T + p["fc1_b"])
    return f1 @ p["fc2_w"].T + p["fc2_b"]


def make_params(key, input_len, num_classes):
    ks = jax.random.split(key, 16)
    n = lambda k, s, sc: sc * jax.random.normal(k, s, jnp.float32)
    u = lambda k, s: jax.random.uniform(k, s, jnp.float32, 0.5, 1.5)
    L4 = input_len // 4
    return {
        "conv1_w": n(ks[0], (64, 1, 3), 0.2), "conv1_b": n(ks[1], (64,), 0.1),
        "bn1_g": 1.0 + n(ks[2], (64,), 0.1), "bn1_b": n(ks[3], (64,), 0.1),
        "bn1_m": n(ks[4], (64,), 0.1), "bn1_v": u(ks[5], (64,)),
        "conv2_w": n(ks[6], (128, 64, 3), 0.05), "conv2_b": n(ks[7], (128,), 0.1),
        "bn2_g": 1.0 + n(ks[8], (128,), 0.1), "bn2_b": n(ks[9], (128,), 0.1),
        "bn2_m": n(ks[10], (128,), 0.1), "bn2_v": u(ks[11], (128,)),
        "fc1_w": n(ks[12], (128, L4 * 128), 0.02), "fc1_b": n(ks[13], (128,), 0.1),
        "fc2_w": n(ks[14], (num_classes, 128), 0.1),
        "fc2_b": n(ks[15], (num_classes,), 0.1),
    }


if __name__ == "__main__":
    B, input_len, num_classes = 2, 64, 10
    key = jax.random.PRNGKey(0)
    kx, kp = jax.random.split(key)
    x = jax.random.normal(kx, (B, 1, input_len), jnp.float32)
    params = make_params(kp, input_len, num_classes)

    y = audio_cnn_forward(x, params)
    jax.block_until_ready(y)

    y_ref = reference_forward(x, params)
    assert y.shape == (B, num_classes)
    assert jnp.allclose(y, y_ref, rtol=5e-2, atol=5e-2)
    print("KERNEL_OK")
</pallas_src>

<mosaic_0001>
module attributes {stable_mosaic.version = 11 : i64} {
  func.func @audio_cnn_kernel(%arg0: i32, %arg1: i32, %arg2: memref<1x1x8x128xf32, #tpu.memory_space<vmem>>, %arg3: memref<4x64xf32, #tpu.memory_space<vmem>>, %arg4: memref<192x128xbf16, #tpu.memory_space<vmem>>, %arg5: memref<1x128xf32, #tpu.memory_space<vmem>>, %arg6: memref<8x256x128xbf16, #tpu.memory_space<vmem>>, %arg7: memref<1x128xf32, #tpu.memory_space<vmem>>, %arg8: memref<128x128xbf16, #tpu.memory_space<vmem>>, %arg9: memref<1x128xf32, #tpu.memory_space<vmem>>, %arg10: memref<8x128xf32, #tpu.memory_space<vmem>>, %arg11: memref<8x128xf32, #tpu.memory_space<vmem>>) attributes {dimension_semantics = [#tpu.dimension_semantics<parallel>, #tpu.dimension_semantics<arbitrary>], iteration_bounds = array<i64: 1, 1>, scalar_prefetch = 0 : i64, scratch_operands = 1 : i64, tpu.core_type = #tpu.core_type<tc>, window_params = [{transform_indices = @transform_0, window_bounds = array<i64: 1, 1, 8, 128>}, {pipeline_mode = #tpu.pipeline_mode<synchronous>, transform_indices = @transform_1, window_bounds = array<i64: 4, 64>}, {pipeline_mode = #tpu.pipeline_mode<synchronous>, transform_indices = @transform_2, window_bounds = array<i64: 192, 128>}, {pipeline_mode = #tpu.pipeline_mode<synchronous>, transform_indices = @transform_3, window_bounds = array<i64: 1, 128>}, {transform_indices = @transform_4, window_bounds = array<i64: 8, 256, 128>}, {pipeline_mode = #tpu.pipeline_mode<synchronous>, transform_indices = @transform_5, window_bounds = array<i64: 1, 128>}, {pipeline_mode = #tpu.pipeline_mode<synchronous>, transform_indices = @transform_6, window_bounds = array<i64: 128, 128>}, {pipeline_mode = #tpu.pipeline_mode<synchronous>, transform_indices = @transform_7, window_bounds = array<i64: 1, 128>}, {transform_indices = @transform_8, window_bounds = array<i64: 8, 128>}]} {
    %c0_i32 = arith.constant 0 : i32
    %0 = arith.cmpi eq, %arg1, %c0_i32 : i32
    %1 = arith.extui %0 : i1 to i32
    %c0_i32_0 = arith.constant 0 : i32
    %2 = arith.cmpi ne, %1, %c0_i32_0 : i32
    scf.if %2 {
      %cst_280 = arith.constant 0.000000e+00 : f32
      %2897 = vector.broadcast %cst_280 : f32 to vector<8x128xf32>
      %c0_281 = arith.constant 0 : index
      %c0_282 = arith.constant 0 : index
      %2898 = vector.load %arg11[%c0_281, %c0_282] : memref<8x128xf32, #tpu.memory_space<vmem>>, vector<8x128xf32>
      tpu.vector_store %arg11[%c0_281, %c0_282], %2897 {strides = array<i32>} : memref<8x128xf32, #tpu.memory_space<vmem>>, vector<8x128xf32>,
    } else {
    }
    %c0 = arith.constant 0 : index
    %c0_1 = arith.constant 0 : index
    %c0_2 = arith.constant 0 : index
    %c0_3 = arith.constant 0 : index
    %3 = vector.load %arg2[%c0, %c0_1, %c0_2, %c0_3] : memref<1x1x8x128xf32, #tpu.memory_space<vmem>>, vector<1x1x8x128xf32>
    %4 = vector.shape_cast %3 : vector<1x1x8x128xf32> to vector<8x128xf32>
    %c0_4 = arith.constant 0 : index
    %c0_5 = arith.constant 0 : index
    %5 = vector.load %arg3[%c0_4, %c0_5] : memref<4x64xf32, #tpu.memory_space<vmem>>, vector<4x64xf32>
    %6 = vector.extract_strided_slice %5 {offsets = [0, 0], sizes = [1, 64], strides = [1, 1]} : vector<4x64xf32> to vector<1x64xf32>
    %7 = vector.extract_strided_slice %5 {offsets = [1, 0], sizes = [1, 64], strides = [1, 1]} : vector<4x64xf32> to vector<1x64xf32>
    %8 = vector.extract_strided_slice %5 {offsets = [2, 0], sizes = [1, 64], strides = [1, 1]} : vector<4x64xf32> to vector<1x64xf32>
    %9 = vector.extract_strided_slice %5 {offsets = [3, 0], sizes = [1, 64], strides = [1, 1]} : vector<4x64xf32> to vector<1x64xf32>
    %c0_6 = arith.constant 0 : index
    %c0_7 = arith.constant 0 : index
    %10 = vector.load %arg4[%c0_6, %c0_7] : memref<192x128xbf16, #tpu.memory_space<vmem>>, vector<192x128xbf16>
    %c0_8 = arith.constant 0 : index
    %c0_9 = arith.constant 0 : index
    %11 = vector.load %arg5[%c0_8, %c0_9] : memref<1x128xf32, #tpu.memory_space<vmem>>, vector<1x128xf32>
    %c0_10 = arith.constant 0 : index
    %c0_11 = arith.constant 0 : index
    %12 = vector.load %arg11[%c0_10, %c0_11] : memref<8x128xf32, #tpu.memory_space<vmem>>, vector<8x128xf32>
    %c16_i32 = arith.constant 16 : i32
    %13 = arith.muli %arg1, %c16_i32 : i32
    %c0_i32_12 = arith.constant 0 : i32
    %14 = arith.addi %13, %c0_i32_12 : i32
    %15 = vector.extract_strided_slice %4 {offsets = [0, 0], sizes = [8, 1], strides = [1, 1]} : vector<8x128xf32> to vector<8x1xf32>
    %16 = vector.broadcast %15 : vector<8x1xf32> to vector<8x64xf32>
    %17 = vector.broadcast %6 : vector<1x64xf32> to vector<8x64xf32>
    %18 = arith.mulf %16, %17 : vector<8x64xf32>
    %19 = vector.extract_strided_slice %4 {offsets = [0, 1], sizes = [8, 1], strides = [1, 1]} : vector<8x128xf32> to vector<8x1xf32>
    %20 = vector.broadcast %19 : vector<8x1xf32> to vector<8x64xf32>
    %21 = vector.broadcast %7 : vector<1x64xf32> to vector<8x64xf32>
    %22 = arith.mulf %20, %21 : vector<8x64xf32>
    %23 = arith.addf %18, %22 : vector<8x64xf32>
    %24 = vector.extract_strided_slice %4 {offsets = [0, 2], sizes = [8, 1], strides = [1, 1]} : vector<8x128xf32> to vector<8x1xf32>
    %25 = vector.broadcast %24 : vector<8x1xf32> to vector<8x64xf32>
    %26 = vector.broadcast %8 : vector<1x64xf32> to vector<8x64xf32>
    %27 = arith.mulf %25, %26 : vector<8x64xf32>
    %28 = arith.addf %23, %27 : vector<8x64xf32>
    %29 = vector.broadcast %9 : vector<1x64xf32> to vector<8x64xf32>
    %30 = arith.addf %28, %29 : vector<8x64xf32>
    %cst = arith.constant 0.000000e+00 : f32
    %31 = vector.broadcast %cst : f32 to vector<8x64xf32>
    %32 = arith.maximumf %30, %31 : vector<8x64xf32>
    %33 = vector.extract_strided_slice %4 {offsets = [0, 1], sizes = [8, 1], strides = [1, 1]} : vector<8x128xf32> to vector<8x1xf32>
    %34 = vector.broadcast %33 : vector<8x1xf32> to vector<8x64xf32>
    %35 = vector.broadcast %6 : vector<1x64xf32> to vector<8x64xf32>
    %36 = arith.mulf %34, %35 : vector<8x64xf32>
    %37 = vector.extract_strided_slice %4 {offsets = [0, 2], sizes = [8, 1], strides = [1, 1]} : vector<8x128xf32> to vector<8x1xf32>
    %38 = vector.broadcast %37 : vector<8x1xf32> to vector<8x64xf32>
    %39 = vector.broadcast %7 : vector<1x64xf32> to vector<8x64xf32>
    %40 = arith.mulf %38, %39 : vector<8x64xf32>
    %41 = arith.addf %36, %40 : vector<8x64xf32>
    %42 = vector.extract_strided_slice %4 {offsets = [0, 3], sizes = [8, 1], strides = [1, 1]} : vector<8x128xf32> to vector<8x1xf32>
    %43 = vector.broadcast %42 : vector<8x1xf32> to vector<8x64xf32>
    %44 = vector.broadcast %8 : vector<1x64xf32> to vector<8x64xf32>
    %45 = arith.mulf %43, %44 : vector<8x64xf32>
    %46 = arith.addf %41, %45 : vector<8x64xf32>
    %47 = vector.broadcast %9 : vector<1x64xf32> to vector<8x64xf32>
    %48 = arith.addf %46, %47 : vector<8x64xf32>
    %cst_13 = arith.constant 0.000000e+00 : f32
    %49 = vector.broadcast %cst_13 : f32 to vector<8x64xf32>
    %50 = arith.maximumf %48, %49 : vector<8x64xf32>
    %51 = arith.maximumf %32, %50 : vector<8x64xf32>
    %52 = vector.extract_strided_slice %4 {offsets = [0, 2], sizes = [8, 1], strides = [1, 1]} : vector<8x128xf32> to vector<8x1xf32>
    %53 = vector.broadcast %52 : vector<8x1xf32> to vector<8x64xf32>
    %54 = vector.broadcast %6 : vector<1x64xf32> to vector<8x64xf32>
    %55 = arith.mulf %53, %54 : vector<8x64xf32>
    %56 = vector.extract_strided_slice %4 {offsets = [0, 3], sizes = [8, 1], strides = [1, 1]} : vector<8x128xf32> to vector<8x1xf32>
    %57 = vector.broadcast %56 : vector<8x1xf32> to vector<8x64xf32>
    %58 = vector.broadcast %7 : vector<1x64xf32> to vector<8x64xf32>
    %59 = arith.mulf %57, %58 : vector<8x64xf32>
    %60 = arith.addf %55, %59 : vector<8x64xf32>
    %61 = vector.extract_strided_slice %4 {offsets = [0, 4], sizes = [8, 1], strides = [1, 1]} : vector<8x128xf32> to vector<8x1xf32>
    %62 = vector.broadcast %61 : vector<8x1xf32> to vector<8x64xf32>
    %63 = vector.broadcast %8 : vector<1x64xf32> to vector<8x64xf32>
    %64 = arith.mulf %62, %63 : vector<8x64xf32>
    %65 = arith.addf %60, %64 : vector<8x64xf32>
    %66 = vector.broadcast %9 : vector<1x64xf32> to vector<8x64xf32>
    %67 = arith.addf %65, %66 : vector<8x64xf32>
    %cst_14 = arith.constant 0.000000e+00 : f32
    %68 = vector.broadcast %cst_14 : f32 to vector<8x64xf32>
    %69 = arith.maximumf %67, %68 : vector<8x64xf32>
    %70 = vector.extract_strided_slice %4 {offsets = [0, 3], sizes = [8, 1], strides = [1, 1]} : vector<8x128xf32> to vector<8x1xf32>
    %71 = vector.broadcast %70 : vector<8x1xf32> to vector<8x64xf32>
    %72 = vector.broadcast %6 : vector<1x64xf32> to vector<8x64xf32>
    %73 = arith.mulf %71, %72 : vector<8x64xf32>
    %74 = vector.extract_strided_slice %4 {offsets = [0, 4], sizes = [8, 1], strides = [1, 1]} : vector<8x128xf32> to vector<8x1xf32>
    %75 = vector.broadcast %74 : vector<8x1xf32> to vector<8x64xf32>
    %76 = vector.broadcast %7 : vector<1x64xf32> to vector<8x64xf32>
    %77 = arith.mulf %75, %76 : vector<8x64xf32>
    %78 = arith.addf %73, %77 : vector<8x64xf32>
    %79 = vector.extract_strided_slice %4 {offsets = [0, 5], sizes = [8, 1], strides = [1, 1]} : vector<8x128xf32> to vector<8x1xf32>
    %80 = vector.broadcast %79 : vector<8x1xf32> to vector<8x64xf32>
    %81 = vector.broadcast %8 : vector<1x64xf32> to vector<8x64xf32>
    %82 = arith.mulf %80, %81 : vector<8x64xf32>
    %83 = arith.addf %78, %82 : vector<8x64xf32>
    %84 = vector.broadcast %9 : vector<1x64xf32> to vector<8x64xf32>
    %85 = arith.addf %83, %84 : vector<8x64xf32>
    %cst_15 = arith.constant 0.000000e+00 : f32
    %86 = vector.broadcast %cst_15 : f32 to vector<8x64xf32>
    %87 = arith.maximumf %85, %86 : vector<8x64xf32>
    %88 = arith.maximumf %69, %87 : vector<8x64xf32>
    %89 = vector.extract_strided_slice %4 {offsets = [0, 4], sizes = [8, 1], strides = [1, 1]} : vector<8x128xf32> to vector<8x1xf32>
    %90 = vector.broadcast %89 : vector<8x1xf32> to vector<8x64xf32>
    %91 = vector.broadcast %6 : vector<1x64xf32> to vector<8x64xf32>
    %92 = arith.mulf %90, %91 : vector<8x64xf32>
    %93 = vector.extract_strided_slice %4 {offsets = [0, 5], sizes = [8, 1], strides = [1, 1]} : vector<8x128xf32> to vector<8x1xf32>
    %94 = vector.broadcast %93 : vector<8x1xf32> to vector<8x64xf32>
    %95 = vector.broadcast %7 : vector<1x64xf32> to vector<8x64xf32>
    %96 = arith.mulf %94, %95 : vector<8x64xf32>
    %97 = arith.addf %92, %96 : vector<8x64xf32>
    %98 = vector.extract_strided_slice %4 {offsets = [0, 6], sizes = [8, 1], strides = [1, 1]} : vector<8x128xf32> to vector<8x1xf32>
    %99 = vector.broadcast %98 : vector<8x1xf32> to vector<8x64xf32>
    %100 = vector.broadcast %8 : vector<1x64xf32> to vector<8x64xf32>
    %101 = arith.mulf %99, %100 : vector<8x64xf32>
    %102 = arith.addf %97, %101 : vector<8x64xf32>
    %103 = vector.broadcast %9 : vector<1x64xf32> to vector<8x64xf32>
    %104 = arith.addf %102, %103 : vector<8x64xf32>
    %cst_16 = arith.constant 0.000000e+00 : f32
    %105 = vector.broadcast %cst_16 : f32 to vector<8x64xf32>
    %106 = arith.maximumf %104, %105 : vector<8x64xf32>
    %107 = vector.extract_strided_slice %4 {offsets = [0, 5], sizes = [8, 1], strides = [1, 1]} : vector<8x128xf32> to vector<8x1xf32>
    %108 = vector.broadcast %107 : vector<8x1xf32> to vector<8x64xf32>
    %109 = vector.broadcast %6 : vector<1x64xf32> to vector<8x64xf32>
    %110 = arith.mulf %108, %109 : vector<8x64xf32>
    %111 = vector.extract_strided_slice %4 {offsets = [0, 6], sizes = [8, 1], strides = [1, 1]} : vector<8x128xf32> to vector<8x1xf32>
    %112 = vector.broadcast %111 : vector<8x1xf32> to vector<8x64xf32>
    %113 = vector.broadcast %7 : vector<1x64xf32> to vector<8x64xf32>
    %114 = arith.mulf %112, %113 : vector<8x64xf32>
    %115 = arith.addf %110, %114 : vector<8x64xf32>
    %116 = vector.extract_strided_slice %4 {offsets = [0, 7], sizes = [8, 1], strides = [1, 1]} : vector<8x128xf32> to vector<8x1xf32>
    %117 = vector.broadcast %116 : vector<8x1xf32> to vector<8x64xf32>
    %118 = vector.broadcast %8 : vector<1x64xf32> to vector<8x64xf32>
    %119 = arith.mulf %117, %118 : vector<8x64xf32>
    %120 = arith.addf %115, %119 : vector<8x64xf32>
    %121 = vector.broadcast %9 : vector<1x64xf32> to vector<8x64xf32>
    %122 = arith.addf %120, %121 : vector<8x64xf32>
    %cst_17 = arith.constant 0.000000e+00 : f32
    %123 = vector.broadcast %cst_17 : f32 to vector<8x64xf32>
    %124 = arith.maximumf %122, %123 : vector<8x64xf32>
    %125 = arith.maximumf %106, %124 : vector<8x64xf32>
    %126 = vector.extract_strided_slice %4 {offsets = [0, 6], sizes = [8, 1], strides = [1, 1]} : vector<8x128xf32> to vector<8x1xf32>
    %127 = vector.broadcast %126 : vector<8x1xf32> to vector<8x64xf32>
    %128 = vector.broadcast %6 : vector<1x64xf32> to vector<8x64xf32>
    %129 = arith.mulf %127, %128 : vector<8x64xf32>
    %130 = vector.extract_strided_slice %4 {offsets = [0, 7], sizes = [8, 1], strides = [1, 1]} : vector<8x128xf32> to vector<8x1xf32>
    %131 = vector.broadcast %130 : vector<8x1xf32> to vector<8x64xf32>
    %132 = vector.broadcast %7 : vector<1x64xf32> to vector<8x64xf32>
    %133 = arith.mulf %131, %132 : vector<8x64xf32>
    %134 = arith.addf %129, %133 : vector<8x64xf32>
    %135 = vector.extract_strided_slice %4 {offsets = [0, 8], sizes = [8, 1], strides = [1, 1]} : vector<8x128xf32> to vector<8x1xf32>
    %136 = vector.broadcast %135 : vector<8x1xf32> to vector<8x64xf32>
    %137 = vector.broadcast %8 : vector<1x64xf32> to vector<8x64xf32>
    %138 = arith.mulf %136, %137 : vector<8x64xf32>
    %139 = arith.addf %134, %138 : vector<8x64xf32>
    %140 = vector.broadcast %9 : vector<1x64xf32> to vector<8x64xf32>
    %141 = arith.addf %139, %140 : vector<8x64xf32>
    %cst_18 = arith.constant 0.000000e+00 : f32
    %142 = vector.broadcast %cst_18 : f32 to vector<8x64xf32>
    %143 = arith.maximumf %141, %142 : vector<8x64xf32>
    %144 = vector.extract_strided_slice %4 {offsets = [0, 7], sizes = [8, 1], strides = [1, 1]} : vector<8x128xf32> to vector<8x1xf32>
    %145 = vector.broadcast %144 : vector<8x1xf32> to vector<8x64xf32>
    %146 = vector.broadcast %6 : vector<1x64xf32> to vector<8x64xf32>
    %147 = arith.mulf %145, %146 : vector<8x64xf32>
    %148 = vector.extract_strided_slice %4 {offsets = [0, 8], sizes = [8, 1], strides = [1, 1]} : vector<8x128xf32> to vector<8x1xf32>
    %149 = vector.broadcast %148 : vector<8x1xf32> to vector<8x64xf32>
    %150 = vector.broadcast %7 : vector<1x64xf32> to vector<8x64xf32>
    %151 = arith.mulf %149, %150 : vector<8x64xf32>
    %152 = arith.addf %147, %151 : vector<8x64xf32>
    %153 = vector.extract_strided_slice %4 {offsets = [0, 9], sizes = [8, 1], strides = [1, 1]} : vector<8x128xf32> to vector<8x1xf32>
    %154 = vector.broadcast %153 : vector<8x1xf32> to vector<8x64xf32>
    %155 = vector.broadcast %8 : vector<1x64xf32> to vector<8x64xf32>
    %156 = arith.mulf %154, %155 : vector<8x64xf32>
    %157 = arith.addf %152, %156 : vector<8x64xf32>
    %158 = vector.broadcast %9 : vector<1x64xf32> to vector<8x64xf32>
    %159 = arith.addf %157, %158 : vector<8x64xf32>
    %cst_19 = arith.constant 0.000000e+00 : f32
    %160 = vector.broadcast %cst_19 : f32 to vector<8x64xf32>
    %161 = arith.maximumf %159, %160 : vector<8x64xf32>
    %162 = arith.maximumf %143, %161 : vector<8x64xf32>
    %c0_i32_20 = arith.constant 0 : i32
    %163 = arith.cmpi sgt, %14, %c0_i32_20 : i32
    %164 = arith.extui %163 : i1 to i32
    %165 = arith.sitofp %164 : i32 to f32
    %166 = vector.broadcast %165 : f32 to vector<8x64xf32>
    %167 = arith.mulf %51, %166 : vector<8x64xf32>
    %c15_i32 = arith.constant 15 : i32
    %168 = arith.cmpi slt, %14, %c15_i32 : i32
    %169 = arith.extui %168 : i1 to i32
    %170 = arith.sitofp %169 : i32 to f32
    %171 = vector.broadcast %170 : f32 to vector<8x64xf32>
    %172 = arith.mulf %162, %171 : vector<8x64xf32>
    %173 = arith.truncf %167 : vector<8x64xf32> to vector<8x64xbf16>
    %174 = arith.truncf %88 : vector<8x64xf32> to vector<8x64xbf16>
    %175 = arith.truncf %125 : vector<8x64xf32> to vector<8x64xbf16>
    %176 = arith.truncf %172 : vector<8x64xf32> to vector<8x64xbf16>
    %177 = tpu.concatenate %173, %174, %175 in 1 : vector<8x64xbf16>, vector<8x64xbf16>, vector<8x64xbf16> -> vector<8x192xbf16>
    %cst_21 = arith.constant dense<0.000000e+00> : vector<8x128xf32>
    %178 = tpu.matmul %177, %10, %cst_21 {dimension_numbers = #tpu.dot_dimension_numbers<[1], [0], [0], [1], [0, 0, 1, 1], [], []>} : vector<8x192xbf16>, vector<192x128xbf16>, vector<8x128xf32> -> vector<8x128xf32>
    %179 = vector.broadcast %11 : vector<1x128xf32> to vector<8x128xf32>
    %180 = arith.addf %178, %179 : vector<8x128xf32>
    %cst_22 = arith.constant 0.000000e+00 : f32
    %181 = vector.broadcast %cst_22 : f32 to vector<8x128xf32>
    %182 = arith.maximumf %180, %181 : vector<8x128xf32>
    %183 = tpu.concatenate %174, %175, %176 in 1 : vector<8x64xbf16>, vector<8x64xbf16>, vector<8x64xbf16> -> vector<8x192xbf16>
    %cst_23 = arith.constant dense<0.000000e+00> : vector<8x128xf32>
    %184 = tpu.matmul %183, %10, %cst_23 {dimension_numbers = #tpu.dot_dimension_numbers<[1], [0], [0], [1], [0, 0, 1, 1], [], []>} : vector<8x192xbf16>, vector<192x128xbf16>, vector<8x128xf32> -> vector<8x128xf32>
    %185 = vector.broadcast %11 : vector<1x128xf32> to vector<8x128xf32>
    %186 = arith.addf %184, %185 : vector<8x128xf32>
    %cst_24 = arith.constant 0.000000e+00 : f32
    %187 = vector.broadcast %cst_24 : f32 to vector<8x128xf32>
    %188 = arith.maximumf %186, %187 : vector<8x128xf32>
    %189 = arith.maximumf %182, %188 : vector<8x128xf32>
    %c16_i32_25 = arith.constant 16 : i32
    %190 = arith.muli %arg1, %c16_i32_25 : i32
    %c1_i32 = arith.constant 1 : i32
    %191 = arith.addi %190, %c1_i32 : i32
    %192 = vector.extract_strided_slice %4 {offsets = [0, 4], sizes = [8, 1], strides = [1, 1]} : vector<8x128xf32> to vector<8x1xf32>
    %193 = vector.broadcast %192 : vector<8x1xf32> to vector<8x64xf32>
    %194 = vector.broadcast %6 : vector<1x64xf32> to vector<8x64xf32>
    %195 = arith.mulf %193, %194 : vector<8x64xf32>
    %196 = vector.extract_strided_slice %4 {offsets = [0, 5], sizes = [8, 1], strides = [1, 1]} : vector<8x128xf32> to vector<8x1xf32>
    %197 = vector.broadcast %196 : vector<8x1xf32> to vector<8x64xf32>
    %198 = vector.broadcast %7 : vector<1x64xf32> to vector<8x64xf32>
    %199 = arith.mulf %197, %198 : vector<8x64xf32>
    %200 = arith.addf %195, %199 : vector<8x64xf32>
    %201 = vector.extract_strided_slice %4 {offsets = [0, 6], sizes = [8, 1], strides = [1, 1]} : vector<8x128xf32> to vector<8x1xf32>
    %202 = vector.broadcast %201 : vector<8x1xf32> to vector<8x64xf32>
    %203 = vector.broadcast %8 : vector<1x64xf32> to vector<8x64xf32>
    %204 = arith.mulf %202, %203 : vector<8x64xf32>
    %205 = arith.addf %200, %204 : vector<8x64xf32>
    %206 = vector.broadcast %9 : vector<1x64xf32> to vector<8x64xf32>
    %207 = arith.addf %205, %206 : vector<8x64xf32>
    %cst_26 = arith.constant 0.000000e+00 : f32
    %208 = vector.broadcast %cst_26 : f32 to vector<8x64xf32>
    %209 = arith.maximumf %207, %208 : vector<8x64xf32>
    %210 = vector.extract_strided_slice %4 {offsets = [0, 5], sizes = [8, 1], strides = [1, 1]} : vector<8x128xf32> to vector<8x1xf32>
    %211 = vector.broadcast %210 : vector<8x1xf32> to vector<8x64xf32>
    %212 = vector.broadcast %6 : vector<1x64xf32> to vector<8x64xf32>
    %213 = arith.mulf %211, %212 : vector<8x64xf32>
    %214 = vector.extract_strided_slice %4 {offsets = [0, 6], sizes = [8, 1], strides = [1, 1]} : vector<8x128xf32> to vector<8x1xf32>
    %215 = vector.broadcast %214 : vector<8x1xf32> to vector<8x64xf32>
    %216 = vector.broadcast %7 : vector<1x64xf32> to vector<8x64xf32>
    %217 = arith.mulf %215, %216 : vector<8x64xf32>
    %218 = arith.addf %213, %217 : vector<8x64xf32>
    %219 = vector.extract_strided_slice %4 {offsets = [0, 7], sizes = [8, 1], strides = [1, 1]} : vector<8x128xf32> to vector<8x1xf32>
    %220 = vector.broadcast %219 : vector<8x1xf32> to vector<8x64xf32>
    %221 = vector.broadcast %8 : vector<1x64xf32> to vector<8x64xf32>
    %222 = arith.mulf %220, %221 : vector<8x64xf32>
    %223 = arith.addf %218, %222 : vector<8x64xf32>
    %224 = vector.broadcast %9 : vector<1x64xf32> to vector<8x64xf32>
    %225 = arith.addf %223, %224 : vector<8x64xf32>
    %cst_27 = arith.constant 0.000000e+00 : f32
    %226 = vector.broadcast %cst_27 : f32 to vector<8x64xf32>
    %227 = arith.maximumf %225, %226 : vector<8x64xf32>
    %228 = arith.maximumf %209, %227 : vector<8x64xf32>
    %229 = vector.extract_strided_slice %4 {offsets = [0, 6], sizes = [8, 1], strides = [1, 1]} : vector<8x128xf32> to vector<8x1xf32>
    %230 = vector.broadcast %229 : vector<8x1xf32> to vector<8x64xf32>
    %231 = vector.broadcast %6 : vector<1x64xf32> to vector<8x64xf32>
    %232 = arith.mulf %230, %231 : vector<8x64xf32>
    %233 = vector.extract_strided_slice %4 {offsets = [0, 7], sizes = [8, 1], strides = [1, 1]} : vector<8x128xf32> to vector<8x1xf32>
    %234 = vector.broadcast %233 : vector<8x1xf32> to vector<8x64xf32>
    %235 = vector.broadcast %7 : vector<1x64xf32> to vector<8x64xf32>
    %236 = arith.mulf %234, %235 : vector<8x64xf32>
    %237 = arith.addf %232, %236 : vector<8x64xf32>
    %238 = vector.extract_strided_slice %4 {offsets = [0, 8], sizes = [8, 1], strides = [1, 1]} : vector<8x128xf32> to vector<8x1xf32>
    %239 = vector.broadcast %238 : vector<8x1xf32> to vector<8x64xf32>
    %240 = vector.broadcast %8 : vector<1x64xf32> to vector<8x64xf32>
    %241 = arith.mulf %239, %240 : vector<8x64xf32>
    %242 = arith.addf %237, %241 : vector<8x64xf32>
    %243 = vector.broadcast %9 : vector<1x64xf32> to vector<8x64xf32>
    %244 = arith.addf %242, %243 : vector<8x64xf32>
    %cst_28 = arith.constant 0.000000e+00 : f32
    %245 = vector.broadcast %cst_28 : f32 to vector<8x64xf32>
    %246 = arith.maximumf %244, %245 : vector<8x64xf32>
    %247 = vector.extract_strided_slice %4 {offsets = [0, 7], sizes = [8, 1], strides = [1, 1]} : vector<8x128xf32> to vector<8x1xf32>
    %248 = vector.broadcast %247 : vector<8x1xf32> to vector<8x64xf32>
    %249 = vector.broadcast %6 : vector<1x64xf32> to vector<8x64xf32>
    %250 = arith.mulf %248, %249 : vector<8x64xf32>
    %251 = vector.extract_strided_slice %4 {offsets = [0, 8], sizes = [8, 1], strides = [1, 1]} : vector<8x128xf32> to vector<8x1xf32>
    %252 = vector.broadcast %251 : vector<8x1xf32> to vector<8x64xf32>
    %253 = vector.broadcast %7 : vector<1x64xf32> to vector<8x64xf32>
    %254 = arith.mulf %252, %253 : vector<8x64xf32>
    %255 = arith.addf %250, %254 : vector<8x64xf32>
    %256 = vector.extract_strided_slice %4 {offsets = [0, 9], sizes = [8, 1], strides = [1, 1]} : vector<8x128xf32> to vector<8x1xf32>
    %257 = vector.broadcast %256 : vector<8x1xf32> to vector<8x64xf32>
    %258 = vector.broadcast %8 : vector<1x64xf32> to vector<8x64xf32>
    %259 = arith.mulf %257, %258 : vector<8x64xf32>
    %260 = arith.addf %255, %259 : vector<8x64xf32>
    %261 = vector.broadcast %9 : vector<1x64xf32> to vector<8x64xf32>
    %262 = arith.addf %260, %261 : vector<8x64xf32>
    %cst_29 = arith.constant 0.000000e+00 : f32
    %263 = vector.broadcast %cst_29 : f32 to vector<8x64xf32>
    %264 = arith.maximumf %262, %263 : vector<8x64xf32>
    %265 = arith.maximumf %246, %264 : vector<8x64xf32>
    %266 = vector.extract_strided_slice %4 {offsets = [0, 8], sizes = [8, 1], strides = [1, 1]} : vector<8x128xf32> to vector<8x1xf32>
    %267 = vector.broadcast %266 : vector<8x1xf32> to vector<8x64xf32>
    %268 = vector.broadcast %6 : vector<1x64xf32> to vector<8x64xf32>
    %269 = arith.mulf %267, %268 : vector<8x64xf32>
    %270 = vector.extract_strided_slice %4 {offsets = [0, 9], sizes = [8, 1], strides = [1, 1]} : vector<8x128xf32> to vector<8x1xf32>
    %271 = vector.broadcast %270 : vector<8x1xf32> to vector<8x64xf32>
    %272 = vector.broadcast %7 : vector<1x64xf32> to vector<8x64xf32>
    %273 = arith.mulf %271, %272 : vector<8x64xf32>
    %274 = arith.addf %269, %273 : vector<8x64xf32>
    %275 = vector.extract_strided_slice %4 {offsets = [0, 10], sizes = [8, 1], strides = [1, 1]} : vector<8x128xf32> to vector<8x1xf32>
    %276 = vector.broadcast %275 : vector<8x1xf32> to vector<8x64xf32>
    %277 = vector.broadcast %8 : vector<1x64xf32> to vector<8x64xf32>
    %278 = arith.mulf %276, %277 : vector<8x64xf32>
    %279 = arith.addf %274, %278 : vector<8x64xf32>
    %280 = vector.broadcast %9 : vector<1x64xf32> to vector<8x64xf32>
    %281 = arith.addf %279, %280 : vector<8x64xf32>
    %cst_30 = arith.constant 0.000000e+00 : f32
    %282 = vector.broadcast %cst_30 : f32 to vector<8x64xf32>
    %283 = arith.maximumf %281, %282 : vector<8x64xf32>
    %284 = vector.extract_strided_slice %4 {offsets = [0, 9], sizes = [8, 1], strides = [1, 1]} : vector<8x128xf32> to vector<8x1xf32>
    %285 = vector.broadcast %284 : vector<8x1xf32> to vector<8x64xf32>
    %286 = vector.broadcast %6 : vector<1x64xf32> to vector<8x64xf32>
    %287 = arith.mulf %285, %286 : vector<8x64xf32>
    %288 = vector.extract_strided_slice %4 {offsets = [0, 10], sizes = [8, 1], strides = [1, 1]} : vector<8x128xf32> to vector<8x1xf32>
    %289 = vector.broadcast %288 : vector<8x1xf32> to vector<8x64xf32>
    %290 = vector.broadcast %7 : vector<1x64xf32> to vector<8x64xf32>
    %291 = arith.mulf %289, %290 : vector<8x64xf32>
    %292 = arith.addf %287, %291 : vector<8x64xf32>
    %293 = vector.extract_strided_slice %4 {offsets = [0, 11], sizes = [8, 1], strides = [1, 1]} : vector<8x128xf32> to vector<8x1xf32>
    %294 = vector.broadcast %293 : vector<8x1xf32> to vector<8x64xf32>
    %295 = vector.broadcast %8 : vector<1x64xf32> to vector<8x64xf32>
    %296 = arith.mulf %294, %295 : vector<8x64xf32>
    %297 = arith.addf %292, %296 : vector<8x64xf32>
    %298 = vector.broadcast %9 : vector<1x64xf32> to vector<8x64xf32>
    %299 = arith.addf %297, %298 : vector<8x64xf32>
    %cst_31 = arith.constant 0.000000e+00 : f32
    %300 = vector.broadcast %cst_31 : f32 to vector<8x64xf32>
    %301 = arith.maximumf %299, %300 : vector<8x64xf32>
    %302 = arith.maximumf %283, %301 : vector<8x64xf32>
    %303 = vector.extract_strided_slice %4 {offsets = [0, 10], sizes = [8, 1], strides = [1, 1]} : vector<8x128xf32> to vector<8x1xf32>
    %304 = vector.broadcast %303 : vector<8x1xf32> to vector<8x64xf32>
    %305 = vector.broadcast %6 : vector<1x64xf32> to vector<8x64xf32>
    %306 = arith.mulf %304, %305 : vector<8x64xf32>
    %307 = vector.extract_strided_slice %4 {offsets = [0, 11], sizes = [8, 1], strides = [1, 1]} : vector<8x128xf32> to vector<8x1xf32>
    %308 = vector.broadcast %307 : vector<8x1xf32> to vector<8x64xf32>
    %309 = vector.broadcast %7 : vector<1x64xf32> to vector<8x64xf32>
    %310 = arith.mulf %308, %309 : vector<8x64xf32>
    %311 = arith.addf %306, %310 : vector<8x64xf32>
    %312 = vector.extract_strided_slice %4 {offsets = [0, 12], sizes = [8, 1], strides = [1, 1]} : vector<8x128xf32> to vector<8x1xf32>
    %313 = vector.broadcast %312 : vector<8x1xf32> to vector<8x64xf32>
    %314 = vector.broadcast %8 : vector<1x64xf32> to vector<8x64xf32>
    %315 = arith.mulf %313, %314 : vector<8x64xf32>
    %316 = arith.addf %311, %315 : vector<8x64xf32>
    %317 = vector.broadcast %9 : vector<1x64xf32> to vector<8x64xf32>
    %318 = arith.addf %316, %317 : vector<8x64xf32>
    %cst_32 = arith.constant 0.000000e+00 : f32
    %319 = vector.broadcast %cst_32 : f32 to vector<8x64xf32>
    %320 = arith.maximumf %318, %319 : vector<8x64xf32>
    %321 = vector.extract_strided_slice %4 {offsets = [0, 11], sizes = [8, 1], strides = [1, 1]} : vector<8x128xf32> to vector<8x1xf32>
    %322 = vector.broadcast %321 : vector<8x1xf32> to vector<8x64xf32>
    %323 = vector.broadcast %6 : vector<1x64xf32> to vector<8x64xf32>
    %324 = arith.mulf %322, %323 : vector<8x64xf32>
    %325 = vector.extract_strided_slice %4 {offsets = [0, 12], sizes = [8, 1], strides = [1, 1]} : vector<8x128xf32> to vector<8x1xf32>
    %326 = vector.broadcast %325 : vector<8x1xf32> to vector<8x64xf32>
    %327 = vector.broadcast %7 : vector<1x64xf32> to vector<8x64xf32>
    %328 = arith.mulf %326, %327 : vector<8x64xf32>
    %329 = arith.addf %324, %328 : vector<8x64xf32>
    %330 = vector.extract_strided_slice %4 {offsets = [0, 13], sizes = [8, 1], strides = [1, 1]} : vector<8x128xf32> to vector<8x1xf32>
    %331 = vector.broadcast %330 : vector<8x1xf32> to vector<8x64xf32>
    %332 = vector.broadcast %8 : vector<1x64xf32> to vector<8x64xf32>
    %333 = arith.mulf %331, %332 : vector<8x64xf32>
    %334 = arith.addf %329, %333 : vector<8x64xf32>
    %335 = vector.broadcast %9 : vector<1x64xf32> to vector<8x64xf32>
    %336 = arith.addf %334, %335 : vector<8x64xf32>
    %cst_33 = arith.constant 0.000000e+00 : f32
    %337 = vector.broadcast %cst_33 : f32 to vector<8x64xf32>
    %338 = arith.maximumf %336, %337 : vector<8x64xf32>
    %339 = arith.maximumf %320, %338 : vector<8x64xf32>
    %c0_i32_34 = arith.constant 0 : i32
    %340 = arith.cmpi sgt, %191, %c0_i32_34 : i32
    %341 = arith.extui %340 : i1 to i32
    %342 = arith.sitofp %341 : i32 to f32
    %343 = vector.broadcast %342 : f32 to vector<8x64xf32>
    %344 = arith.mulf %228, %343 : vector<8x64xf32>
    %c15_i32_35 = arith.constant 15 : i32
    %345 = arith.cmpi slt, %191, %c15_i32_35 : i32
    %346 = arith.extui %345 : i1 to i32
    %347 = arith.sitofp %346 : i32 to f32
    %348 = vector.broadcast %347 : f32 to vector<8x64xf32>
    %349 = arith.mulf %339, %348 : vector<8x64xf32>
    %350 = arith.truncf %344 : vector<8x64xf32> to vector<8x64xbf16>
    %351 = arith.truncf %265 : vector<8x64xf32> to vector<8x64xbf16>
    %352 = arith.truncf %302 : vector<8x64xf32> to vector<8x64xbf16>
    %353 = arith.truncf %349 : vector<8x64xf32> to vector<8x64xbf16>
    %354 = tpu.concatenate %350, %351, %352 in 1 : vector<8x64xbf16>, vector<8x64xbf16>, vector<8x64xbf16> -> vector<8x192xbf16>
    %cst_36 = arith.constant dense<0.000000e+00> : vector<8x128xf32>
    %355 = tpu.matmul %354, %10, %cst_36 {dimension_numbers = #tpu.dot_dimension_numbers<[1], [0], [0], [1], [0, 0, 1, 1], [], []>} : vector<8x192xbf16>, vector<192x128xbf16>, vector<8x128xf32> -> vector<8x128xf32>
    %356 = vector.broadcast %11 : vector<1x128xf32> to vector<8x128xf32>
    %357 = arith.addf %355, %356 : vector<8x128xf32>
    %cst_37 = arith.constant 0.000000e+00 : f32
    %358 = vector.broadcast %cst_37 : f32 to vector<8x128xf32>
    %359 = arith.maximumf %357, %358 : vector<8x128xf32>
    %360 = tpu.concatenate %351, %352, %353 in 1 : vector<8x64xbf16>, vector<8x64xbf16>, vector<8x64xbf16> -> vector<8x192xbf16>
    %cst_38 = arith.constant dense<0.000000e+00> : vector<8x128xf32>
    %361 = tpu.matmul %360, %10, %cst_38 {dimension_numbers = #tpu.dot_dimension_numbers<[1], [0], [0], [1], [0, 0, 1, 1], [], []>} : vector<8x192xbf16>, vector<192x128xbf16>, vector<8x128xf32> -> vector<8x128xf32>
    %362 = vector.broadcast %11 : vector<1x128xf32> to vector<8x128xf32>
    %363 = arith.addf %361, %362 : vector<8x128xf32>
    %cst_39 = arith.constant 0.000000e+00 : f32
    %364 = vector.broadcast %cst_39 : f32 to vector<8x128xf32>
    %365 = arith.maximumf %363, %364 : vector<8x128xf32>
    %366 = arith.maximumf %359, %365 : vector<8x128xf32>
    %367 = tpu.concatenate %189, %366 in 1 : vector<8x128xf32>, vector<8x128xf32> -> vector<8x256xf32>
    %368 = arith.truncf %367 : vector<8x256xf32> to vector<8x256xbf16>
    %c0_40 = arith.constant 0 : index
    %c0_41 = arith.constant 0 : index
    %c0_42 = arith.constant 0 : index
    %369 = vector.load %arg6[%c0_40, %c0_41, %c0_42] : memref<8x256x128xbf16, #tpu.memory_space<vmem>>, vector<1x256x128xbf16>
    %370 = vector.shape_cast %369 : vector<1x256x128xbf16> to vector<256x128xbf16>
    %cst_43 = arith.constant dense<0.000000e+00> : vector<8x128xf32>
    %371 = tpu.matmul %368, %370, %cst_43 {dimension_numbers = #tpu.dot_dimension_numbers<[1], [0], [0], [1], [0, 0, 1, 1], [], []>} : vector<8x256xbf16>, vector<256x128xbf16>, vector<8x128xf32> -> vector<8x128xf32>
    %372 = arith.addf %12, %371 : vector<8x128xf32>
    %c16_i32_44 = arith.constant 16 : i32
    %373 = arith.muli %arg1, %c16_i32_44 : i32
    %c2_i32 = arith.constant 2 : i32
    %374 = arith.addi %373, %c2_i32 : i32
    %375 = vector.extract_strided_slice %4 {offsets = [0, 8], sizes = [8, 1], strides = [1, 1]} : vector<8x128xf32> to vector<8x1xf32>
    %376 = vector.broadcast %375 : vector<8x1xf32> to vector<8x64xf32>
    %377 = vector.broadcast %6 : vector<1x64xf32> to vector<8x64xf32>
    %378 = arith.mulf %376, %377 : vector<8x64xf32>
    %379 = vector.extract_strided_slice %4 {offsets = [0, 9], sizes = [8, 1], strides = [1, 1]} : vector<8x128xf32> to vector<8x1xf32>
    %380 = vector.broadcast %379 : vector<8x1xf32> to vector<8x64xf32>
    %381 = vector.broadcast %7 : vector<1x64xf32> to vector<8x64xf32>
    %382 = arith.mulf %380, %381 : vector<8x64xf32>
    %383 = arith.addf %378, %382 : vector<8x64xf32>
    %384 = vector.extract_strided_slice %4 {offsets = [0, 10], sizes = [8, 1], strides = [1, 1]} : vector<8x128xf32> to vector<8x1xf32>
    %385 = vector.broadcast %384 : vector<8x1xf32> to vector<8x64xf32>
    %386 = vector.broadcast %8 : vector<1x64xf32> to vector<8x64xf32>
    %387 = arith.mulf %385, %386 : vector<8x64xf32>
    %388 = arith.addf %383, %387 : vector<8x64xf32>
    %389 = vector.broadcast %9 : vector<1x64xf32> to vector<8x64xf32>
    %390 = arith.addf %388, %389 : vector<8x64xf32>
    %cst_45 = arith.constant 0.000000e+00 : f32
    %391 = vector.broadcast %cst_45 : f32 to vector<8x64xf32>
    %392 = arith.maximumf %390, %391 : vector<8x64xf32>
    %393 = vector.extract_strided_slice %4 {offsets = [0, 9], sizes = [8, 1], strides = [1, 1]} : vector<8x128xf32> to vector<8x1xf32>
    %394 = vector.broadcast %393 : vector<8x1xf32> to vector<8x64xf32>
    %395 = vector.broadcast %6 : vector<1x64xf32> to vector<8x64xf32>
    %396 = arith.mulf %394, %395 : vector<8x64xf32>
    %397 = vector.extract_strided_slice %4 {offsets = [0, 10], sizes = [8, 1], strides = [1, 1]} : vector<8x128xf32> to vector<8x1xf32>
    %398 = vector.broadcast %397 : vector<8x1xf32> to vector<8x64xf32>
    %399 = vector.broadcast %7 : vector<1x64xf32> to vector<8x64xf32>
    %400 = arith.mulf %398, %399 : vector<8x64xf32>
    %401 = arith.addf %396, %400 : vector<8x64xf32>
    %402 = vector.extract_strided_slice %4 {offsets = [0, 11], sizes = [8, 1], strides = [1, 1]} : vector<8x128xf32> to vector<8x1xf32>
    %403 = vector.broadcast %402 : vector<8x1xf32> to vector<8x64xf32>
    %404 = vector.broadcast %8 : vector<1x64xf32> to vector<8x64xf32>
    %405 = arith.mulf %403, %404 : vector<8x64xf32>
    %406 = arith.addf %401, %405 : vector<8x64xf32>
    %407 = vector.broadcast %9 : vector<1x64xf32> to vector<8x64xf32>
    %408 = arith.addf %406, %407 : vector<8x64xf32>
    %cst_46 = arith.constant 0.000000e+00 : f32
    %409 = vector.broadcast %cst_46 : f32 to vector<8x64xf32>
    %410 = arith.maximumf %408, %409 : vector<8x64xf32>
    %411 = arith.maximumf %392, %410 : vector<8x64xf32>
    %412 = vector.extract_strided_slice %4 {offsets = [0, 10], sizes = [8, 1], strides = [1, 1]} : vector<8x128xf32> to vector<8x1xf32>
    %413 = vector.broadcast %412 : vector<8x1xf32> to vector<8x64xf32>
    %414 = vector.broadcast %6 : vector<1x64xf32> to vector<8x64xf32>
    %415 = arith.mulf %413, %414 : vector<8x64xf32>
    %416 = vector.extract_strided_slice %4 {offsets = [0, 11], sizes = [8, 1], strides = [1, 1]} : vector<8x128xf32> to vector<8x1xf32>
    %417 = vector.broadcast %416 : vector<8x1xf32> to vector<8x64xf32>
    %418 = vector.broadcast %7 : vector<1x64xf32> to vector<8x64xf32>
    %419 = arith.mulf %417, %418 : vector<8x64xf32>
    %420 = arith.addf %415, %419 : vector<8x64xf32>
    %421 = vector.extract_strided_slice %4 {offsets = [0, 12], sizes = [8, 1], strides = [1, 1]} : vector<8x128xf32> to vector<8x1xf32>
    %422 = vector.broadcast %421 : vector<8x1xf32> to vector<8x64xf32>
    %423 = vector.broadcast %8 : vector<1x64xf32> to vector<8x64xf32>
    %424 = arith.mulf %422, %423 : vector<8x64xf32>
    %425 = arith.addf %420, %424 : vector<8x64xf32>
    %426 = vector.broadcast %9 : vector<1x64xf32> to vector<8x64xf32>
    %427 = arith.addf %425, %426 : vector<8x64xf32>
    %cst_47 = arith.constant 0.000000e+00 : f32
    %428 = vector.broadcast %cst_47 : f32 to vector<8x64xf32>
    %429 = arith.maximumf %427, %428 : vector<8x64xf32>
    %430 = vector.extract_strided_slice %4 {offsets = [0, 11], sizes = [8, 1], strides = [1, 1]} : vector<8x128xf32> to vector<8x1xf32>
    %431 = vector.broadcast %430 : vector<8x1xf32> to vector<8x64xf32>
    %432 = vector.broadcast %6 : vector<1x64xf32> to vector<8x64xf32>
    %433 = arith.mulf %431, %432 : vector<8x64xf32>
    %434 = vector.extract_strided_slice %4 {offsets = [0, 12], sizes = [8, 1], strides = [1, 1]} : vector<8x128xf32> to vector<8x1xf32>
    %435 = vector.broadcast %434 : vector<8x1xf32> to vector<8x64xf32>
    %436 = vector.broadcast %7 : vector<1x64xf32> to vector<8x64xf32>
    %437 = arith.mulf %435, %436 : vector<8x64xf32>
    %438 = arith.addf %433, %437 : vector<8x64xf32>
    %439 = vector.extract_strided_slice %4 {offsets = [0, 13], sizes = [8, 1], strides = [1, 1]} : vector<8x128xf32> to vector<8x1xf32>
    %440 = vector.broadcast %439 : vector<8x1xf32> to vector<8x64xf32>
    %441 = vector.broadcast %8 : vector<1x64xf32> to vector<8x64xf32>
    %442 = arith.mulf %440, %441 : vector<8x64xf32>
    %443 = arith.addf %438, %442 : vector<8x64xf32>
    %444 = vector.broadcast %9 : vector<1x64xf32> to vector<8x64xf32>
    %445 = arith.addf %443, %444 : vector<8x64xf32>
    %cst_48 = arith.constant 0.000000e+00 : f32
    %446 = vector.broadcast %cst_48 : f32 to vector<8x64xf32>
    %447 = arith.maximumf %445, %446 : vector<8x64xf32>
    %448 = arith.maximumf %429, %447 : vector<8x64xf32>
    %449 = vector.extract_strided_slice %4 {offsets = [0, 12], sizes = [8, 1], strides = [1, 1]} : vector<8x128xf32> to vector<8x1xf32>
    %450 = vector.broadcast %449 : vector<8x1xf32> to vector<8x64xf32>
    %451 = vector.broadcast %6 : vector<1x64xf32> to vector<8x64xf32>
    %452 = arith.mulf %450, %451 : vector<8x64xf32>
    %453 = vector.extract_strided_slice %4 {offsets = [0, 13], sizes = [8, 1], strides = [1, 1]} : vector<8x128xf32> to vector<8x1xf32>
    %454 = vector.broadcast %453 : vector<8x1xf32> to vector<8x64xf32>
    %455 = vector.broadcast %7 : vector<1x64xf32> to vector<8x64xf32>
    %456 = arith.mulf %454, %455 : vector<8x64xf32>
    %457 = arith.addf %452, %456 : vector<8x64xf32>
    %458 = vector.extract_strided_slice %4 {offsets = [0, 14], sizes = [8, 1], strides = [1, 1]} : vector<8x128xf32> to vector<8x1xf32>
    %459 = vector.broadcast %458 : vector<8x1xf32> to vector<8x64xf32>
    %460 = vector.broadcast %8 : vector<1x64xf32> to vector<8x64xf32>
    %461 = arith.mulf %459, %460 : vector<8x64xf32>
    %462 = arith.addf %457, %461 : vector<8x64xf32>
    %463 = vector.broadcast %9 : vector<1x64xf32> to vector<8x64xf32>
    %464 = arith.addf %462, %463 : vector<8x64xf32>
    %cst_49 = arith.constant 0.000000e+00 : f32
    %465 = vector.broadcast %cst_49 : f32 to vector<8x64xf32>
    %466 = arith.maximumf %464, %465 : vector<8x64xf32>
    %467 = vector.extract_strided_slice %4 {offsets = [0, 13], sizes = [8, 1], strides = [1, 1]} : vector<8x128xf32> to vector<8x1xf32>
    %468 = vector.broadcast %467 : vector<8x1xf32> to vector<8x64xf32>
    %469 = vector.broadcast %6 : vector<1x64xf32> to vector<8x64xf32>
    %470 = arith.mulf %468, %469 : vector<8x64xf32>
    %471 = vector.extract_strided_slice %4 {offsets = [0, 14], sizes = [8, 1], strides = [1, 1]} : vector<8x128xf32> to vector<8x1xf32>
    %472 = vector.broadcast %471 : vector<8x1xf32> to vector<8x64xf32>
    %473 = vector.broadcast %7 : vector<1x64xf32> to vector<8x64xf32>
    %474 = arith.mulf %472, %473 : vector<8x64xf32>
    %475 = arith.addf %470, %474 : vector<8x64xf32>
    %476 = vector.extract_strided_slice %4 {offsets = [0, 15], sizes = [8, 1], strides = [1, 1]} : vector<8x128xf32> to vector<8x1xf32>
    %477 = vector.broadcast %476 : vector<8x1xf32> to vector<8x64xf32>
    %478 = vector.broadcast %8 : vector<1x64xf32> to vector<8x64xf32>
    %479 = arith.mulf %477, %478 : vector<8x64xf32>
    %480 = arith.addf %475, %479 : vector<8x64xf32>
    %481 = vector.broadcast %9 : vector<1x64xf32> to vector<8x64xf32>
    %482 = arith.addf %480, %481 : vector<8x64xf32>
    %cst_50 = arith.constant 0.000000e+00 : f32
    %483 = vector.broadcast %cst_50 : f32 to vector<8x64xf32>
    %484 = arith.maximumf %482, %483 : vector<8x64xf32>
    %485 = arith.maximumf %466, %484 : vector<8x64xf32>
    %486 = vector.extract_strided_slice %4 {offsets = [0, 14], sizes = [8, 1], strides = [1, 1]} : vector<8x128xf32> to vector<8x1xf32>
    %487 = vector.broadcast %486 : vector<8x1xf32> to vector<8x64xf32>
    %488 = vector.broadcast %6 : vector<1x64xf32> to vector<8x64xf32>
    %489 = arith.mulf %487, %488 : vector<8x64xf32>
    %490 = vector.extract_strided_slice %4 {offsets = [0, 15], sizes = [8, 1], strides = [1, 1]} : vector<8x128xf32> to vector<8x1xf32>
    %491 = vector.broadcast %490 : vector<8x1xf32> to vector<8x64xf32>
    %492 = vector.broadcast %7 : vector<1x64xf32> to vector<8x64xf32>
    %493 = arith.mulf %491, %492 : vector<8x64xf32>
    %494 = arith.addf %489, %493 : vector<8x64xf32>
    %495 = vector.extract_strided_slice %4 {offsets = [0, 16], sizes = [8, 1], strides = [1, 1]} : vector<8x128xf32> to vector<8x1xf32>
    %496 = vector.broadcast %495 : vector<8x1xf32> to vector<8x64xf32>
    %497 = vector.broadcast %8 : vector<1x64xf32> to vector<8x64xf32>
    %498 = arith.mulf %496, %497 : vector<8x64xf32>
    %499 = arith.addf %494, %498 : vector<8x64xf32>
    %500 = vector.broadcast %9 : vector<1x64xf32> to vector<8x64xf32>
    %501 = arith.addf %499, %500 : vector<8x64xf32>
    %cst_51 = arith.constant 0.000000e+00 : f32
    %502 = vector.broadcast %cst_51 : f32 to vector<8x64xf32>
    %503 = arith.maximumf %501, %502 : vector<8x64xf32>
    %504 = vector.extract_strided_slice %4 {offsets = [0, 15], sizes = [8, 1], strides = [1, 1]} : vector<8x128xf32> to vector<8x1xf32>
    %505 = vector.broadcast %504 : vector<8x1xf32> to vector<8x64xf32>
    %506 = vector.broadcast %6 : vector<1x64xf32> to vector<8x64xf32>
    %507 = arith.mulf %505, %506 : vector<8x64xf32>
    %508 = vector.extract_strided_slice %4 {offsets = [0, 16], sizes = [8, 1], strides = [1, 1]} : vector<8x128xf32> to vector<8x1xf32>
    %509 = vector.broadcast %508 : vector<8x1xf32> to vector<8x64xf32>
    %510 = vector.broadcast %7 : vector<1x64xf32> to vector<8x64xf32>
    %511 = arith.mulf %509, %510 : vector<8x64xf32>
    %512 = arith.addf %507, %511 : vector<8x64xf32>
    %513 = vector.extract_strided_slice %4 {offsets = [0, 17], sizes = [8, 1], strides = [1, 1]} : vector<8x128xf32> to vector<8x1xf32>
    %514 = vector.broadcast %513 : vector<8x1xf32> to vector<8x64xf32>
    %515 = vector.broadcast %8 : vector<1x64xf32> to vector<8x64xf32>
    %516 = arith.mulf %514, %515 : vector<8x64xf32>
    %517 = arith.addf %512, %516 : vector<8x64xf32>
    %518 = vector.broadcast %9 : vector<1x64xf32> to vector<8x64xf32>
    %519 = arith.addf %517, %518 : vector<8x64xf32>
    %cst_52 = arith.constant 0.000000e+00 : f32
    %520 = vector.broadcast %cst_52 : f32 to vector<8x64xf32>
    %521 = arith.maximumf %519, %520 : vector<8x64xf32>
    %522 = arith.maximumf %503, %521 : vector<8x64xf32>
    %c0_i32_53 = arith.constant 0 : i32
    %523 = arith.cmpi sgt, %374, %c0_i32_53 : i32
    %524 = arith.extui %523 : i1 to i32
    %525 = arith.sitofp %524 : i32 to f32
    %526 = vector.broadcast %525 : f32 to vector<8x64xf32>
    %527 = arith.mulf %411, %526 : vector<8x64xf32>
    %c15_i32_54 = arith.constant 15 : i32
    %528 = arith.cmpi slt, %374, %c15_i32_54 : i32
    %529 = arith.extui %528 : i1 to i32
    %530 = arith.sitofp %529 : i32 to f32
    %531 = vector.broadcast %530 : f32 to vector<8x64xf32>
    %532 = arith.mulf %522, %531 : vector<8x64xf32>
    %533 = arith.truncf %527 : vector<8x64xf32> to vector<8x64xbf16>
    %534 = arith.truncf %448 : vector<8x64xf32> to vector<8x64xbf16>
    %535 = arith.truncf %485 : vector<8x64xf32> to vector<8x64xbf16>
    %536 = arith.truncf %532 : vector<8x64xf32> to vector<8x64xbf16>
    %537 = tpu.concatenate %533, %534, %535 in 1 : vector<8x64xbf16>, vector<8x64xbf16>, vector<8x64xbf16> -> vector<8x192xbf16>
    %cst_55 = arith.constant dense<0.000000e+00> : vector<8x128xf32>
    %538 = tpu.matmul %537, %10, %cst_55 {dimension_numbers = #tpu.dot_dimension_numbers<[1], [0], [0], [1], [0, 0, 1, 1], [], []>} : vector<8x192xbf16>, vector<192x128xbf16>, vector<8x128xf32> -> vector<8x128xf32>
    %539 = vector.broadcast %11 : vector<1x128xf32> to vector<8x128xf32>
    %540 = arith.addf %538, %539 : vector<8x128xf32>
    %cst_56 = arith.constant 0.000000e+00 : f32
    %541 = vector.broadcast %cst_56 : f32 to vector<8x128xf32>
    %542 = arith.maximumf %540, %541 : vector<8x128xf32>
    %543 = tpu.concatenate %534, %535, %536 in 1 : vector<8x64xbf16>, vector<8x64xbf16>, vector<8x64xbf16> -> vector<8x192xbf16>
    %cst_57 = arith.constant dense<0.000000e+00> : vector<8x128xf32>
    %544 = tpu.matmul %543, %10, %cst_57 {dimension_numbers = #tpu.dot_dimension_numbers<[1], [0], [0], [1], [0, 0, 1, 1], [], []>} : vector<8x192xbf16>, vector<192x128xbf16>, vector<8x128xf32> -> vector<8x128xf32>
    %545 = vector.broadcast %11 : vector<1x128xf32> to vector<8x128xf32>
    %546 = arith.addf %544, %545 : vector<8x128xf32>
    %cst_58 = arith.constant 0.000000e+00 : f32
    %547 = vector.broadcast %cst_58 : f32 to vector<8x128xf32>
    %548 = arith.maximumf %546, %547 : vector<8x128xf32>
    %549 = arith.maximumf %542, %548 : vector<8x128xf32>
    %c16_i32_59 = arith.constant 16 : i32
    %550 = arith.muli %arg1, %c16_i32_59 : i32
    %c3_i32 = arith.constant 3 : i32
    %551 = arith.addi %550, %c3_i32 : i32
    %552 = vector.extract_strided_slice %4 {offsets = [0, 12], sizes = [8, 1], strides = [1, 1]} : vector<8x128xf32> to vector<8x1xf32>
    %553 = vector.broadcast %552 : vector<8x1xf32> to vector<8x64xf32>
    %554 = vector.broadcast %6 : vector<1x64xf32> to vector<8x64xf32>
    %555 = arith.mulf %553, %554 : vector<8x64xf32>
    %556 = vector.extract_strided_slice %4 {offsets = [0, 13], sizes = [8, 1], strides = [1, 1]} : vector<8x128xf32> to vector<8x1xf32>
    %557 = vector.broadcast %556 : vector<8x1xf32> to vector<8x64xf32>
    %558 = vector.broadcast %7 : vector<1x64xf32> to vector<8x64xf32>
    %559 = arith.mulf %557, %558 : vector<8x64xf32>
    %560 = arith.addf %555, %559 : vector<8x64xf32>
    %561 = vector.extract_strided_slice %4 {offsets = [0, 14], sizes = [8, 1], strides = [1, 1]} : vector<8x128xf32> to vector<8x1xf32>
    %562 = vector.broadcast %561 : vector<8x1xf32> to vector<8x64xf32>
    %563 = vector.broadcast %8 : vector<1x64xf32> to vector<8x64xf32>
    %564 = arith.mulf %562, %563 : vector<8x64xf32>
    %565 = arith.addf %560, %564 : vector<8x64xf32>
    %566 = vector.broadcast %9 : vector<1x64xf32> to vector<8x64xf32>
    %567 = arith.addf %565, %566 : vector<8x64xf32>
    %cst_60 = arith.constant 0.000000e+00 : f32
    %568 = vector.broadcast %cst_60 : f32 to vector<8x64xf32>
    %569 = arith.maximumf %567, %568 : vector<8x64xf32>
    %570 = vector.extract_strided_slice %4 {offsets = [0, 13], sizes = [8, 1], strides = [1, 1]} : vector<8x128xf32> to vector<8x1xf32>
    %571 = vector.broadcast %570 : vector<8x1xf32> to vector<8x64xf32>
    %572 = vector.broadcast %6 : vector<1x64xf32> to vector<8x64xf32>
    %573 = arith.mulf %571, %572 : vector<8x64xf32>
    %574 = vector.extract_strided_slice %4 {offsets = [0, 14], sizes = [8, 1], strides = [1, 1]} : vector<8x128xf32> to vector<8x1xf32>
    %575 = vector.broadcast %574 : vector<8x1xf32> to vector<8x64xf32>
    %576 = vector.broadcast %7 : vector<1x64xf32> to vector<8x64xf32>
    %577 = arith.mulf %575, %576 : vector<8x64xf32>
    %578 = arith.addf %573, %577 : vector<8x64xf32>
    %579 = vector.extract_strided_slice %4 {offsets = [0, 15], sizes = [8, 1], strides = [1, 1]} : vector<8x128xf32> to vector<8x1xf32>
    %580 = vector.broadcast %579 : vector<8x1xf32> to vector<8x64xf32>
    %581 = vector.broadcast %8 : vector<1x64xf32> to vector<8x64xf32>
    %582 = arith.mulf %580, %581 : vector<8x64xf32>
    %583 = arith.addf %578, %582 : vector<8x64xf32>
    %584 = vector.broadcast %9 : vector<1x64xf32> to vector<8x64xf32>
    %585 = arith.addf %583, %584 : vector<8x64xf32>
    %cst_61 = arith.constant 0.000000e+00 : f32
    %586 = vector.broadcast %cst_61 : f32 to vector<8x64xf32>
    %587 = arith.maximumf %585, %586 : vector<8x64xf32>
    %588 = arith.maximumf %569, %587 : vector<8x64xf32>
    %589 = vector.extract_strided_slice %4 {offsets = [0, 14], sizes = [8, 1], strides = [1, 1]} : vector<8x128xf32> to vector<8x1xf32>
    %590 = vector.broadcast %589 : vector<8x1xf32> to vector<8x64xf32>
    %591 = vector.broadcast %6 : vector<1x64xf32> to vector<8x64xf32>
    %592 = arith.mulf %590, %591 : vector<8x64xf32>
    %593 = vector.extract_strided_slice %4 {offsets = [0, 15], sizes = [8, 1], strides = [1, 1]} : vector<8x128xf32> to vector<8x1xf32>
    %594 = vector.broadcast %593 : vector<8x1xf32> to vector<8x64xf32>
    %595 = vector.broadcast %7 : vector<1x64xf32> to vector<8x64xf32>
    %596 = arith.mulf %594, %595 : vector<8x64xf32>
    %597 = arith.addf %592, %596 : vector<8x64xf32>
    %598 = vector.extract_strided_slice %4 {offsets = [0, 16], sizes = [8, 1], strides = [1, 1]} : vector<8x128xf32> to vector<8x1xf32>
    %599 = vector.broadcast %598 : vector<8x1xf32> to vector<8x64xf32>
    %600 = vector.broadcast %8 : vector<1x64xf32> to vector<8x64xf32>
    %601 = arith.mulf %599, %600 : vector<8x64xf32>
    %602 = arith.addf %597, %601 : vector<8x64xf32>
    %603 = vector.broadcast %9 : vector<1x64xf32> to vector<8x64xf32>
    %604 = arith.addf %602, %603 : vector<8x64xf32>
    %cst_62 = arith.constant 0.000000e+00 : f32
    %605 = vector.broadcast %cst_62 : f32 to vector<8x64xf32>
    %606 = arith.maximumf %604, %605 : vector<8x64xf32>
    %607 = vector.extract_strided_slice %4 {offsets = [0, 15], sizes = [8, 1], strides = [1, 1]} : vector<8x128xf32> to vector<8x1xf32>
    %608 = vector.broadcast %607 : vector<8x1xf32> to vector<8x64xf32>
    %609 = vector.broadcast %6 : vector<1x64xf32> to vector<8x64xf32>
    %610 = arith.mulf %608, %609 : vector<8x64xf32>
    %611 = vector.extract_strided_slice %4 {offsets = [0, 16], sizes = [8, 1], strides = [1, 1]} : vector<8x128xf32> to vector<8x1xf32>
    %612 = vector.broadcast %611 : vector<8x1xf32> to vector<8x64xf32>
    %613 = vector.broadcast %7 : vector<1x64xf32> to vector<8x64xf32>
    %614 = arith.mulf %612, %613 : vector<8x64xf32>
    %615 = arith.addf %610, %614 : vector<8x64xf32>
    %616 = vector.extract_strided_slice %4 {offsets = [0, 17], sizes = [8, 1], strides = [1, 1]} : vector<8x128xf32> to vector<8x1xf32>
    %617 = vector.broadcast %616 : vector<8x1xf32> to vector<8x64xf32>
    %618 = vector.broadcast %8 : vector<1x64xf32> to vector<8x64xf32>
    %619 = arith.mulf %617, %618 : vector<8x64xf32>
    %620 = arith.addf %615, %619 : vector<8x64xf32>
    %621 = vector.broadcast %9 : vector<1x64xf32> to vector<8x64xf32>
    %622 = arith.addf %620, %621 : vector<8x64xf32>
    %cst_63 = arith.constant 0.000000e+00 : f32
    %623 = vector.broadcast %cst_63 : f32 to vector<8x64xf32>
    %624 = arith.maximumf %622, %623 : vector<8x64xf32>
    %625 = arith.maximumf %606, %624 : vector<8x64xf32>
    %626 = vector.extract_strided_slice %4 {offsets = [0, 16], sizes = [8, 1], strides = [1, 1]} : vector<8x128xf32> to vector<8x1xf32>
    %627 = vector.broadcast %626 : vector<8x1xf32> to vector<8x64xf32>
    %628 = vector.broadcast %6 : vector<1x64xf32> to vector<8x64xf32>
    %629 = arith.mulf %627, %628 : vector<8x64xf32>
    %630 = vector.extract_strided_slice %4 {offsets = [0, 17], sizes = [8, 1], strides = [1, 1]} : vector<8x128xf32> to vector<8x1xf32>
    %631 = vector.broadcast %630 : vector<8x1xf32> to vector<8x64xf32>
    %632 = vector.broadcast %7 : vector<1x64xf32> to vector<8x64xf32>
    %633 = arith.mulf %631, %632 : vector<8x64xf32>
    %634 = arith.addf %629, %633 : vector<8x64xf32>
    %635 = vector.extract_strided_slice %4 {offsets = [0, 18], sizes = [8, 1], strides = [1, 1]} : vector<8x128xf32> to vector<8x1xf32>
    %636 = vector.broadcast %635 : vector<8x1xf32> to vector<8x64xf32>
    %637 = vector.broadcast %8 : vector<1x64xf32> to vector<8x64xf32>
    %638 = arith.mulf %636, %637 : vector<8x64xf32>
    %639 = arith.addf %634, %638 : vector<8x64xf32>
    %640 = vector.broadcast %9 : vector<1x64xf32> to vector<8x64xf32>
    %641 = arith.addf %639, %640 : vector<8x64xf32>
    %cst_64 = arith.constant 0.000000e+00 : f32
    %642 = vector.broadcast %cst_64 : f32 to vector<8x64xf32>
    %643 = arith.maximumf %641, %642 : vector<8x64xf32>
    %644 = vector.extract_strided_slice %4 {offsets = [0, 17], sizes = [8, 1], strides = [1, 1]} : vector<8x128xf32> to vector<8x1xf32>
    %645 = vector.broadcast %644 : vector<8x1xf32> to vector<8x64xf32>
    %646 = vector.broadcast %6 : vector<1x64xf32> to vector<8x64xf32>
    %647 = arith.mulf %645, %646 : vector<8x64xf32>
    %648 = vector.extract_strided_slice %4 {offsets = [0, 18], sizes = [8, 1], strides = [1, 1]} : vector<8x128xf32> to vector<8x1xf32>
    %649 = vector.broadcast %648 : vector<8x1xf32> to vector<8x64xf32>
    %650 = vector.broadcast %7 : vector<1x64xf32> to vector<8x64xf32>
    %651 = arith.mulf %649, %650 : vector<8x64xf32>
    %652 = arith.addf %647, %651 : vector<8x64xf32>
    %653 = vector.extract_strided_slice %4 {offsets = [0, 19], sizes = [8, 1], strides = [1, 1]} : vector<8x128xf32> to vector<8x1xf32>
    %654 = vector.broadcast %653 : vector<8x1xf32> to vector<8x64xf32>
    %655 = vector.broadcast %8 : vector<1x64xf32> to vector<8x64xf32>
    %656 = arith.mulf %654, %655 : vector<8x64xf32>
    %657 = arith.addf %652, %656 : vector<8x64xf32>
    %658 = vector.broadcast %9 : vector<1x64xf32> to vector<8x64xf32>
    %659 = arith.addf %657, %658 : vector<8x64xf32>
    %cst_65 = arith.constant 0.000000e+00 : f32
    %660 = vector.broadcast %cst_65 : f32 to vector<8x64xf32>
    %661 = arith.maximumf %659, %660 : vector<8x64xf32>
    %662 = arith.maximumf %643, %661 : vector<8x64xf32>
    %663 = vector.extract_strided_slice %4 {offsets = [0, 18], sizes = [8, 1], strides = [1, 1]} : vector<8x128xf32> to vector<8x1xf32>
    %664 = vector.broadcast %663 : vector<8x1xf32> to vector<8x64xf32>
    %665 = vector.broadcast %6 : vector<1x64xf32> to vector<8x64xf32>
    %666 = arith.mulf %664, %665 : vector<8x64xf32>
    %667 = vector.extract_strided_slice %4 {offsets = [0, 19], sizes = [8, 1], strides = [1, 1]} : vector<8x128xf32> to vector<8x1xf32>
    %668 = vector.broadcast %667 : vector<8x1xf32> to vector<8x64xf32>
    %669 = vector.broadcast %7 : vector<1x64xf32> to vector<8x64xf32>
    %670 = arith.mulf %668, %669 : vector<8x64xf32>
    %671 = arith.addf %666, %670 : vector<8x64xf32>
    %672 = vector.extract_strided_slice %4 {offsets = [0, 20], sizes = [8, 1], strides = [1, 1]} : vector<8x128xf32> to vector<8x1xf32>
    %673 = vector.broadcast %672 : vector<8x1xf32> to vector<8x64xf32>
    %674 = vector.broadcast %8 : vector<1x64xf32> to vector<8x64xf32>
    %675 = arith.mulf %673, %674 : vector<8x64xf32>
    %676 = arith.addf %671, %675 : vector<8x64xf32>
    %677 = vector.broadcast %9 : vector<1x64xf32> to vector<8x64xf32>
    %678 = arith.addf %676, %677 : vector<8x64xf32>
    %cst_66 = arith.constant 0.000000e+00 : f32
    %679 = vector.broadcast %cst_66 : f32 to vector<8x64xf32>
    %680 = arith.maximumf %678, %679 : vector<8x64xf32>
    %681 = vector.extract_strided_slice %4 {offsets = [0, 19], sizes = [8, 1], strides = [1, 1]} : vector<8x128xf32> to vector<8x1xf32>
    %682 = vector.broadcast %681 : vector<8x1xf32> to vector<8x64xf32>
    %683 = vector.broadcast %6 : vector<1x64xf32> to vector<8x64xf32>
    %684 = arith.mulf %682, %683 : vector<8x64xf32>
    %685 = vector.extract_strided_slice %4 {offsets = [0, 20], sizes = [8, 1], strides = [1, 1]} : vector<8x128xf32> to vector<8x1xf32>
    %686 = vector.broadcast %685 : vector<8x1xf32> to vector<8x64xf32>
    %687 = vector.broadcast %7 : vector<1x64xf32> to vector<8x64xf32>
    %688 = arith.mulf %686, %687 : vector<8x64xf32>
    %689 = arith.addf %684, %688 : vector<8x64xf32>
    %690 = vector.extract_strided_slice %4 {offsets = [0, 21], sizes = [8, 1], strides = [1, 1]} : vector<8x128xf32> to vector<8x1xf32>
    %691 = vector.broadcast %690 : vector<8x1xf32> to vector<8x64xf32>
    %692 = vector.broadcast %8 : vector<1x64xf32> to vector<8x64xf32>
    %693 = arith.mulf %691, %692 : vector<8x64xf32>
    %694 = arith.addf %689, %693 : vector<8x64xf32>
    %695 = vector.broadcast %9 : vector<1x64xf32> to vector<8x64xf32>
    %696 = arith.addf %694, %695 : vector<8x64xf32>
    %cst_67 = arith.constant 0.000000e+00 : f32
    %697 = vector.broadcast %cst_67 : f32 to vector<8x64xf32>
    %698 = arith.maximumf %696, %697 : vector<8x64xf32>
    %699 = arith.maximumf %680, %698 : vector<8x64xf32>
    %c0_i32_68 = arith.constant 0 : i32
    %700 = arith.cmpi sgt, %551, %c0_i32_68 : i32
    %701 = arith.extui %700 : i1 to i32
    %702 = arith.sitofp %701 : i32 to f32
    %703 = vector.broadcast %702 : f32 to vector<8x64xf32>
    %704 = arith.mulf %588, %703 : vector<8x64xf32>
    %c15_i32_69 = arith.constant 15 : i32
    %705 = arith.cmpi slt, %551, %c15_i32_69 : i32
    %706 = arith.extui %705 : i1 to i32
    %707 = arith.sitofp %706 : i32 to f32
    %708 = vector.broadcast %707 : f32 to vector<8x64xf32>
    %709 = arith.mulf %699, %708 : vector<8x64xf32>
    %710 = arith.truncf %704 : vector<8x64xf32> to vector<8x64xbf16>
    %711 = arith.truncf %625 : vector<8x64xf32> to vector<8x64xbf16>
    %712 = arith.truncf %662 : vector<8x64xf32> to vector<8x64xbf16>
    %713 = arith.truncf %709 : vector<8x64xf32> to vector<8x64xbf16>
    %714 = tpu.concatenate %710, %711, %712 in 1 : vector<8x64xbf16>, vector<8x64xbf16>, vector<8x64xbf16> -> vector<8x192xbf16>
    %cst_70 = arith.constant dense<0.000000e+00> : vector<8x128xf32>
    %715 = tpu.matmul %714, %10, %cst_70 {dimension_numbers = #tpu.dot_dimension_numbers<[1], [0], [0], [1], [0, 0, 1, 1], [], []>} : vector<8x192xbf16>, vector<192x128xbf16>, vector<8x128xf32> -> vector<8x128xf32>
    %716 = vector.broadcast %11 : vector<1x128xf32> to vector<8x128xf32>
    %717 = arith.addf %715, %716 : vector<8x128xf32>
    %cst_71 = arith.constant 0.000000e+00 : f32
    %718 = vector.broadcast %cst_71 : f32 to vector<8x128xf32>
    %719 = arith.maximumf %717, %718 : vector<8x128xf32>
    %720 = tpu.concatenate %711, %712, %713 in 1 : vector<8x64xbf16>, vector<8x64xbf16>, vector<8x64xbf16> -> vector<8x192xbf16>
    %cst_72 = arith.constant dense<0.000000e+00> : vector<8x128xf32>
    %721 = tpu.matmul %720, %10, %cst_72 {dimension_numbers = #tpu.dot_dimension_numbers<[1], [0], [0], [1], [0, 0, 1, 1], [], []>} : vector<8x192xbf16>, vector<192x128xbf16>, vector<8x128xf32> -> vector<8x128xf32>
    %722 = vector.broadcast %11 : vector<1x128xf32> to vector<8x128xf32>
    %723 = arith.addf %721, %722 : vector<8x128xf32>
    %cst_73 = arith.constant 0.000000e+00 : f32
    %724 = vector.broadcast %cst_73 : f32 to vector<8x128xf32>
    %725 = arith.maximumf %723, %724 : vector<8x128xf32>
    %726 = arith.maximumf %719, %725 : vector<8x128xf32>
    %727 = tpu.concatenate %549, %726 in 1 : vector<8x128xf32>, vector<8x128xf32> -> vector<8x256xf32>
    %728 = arith.truncf %727 : vector<8x256xf32> to vector<8x256xbf16>
    %c1 = arith.constant 1 : index
    %c0_74 = arith.constant 0 : index
    %c0_75 = arith.constant 0 : index
    %729 = vector.load %arg6[%c1, %c0_74, %c0_75] : memref<8x256x128xbf16, #tpu.memory_space<vmem>>, vector<1x256x128xbf16>
    %730 = vector.shape_cast %729 : vector<1x256x128xbf16> to vector<256x128xbf16>
    %cst_76 = arith.constant dense<0.000000e+00> : vector<8x128xf32>
    %731 = tpu.matmul %728, %730, %cst_76 {dimension_numbers = #tpu.dot_dimension_numbers<[1], [0], [0], [1], [0, 0, 1, 1], [], []>} : vector<8x256xbf16>, vector<256x128xbf16>, vector<8x128xf32> -> vector<8x128xf32>
    %732 = arith.addf %372, %731 : vector<8x128xf32>
    %c16_i32_77 = arith.constant 16 : i32
    %733 = arith.muli %arg1, %c16_i32_77 : i32
    %c4_i32 = arith.constant 4 : i32
    %734 = arith.addi %733, %c4_i32 : i32
    %735 = vector.extract_strided_slice %4 {offsets = [0, 16], sizes = [8, 1], strides = [1, 1]} : vector<8x128xf32> to vector<8x1xf32>
    %736 = vector.broadcast %735 : vector<8x1xf32> to vector<8x64xf32>
    %737 = vector.broadcast %6 : vector<1x64xf32> to vector<8x64xf32>
    %738 = arith.mulf %736, %737 : vector<8x64xf32>
    %739 = vector.extract_strided_slice %4 {offsets = [0, 17], sizes = [8, 1], strides = [1, 1]} : vector<8x128xf32> to vector<8x1xf32>
    %740 = vector.broadcast %739 : vector<8x1xf32> to vector<8x64xf32>
    %741 = vector.broadcast %7 : vector<1x64xf32> to vector<8x64xf32>
    %742 = arith.mulf %740, %741 : vector<8x64xf32>
    %743 = arith.addf %738, %742 : vector<8x64xf32>
    %744 = vector.extract_strided_slice %4 {offsets = [0, 18], sizes = [8, 1], strides = [1, 1]} : vector<8x128xf32> to vector<8x1xf32>
    %745 = vector.broadcast %744 : vector<8x1xf32> to vector<8x64xf32>
    %746 = vector.broadcast %8 : vector<1x64xf32> to vector<8x64xf32>
    %747 = arith.mulf %745, %746 : vector<8x64xf32>
    %748 = arith.addf %743, %747 : vector<8x64xf32>
    %749 = vector.broadcast %9 : vector<1x64xf32> to vector<8x64xf32>
    %750 = arith.addf %748, %749 : vector<8x64xf32>
    %cst_78 = arith.constant 0.000000e+00 : f32
    %751 = vector.broadcast %cst_78 : f32 to vector<8x64xf32>
    %752 = arith.maximumf %750, %751 : vector<8x64xf32>
    %753 = vector.extract_strided_slice %4 {offsets = [0, 17], sizes = [8, 1], strides = [1, 1]} : vector<8x128xf32> to vector<8x1xf32>
    %754 = vector.broadcast %753 : vector<8x1xf32> to vector<8x64xf32>
    %755 = vector.broadcast %6 : vector<1x64xf32> to vector<8x64xf32>
    %756 = arith.mulf %754, %755 : vector<8x64xf32>
    %757 = vector.extract_strided_slice %4 {offsets = [0, 18], sizes = [8, 1], strides = [1, 1]} : vector<8x128xf32> to vector<8x1xf32>
    %758 = vector.broadcast %757 : vector<8x1xf32> to vector<8x64xf32>
    %759 = vector.broadcast %7 : vector<1x64xf32> to vector<8x64xf32>
    %760 = arith.mulf %758, %759 : vector<8x64xf32>
    %761 = arith.addf %756, %760 : vector<8x64xf32>
    %762 = vector.extract_strided_slice %4 {offsets = [0, 19], sizes = [8, 1], strides = [1, 1]} : vector<8x128xf32> to vector<8x1xf32>
    %763 = vector.broadcast %762 : vector<8x1xf32> to vector<8x64xf32>
    %764 = vector.broadcast %8 : vector<1x64xf32> to vector<8x64xf32>
    %765 = arith.mulf %763, %764 : vector<8x64xf32>
    %766 = arith.addf %761, %765 : vector<8x64xf32>
    %767 = vector.broadcast %9 : vector<1x64xf32> to vector<8x64xf32>
    %768 = arith.addf %766, %767 : vector<8x64xf32>
    %cst_79 = arith.constant 0.000000e+00 : f32
    %769 = vector.broadcast %cst_79 : f32 to vector<8x64xf32>
    %770 = arith.maximumf %768, %769 : vector<8x64xf32>
    %771 = arith.maximumf %752, %770 : vector<8x64xf32>
    %772 = vector.extract_strided_slice %4 {offsets = [0, 18], sizes = [8, 1], strides = [1, 1]} : vector<8x128xf32> to vector<8x1xf32>
    %773 = vector.broadcast %772 : vector<8x1xf32> to vector<8x64xf32>
    %774 = vector.broadcast %6 : vector<1x64xf32> to vector<8x64xf32>
    %775 = arith.mulf %773, %774 : vector<8x64xf32>
    %776 = vector.extract_strided_slice %4 {offsets = [0, 19], sizes = [8, 1], strides = [1, 1]} : vector<8x128xf32> to vector<8x1xf32>
    %777 = vector.broadcast %776 : vector<8x1xf32> to vector<8x64xf32>
    %778 = vector.broadcast %7 : vector<1x64xf32> to vector<8x64xf32>
    %779 = arith.mulf %777, %778 : vector<8x64xf32>
    %780 = arith.addf %775, %779 : vector<8x64xf32>
    %781 = vector.extract_strided_slice %4 {offsets = [0, 20], sizes = [8, 1], strides = [1, 1]} : vector<8x128xf32> to vector<8x1xf32>
    %782 = vector.broadcast %781 : vector<8x1xf32> to vector<8x64xf32>
    %783 = vector.broadcast %8 : vector<1x64xf32> to vector<8x64xf32>
    %784 = arith.mulf %782, %783 : vector<8x64xf32>
    %785 = arith.addf %780, %784 : vector<8x64xf32>
    %786 = vector.broadcast %9 : vector<1x64xf32> to vector<8x64xf32>
    %787 = arith.addf %785, %786 : vector<8x64xf32>
    %cst_80 = arith.constant 0.000000e+00 : f32
    %788 = vector.broadcast %cst_80 : f32 to vector<8x64xf32>
    %789 = arith.maximumf %787, %788 : vector<8x64xf32>
    %790 = vector.extract_strided_slice %4 {offsets = [0, 19], sizes = [8, 1], strides = [1, 1]} : vector<8x128xf32> to vector<8x1xf32>
    %791 = vector.broadcast %790 : vector<8x1xf32> to vector<8x64xf32>
    %792 = vector.broadcast %6 : vector<1x64xf32> to vector<8x64xf32>
    %793 = arith.mulf %791, %792 : vector<8x64xf32>
    %794 = vector.extract_strided_slice %4 {offsets = [0, 20], sizes = [8, 1], strides = [1, 1]} : vector<8x128xf32> to vector<8x1xf32>
    %795 = vector.broadcast %794 : vector<8x1xf32> to vector<8x64xf32>
    %796 = vector.broadcast %7 : vector<1x64xf32> to vector<8x64xf32>
    %797 = arith.mulf %795, %796 : vector<8x64xf32>
    %798 = arith.addf %793, %797 : vector<8x64xf32>
    %799 = vector.extract_strided_slice %4 {offsets = [0, 21], sizes = [8, 1], strides = [1, 1]} : vector<8x128xf32> to vector<8x1xf32>
    %800 = vector.broadcast %799 : vector<8x1xf32> to vector<8x64xf32>
    %801 = vector.broadcast %8 : vector<1x64xf32> to vector<8x64xf32>
    %802 = arith.mulf %800, %801 : vector<8x64xf32>
    %803 = arith.addf %798, %802 : vector<8x64xf32>
    %804 = vector.broadcast %9 : vector<1x64xf32> to vector<8x64xf32>
    %805 = arith.addf %803, %804 : vector<8x64xf32>
    %cst_81 = arith.constant 0.000000e+00 : f32
    %806 = vector.broadcast %cst_81 : f32 to vector<8x64xf32>
    %807 = arith.maximumf %805, %806 : vector<8x64xf32>
    %808 = arith.maximumf %789, %807 : vector<8x64xf32>
    %809 = vector.extract_strided_slice %4 {offsets = [0, 20], sizes = [8, 1], strides = [1, 1]} : vector<8x128xf32> to vector<8x1xf32>
    %810 = vector.broadcast %809 : vector<8x1xf32> to vector<8x64xf32>
    %811 = vector.broadcast %6 : vector<1x64xf32> to vector<8x64xf32>
    %812 = arith.mulf %810, %811 : vector<8x64xf32>
    %813 = vector.extract_strided_slice %4 {offsets = [0, 21], sizes = [8, 1], strides = [1, 1]} : vector<8x128xf32> to vector<8x1xf32>
    %814 = vector.broadcast %813 : vector<8x1xf32> to vector<8x64xf32>
    %815 = vector.broadcast %7 : vector<1x64xf32> to vector<8x64xf32>
    %816 = arith.mulf %814, %815 : vector<8x64xf32>
    %817 = arith.addf %812, %816 : vector<8x64xf32>
    %818 = vector.extract_strided_slice %4 {offsets = [0, 22], sizes = [8, 1], strides = [1, 1]} : vector<8x128xf32> to vector<8x1xf32>
    %819 = vector.broadcast %818 : vector<8x1xf32> to vector<8x64xf32>
    %820 = vector.broadcast %8 : vector<1x64xf32> to vector<8x64xf32>
    %821 = arith.mulf %819, %820 : vector<8x64xf32>
    %822 = arith.addf %817, %821 : vector<8x64xf32>
    %823 = vector.broadcast %9 : vector<1x64xf32> to vector<8x64xf32>
    %824 = arith.addf %822, %823 : vector<8x64xf32>
    %cst_82 = arith.constant 0.000000e+00 : f32
    %825 = vector.broadcast %cst_82 : f32 to vector<8x64xf32>
    %826 = arith.maximumf %824, %825 : vector<8x64xf32>
    %827 = vector.extract_strided_slice %4 {offsets = [0, 21], sizes = [8, 1], strides = [1, 1]} : vector<8x128xf32> to vector<8x1xf32>
    %828 = vector.broadcast %827 : vector<8x1xf32> to vector<8x64xf32>
    %829 = vector.broadcast %6 : vector<1x64xf32> to vector<8x64xf32>
    %830 = arith.mulf %828, %829 : vector<8x64xf32>
    %831 = vector.extract_strided_slice %4 {offsets = [0, 22], sizes = [8, 1], strides = [1, 1]} : vector<8x128xf32> to vector<8x1xf32>
    %832 = vector.broadcast %831 : vector<8x1xf32> to vector<8x64xf32>
    %833 = vector.broadcast %7 : vector<1x64xf32> to vector<8x64xf32>
    %834 = arith.mulf %832, %833 : vector<8x64xf32>
    %835 = arith.addf %830, %834 : vector<8x64xf32>
    %836 = vector.extract_strided_slice %4 {offsets = [0, 23], sizes = [8, 1], strides = [1, 1]} : vector<8x128xf32> to vector<8x1xf32>
    %837 = vector.broadcast %836 : vector<8x1xf32> to vector<8x64xf32>
    %838 = vector.broadcast %8 : vector<1x64xf32> to vector<8x64xf32>
    %839 = arith.mulf %837, %838 : vector<8x64xf32>
    %840 = arith.addf %835, %839 : vector<8x64xf32>
    %841 = vector.broadcast %9 : vector<1x64xf32> to vector<8x64xf32>
    %842 = arith.addf %840, %841 : vector<8x64xf32>
    %cst_83 = arith.constant 0.000000e+00 : f32
    %843 = vector.broadcast %cst_83 : f32 to vector<8x64xf32>
    %844 = arith.maximumf %842, %843 : vector<8x64xf32>
    %845 = arith.maximumf %826, %844 : vector<8x64xf32>
    %846 = vector.extract_strided_slice %4 {offsets = [0, 22], sizes = [8, 1], strides = [1, 1]} : vector<8x128xf32> to vector<8x1xf32>
    %847 = vector.broadcast %846 : vector<8x1xf32> to vector<8x64xf32>
    %848 = vector.broadcast %6 : vector<1x64xf32> to vector<8x64xf32>
    %849 = arith.mulf %847, %848 : vector<8x64xf32>
    %850 = vector.extract_strided_slice %4 {offsets = [0, 23], sizes = [8, 1], strides = [1, 1]} : vector<8x128xf32> to vector<8x1xf32>
    %851 = vector.broadcast %850 : vector<8x1xf32> to vector<8x64xf32>
    %852 = vector.broadcast %7 : vector<1x64xf32> to vector<8x64xf32>
    %853 = arith.mulf %851, %852 : vector<8x64xf32>
    %854 = arith.addf %849, %853 : vector<8x64xf32>
    %855 = vector.extract_strided_slice %4 {offsets = [0, 24], sizes = [8, 1], strides = [1, 1]} : vector<8x128xf32> to vector<8x1xf32>
    %856 = vector.broadcast %855 : vector<8x1xf32> to vector<8x64xf32>
    %857 = vector.broadcast %8 : vector<1x64xf32> to vector<8x64xf32>
    %858 = arith.mulf %856, %857 : vector<8x64xf32>
    %859 = arith.addf %854, %858 : vector<8x64xf32>
    %860 = vector.broadcast %9 : vector<1x64xf32> to vector<8x64xf32>
    %861 = arith.addf %859, %860 : vector<8x64xf32>
    %cst_84 = arith.constant 0.000000e+00 : f32
    %862 = vector.broadcast %cst_84 : f32 to vector<8x64xf32>
    %863 = arith.maximumf %861, %862 : vector<8x64xf32>
    %864 = vector.extract_strided_slice %4 {offsets = [0, 23], sizes = [8, 1], strides = [1, 1]} : vector<8x128xf32> to vector<8x1xf32>
    %865 = vector.broadcast %864 : vector<8x1xf32> to vector<8x64xf32>
    %866 = vector.broadcast %6 : vector<1x64xf32> to vector<8x64xf32>
    %867 = arith.mulf %865, %866 : vector<8x64xf32>
    %868 = vector.extract_strided_slice %4 {offsets = [0, 24], sizes = [8, 1], strides = [1, 1]} : vector<8x128xf32> to vector<8x1xf32>
    %869 = vector.broadcast %868 : vector<8x1xf32> to vector<8x64xf32>
    %870 = vector.broadcast %7 : vector<1x64xf32> to vector<8x64xf32>
    %871 = arith.mulf %869, %870 : vector<8x64xf32>
    %872 = arith.addf %867, %871 : vector<8x64xf32>
    %873 = vector.extract_strided_slice %4 {offsets = [0, 25], sizes = [8, 1], strides = [1, 1]} : vector<8x128xf32> to vector<8x1xf32>
    %874 = vector.broadcast %873 : vector<8x1xf32> to vector<8x64xf32>
    %875 = vector.broadcast %8 : vector<1x64xf32> to vector<8x64xf32>
    %876 = arith.mulf %874, %875 : vector<8x64xf32>
    %877 = arith.addf %872, %876 : vector<8x64xf32>
    %878 = vector.broadcast %9 : vector<1x64xf32> to vector<8x64xf32>
    %879 = arith.addf %877, %878 : vector<8x64xf32>
    %cst_85 = arith.constant 0.000000e+00 : f32
    %880 = vector.broadcast %cst_85 : f32 to vector<8x64xf32>
    %881 = arith.maximumf %879, %880 : vector<8x64xf32>
    %882 = arith.maximumf %863, %881 : vector<8x64xf32>
    %c0_i32_86 = arith.constant 0 : i32
    %883 = arith.cmpi sgt, %734, %c0_i32_86 : i32
    %884 = arith.extui %883 : i1 to i32
    %885 = arith.sitofp %884 : i32 to f32
    %886 = vector.broadcast %885 : f32 to vector<8x64xf32>
    %887 = arith.mulf %771, %886 : vector<8x64xf32>
    %c15_i32_87 = arith.constant 15 : i32
    %888 = arith.cmpi slt, %734, %c15_i32_87 : i32
    %889 = arith.extui %888 : i1 to i32
    %890 = arith.sitofp %889 : i32 to f32
    %891 = vector.broadcast %890 : f32 to vector<8x64xf32>
    %892 = arith.mulf %882, %891 : vector<8x64xf32>
    %893 = arith.truncf %887 : vector<8x64xf32> to vector<8x64xbf16>
    %894 = arith.truncf %808 : vector<8x64xf32> to vector<8x64xbf16>
    %895 = arith.truncf %845 : vector<8x64xf32> to vector<8x64xbf16>
    %896 = arith.truncf %892 : vector<8x64xf32> to vector<8x64xbf16>
    %897 = tpu.concatenate %893, %894, %895 in 1 : vector<8x64xbf16>, vector<8x64xbf16>, vector<8x64xbf16> -> vector<8x192xbf16>
    %cst_88 = arith.constant dense<0.000000e+00> : vector<8x128xf32>
    %898 = tpu.matmul %897, %10, %cst_88 {dimension_numbers = #tpu.dot_dimension_numbers<[1], [0], [0], [1], [0, 0, 1, 1], [], []>} : vector<8x192xbf16>, vector<192x128xbf16>, vector<8x128xf32> -> vector<8x128xf32>
    %899 = vector.broadcast %11 : vector<1x128xf32> to vector<8x128xf32>
    %900 = arith.addf %898, %899 : vector<8x128xf32>
    %cst_89 = arith.constant 0.000000e+00 : f32
    %901 = vector.broadcast %cst_89 : f32 to vector<8x128xf32>
    %902 = arith.maximumf %900, %901 : vector<8x128xf32>
    %903 = tpu.concatenate %894, %895, %896 in 1 : vector<8x64xbf16>, vector<8x64xbf16>, vector<8x64xbf16> -> vector<8x192xbf16>
    %cst_90 = arith.constant dense<0.000000e+00> : vector<8x128xf32>
    %904 = tpu.matmul %903, %10, %cst_90 {dimension_numbers = #tpu.dot_dimension_numbers<[1], [0], [0], [1], [0, 0, 1, 1], [], []>} : vector<8x192xbf16>, vector<192x128xbf16>, vector<8x128xf32> -> vector<8x128xf32>
    %905 = vector.broadcast %11 : vector<1x128xf32> to vector<8x128xf32>
    %906 = arith.addf %904, %905 : vector<8x128xf32>
    %cst_91 = arith.constant 0.000000e+00 : f32
    %907 = vector.broadcast %cst_91 : f32 to vector<8x128xf32>
    %908 = arith.maximumf %906, %907 : vector<8x128xf32>
    %909 = arith.maximumf %902, %908 : vector<8x128xf32>
    %c16_i32_92 = arith.constant 16 : i32
    %910 = arith.muli %arg1, %c16_i32_92 : i32
    %c5_i32 = arith.constant 5 : i32
    %911 = arith.addi %910, %c5_i32 : i32
    %912 = vector.extract_strided_slice %4 {offsets = [0, 20], sizes = [8, 1], strides = [1, 1]} : vector<8x128xf32> to vector<8x1xf32>
    %913 = vector.broadcast %912 : vector<8x1xf32> to vector<8x64xf32>
    %914 = vector.broadcast %6 : vector<1x64xf32> to vector<8x64xf32>
    %915 = arith.mulf %913, %914 : vector<8x64xf32>
    %916 = vector.extract_strided_slice %4 {offsets = [0, 21], sizes = [8, 1], strides = [1, 1]} : vector<8x128xf32> to vector<8x1xf32>
    %917 = vector.broadcast %916 : vector<8x1xf32> to vector<8x64xf32>
    %918 = vector.broadcast %7 : vector<1x64xf32> to vector<8x64xf32>
    %919 = arith.mulf %917, %918 : vector<8x64xf32>
    %920 = arith.addf %915, %919 : vector<8x64xf32>
    %921 = vector.extract_strided_slice %4 {offsets = [0, 22], sizes = [8, 1], strides = [1, 1]} : vector<8x128xf32> to vector<8x1xf32>
    %922 = vector.broadcast %921 : vector<8x1xf32> to vector<8x64xf32>
    %923 = vector.broadcast %8 : vector<1x64xf32> to vector<8x64xf32>
    %924 = arith.mulf %922, %923 : vector<8x64xf32>
    %925 = arith.addf %920, %924 : vector<8x64xf32>
    %926 = vector.broadcast %9 : vector<1x64xf32> to vector<8x64xf32>
    %927 = arith.addf %925, %926 : vector<8x64xf32>
    %cst_93 = arith.constant 0.000000e+00 : f32
    %928 = vector.broadcast %cst_93 : f32 to vector<8x64xf32>
    %929 = arith.maximumf %927, %928 : vector<8x64xf32>
    %930 = vector.extract_strided_slice %4 {offsets = [0, 21], sizes = [8, 1], strides = [1, 1]} : vector<8x128xf32> to vector<8x1xf32>
    %931 = vector.broadcast %930 : vector<8x1xf32> to vector<8x64xf32>
    %932 = vector.broadcast %6 : vector<1x64xf32> to vector<8x64xf32>
    %933 = arith.mulf %931, %932 : vector<8x64xf32>
    %934 = vector.extract_strided_slice %4 {offsets = [0, 22], sizes = [8, 1], strides = [1, 1]} : vector<8x128xf32> to vector<8x1xf32>
    %935 = vector.broadcast %934 : vector<8x1xf32> to vector<8x64xf32>
    %936 = vector.broadcast %7 : vector<1x64xf32> to vector<8x64xf32>
    %937 = arith.mulf %935, %936 : vector<8x64xf32>
    %938 = arith.addf %933, %937 : vector<8x64xf32>
    %939 = vector.extract_strided_slice %4 {offsets = [0, 23], sizes = [8, 1], strides = [1, 1]} : vector<8x128xf32> to vector<8x1xf32>
    %940 = vector.broadcast %939 : vector<8x1xf32> to vector<8x64xf32>
    %941 = vector.broadcast %8 : vector<1x64xf32> to vector<8x64xf32>
    %942 = arith.mulf %940, %941 : vector<8x64xf32>
    %943 = arith.addf %938, %942 : vector<8x64xf32>
    %944 = vector.broadcast %9 : vector<1x64xf32> to vector<8x64xf32>
    %945 = arith.addf %943, %944 : vector<8x64xf32>
    %cst_94 = arith.constant 0.000000e+00 : f32
    %946 = vector.broadcast %cst_94 : f32 to vector<8x64xf32>
    %947 = arith.maximumf %945, %946 : vector<8x64xf32>
    %948 = arith.maximumf %929, %947 : vector<8x64xf32>
    %949 = vector.extract_strided_slice %4 {offsets = [0, 22], sizes = [8, 1], strides = [1, 1]} : vector<8x128xf32> to vector<8x1xf32>
    %950 = vector.broadcast %949 : vector<8x1xf32> to vector<8x64xf32>
    %951 = vector.broadcast %6 : vector<1x64xf32> to vector<8x64xf32>
    %952 = arith.mulf %950, %951 : vector<8x64xf32>
    %953 = vector.extract_strided_slice %4 {offsets = [0, 23], sizes = [8, 1], strides = [1, 1]} : vector<8x128xf32> to vector<8x1xf32>
    %954 = vector.broadcast %953 : vector<8x1xf32> to vector<8x64xf32>
    %955 = vector.broadcast %7 : vector<1x64xf32> to vector<8x64xf32>
    %956 = arith.mulf %954, %955 : vector<8x64xf32>
    %957 = arith.addf %952, %956 : vector<8x64xf32>
    %958 = vector.extract_strided_slice %4 {offsets = [0, 24], sizes = [8, 1], strides = [1, 1]} : vector<8x128xf32> to vector<8x1xf32>
    %959 = vector.broadcast %958 : vector<8x1xf32> to vector<8x64xf32>
    %960 = vector.broadcast %8 : vector<1x64xf32> to vector<8x64xf32>
    %961 = arith.mulf %959, %960 : vector<8x64xf32>
    %962 = arith.addf %957, %961 : vector<8x64xf32>
    %963 = vector.broadcast %9 : vector<1x64xf32> to vector<8x64xf32>
    %964 = arith.addf %962, %963 : vector<8x64xf32>
    %cst_95 = arith.constant 0.000000e+00 : f32
    %965 = vector.broadcast %cst_95 : f32 to vector<8x64xf32>
    %966 = arith.maximumf %964, %965 : vector<8x64xf32>
    %967 = vector.extract_strided_slice %4 {offsets = [0, 23], sizes = [8, 1], strides = [1, 1]} : vector<8x128xf32> to vector<8x1xf32>
    %968 = vector.broadcast %967 : vector<8x1xf32> to vector<8x64xf32>
    %969 = vector.broadcast %6 : vector<1x64xf32> to vector<8x64xf32>
    %970 = arith.mulf %968, %969 : vector<8x64xf32>
    %971 = vector.extract_strided_slice %4 {offsets = [0, 24], sizes = [8, 1], strides = [1, 1]} : vector<8x128xf32> to vector<8x1xf32>
    %972 = vector.broadcast %971 : vector<8x1xf32> to vector<8x64xf32>
    %973 = vector.broadcast %7 : vector<1x64xf32> to vector<8x64xf32>
    %974 = arith.mulf %972, %973 : vector<8x64xf32>
    %975 = arith.addf %970, %974 : vector<8x64xf32>
    %976 = vector.extract_strided_slice %4 {offsets = [0, 25], sizes = [8, 1], strides = [1, 1]} : vector<8x128xf32> to vector<8x1xf32>
    %977 = vector.broadcast %976 : vector<8x1xf32> to vector<8x64xf32>
    %978 = vector.broadcast %8 : vector<1x64xf32> to vector<8x64xf32>
    %979 = arith.mulf %977, %978 : vector<8x64xf32>
    %980 = arith.addf %975, %979 : vector<8x64xf32>
    %981 = vector.broadcast %9 : vector<1x64xf32> to vector<8x64xf32>
    %982 = arith.addf %980, %981 : vector<8x64xf32>
    %cst_96 = arith.constant 0.000000e+00 : f32
    %983 = vector.broadcast %cst_96 : f32 to vector<8x64xf32>
    %984 = arith.maximumf %982, %983 : vector<8x64xf32>
    %985 = arith.maximumf %966, %984 : vector<8x64xf32>
    %986 = vector.extract_strided_slice %4 {offsets = [0, 24], sizes = [8, 1], strides = [1, 1]} : vector<8x128xf32> to vector<8x1xf32>
    %987 = vector.broadcast %986 : vector<8x1xf32> to vector<8x64xf32>
    %988 = vector.broadcast %6 : vector<1x64xf32> to vector<8x64xf32>
    %989 = arith.mulf %987, %988 : vector<8x64xf32>
    %990 = vector.extract_strided_slice %4 {offsets = [0, 25], sizes = [8, 1], strides = [1, 1]} : vector<8x128xf32> to vector<8x1xf32>
    %991 = vector.broadcast %990 : vector<8x1xf32> to vector<8x64xf32>
    %992 = vector.broadcast %7 : vector<1x64xf32> to vector<8x64xf32>
    %993 = arith.mulf %991, %992 : vector<8x64xf32>
    %994 = arith.addf %989, %993 : vector<8x64xf32>
    %995 = vector.extract_strided_slice %4 {offsets = [0, 26], sizes = [8, 1], strides = [1, 1]} : vector<8x128xf32> to vector<8x1xf32>
    %996 = vector.broadcast %995 : vector<8x1xf32> to vector<8x64xf32>
    %997 = vector.broadcast %8 : vector<1x64xf32> to vector<8x64xf32>
    %998 = arith.mulf %996, %997 : vector<8x64xf32>
    %999 = arith.addf %994, %998 : vector<8x64xf32>
    %1000 = vector.broadcast %9 : vector<1x64xf32> to vector<8x64xf32>
    %1001 = arith.addf %999, %1000 : vector<8x64xf32>
    %cst_97 = arith.constant 0.000000e+00 : f32
    %1002 = vector.broadcast %cst_97 : f32 to vector<8x64xf32>
    %1003 = arith.maximumf %1001, %1002 : vector<8x64xf32>
    %1004 = vector.extract_strided_slice %4 {offsets = [0, 25], sizes = [8, 1], strides = [1, 1]} : vector<8x128xf32> to vector<8x1xf32>
    %1005 = vector.broadcast %1004 : vector<8x1xf32> to vector<8x64xf32>
    %1006 = vector.broadcast %6 : vector<1x64xf32> to vector<8x64xf32>
    %1007 = arith.mulf %1005, %1006 : vector<8x64xf32>
    %1008 = vector.extract_strided_slice %4 {offsets = [0, 26], sizes = [8, 1], strides = [1, 1]} : vector<8x128xf32> to vector<8x1xf32>
    %1009 = vector.broadcast %1008 : vector<8x1xf32> to vector<8x64xf32>
    %1010 = vector.broadcast %7 : vector<1x64xf32> to vector<8x64xf32>
    %1011 = arith.mulf %1009, %1010 : vector<8x64xf32>
    %1012 = arith.addf %1007, %1011 : vector<8x64xf32>
    %1013 = vector.extract_strided_slice %4 {offsets = [0, 27], sizes = [8, 1], strides = [1, 1]} : vector<8x128xf32> to vector<8x1xf32>
    %1014 = vector.broadcast %1013 : vector<8x1xf32> to vector<8x64xf32>
    %1015 = vector.broadcast %8 : vector<1x64xf32> to vector<8x64xf32>
    %1016 = arith.mulf %1014, %1015 : vector<8x64xf32>
    %1017 = arith.addf %1012, %1016 : vector<8x64xf32>
    %1018 = vector.broadcast %9 : vector<1x64xf32> to vector<8x64xf32>
    %1019 = arith.addf %1017, %1018 : vector<8x64xf32>
    %cst_98 = arith.constant 0.000000e+00 : f32
    %1020 = vector.broadcast %cst_98 : f32 to vector<8x64xf32>
    %1021 = arith.maximumf %1019, %1020 : vector<8x64xf32>
    %1022 = arith.maximumf %1003, %1021 : vector<8x64xf32>
    %1023 = vector.extract_strided_slice %4 {offsets = [0, 26], sizes = [8, 1], strides = [1, 1]} : vector<8x128xf32> to vector<8x1xf32>
    %1024 = vector.broadcast %1023 : vector<8x1xf32> to vector<8x64xf32>
    %1025 = vector.broadcast %6 : vector<1x64xf32> to vector<8x64xf32>
    %1026 = arith.mulf %1024, %1025 : vector<8x64xf32>
    %1027 = vector.extract_strided_slice %4 {offsets = [0, 27], sizes = [8, 1], strides = [1, 1]} : vector<8x128xf32> to vector<8x1xf32>
    %1028 = vector.broadcast %1027 : vector<8x1xf32> to vector<8x64xf32>
    %1029 = vector.broadcast %7 : vector<1x64xf32> to vector<8x64xf32>
    %1030 = arith.mulf %1028, %1029 : vector<8x64xf32>
    %1031 = arith.addf %1026, %1030 : vector<8x64xf32>
    %1032 = vector.extract_strided_slice %4 {offsets = [0, 28], sizes = [8, 1], strides = [1, 1]} : vector<8x128xf32> to vector<8x1xf32>
    %1033 = vector.broadcast %1032 : vector<8x1xf32> to vector<8x64xf32>
    %1034 = vector.broadcast %8 : vector<1x64xf32> to vector<8x64xf32>
    %1035 = arith.mulf %1033, %1034 : vector<8x64xf32>
    %1036 = arith.addf %1031, %1035 : vector<8x64xf32>
    %1037 = vector.broadcast %9 : vector<1x64xf32> to vector<8x64xf32>
    %1038 = arith.addf %1036, %1037 : vector<8x64xf32>
    %cst_99 = arith.constant 0.000000e+00 : f32
    %1039 = vector.broadcast %cst_99 : f32 to vector<8x64xf32>
    %1040 = arith.maximumf %1038, %1039 : vector<8x64xf32>
    %1041 = vector.extract_strided_slice %4 {offsets = [0, 27], sizes = [8, 1], strides = [1, 1]} : vector<8x128xf32> to vector<8x1xf32>
    %1042 = vector.broadcast %1041 : vector<8x1xf32> to vector<8x64xf32>
    %1043 = vector.broadcast %6 : vector<1x64xf32> to vector<8x64xf32>
    %1044 = arith.mulf %1042, %1043 : vector<8x64xf32>
    %1045 = vector.extract_strided_slice %4 {offsets = [0, 28], sizes = [8, 1], strides = [1, 1]} : vector<8x128xf32> to vector<8x1xf32>
    %1046 = vector.broadcast %1045 : vector<8x1xf32> to vector<8x64xf32>
    %1047 = vector.broadcast %7 : vector<1x64xf32> to vector<8x64xf32>
    %1048 = arith.mulf %1046, %1047 : vector<8x64xf32>
    %1049 = arith.addf %1044, %1048 : vector<8x64xf32>
    %1050 = vector.extract_strided_slice %4 {offsets = [0, 29], sizes = [8, 1], strides = [1, 1]} : vector<8x128xf32> to vector<8x1xf32>
    %1051 = vector.broadcast %1050 : vector<8x1xf32> to vector<8x64xf32>
    %1052 = vector.broadcast %8 : vector<1x64xf32> to vector<8x64xf32>
    %1053 = arith.mulf %1051, %1052 : vector<8x64xf32>
    %1054 = arith.addf %1049, %1053 : vector<8x64xf32>
    %1055 = vector.broadcast %9 : vector<1x64xf32> to vector<8x64xf32>
    %1056 = arith.addf %1054, %1055 : vector<8x64xf32>
    %cst_100 = arith.constant 0.000000e+00 : f32
    %1057 = vector.broadcast %cst_100 : f32 to vector<8x64xf32>
    %1058 = arith.maximumf %1056, %1057 : vector<8x64xf32>
    %1059 = arith.maximumf %1040, %1058 : vector<8x64xf32>
    %c0_i32_101 = arith.constant 0 : i32
    %1060 = arith.cmpi sgt, %911, %c0_i32_101 : i32
    %1061 = arith.extui %1060 : i1 to i32
    %1062 = arith.sitofp %1061 : i32 to f32
    %1063 = vector.broadcast %1062 : f32 to vector<8x64xf32>
    %1064 = arith.mulf %948, %1063 : vector<8x64xf32>
    %c15_i32_102 = arith.constant 15 : i32
    %1065 = arith.cmpi slt, %911, %c15_i32_102 : i32
    %1066 = arith.extui %1065 : i1 to i32
    %1067 = arith.sitofp %1066 : i32 to f32
    %1068 = vector.broadcast %1067 : f32 to vector<8x64xf32>
    %1069 = arith.mulf %1059, %1068 : vector<8x64xf32>
    %1070 = arith.truncf %1064 : vector<8x64xf32> to vector<8x64xbf16>
    %1071 = arith.truncf %985 : vector<8x64xf32> to vector<8x64xbf16>
    %1072 = arith.truncf %1022 : vector<8x64xf32> to vector<8x64xbf16>
    %1073 = arith.truncf %1069 : vector<8x64xf32> to vector<8x64xbf16>
    %1074 = tpu.concatenate %1070, %1071, %1072 in 1 : vector<8x64xbf16>, vector<8x64xbf16>, vector<8x64xbf16> -> vector<8x192xbf16>
    %cst_103 = arith.constant dense<0.000000e+00> : vector<8x128xf32>
    %1075 = tpu.matmul %1074, %10, %cst_103 {dimension_numbers = #tpu.dot_dimension_numbers<[1], [0], [0], [1], [0, 0, 1, 1], [], []>} : vector<8x192xbf16>, vector<192x128xbf16>, vector<8x128xf32> -> vector<8x128xf32>
    %1076 = vector.broadcast %11 : vector<1x128xf32> to vector<8x128xf32>
    %1077 = arith.addf %1075, %1076 : vector<8x128xf32>
    %cst_104 = arith.constant 0.000000e+00 : f32
    %1078 = vector.broadcast %cst_104 : f32 to vector<8x128xf32>
    %1079 = arith.maximumf %1077, %1078 : vector<8x128xf32>
    %1080 = tpu.concatenate %1071, %1072, %1073 in 1 : vector<8x64xbf16>, vector<8x64xbf16>, vector<8x64xbf16> -> vector<8x192xbf16>
    %cst_105 = arith.constant dense<0.000000e+00> : vector<8x128xf32>
    %1081 = tpu.matmul %1080, %10, %cst_105 {dimension_numbers = #tpu.dot_dimension_numbers<[1], [0], [0], [1], [0, 0, 1, 1], [], []>} : vector<8x192xbf16>, vector<192x128xbf16>, vector<8x128xf32> -> vector<8x128xf32>
    %1082 = vector.broadcast %11 : vector<1x128xf32> to vector<8x128xf32>
    %1083 = arith.addf %1081, %1082 : vector<8x128xf32>
    %cst_106 = arith.constant 0.000000e+00 : f32
    %1084 = vector.broadcast %cst_106 : f32 to vector<8x128xf32>
    %1085 = arith.maximumf %1083, %1084 : vector<8x128xf32>
    %1086 = arith.maximumf %1079, %1085 : vector<8x128xf32>
    %1087 = tpu.concatenate %909, %1086 in 1 : vector<8x128xf32>, vector<8x128xf32> -> vector<8x256xf32>
    %1088 = arith.truncf %1087 : vector<8x256xf32> to vector<8x256xbf16>
    %c2 = arith.constant 2 : index
    %c0_107 = arith.constant 0 : index
    %c0_108 = arith.constant 0 : index
    %1089 = vector.load %arg6[%c2, %c0_107, %c0_108] : memref<8x256x128xbf16, #tpu.memory_space<vmem>>, vector<1x256x128xbf16>
    %1090 = vector.shape_cast %1089 : vector<1x256x128xbf16> to vector<256x128xbf16>
    %cst_109 = arith.constant dense<0.000000e+00> : vector<8x128xf32>
    %1091 = tpu.matmul %1088, %1090, %cst_109 {dimension_numbers = #tpu.dot_dimension_numbers<[1], [0], [0], [1], [0, 0, 1, 1], [], []>} : vector<8x256xbf16>, vector<256x128xbf16>, vector<8x128xf32> -> vector<8x128xf32>
    %1092 = arith.addf %732, %1091 : vector<8x128xf32>
    %c16_i32_110 = arith.constant 16 : i32
    %1093 = arith.muli %arg1, %c16_i32_110 : i32
    %c6_i32 = arith.constant 6 : i32
    %1094 = arith.addi %1093, %c6_i32 : i32
    %1095 = vector.extract_strided_slice %4 {offsets = [0, 24], sizes = [8, 1], strides = [1, 1]} : vector<8x128xf32> to vector<8x1xf32>
    %1096 = vector.broadcast %1095 : vector<8x1xf32> to vector<8x64xf32>
    %1097 = vector.broadcast %6 : vector<1x64xf32> to vector<8x64xf32>
    %1098 = arith.mulf %1096, %1097 : vector<8x64xf32>
    %1099 = vector.extract_strided_slice %4 {offsets = [0, 25], sizes = [8, 1], strides = [1, 1]} : vector<8x128xf32> to vector<8x1xf32>
    %1100 = vector.broadcast %1099 : vector<8x1xf32> to vector<8x64xf32>
    %1101 = vector.broadcast %7 : vector<1x64xf32> to vector<8x64xf32>
    %1102 = arith.mulf %1100, %1101 : vector<8x64xf32>
    %1103 = arith.addf %1098, %1102 : vector<8x64xf32>
    %1104 = vector.extract_strided_slice %4 {offsets = [0, 26], sizes = [8, 1], strides = [1, 1]} : vector<8x128xf32> to vector<8x1xf32>
    %1105 = vector.broadcast %1104 : vector<8x1xf32> to vector<8x64xf32>
    %1106 = vector.broadcast %8 : vector<1x64xf32> to vector<8x64xf32>
    %1107 = arith.mulf %1105, %1106 : vector<8x64xf32>
    %1108 = arith.addf %1103, %1107 : vector<8x64xf32>
    %1109 = vector.broadcast %9 : vector<1x64xf32> to vector<8x64xf32>
    %1110 = arith.addf %1108, %1109 : vector<8x64xf32>
    %cst_111 = arith.constant 0.000000e+00 : f32
    %1111 = vector.broadcast %cst_111 : f32 to vector<8x64xf32>
    %1112 = arith.maximumf %1110, %1111 : vector<8x64xf32>
    %1113 = vector.extract_strided_slice %4 {offsets = [0, 25], sizes = [8, 1], strides = [1, 1]} : vector<8x128xf32> to vector<8x1xf32>
    %1114 = vector.broadcast %1113 : vector<8x1xf32> to vector<8x64xf32>
    %1115 = vector.broadcast %6 : vector<1x64xf32> to vector<8x64xf32>
    %1116 = arith.mulf %1114, %1115 : vector<8x64xf32>
    %1117 = vector.extract_strided_slice %4 {offsets = [0, 26], sizes = [8, 1], strides = [1, 1]} : vector<8x128xf32> to vector<8x1xf32>
    %1118 = vector.broadcast %1117 : vector<8x1xf32> to vector<8x64xf32>
    %1119 = vector.broadcast %7 : vector<1x64xf32> to vector<8x64xf32>
    %1120 = arith.mulf %1118, %1119 : vector<8x64xf32>
    %1121 = arith.addf %1116, %1120 : vector<8x64xf32>
    %1122 = vector.extract_strided_slice %4 {offsets = [0, 27], sizes = [8, 1], strides = [1, 1]} : vector<8x128xf32> to vector<8x1xf32>
    %1123 = vector.broadcast %1122 : vector<8x1xf32> to vector<8x64xf32>
    %1124 = vector.broadcast %8 : vector<1x64xf32> to vector<8x64xf32>
    %1125 = arith.mulf %1123, %1124 : vector<8x64xf32>
    %1126 = arith.addf %1121, %1125 : vector<8x64xf32>
    %1127 = vector.broadcast %9 : vector<1x64xf32> to vector<8x64xf32>
    %1128 = arith.addf %1126, %1127 : vector<8x64xf32>
    %cst_112 = arith.constant 0.000000e+00 : f32
    %1129 = vector.broadcast %cst_112 : f32 to vector<8x64xf32>
    %1130 = arith.maximumf %1128, %1129 : vector<8x64xf32>
    %1131 = arith.maximumf %1112, %1130 : vector<8x64xf32>
    %1132 = vector.extract_strided_slice %4 {offsets = [0, 26], sizes = [8, 1], strides = [1, 1]} : vector<8x128xf32> to vector<8x1xf32>
    %1133 = vector.broadcast %1132 : vector<8x1xf32> to vector<8x64xf32>
    %1134 = vector.broadcast %6 : vector<1x64xf32> to vector<8x64xf32>
    %1135 = arith.mulf %1133, %1134 : vector<8x64xf32>
    %1136 = vector.extract_strided_slice %4 {offsets = [0, 27], sizes = [8, 1], strides = [1, 1]} : vector<8x128xf32> to vector<8x1xf32>
    %1137 = vector.broadcast %1136 : vector<8x1xf32> to vector<8x64xf32>
    %1138 = vector.broadcast %7 : vector<1x64xf32> to vector<8x64xf32>
    %1139 = arith.mulf %1137, %1138 : vector<8x64xf32>
    %1140 = arith.addf %1135, %1139 : vector<8x64xf32>
    %1141 = vector.extract_strided_slice %4 {offsets = [0, 28], sizes = [8, 1], strides = [1, 1]} : vector<8x128xf32> to vector<8x1xf32>
    %1142 = vector.broadcast %1141 : vector<8x1xf32> to vector<8x64xf32>
    %1143 = vector.broadcast %8 : vector<1x64xf32> to vector<8x64xf32>
    %1144 = arith.mulf %1142, %1143 : vector<8x64xf32>
    %1145 = arith.addf %1140, %1144 : vector<8x64xf32>
    %1146 = vector.broadcast %9 : vector<1x64xf32> to vector<8x64xf32>
    %1147 = arith.addf %1145, %1146 : vector<8x64xf32>
    %cst_113 = arith.constant 0.000000e+00 : f32
    %1148 = vector.broadcast %cst_113 : f32 to vector<8x64xf32>
    %1149 = arith.maximumf %1147, %1148 : vector<8x64xf32>
    %1150 = vector.extract_strided_slice %4 {offsets = [0, 27], sizes = [8, 1], strides = [1, 1]} : vector<8x128xf32> to vector<8x1xf32>
    %1151 = vector.broadcast %1150 : vector<8x1xf32> to vector<8x64xf32>
    %1152 = vector.broadcast %6 : vector<1x64xf32> to vector<8x64xf32>
    %1153 = arith.mulf %1151, %1152 : vector<8x64xf32>
    %1154 = vector.extract_strided_slice %4 {offsets = [0, 28], sizes = [8, 1], strides = [1, 1]} : vector<8x128xf32> to vector<8x1xf32>
    %1155 = vector.broadcast %1154 : vector<8x1xf32> to vector<8x64xf32>
    %1156 = vector.broadcast %7 : vector<1x64xf32> to vector<8x64xf32>
    %1157 = arith.mulf %1155, %1156 : vector<8x64xf32>
    %1158 = arith.addf %1153, %1157 : vector<8x64xf32>
    %1159 = vector.extract_strided_slice %4 {offsets = [0, 29], sizes = [8, 1], strides = [1, 1]} : vector<8x128xf32> to vector<8x1xf32>
    %1160 = vector.broadcast %1159 : vector<8x1xf32> to vector<8x64xf32>
    %1161 = vector.broadcast %8 : vector<1x64xf32> to vector<8x64xf32>
    %1162 = arith.mulf %1160, %1161 : vector<8x64xf32>
    %1163 = arith.addf %1158, %1162 : vector<8x64xf32>
    %1164 = vector.broadcast %9 : vector<1x64xf32> to vector<8x64xf32>
    %1165 = arith.addf %1163, %1164 : vector<8x64xf32>
    %cst_114 = arith.constant 0.000000e+00 : f32
    %1166 = vector.broadcast %cst_114 : f32 to vector<8x64xf32>
    %1167 = arith.maximumf %1165, %1166 : vector<8x64xf32>
    %1168 = arith.maximumf %1149, %1167 : vector<8x64xf32>
    %1169 = vector.extract_strided_slice %4 {offsets = [0, 28], sizes = [8, 1], strides = [1, 1]} : vector<8x128xf32> to vector<8x1xf32>
    %1170 = vector.broadcast %1169 : vector<8x1xf32> to vector<8x64xf32>
    %1171 = vector.broadcast %6 : vector<1x64xf32> to vector<8x64xf32>
    %1172 = arith.mulf %1170, %1171 : vector<8x64xf32>
    %1173 = vector.extract_strided_slice %4 {offsets = [0, 29], sizes = [8, 1], strides = [1, 1]} : vector<8x128xf32> to vector<8x1xf32>
    %1174 = vector.broadcast %1173 : vector<8x1xf32> to vector<8x64xf32>
    %1175 = vector.broadcast %7 : vector<1x64xf32> to vector<8x64xf32>
    %1176 = arith.mulf %1174, %1175 : vector<8x64xf32>
    %1177 = arith.addf %1172, %1176 : vector<8x64xf32>
    %1178 = vector.extract_strided_slice %4 {offsets = [0, 30], sizes = [8, 1], strides = [1, 1]} : vector<8x128xf32> to vector<8x1xf32>
    %1179 = vector.broadcast %1178 : vector<8x1xf32> to vector<8x64xf32>
    %1180 = vector.broadcast %8 : vector<1x64xf32> to vector<8x64xf32>
    %1181 = arith.mulf %1179, %1180 : vector<8x64xf32>
    %1182 = arith.addf %1177, %1181 : vector<8x64xf32>
    %1183 = vector.broadcast %9 : vector<1x64xf32> to vector<8x64xf32>
    %1184 = arith.addf %1182, %1183 : vector<8x64xf32>
    %cst_115 = arith.constant 0.000000e+00 : f32
    %1185 = vector.broadcast %cst_115 : f32 to vector<8x64xf32>
    %1186 = arith.maximumf %1184, %1185 : vector<8x64xf32>
    %1187 = vector.extract_strided_slice %4 {offsets = [0, 29], sizes = [8, 1], strides = [1, 1]} : vector<8x128xf32> to vector<8x1xf32>
    %1188 = vector.broadcast %1187 : vector<8x1xf32> to vector<8x64xf32>
    %1189 = vector.broadcast %6 : vector<1x64xf32> to vector<8x64xf32>
    %1190 = arith.mulf %1188, %1189 : vector<8x64xf32>
    %1191 = vector.extract_strided_slice %4 {offsets = [0, 30], sizes = [8, 1], strides = [1, 1]} : vector<8x128xf32> to vector<8x1xf32>
    %1192 = vector.broadcast %1191 : vector<8x1xf32> to vector<8x64xf32>
    %1193 = vector.broadcast %7 : vector<1x64xf32> to vector<8x64xf32>
    %1194 = arith.mulf %1192, %1193 : vector<8x64xf32>
    %1195 = arith.addf %1190, %1194 : vector<8x64xf32>
    %1196 = vector.extract_strided_slice %4 {offsets = [0, 31], sizes = [8, 1], strides = [1, 1]} : vector<8x128xf32> to vector<8x1xf32>
    %1197 = vector.broadcast %1196 : vector<8x1xf32> to vector<8x64xf32>
    %1198 = vector.broadcast %8 : vector<1x64xf32> to vector<8x64xf32>
    %1199 = arith.mulf %1197, %1198 : vector<8x64xf32>
    %1200 = arith.addf %1195, %1199 : vector<8x64xf32>
    %1201 = vector.broadcast %9 : vector<1x64xf32> to vector<8x64xf32>
    %1202 = arith.addf %1200, %1201 : vector<8x64xf32>
    %cst_116 = arith.constant 0.000000e+00 : f32
    %1203 = vector.broadcast %cst_116 : f32 to vector<8x64xf32>
    %1204 = arith.maximumf %1202, %1203 : vector<8x64xf32>
    %1205 = arith.maximumf %1186, %1204 : vector<8x64xf32>
    %1206 = vector.extract_strided_slice %4 {offsets = [0, 30], sizes = [8, 1], strides = [1, 1]} : vector<8x128xf32> to vector<8x1xf32>
    %1207 = vector.broadcast %1206 : vector<8x1xf32> to vector<8x64xf32>
    %1208 = vector.broadcast %6 : vector<1x64xf32> to vector<8x64xf32>
    %1209 = arith.mulf %1207, %1208 : vector<8x64xf32>
    %1210 = vector.extract_strided_slice %4 {offsets = [0, 31], sizes = [8, 1], strides = [1, 1]} : vector<8x128xf32> to vector<8x1xf32>
    %1211 = vector.broadcast %1210 : vector<8x1xf32> to vector<8x64xf32>
    %1212 = vector.broadcast %7 : vector<1x64xf32> to vector<8x64xf32>
    %1213 = arith.mulf %1211, %1212 : vector<8x64xf32>
    %1214 = arith.addf %1209, %1213 : vector<8x64xf32>
    %1215 = vector.extract_strided_slice %4 {offsets = [0, 32], sizes = [8, 1], strides = [1, 1]} : vector<8x128xf32> to vector<8x1xf32>
    %1216 = vector.broadcast %1215 : vector<8x1xf32> to vector<8x64xf32>
    %1217 = vector.broadcast %8 : vector<1x64xf32> to vector<8x64xf32>
    %1218 = arith.mulf %1216, %1217 : vector<8x64xf32>
    %1219 = arith.addf %1214, %1218 : vector<8x64xf32>
    %1220 = vector.broadcast %9 : vector<1x64xf32> to vector<8x64xf32>
    %1221 = arith.addf %1219, %1220 : vector<8x64xf32>
    %cst_117 = arith.constant 0.000000e+00 : f32
    %1222 = vector.broadcast %cst_117 : f32 to vector<8x64xf32>
    %1223 = arith.maximumf %1221, %1222 : vector<8x64xf32>
    %1224 = vector.extract_strided_slice %4 {offsets = [0, 31], sizes = [8, 1], strides = [1, 1]} : vector<8x128xf32> to vector<8x1xf32>
    %1225 = vector.broadcast %1224 : vector<8x1xf32> to vector<8x64xf32>
    %1226 = vector.broadcast %6 : vector<1x64xf32> to vector<8x64xf32>
    %1227 = arith.mulf %1225, %1226 : vector<8x64xf32>
    %1228 = vector.extract_strided_slice %4 {offsets = [0, 32], sizes = [8, 1], strides = [1, 1]} : vector<8x128xf32> to vector<8x1xf32>
    %1229 = vector.broadcast %1228 : vector<8x1xf32> to vector<8x64xf32>
    %1230 = vector.broadcast %7 : vector<1x64xf32> to vector<8x64xf32>
    %1231 = arith.mulf %1229, %1230 : vector<8x64xf32>
    %1232 = arith.addf %1227, %1231 : vector<8x64xf32>
    %1233 = vector.extract_strided_slice %4 {offsets = [0, 33], sizes = [8, 1], strides = [1, 1]} : vector<8x128xf32> to vector<8x1xf32>
    %1234 = vector.broadcast %1233 : vector<8x1xf32> to vector<8x64xf32>
    %1235 = vector.broadcast %8 : vector<1x64xf32> to vector<8x64xf32>
    %1236 = arith.mulf %1234, %1235 : vector<8x64xf32>
    %1237 = arith.addf %1232, %1236 : vector<8x64xf32>
    %1238 = vector.broadcast %9 : vector<1x64xf32> to vector<8x64xf32>
    %1239 = arith.addf %1237, %1238 : vector<8x64xf32>
    %cst_118 = arith.constant 0.000000e+00 : f32
    %1240 = vector.broadcast %cst_118 : f32 to vector<8x64xf32>
    %1241 = arith.maximumf %1239, %1240 : vector<8x64xf32>
    %1242 = arith.maximumf %1223, %1241 : vector<8x64xf32>
    %c0_i32_119 = arith.constant 0 : i32
    %1243 = arith.cmpi sgt, %1094, %c0_i32_119 : i32
    %1244 = arith.extui %1243 : i1 to i32
    %1245 = arith.sitofp %1244 : i32 to f32
    %1246 = vector.broadcast %1245 : f32 to vector<8x64xf32>
    %1247 = arith.mulf %1131, %1246 : vector<8x64xf32>
    %c15_i32_120 = arith.constant 15 : i32
    %1248 = arith.cmpi slt, %1094, %c15_i32_120 : i32
    %1249 = arith.extui %1248 : i1 to i32
    %1250 = arith.sitofp %1249 : i32 to f32
    %1251 = vector.broadcast %1250 : f32 to vector<8x64xf32>
    %1252 = arith.mulf %1242, %1251 : vector<8x64xf32>
    %1253 = arith.truncf %1247 : vector<8x64xf32> to vector<8x64xbf16>
    %1254 = arith.truncf %1168 : vector<8x64xf32> to vector<8x64xbf16>
    %1255 = arith.truncf %1205 : vector<8x64xf32> to vector<8x64xbf16>
    %1256 = arith.truncf %1252 : vector<8x64xf32> to vector<8x64xbf16>
    %1257 = tpu.concatenate %1253, %1254, %1255 in 1 : vector<8x64xbf16>, vector<8x64xbf16>, vector<8x64xbf16> -> vector<8x192xbf16>
    %cst_121 = arith.constant dense<0.000000e+00> : vector<8x128xf32>
    %1258 = tpu.matmul %1257, %10, %cst_121 {dimension_numbers = #tpu.dot_dimension_numbers<[1], [0], [0], [1], [0, 0, 1, 1], [], []>} : vector<8x192xbf16>, vector<192x128xbf16>, vector<8x128xf32> -> vector<8x128xf32>
    %1259 = vector.broadcast %11 : vector<1x128xf32> to vector<8x128xf32>
    %1260 = arith.addf %1258, %1259 : vector<8x128xf32>
    %cst_122 = arith.constant 0.000000e+00 : f32
    %1261 = vector.broadcast %cst_122 : f32 to vector<8x128xf32>
    %1262 = arith.maximumf %1260, %1261 : vector<8x128xf32>
    %1263 = tpu.concatenate %1254, %1255, %1256 in 1 : vector<8x64xbf16>, vector<8x64xbf16>, vector<8x64xbf16> -> vector<8x192xbf16>
    %cst_123 = arith.constant dense<0.000000e+00> : vector<8x128xf32>
    %1264 = tpu.matmul %1263, %10, %cst_123 {dimension_numbers = #tpu.dot_dimension_numbers<[1], [0], [0], [1], [0, 0, 1, 1], [], []>} : vector<8x192xbf16>, vector<192x128xbf16>, vector<8x128xf32> -> vector<8x128xf32>
    %1265 = vector.broadcast %11 : vector<1x128xf32> to vector<8x128xf32>
    %1266 = arith.addf %1264, %1265 : vector<8x128xf32>
    %cst_124 = arith.constant 0.000000e+00 : f32
    %1267 = vector.broadcast %cst_124 : f32 to vector<8x128xf32>
    %1268 = arith.maximumf %1266, %1267 : vector<8x128xf32>
    %1269 = arith.maximumf %1262, %1268 : vector<8x128xf32>
    %c16_i32_125 = arith.constant 16 : i32
    %1270 = arith.muli %arg1, %c16_i32_125 : i32
    %c7_i32 = arith.constant 7 : i32
    %1271 = arith.addi %1270, %c7_i32 : i32
    %1272 = vector.extract_strided_slice %4 {offsets = [0, 28], sizes = [8, 1], strides = [1, 1]} : vector<8x128xf32> to vector<8x1xf32>
    %1273 = vector.broadcast %1272 : vector<8x1xf32> to vector<8x64xf32>
    %1274 = vector.broadcast %6 : vector<1x64xf32> to vector<8x64xf32>
    %1275 = arith.mulf %1273, %1274 : vector<8x64xf32>
    %1276 = vector.extract_strided_slice %4 {offsets = [0, 29], sizes = [8, 1], strides = [1, 1]} : vector<8x128xf32> to vector<8x1xf32>
    %1277 = vector.broadcast %1276 : vector<8x1xf32> to vector<8x64xf32>
    %1278 = vector.broadcast %7 : vector<1x64xf32> to vector<8x64xf32>
    %1279 = arith.mulf %1277, %1278 : vector<8x64xf32>
    %1280 = arith.addf %1275, %1279 : vector<8x64xf32>
    %1281 = vector.extract_strided_slice %4 {offsets = [0, 30], sizes = [8, 1], strides = [1, 1]} : vector<8x128xf32> to vector<8x1xf32>
    %1282 = vector.broadcast %1281 : vector<8x1xf32> to vector<8x64xf32>
    %1283 = vector.broadcast %8 : vector<1x64xf32> to vector<8x64xf32>
    %1284 = arith.mulf %1282, %1283 : vector<8x64xf32>
    %1285 = arith.addf %1280, %1284 : vector<8x64xf32>
    %1286 = vector.broadcast %9 : vector<1x64xf32> to vector<8x64xf32>
    %1287 = arith.addf %1285, %1286 : vector<8x64xf32>
    %cst_126 = arith.constant 0.000000e+00 : f32
    %1288 = vector.broadcast %cst_126 : f32 to vector<8x64xf32>
    %1289 = arith.maximumf %1287, %1288 : vector<8x64xf32>
    %1290 = vector.extract_strided_slice %4 {offsets = [0, 29], sizes = [8, 1], strides = [1, 1]} : vector<8x128xf32> to vector<8x1xf32>
    %1291 = vector.broadcast %1290 : vector<8x1xf32> to vector<8x64xf32>
    %1292 = vector.broadcast %6 : vector<1x64xf32> to vector<8x64xf32>
    %1293 = arith.mulf %1291, %1292 : vector<8x64xf32>
    %1294 = vector.extract_strided_slice %4 {offsets = [0, 30], sizes = [8, 1], strides = [1, 1]} : vector<8x128xf32> to vector<8x1xf32>
    %1295 = vector.broadcast %1294 : vector<8x1xf32> to vector<8x64xf32>
    %1296 = vector.broadcast %7 : vector<1x64xf32> to vector<8x64xf32>
    %1297 = arith.mulf %1295, %1296 : vector<8x64xf32>
    %1298 = arith.addf %1293, %1297 : vector<8x64xf32>
    %1299 = vector.extract_strided_slice %4 {offsets = [0, 31], sizes = [8, 1], strides = [1, 1]} : vector<8x128xf32> to vector<8x1xf32>
    %1300 = vector.broadcast %1299 : vector<8x1xf32> to vector<8x64xf32>
    %1301 = vector.broadcast %8 : vector<1x64xf32> to vector<8x64xf32>
    %1302 = arith.mulf %1300, %1301 : vector<8x64xf32>
    %1303 = arith.addf %1298, %1302 : vector<8x64xf32>
    %1304 = vector.broadcast %9 : vector<1x64xf32> to vector<8x64xf32>
    %1305 = arith.addf %1303, %1304 : vector<8x64xf32>
    %cst_127 = arith.constant 0.000000e+00 : f32
    %1306 = vector.broadcast %cst_127 : f32 to vector<8x64xf32>
    %1307 = arith.maximumf %1305, %1306 : vector<8x64xf32>
    %1308 = arith.maximumf %1289, %1307 : vector<8x64xf32>
    %1309 = vector.extract_strided_slice %4 {offsets = [0, 30], sizes = [8, 1], strides = [1, 1]} : vector<8x128xf32> to vector<8x1xf32>
    %1310 = vector.broadcast %1309 : vector<8x1xf32> to vector<8x64xf32>
    %1311 = vector.broadcast %6 : vector<1x64xf32> to vector<8x64xf32>
    %1312 = arith.mulf %1310, %1311 : vector<8x64xf32>
    %1313 = vector.extract_strided_slice %4 {offsets = [0, 31], sizes = [8, 1], strides = [1, 1]} : vector<8x128xf32> to vector<8x1xf32>
    %1314 = vector.broadcast %1313 : vector<8x1xf32> to vector<8x64xf32>
    %1315 = vector.broadcast %7 : vector<1x64xf32> to vector<8x64xf32>
    %1316 = arith.mulf %1314, %1315 : vector<8x64xf32>
    %1317 = arith.addf %1312, %1316 : vector<8x64xf32>
    %1318 = vector.extract_strided_slice %4 {offsets = [0, 32], sizes = [8, 1], strides = [1, 1]} : vector<8x128xf32> to vector<8x1xf32>
    %1319 = vector.broadcast %1318 : vector<8x1xf32> to vector<8x64xf32>
    %1320 = vector.broadcast %8 : vector<1x64xf32> to vector<8x64xf32>
    %1321 = arith.mulf %1319, %1320 : vector<8x64xf32>
    %1322 = arith.addf %1317, %1321 : vector<8x64xf32>
    %1323 = vector.broadcast %9 : vector<1x64xf32> to vector<8x64xf32>
    %1324 = arith.addf %1322, %1323 : vector<8x64xf32>
    %cst_128 = arith.constant 0.000000e+00 : f32
    %1325 = vector.broadcast %cst_128 : f32 to vector<8x64xf32>
    %1326 = arith.maximumf %1324, %1325 : vector<8x64xf32>
    %1327 = vector.extract_strided_slice %4 {offsets = [0, 31], sizes = [8, 1], strides = [1, 1]} : vector<8x128xf32> to vector<8x1xf32>
    %1328 = vector.broadcast %1327 : vector<8x1xf32> to vector<8x64xf32>
    %1329 = vector.broadcast %6 : vector<1x64xf32> to vector<8x64xf32>
    %1330 = arith.mulf %1328, %1329 : vector<8x64xf32>
    %1331 = vector.extract_strided_slice %4 {offsets = [0, 32], sizes = [8, 1], strides = [1, 1]} : vector<8x128xf32> to vector<8x1xf32>
    %1332 = vector.broadcast %1331 : vector<8x1xf32> to vector<8x64xf32>
    %1333 = vector.broadcast %7 : vector<1x64xf32> to vector<8x64xf32>
    %1334 = arith.mulf %1332, %1333 : vector<8x64xf32>
    %1335 = arith.addf %1330, %1334 : vector<8x64xf32>
    %1336 = vector.extract_strided_slice %4 {offsets = [0, 33], sizes = [8, 1], strides = [1, 1]} : vector<8x128xf32> to vector<8x1xf32>
    %1337 = vector.broadcast %1336 : vector<8x1xf32> to vector<8x64xf32>
    %1338 = vector.broadcast %8 : vector<1x64xf32> to vector<8x64xf32>
    %1339 = arith.mulf %1337, %1338 : vector<8x64xf32>
    %1340 = arith.addf %1335, %1339 : vector<8x64xf32>
    %1341 = vector.broadcast %9 : vector<1x64xf32> to vector<8x64xf32>
    %1342 = arith.addf %1340, %1341 : vector<8x64xf32>
    %cst_129 = arith.constant 0.000000e+00 : f32
    %1343 = vector.broadcast %cst_129 : f32 to vector<8x64xf32>
    %1344 = arith.maximumf %1342, %1343 : vector<8x64xf32>
    %1345 = arith.maximumf %1326, %1344 : vector<8x64xf32>
    %1346 = vector.extract_strided_slice %4 {offsets = [0, 32], sizes = [8, 1], strides = [1, 1]} : vector<8x128xf32> to vector<8x1xf32>
    %1347 = vector.broadcast %1346 : vector<8x1xf32> to vector<8x64xf32>
    %1348 = vector.broadcast %6 : vector<1x64xf32> to vector<8x64xf32>
    %1349 = arith.mulf %1347, %1348 : vector<8x64xf32>
    %1350 = vector.extract_strided_slice %4 {offsets = [0, 33], sizes = [8, 1], strides = [1, 1]} : vector<8x128xf32> to vector<8x1xf32>
    %1351 = vector.broadcast %1350 : vector<8x1xf32> to vector<8x64xf32>
    %1352 = vector.broadcast %7 : vector<1x64xf32> to vector<8x64xf32>
    %1353 = arith.mulf %1351, %1352 : vector<8x64xf32>
    %1354 = arith.addf %1349, %1353 : vector<8x64xf32>
    %1355 = vector.extract_strided_slice %4 {offsets = [0, 34], sizes = [8, 1], strides = [1, 1]} : vector<8x128xf32> to vector<8x1xf32>
    %1356 = vector.broadcast %1355 : vector<8x1xf32> to vector<8x64xf32>
    %1357 = vector.broadcast %8 : vector<1x64xf32> to vector<8x64xf32>
    %1358 = arith.mulf %1356, %1357 : vector<8x64xf32>
    %1359 = arith.addf %1354, %1358 : vector<8x64xf32>
    %1360 = vector.broadcast %9 : vector<1x64xf32> to vector<8x64xf32>
    %1361 = arith.addf %1359, %1360 : vector<8x64xf32>
    %cst_130 = arith.constant 0.000000e+00 : f32
    %1362 = vector.broadcast %cst_130 : f32 to vector<8x64xf32>
    %1363 = arith.maximumf %1361, %1362 : vector<8x64xf32>
    %1364 = vector.extract_strided_slice %4 {offsets = [0, 33], sizes = [8, 1], strides = [1, 1]} : vector<8x128xf32> to vector<8x1xf32>
    %1365 = vector.broadcast %1364 : vector<8x1xf32> to vector<8x64xf32>
    %1366 = vector.broadcast %6 : vector<1x64xf32> to vector<8x64xf32>
    %1367 = arith.mulf %1365, %1366 : vector<8x64xf32>
    %1368 = vector.extract_strided_slice %4 {offsets = [0, 34], sizes = [8, 1], strides = [1, 1]} : vector<8x128xf32> to vector<8x1xf32>
    %1369 = vector.broadcast %1368 : vector<8x1xf32> to vector<8x64xf32>
    %1370 = vector.broadcast %7 : vector<1x64xf32> to vector<8x64xf32>
    %1371 = arith.mulf %1369, %1370 : vector<8x64xf32>
    %1372 = arith.addf %1367, %1371 : vector<8x64xf32>
    %1373 = vector.extract_strided_slice %4 {offsets = [0, 35], sizes = [8, 1], strides = [1, 1]} : vector<8x128xf32> to vector<8x1xf32>
    %1374 = vector.broadcast %1373 : vector<8x1xf32> to vector<8x64xf32>
    %1375 = vector.broadcast %8 : vector<1x64xf32> to vector<8x64xf32>
    %1376 = arith.mulf %1374, %1375 : vector<8x64xf32>
    %1377 = arith.addf %1372, %1376 : vector<8x64xf32>
    %1378 = vector.broadcast %9 : vector<1x64xf32> to vector<8x64xf32>
    %1379 = arith.addf %1377, %1378 : vector<8x64xf32>
    %cst_131 = arith.constant 0.000000e+00 : f32
    %1380 = vector.broadcast %cst_131 : f32 to vector<8x64xf32>
    %1381 = arith.maximumf %1379, %1380 : vector<8x64xf32>
    %1382 = arith.maximumf %1363, %1381 : vector<8x64xf32>
    %1383 = vector.extract_strided_slice %4 {offsets = [0, 34], sizes = [8, 1], strides = [1, 1]} : vector<8x128xf32> to vector<8x1xf32>
    %1384 = vector.broadcast %1383 : vector<8x1xf32> to vector<8x64xf32>
    %1385 = vector.broadcast %6 : vector<1x64xf32> to vector<8x64xf32>
    %1386 = arith.mulf %1384, %1385 : vector<8x64xf32>
    %1387 = vector.extract_strided_slice %4 {offsets = [0, 35], sizes = [8, 1], strides = [1, 1]} : vector<8x128xf32> to vector<8x1xf32>
    %1388 = vector.broadcast %1387 : vector<8x1xf32> to vector<8x64xf32>
    %1389 = vector.broadcast %7 : vector<1x64xf32> to vector<8x64xf32>
    %1390 = arith.mulf %1388, %1389 : vector<8x64xf32>
    %1391 = arith.addf %1386, %1390 : vector<8x64xf32>
    %1392 = vector.extract_strided_slice %4 {offsets = [0, 36], sizes = [8, 1], strides = [1, 1]} : vector<8x128xf32> to vector<8x1xf32>
    %1393 = vector.broadcast %1392 : vector<8x1xf32> to vector<8x64xf32>
    %1394 = vector.broadcast %8 : vector<1x64xf32> to vector<8x64xf32>
    %1395 = arith.mulf %1393, %1394 : vector<8x64xf32>
    %1396 = arith.addf %1391, %1395 : vector<8x64xf32>
    %1397 = vector.broadcast %9 : vector<1x64xf32> to vector<8x64xf32>
    %1398 = arith.addf %1396, %1397 : vector<8x64xf32>
    %cst_132 = arith.constant 0.000000e+00 : f32
    %1399 = vector.broadcast %cst_132 : f32 to vector<8x64xf32>
    %1400 = arith.maximumf %1398, %1399 : vector<8x64xf32>
    %1401 = vector.extract_strided_slice %4 {offsets = [0, 35], sizes = [8, 1], strides = [1, 1]} : vector<8x128xf32> to vector<8x1xf32>
    %1402 = vector.broadcast %1401 : vector<8x1xf32> to vector<8x64xf32>
    %1403 = vector.broadcast %6 : vector<1x64xf32> to vector<8x64xf32>
    %1404 = arith.mulf %1402, %1403 : vector<8x64xf32>
    %1405 = vector.extract_strided_slice %4 {offsets = [0, 36], sizes = [8, 1], strides = [1, 1]} : vector<8x128xf32> to vector<8x1xf32>
    %1406 = vector.broadcast %1405 : vector<8x1xf32> to vector<8x64xf32>
    %1407 = vector.broadcast %7 : vector<1x64xf32> to vector<8x64xf32>
    %1408 = arith.mulf %1406, %1407 : vector<8x64xf32>
    %1409 = arith.addf %1404, %1408 : vector<8x64xf32>
    %1410 = vector.extract_strided_slice %4 {offsets = [0, 37], sizes = [8, 1], strides = [1, 1]} : vector<8x128xf32> to vector<8x1xf32>
    %1411 = vector.broadcast %1410 : vector<8x1xf32> to vector<8x64xf32>
    %1412 = vector.broadcast %8 : vector<1x64xf32> to vector<8x64xf32>
    %1413 = arith.mulf %1411, %1412 : vector<8x64xf32>
    %1414 = arith.addf %1409, %1413 : vector<8x64xf32>
    %1415 = vector.broadcast %9 : vector<1x64xf32> to vector<8x64xf32>
    %1416 = arith.addf %1414, %1415 : vector<8x64xf32>
    %cst_133 = arith.constant 0.000000e+00 : f32
    %1417 = vector.broadcast %cst_133 : f32 to vector<8x64xf32>
    %1418 = arith.maximumf %1416, %1417 : vector<8x64xf32>
    %1419 = arith.maximumf %1400, %1418 : vector<8x64xf32>
    %c0_i32_134 = arith.constant 0 : i32
    %1420 = arith.cmpi sgt, %1271, %c0_i32_134 : i32
    %1421 = arith.extui %1420 : i1 to i32
    %1422 = arith.sitofp %1421 : i32 to f32
    %1423 = vector.broadcast %1422 : f32 to vector<8x64xf32>
    %1424 = arith.mulf %1308, %1423 : vector<8x64xf32>
    %c15_i32_135 = arith.constant 15 : i32
    %1425 = arith.cmpi slt, %1271, %c15_i32_135 : i32
    %1426 = arith.extui %1425 : i1 to i32
    %1427 = arith.sitofp %1426 : i32 to f32
    %1428 = vector.broadcast %1427 : f32 to vector<8x64xf32>
    %1429 = arith.mulf %1419, %1428 : vector<8x64xf32>
    %1430 = arith.truncf %1424 : vector<8x64xf32> to vector<8x64xbf16>
    %1431 = arith.truncf %1345 : vector<8x64xf32> to vector<8x64xbf16>
    %1432 = arith.truncf %1382 : vector<8x64xf32> to vector<8x64xbf16>
    %1433 = arith.truncf %1429 : vector<8x64xf32> to vector<8x64xbf16>
    %1434 = tpu.concatenate %1430, %1431, %1432 in 1 : vector<8x64xbf16>, vector<8x64xbf16>, vector<8x64xbf16> -> vector<8x192xbf16>
    %cst_136 = arith.constant dense<0.000000e+00> : vector<8x128xf32>
    %1435 = tpu.matmul %1434, %10, %cst_136 {dimension_numbers = #tpu.dot_dimension_numbers<[1], [0], [0], [1], [0, 0, 1, 1], [], []>} : vector<8x192xbf16>, vector<192x128xbf16>, vector<8x128xf32> -> vector<8x128xf32>
    %1436 = vector.broadcast %11 : vector<1x128xf32> to vector<8x128xf32>
    %1437 = arith.addf %1435, %1436 : vector<8x128xf32>
    %cst_137 = arith.constant 0.000000e+00 : f32
    %1438 = vector.broadcast %cst_137 : f32 to vector<8x128xf32>
    %1439 = arith.maximumf %1437, %1438 : vector<8x128xf32>
    %1440 = tpu.concatenate %1431, %1432, %1433 in 1 : vector<8x64xbf16>, vector<8x64xbf16>, vector<8x64xbf16> -> vector<8x192xbf16>
    %cst_138 = arith.constant dense<0.000000e+00> : vector<8x128xf32>
    %1441 = tpu.matmul %1440, %10, %cst_138 {dimension_numbers = #tpu.dot_dimension_numbers<[1], [0], [0], [1], [0, 0, 1, 1], [], []>} : vector<8x192xbf16>, vector<192x128xbf16>, vector<8x128xf32> -> vector<8x128xf32>
    %1442 = vector.broadcast %11 : vector<1x128xf32> to vector<8x128xf32>
    %1443 = arith.addf %1441, %1442 : vector<8x128xf32>
    %cst_139 = arith.constant 0.000000e+00 : f32
    %1444 = vector.broadcast %cst_139 : f32 to vector<8x128xf32>
    %1445 = arith.maximumf %1443, %1444 : vector<8x128xf32>
    %1446 = arith.maximumf %1439, %1445 : vector<8x128xf32>
    %1447 = tpu.concatenate %1269, %1446 in 1 : vector<8x128xf32>, vector<8x128xf32> -> vector<8x256xf32>
    %1448 = arith.truncf %1447 : vector<8x256xf32> to vector<8x256xbf16>
    %c3 = arith.constant 3 : index
    %c0_140 = arith.constant 0 : index
    %c0_141 = arith.constant 0 : index
    %1449 = vector.load %arg6[%c3, %c0_140, %c0_141] : memref<8x256x128xbf16, #tpu.memory_space<vmem>>, vector<1x256x128xbf16>
    %1450 = vector.shape_cast %1449 : vector<1x256x128xbf16> to vector<256x128xbf16>
    %cst_142 = arith.constant dense<0.000000e+00> : vector<8x128xf32>
    %1451 = tpu.matmul %1448, %1450, %cst_142 {dimension_numbers = #tpu.dot_dimension_numbers<[1], [0], [0], [1], [0, 0, 1, 1], [], []>} : vector<8x256xbf16>, vector<256x128xbf16>, vector<8x128xf32> -> vector<8x128xf32>
    %1452 = arith.addf %1092, %1451 : vector<8x128xf32>
    %c16_i32_143 = arith.constant 16 : i32
    %1453 = arith.muli %arg1, %c16_i32_143 : i32
    %c8_i32 = arith.constant 8 : i32
    %1454 = arith.addi %1453, %c8_i32 : i32
    %1455 = vector.extract_strided_slice %4 {offsets = [0, 32], sizes = [8, 1], strides = [1, 1]} : vector<8x128xf32> to vector<8x1xf32>
    %1456 = vector.broadcast %1455 : vector<8x1xf32> to vector<8x64xf32>
    %1457 = vector.broadcast %6 : vector<1x64xf32> to vector<8x64xf32>
    %1458 = arith.mulf %1456, %1457 : vector<8x64xf32>
    %1459 = vector.extract_strided_slice %4 {offsets = [0, 33], sizes = [8, 1], strides = [1, 1]} : vector<8x128xf32> to vector<8x1xf32>
    %1460 = vector.broadcast %1459 : vector<8x1xf32> to vector<8x64xf32>
    %1461 = vector.broadcast %7 : vector<1x64xf32> to vector<8x64xf32>
    %1462 = arith.mulf %1460, %1461 : vector<8x64xf32>
    %1463 = arith.addf %1458, %1462 : vector<8x64xf32>
    %1464 = vector.extract_strided_slice %4 {offsets = [0, 34], sizes = [8, 1], strides = [1, 1]} : vector<8x128xf32> to vector<8x1xf32>
    %1465 = vector.broadcast %1464 : vector<8x1xf32> to vector<8x64xf32>
    %1466 = vector.broadcast %8 : vector<1x64xf32> to vector<8x64xf32>
    %1467 = arith.mulf %1465, %1466 : vector<8x64xf32>
    %1468 = arith.addf %1463, %1467 : vector<8x64xf32>
    %1469 = vector.broadcast %9 : vector<1x64xf32> to vector<8x64xf32>
    %1470 = arith.addf %1468, %1469 : vector<8x64xf32>
    %cst_144 = arith.constant 0.000000e+00 : f32
    %1471 = vector.broadcast %cst_144 : f32 to vector<8x64xf32>
    %1472 = arith.maximumf %1470, %1471 : vector<8x64xf32>
    %1473 = vector.extract_strided_slice %4 {offsets = [0, 33], sizes = [8, 1], strides = [1, 1]} : vector<8x128xf32> to vector<8x1xf32>
    %1474 = vector.broadcast %1473 : vector<8x1xf32> to vector<8x64xf32>
    %1475 = vector.broadcast %6 : vector<1x64xf32> to vector<8x64xf32>
    %1476 = arith.mulf %1474, %1475 : vector<8x64xf32>
    %1477 = vector.extract_strided_slice %4 {offsets = [0, 34], sizes = [8, 1], strides = [1, 1]} : vector<8x128xf32> to vector<8x1xf32>
    %1478 = vector.broadcast %1477 : vector<8x1xf32> to vector<8x64xf32>
    %1479 = vector.broadcast %7 : vector<1x64xf32> to vector<8x64xf32>
    %1480 = arith.mulf %1478, %1479 : vector<8x64xf32>
    %1481 = arith.addf %1476, %1480 : vector<8x64xf32>
    %1482 = vector.extract_strided_slice %4 {offsets = [0, 35], sizes = [8, 1], strides = [1, 1]} : vector<8x128xf32> to vector<8x1xf32>
    %1483 = vector.broadcast %1482 : vector<8x1xf32> to vector<8x64xf32>
    %1484 = vector.broadcast %8 : vector<1x64xf32> to vector<8x64xf32>
    %1485 = arith.mulf %1483, %1484 : vector<8x64xf32>
    %1486 = arith.addf %1481, %1485 : vector<8x64xf32>
    %1487 = vector.broadcast %9 : vector<1x64xf32> to vector<8x64xf32>
    %1488 = arith.addf %1486, %1487 : vector<8x64xf32>
    %cst_145 = arith.constant 0.000000e+00 : f32
    %1489 = vector.broadcast %cst_145 : f32 to vector<8x64xf32>
    %1490 = arith.maximumf %1488, %1489 : vector<8x64xf32>
    %1491 = arith.maximumf %1472, %1490 : vector<8x64xf32>
    %1492 = vector.extract_strided_slice %4 {offsets = [0, 34], sizes = [8, 1], strides = [1, 1]} : vector<8x128xf32> to vector<8x1xf32>
    %1493 = vector.broadcast %1492 : vector<8x1xf32> to vector<8x64xf32>
    %1494 = vector.broadcast %6 : vector<1x64xf32> to vector<8x64xf32>
    %1495 = arith.mulf %1493, %1494 : vector<8x64xf32>
    %1496 = vector.extract_strided_slice %4 {offsets = [0, 35], sizes = [8, 1], strides = [1, 1]} : vector<8x128xf32> to vector<8x1xf32>
    %1497 = vector.broadcast %1496 : vector<8x1xf32> to vector<8x64xf32>
    %1498 = vector.broadcast %7 : vector<1x64xf32> to vector<8x64xf32>
    %1499 = arith.mulf %1497, %1498 : vector<8x64xf32>
    %1500 = arith.addf %1495, %1499 : vector<8x64xf32>
    %1501 = vector.extract_strided_slice %4 {offsets = [0, 36], sizes = [8, 1], strides = [1, 1]} : vector<8x128xf32> to vector<8x1xf32>
    %1502 = vector.broadcast %1501 : vector<8x1xf32> to vector<8x64xf32>
    %1503 = vector.broadcast %8 : vector<1x64xf32> to vector<8x64xf32>
    %1504 = arith.mulf %1502, %1503 : vector<8x64xf32>
    %1505 = arith.addf %1500, %1504 : vector<8x64xf32>
    %1506 = vector.broadcast %9 : vector<1x64xf32> to vector<8x64xf32>
    %1507 = arith.addf %1505, %1506 : vector<8x64xf32>
    %cst_146 = arith.constant 0.000000e+00 : f32
    %1508 = vector.broadcast %cst_146 : f32 to vector<8x64xf32>
    %1509 = arith.maximumf %1507, %1508 : vector<8x64xf32>
    %1510 = vector.extract_strided_slice %4 {offsets = [0, 35], sizes = [8, 1], strides = [1, 1]} : vector<8x128xf32> to vector<8x1xf32>
    %1511 = vector.broadcast %1510 : vector<8x1xf32> to vector<8x64xf32>
    %1512 = vector.broadcast %6 : vector<1x64xf32> to vector<8x64xf32>
    %1513 = arith.mulf %1511, %1512 : vector<8x64xf32>
    %1514 = vector.extract_strided_slice %4 {offsets = [0, 36], sizes = [8, 1], strides = [1, 1]} : vector<8x128xf32> to vector<8x1xf32>
    %1515 = vector.broadcast %1514 : vector<8x1xf32> to vector<8x64xf32>
    %1516 = vector.broadcast %7 : vector<1x64xf32> to vector<8x64xf32>
    %1517 = arith.mulf %1515, %1516 : vector<8x64xf32>
    %1518 = arith.addf %1513, %1517 : vector<8x64xf32>
    %1519 = vector.extract_strided_slice %4 {offsets = [0, 37], sizes = [8, 1], strides = [1, 1]} : vector<8x128xf32> to vector<8x1xf32>
    %1520 = vector.broadcast %1519 : vector<8x1xf32> to vector<8x64xf32>
    %1521 = vector.broadcast %8 : vector<1x64xf32> to vector<8x64xf32>
    %1522 = arith.mulf %1520, %1521 : vector<8x64xf32>
    %1523 = arith.addf %1518, %1522 : vector<8x64xf32>
    %1524 = vector.broadcast %9 : vector<1x64xf32> to vector<8x64xf32>
    %1525 = arith.addf %1523, %1524 : vector<8x64xf32>
    %cst_147 = arith.constant 0.000000e+00 : f32
    %1526 = vector.broadcast %cst_147 : f32 to vector<8x64xf32>
    %1527 = arith.maximumf %1525, %1526 : vector<8x64xf32>
    %1528 = arith.maximumf %1509, %1527 : vector<8x64xf32>
    %1529 = vector.extract_strided_slice %4 {offsets = [0, 36], sizes = [8, 1], strides = [1, 1]} : vector<8x128xf32> to vector<8x1xf32>
    %1530 = vector.broadcast %1529 : vector<8x1xf32> to vector<8x64xf32>
    %1531 = vector.broadcast %6 : vector<1x64xf32> to vector<8x64xf32>
    %1532 = arith.mulf %1530, %1531 : vector<8x64xf32>
    %1533 = vector.extract_strided_slice %4 {offsets = [0, 37], sizes = [8, 1], strides = [1, 1]} : vector<8x128xf32> to vector<8x1xf32>
    %1534 = vector.broadcast %1533 : vector<8x1xf32> to vector<8x64xf32>
    %1535 = vector.broadcast %7 : vector<1x64xf32> to vector<8x64xf32>
    %1536 = arith.mulf %1534, %1535 : vector<8x64xf32>
    %1537 = arith.addf %1532, %1536 : vector<8x64xf32>
    %1538 = vector.extract_strided_slice %4 {offsets = [0, 38], sizes = [8, 1], strides = [1, 1]} : vector<8x128xf32> to vector<8x1xf32>
    %1539 = vector.broadcast %1538 : vector<8x1xf32> to vector<8x64xf32>
    %1540 = vector.broadcast %8 : vector<1x64xf32> to vector<8x64xf32>
    %1541 = arith.mulf %1539, %1540 : vector<8x64xf32>
    %1542 = arith.addf %1537, %1541 : vector<8x64xf32>
    %1543 = vector.broadcast %9 : vector<1x64xf32> to vector<8x64xf32>
    %1544 = arith.addf %1542, %1543 : vector<8x64xf32>
    %cst_148 = arith.constant 0.000000e+00 : f32
    %1545 = vector.broadcast %cst_148 : f32 to vector<8x64xf32>
    %1546 = arith.maximumf %1544, %1545 : vector<8x64xf32>
    %1547 = vector.extract_strided_slice %4 {offsets = [0, 37], sizes = [8, 1], strides = [1, 1]} : vector<8x128xf32> to vector<8x1xf32>
    %1548 = vector.broadcast %1547 : vector<8x1xf32> to vector<8x64xf32>
    %1549 = vector.broadcast %6 : vector<1x64xf32> to vector<8x64xf32>
    %1550 = arith.mulf %1548, %1549 : vector<8x64xf32>
    %1551 = vector.extract_strided_slice %4 {offsets = [0, 38], sizes = [8, 1], strides = [1, 1]} : vector<8x128xf32> to vector<8x1xf32>
    %1552 = vector.broadcast %1551 : vector<8x1xf32> to vector<8x64xf32>
    %1553 = vector.broadcast %7 : vector<1x64xf32> to vector<8x64xf32>
    %1554 = arith.mulf %1552, %1553 : vector<8x64xf32>
    %1555 = arith.addf %1550, %1554 : vector<8x64xf32>
    %1556 = vector.extract_strided_slice %4 {offsets = [0, 39], sizes = [8, 1], strides = [1, 1]} : vector<8x128xf32> to vector<8x1xf32>
    %1557 = vector.broadcast %1556 : vector<8x1xf32> to vector<8x64xf32>
    %1558 = vector.broadcast %8 : vector<1x64xf32> to vector<8x64xf32>
    %1559 = arith.mulf %1557, %1558 : vector<8x64xf32>
    %1560 = arith.addf %1555, %1559 : vector<8x64xf32>
    %1561 = vector.broadcast %9 : vector<1x64xf32> to vector<8x64xf32>
    %1562 = arith.addf %1560, %1561 : vector<8x64xf32>
    %cst_149 = arith.constant 0.000000e+00 : f32
    %1563 = vector.broadcast %cst_149 : f32 to vector<8x64xf32>
    %1564 = arith.maximumf %1562, %1563 : vector<8x64xf32>
    %1565 = arith.maximumf %1546, %1564 : vector<8x64xf32>
    %1566 = vector.extract_strided_slice %4 {offsets = [0, 38], sizes = [8, 1], strides = [1, 1]} : vector<8x128xf32> to vector<8x1xf32>
    %1567 = vector.broadcast %1566 : vector<8x1xf32> to vector<8x64xf32>
    %1568 = vector.broadcast %6 : vector<1x64xf32> to vector<8x64xf32>
    %1569 = arith.mulf %1567, %1568 : vector<8x64xf32>
    %1570 = vector.extract_strided_slice %4 {offsets = [0, 39], sizes = [8, 1], strides = [1, 1]} : vector<8x128xf32> to vector<8x1xf32>
    %1571 = vector.broadcast %1570 : vector<8x1xf32> to vector<8x64xf32>
    %1572 = vector.broadcast %7 : vector<1x64xf32> to vector<8x64xf32>
    %1573 = arith.mulf %1571, %1572 : vector<8x64xf32>
    %1574 = arith.addf %1569, %1573 : vector<8x64xf32>
    %1575 = vector.extract_strided_slice %4 {offsets = [0, 40], sizes = [8, 1], strides = [1, 1]} : vector<8x128xf32> to vector<8x1xf32>
    %1576 = vector.broadcast %1575 : vector<8x1xf32> to vector<8x64xf32>
    %1577 = vector.broadcast %8 : vector<1x64xf32> to vector<8x64xf32>
    %1578 = arith.mulf %1576, %1577 : vector<8x64xf32>
    %1579 = arith.addf %1574, %1578 : vector<8x64xf32>
    %1580 = vector.broadcast %9 : vector<1x64xf32> to vector<8x64xf32>
    %1581 = arith.addf %1579, %1580 : vector<8x64xf32>
    %cst_150 = arith.constant 0.000000e+00 : f32
    %1582 = vector.broadcast %cst_150 : f32 to vector<8x64xf32>
    %1583 = arith.maximumf %1581, %1582 : vector<8x64xf32>
    %1584 = vector.extract_strided_slice %4 {offsets = [0, 39], sizes = [8, 1], strides = [1, 1]} : vector<8x128xf32> to vector<8x1xf32>
    %1585 = vector.broadcast %1584 : vector<8x1xf32> to vector<8x64xf32>
    %1586 = vector.broadcast %6 : vector<1x64xf32> to vector<8x64xf32>
    %1587 = arith.mulf %1585, %1586 : vector<8x64xf32>
    %1588 = vector.extract_strided_slice %4 {offsets = [0, 40], sizes = [8, 1], strides = [1, 1]} : vector<8x128xf32> to vector<8x1xf32>
    %1589 = vector.broadcast %1588 : vector<8x1xf32> to vector<8x64xf32>
    %1590 = vector.broadcast %7 : vector<1x64xf32> to vector<8x64xf32>
    %1591 = arith.mulf %1589, %1590 : vector<8x64xf32>
    %1592 = arith.addf %1587, %1591 : vector<8x64xf32>
    %1593 = vector.extract_strided_slice %4 {offsets = [0, 41], sizes = [8, 1], strides = [1, 1]} : vector<8x128xf32> to vector<8x1xf32>
    %1594 = vector.broadcast %1593 : vector<8x1xf32> to vector<8x64xf32>
    %1595 = vector.broadcast %8 : vector<1x64xf32> to vector<8x64xf32>
    %1596 = arith.mulf %1594, %1595 : vector<8x64xf32>
    %1597 = arith.addf %1592, %1596 : vector<8x64xf32>
    %1598 = vector.broadcast %9 : vector<1x64xf32> to vector<8x64xf32>
    %1599 = arith.addf %1597, %1598 : vector<8x64xf32>
    %cst_151 = arith.constant 0.000000e+00 : f32
    %1600 = vector.broadcast %cst_151 : f32 to vector<8x64xf32>
    %1601 = arith.maximumf %1599, %1600 : vector<8x64xf32>
    %1602 = arith.maximumf %1583, %1601 : vector<8x64xf32>
    %c0_i32_152 = arith.constant 0 : i32
    %1603 = arith.cmpi sgt, %1454, %c0_i32_152 : i32
    %1604 = arith.extui %1603 : i1 to i32
    %1605 = arith.sitofp %1604 : i32 to f32
    %1606 = vector.broadcast %1605 : f32 to vector<8x64xf32>
    %1607 = arith.mulf %1491, %1606 : vector<8x64xf32>
    %c15_i32_153 = arith.constant 15 : i32
    %1608 = arith.cmpi slt, %1454, %c15_i32_153 : i32
    %1609 = arith.extui %1608 : i1 to i32
    %1610 = arith.sitofp %1609 : i32 to f32
    %1611 = vector.broadcast %1610 : f32 to vector<8x64xf32>
    %1612 = arith.mulf %1602, %1611 : vector<8x64xf32>
    %1613 = arith.truncf %1607 : vector<8x64xf32> to vector<8x64xbf16>
    %1614 = arith.truncf %1528 : vector<8x64xf32> to vector<8x64xbf16>
    %1615 = arith.truncf %1565 : vector<8x64xf32> to vector<8x64xbf16>
    %1616 = arith.truncf %1612 : vector<8x64xf32> to vector<8x64xbf16>
    %1617 = tpu.concatenate %1613, %1614, %1615 in 1 : vector<8x64xbf16>, vector<8x64xbf16>, vector<8x64xbf16> -> vector<8x192xbf16>
    %cst_154 = arith.constant dense<0.000000e+00> : vector<8x128xf32>
    %1618 = tpu.matmul %1617, %10, %cst_154 {dimension_numbers = #tpu.dot_dimension_numbers<[1], [0], [0], [1], [0, 0, 1, 1], [], []>} : vector<8x192xbf16>, vector<192x128xbf16>, vector<8x128xf32> -> vector<8x128xf32>
    %1619 = vector.broadcast %11 : vector<1x128xf32> to vector<8x128xf32>
    %1620 = arith.addf %1618, %1619 : vector<8x128xf32>
    %cst_155 = arith.constant 0.000000e+00 : f32
    %1621 = vector.broadcast %cst_155 : f32 to vector<8x128xf32>
    %1622 = arith.maximumf %1620, %1621 : vector<8x128xf32>
    %1623 = tpu.concatenate %1614, %1615, %1616 in 1 : vector<8x64xbf16>, vector<8x64xbf16>, vector<8x64xbf16> -> vector<8x192xbf16>
    %cst_156 = arith.constant dense<0.000000e+00> : vector<8x128xf32>
    %1624 = tpu.matmul %1623, %10, %cst_156 {dimension_numbers = #tpu.dot_dimension_numbers<[1], [0], [0], [1], [0, 0, 1, 1], [], []>} : vector<8x192xbf16>, vector<192x128xbf16>, vector<8x128xf32> -> vector<8x128xf32>
    %1625 = vector.broadcast %11 : vector<1x128xf32> to vector<8x128xf32>
    %1626 = arith.addf %1624, %1625 : vector<8x128xf32>
    %cst_157 = arith.constant 0.000000e+00 : f32
    %1627 = vector.broadcast %cst_157 : f32 to vector<8x128xf32>
    %1628 = arith.maximumf %1626, %1627 : vector<8x128xf32>
    %1629 = arith.maximumf %1622, %1628 : vector<8x128xf32>
    %c16_i32_158 = arith.constant 16 : i32
    %1630 = arith.muli %arg1, %c16_i32_158 : i32
    %c9_i32 = arith.constant 9 : i32
    %1631 = arith.addi %1630, %c9_i32 : i32
    %1632 = vector.extract_strided_slice %4 {offsets = [0, 36], sizes = [8, 1], strides = [1, 1]} : vector<8x128xf32> to vector<8x1xf32>
    %1633 = vector.broadcast %1632 : vector<8x1xf32> to vector<8x64xf32>
    %1634 = vector.broadcast %6 : vector<1x64xf32> to vector<8x64xf32>
    %1635 = arith.mulf %1633, %1634 : vector<8x64xf32>
    %1636 = vector.extract_strided_slice %4 {offsets = [0, 37], sizes = [8, 1], strides = [1, 1]} : vector<8x128xf32> to vector<8x1xf32>
    %1637 = vector.broadcast %1636 : vector<8x1xf32> to vector<8x64xf32>
    %1638 = vector.broadcast %7 : vector<1x64xf32> to vector<8x64xf32>
    %1639 = arith.mulf %1637, %1638 : vector<8x64xf32>
    %1640 = arith.addf %1635, %1639 : vector<8x64xf32>
    %1641 = vector.extract_strided_slice %4 {offsets = [0, 38], sizes = [8, 1], strides = [1, 1]} : vector<8x128xf32> to vector<8x1xf32>
    %1642 = vector.broadcast %1641 : vector<8x1xf32> to vector<8x64xf32>
    %1643 = vector.broadcast %8 : vector<1x64xf32> to vector<8x64xf32>
    %1644 = arith.mulf %1642, %1643 : vector<8x64xf32>
    %1645 = arith.addf %1640, %1644 : vector<8x64xf32>
    %1646 = vector.broadcast %9 : vector<1x64xf32> to vector<8x64xf32>
    %1647 = arith.addf %1645, %1646 : vector<8x64xf32>
    %cst_159 = arith.constant 0.000000e+00 : f32
    %1648 = vector.broadcast %cst_159 : f32 to vector<8x64xf32>
    %1649 = arith.maximumf %1647, %1648 : vector<8x64xf32>
    %1650 = vector.extract_strided_slice %4 {offsets = [0, 37], sizes = [8, 1], strides = [1, 1]} : vector<8x128xf32> to vector<8x1xf32>
    %1651 = vector.broadcast %1650 : vector<8x1xf32> to vector<8x64xf32>
    %1652 = vector.broadcast %6 : vector<1x64xf32> to vector<8x64xf32>
    %1653 = arith.mulf %1651, %1652 : vector<8x64xf32>
    %1654 = vector.extract_strided_slice %4 {offsets = [0, 38], sizes = [8, 1], strides = [1, 1]} : vector<8x128xf32> to vector<8x1xf32>
    %1655 = vector.broadcast %1654 : vector<8x1xf32> to vector<8x64xf32>
    %1656 = vector.broadcast %7 : vector<1x64xf32> to vector<8x64xf32>
    %1657 = arith.mulf %1655, %1656 : vector<8x64xf32>
    %1658 = arith.addf %1653, %1657 : vector<8x64xf32>
    %1659 = vector.extract_strided_slice %4 {offsets = [0, 39], sizes = [8, 1], strides = [1, 1]} : vector<8x128xf32> to vector<8x1xf32>
    %1660 = vector.broadcast %1659 : vector<8x1xf32> to vector<8x64xf32>
    %1661 = vector.broadcast %8 : vector<1x64xf32> to vector<8x64xf32>
    %1662 = arith.mulf %1660, %1661 : vector<8x64xf32>
    %1663 = arith.addf %1658, %1662 : vector<8x64xf32>
    %1664 = vector.broadcast %9 : vector<1x64xf32> to vector<8x64xf32>
    %1665 = arith.addf %1663, %1664 : vector<8x64xf32>
    %cst_160 = arith.constant 0.000000e+00 : f32
    %1666 = vector.broadcast %cst_160 : f32 to vector<8x64xf32>
    %1667 = arith.maximumf %1665, %1666 : vector<8x64xf32>
    %1668 = arith.maximumf %1649, %1667 : vector<8x64xf32>
    %1669 = vector.extract_strided_slice %4 {offsets = [0, 38], sizes = [8, 1], strides = [1, 1]} : vector<8x128xf32> to vector<8x1xf32>
    %1670 = vector.broadcast %1669 : vector<8x1xf32> to vector<8x64xf32>
    %1671 = vector.broadcast %6 : vector<1x64xf32> to vector<8x64xf32>
    %1672 = arith.mulf %1670, %1671 : vector<8x64xf32>
    %1673 = vector.extract_strided_slice %4 {offsets = [0, 39], sizes = [8, 1], strides = [1, 1]} : vector<8x128xf32> to vector<8x1xf32>
    %1674 = vector.broadcast %1673 : vector<8x1xf32> to vector<8x64xf32>
    %1675 = vector.broadcast %7 : vector<1x64xf32> to vector<8x64xf32>
    %1676 = arith.mulf %1674, %1675 : vector<8x64xf32>
    %1677 = arith.addf %1672, %1676 : vector<8x64xf32>
    %1678 = vector.extract_strided_slice %4 {offsets = [0, 40], sizes = [8, 1], strides = [1, 1]} : vector<8x128xf32> to vector<8x1xf32>
    %1679 = vector.broadcast %1678 : vector<8x1xf32> to vector<8x64xf32>
    %1680 = vector.broadcast %8 : vector<1x64xf32> to vector<8x64xf32>
    %1681 = arith.mulf %1679, %1680 : vector<8x64xf32>
    %1682 = arith.addf %1677, %1681 : vector<8x64xf32>
    %1683 = vector.broadcast %9 : vector<1x64xf32> to vector<8x64xf32>
    %1684 = arith.addf %1682, %1683 : vector<8x64xf32>
    %cst_161 = arith.constant 0.000000e+00 : f32
    %1685 = vector.broadcast %cst_161 : f32 to vector<8x64xf32>
    %1686 = arith.maximumf %1684, %1685 : vector<8x64xf32>
    %1687 = vector.extract_strided_slice %4 {offsets = [0, 39], sizes = [8, 1], strides = [1, 1]} : vector<8x128xf32> to vector<8x1xf32>
    %1688 = vector.broadcast %1687 : vector<8x1xf32> to vector<8x64xf32>
    %1689 = vector.broadcast %6 : vector<1x64xf32> to vector<8x64xf32>
    %1690 = arith.mulf %1688, %1689 : vector<8x64xf32>
    %1691 = vector.extract_strided_slice %4 {offsets = [0, 40], sizes = [8, 1], strides = [1, 1]} : vector<8x128xf32> to vector<8x1xf32>
    %1692 = vector.broadcast %1691 : vector<8x1xf32> to vector<8x64xf32>
    %1693 = vector.broadcast %7 : vector<1x64xf32> to vector<8x64xf32>
    %1694 = arith.mulf %1692, %1693 : vector<8x64xf32>
    %1695 = arith.addf %1690, %1694 : vector<8x64xf32>
    %1696 = vector.extract_strided_slice %4 {offsets = [0, 41], sizes = [8, 1], strides = [1, 1]} : vector<8x128xf32> to vector<8x1xf32>
    %1697 = vector.broadcast %1696 : vector<8x1xf32> to vector<8x64xf32>
    %1698 = vector.broadcast %8 : vector<1x64xf32> to vector<8x64xf32>
    %1699 = arith.mulf %1697, %1698 : vector<8x64xf32>
    %1700 = arith.addf %1695, %1699 : vector<8x64xf32>
    %1701 = vector.broadcast %9 : vector<1x64xf32> to vector<8x64xf32>
    %1702 = arith.addf %1700, %1701 : vector<8x64xf32>
    %cst_162 = arith.constant 0.000000e+00 : f32
    %1703 = vector.broadcast %cst_162 : f32 to vector<8x64xf32>
    %1704 = arith.maximumf %1702, %1703 : vector<8x64xf32>
    %1705 = arith.maximumf %1686, %1704 : vector<8x64xf32>
    %1706 = vector.extract_strided_slice %4 {offsets = [0, 40], sizes = [8, 1], strides = [1, 1]} : vector<8x128xf32> to vector<8x1xf32>
    %1707 = vector.broadcast %1706 : vector<8x1xf32> to vector<8x64xf32>
    %1708 = vector.broadcast %6 : vector<1x64xf32> to vector<8x64xf32>
    %1709 = arith.mulf %1707, %1708 : vector<8x64xf32>
    %1710 = vector.extract_strided_slice %4 {offsets = [0, 41], sizes = [8, 1], strides = [1, 1]} : vector<8x128xf32> to vector<8x1xf32>
    %1711 = vector.broadcast %1710 : vector<8x1xf32> to vector<8x64xf32>
    %1712 = vector.broadcast %7 : vector<1x64xf32> to vector<8x64xf32>
    %1713 = arith.mulf %1711, %1712 : vector<8x64xf32>
    %1714 = arith.addf %1709, %1713 : vector<8x64xf32>
    %1715 = vector.extract_strided_slice %4 {offsets = [0, 42], sizes = [8, 1], strides = [1, 1]} : vector<8x128xf32> to vector<8x1xf32>
    %1716 = vector.broadcast %1715 : vector<8x1xf32> to vector<8x64xf32>
    %1717 = vector.broadcast %8 : vector<1x64xf32> to vector<8x64xf32>
    %1718 = arith.mulf %1716, %1717 : vector<8x64xf32>
    %1719 = arith.addf %1714, %1718 : vector<8x64xf32>
    %1720 = vector.broadcast %9 : vector<1x64xf32> to vector<8x64xf32>
    %1721 = arith.addf %1719, %1720 : vector<8x64xf32>
    %cst_163 = arith.constant 0.000000e+00 : f32
    %1722 = vector.broadcast %cst_163 : f32 to vector<8x64xf32>
    %1723 = arith.maximumf %1721, %1722 : vector<8x64xf32>
    %1724 = vector.extract_strided_slice %4 {offsets = [0, 41], sizes = [8, 1], strides = [1, 1]} : vector<8x128xf32> to vector<8x1xf32>
    %1725 = vector.broadcast %1724 : vector<8x1xf32> to vector<8x64xf32>
    %1726 = vector.broadcast %6 : vector<1x64xf32> to vector<8x64xf32>
    %1727 = arith.mulf %1725, %1726 : vector<8x64xf32>
    %1728 = vector.extract_strided_slice %4 {offsets = [0, 42], sizes = [8, 1], strides = [1, 1]} : vector<8x128xf32> to vector<8x1xf32>
    %1729 = vector.broadcast %1728 : vector<8x1xf32> to vector<8x64xf32>
    %1730 = vector.broadcast %7 : vector<1x64xf32> to vector<8x64xf32>
    %1731 = arith.mulf %1729, %1730 : vector<8x64xf32>
    %1732 = arith.addf %1727, %1731 : vector<8x64xf32>
    %1733 = vector.extract_strided_slice %4 {offsets = [0, 43], sizes = [8, 1], strides = [1, 1]} : vector<8x128xf32> to vector<8x1xf32>
    %1734 = vector.broadcast %1733 : vector<8x1xf32> to vector<8x64xf32>
    %1735 = vector.broadcast %8 : vector<1x64xf32> to vector<8x64xf32>
    %1736 = arith.mulf %1734, %1735 : vector<8x64xf32>
    %1737 = arith.addf %1732, %1736 : vector<8x64xf32>
    %1738 = vector.broadcast %9 : vector<1x64xf32> to vector<8x64xf32>
    %1739 = arith.addf %1737, %1738 : vector<8x64xf32>
    %cst_164 = arith.constant 0.000000e+00 : f32
    %1740 = vector.broadcast %cst_164 : f32 to vector<8x64xf32>
    %1741 = arith.maximumf %1739, %1740 : vector<8x64xf32>
    %1742 = arith.maximumf %1723, %1741 : vector<8x64xf32>
    %1743 = vector.extract_strided_slice %4 {offsets = [0, 42], sizes = [8, 1], strides = [1, 1]} : vector<8x128xf32> to vector<8x1xf32>
    %1744 = vector.broadcast %1743 : vector<8x1xf32> to vector<8x64xf32>
    %1745 = vector.broadcast %6 : vector<1x64xf32> to vector<8x64xf32>
    %1746 = arith.mulf %1744, %1745 : vector<8x64xf32>
    %1747 = vector.extract_strided_slice %4 {offsets = [0, 43], sizes = [8, 1], strides = [1, 1]} : vector<8x128xf32> to vector<8x1xf32>
    %1748 = vector.broadcast %1747 : vector<8x1xf32> to vector<8x64xf32>
    %1749 = vector.broadcast %7 : vector<1x64xf32> to vector<8x64xf32>
    %1750 = arith.mulf %1748, %1749 : vector<8x64xf32>
    %1751 = arith.addf %1746, %1750 : vector<8x64xf32>
    %1752 = vector.extract_strided_slice %4 {offsets = [0, 44], sizes = [8, 1], strides = [1, 1]} : vector<8x128xf32> to vector<8x1xf32>
    %1753 = vector.broadcast %1752 : vector<8x1xf32> to vector<8x64xf32>
    %1754 = vector.broadcast %8 : vector<1x64xf32> to vector<8x64xf32>
    %1755 = arith.mulf %1753, %1754 : vector<8x64xf32>
    %1756 = arith.addf %1751, %1755 : vector<8x64xf32>
    %1757 = vector.broadcast %9 : vector<1x64xf32> to vector<8x64xf32>
    %1758 = arith.addf %1756, %1757 : vector<8x64xf32>
    %cst_165 = arith.constant 0.000000e+00 : f32
    %1759 = vector.broadcast %cst_165 : f32 to vector<8x64xf32>
    %1760 = arith.maximumf %1758, %1759 : vector<8x64xf32>
    %1761 = vector.extract_strided_slice %4 {offsets = [0, 43], sizes = [8, 1], strides = [1, 1]} : vector<8x128xf32> to vector<8x1xf32>
    %1762 = vector.broadcast %1761 : vector<8x1xf32> to vector<8x64xf32>
    %1763 = vector.broadcast %6 : vector<1x64xf32> to vector<8x64xf32>
    %1764 = arith.mulf %1762, %1763 : vector<8x64xf32>
    %1765 = vector.extract_strided_slice %4 {offsets = [0, 44], sizes = [8, 1], strides = [1, 1]} : vector<8x128xf32> to vector<8x1xf32>
    %1766 = vector.broadcast %1765 : vector<8x1xf32> to vector<8x64xf32>
    %1767 = vector.broadcast %7 : vector<1x64xf32> to vector<8x64xf32>
    %1768 = arith.mulf %1766, %1767 : vector<8x64xf32>
    %1769 = arith.addf %1764, %1768 : vector<8x64xf32>
    %1770 = vector.extract_strided_slice %4 {offsets = [0, 45], sizes = [8, 1], strides = [1, 1]} : vector<8x128xf32> to vector<8x1xf32>
    %1771 = vector.broadcast %1770 : vector<8x1xf32> to vector<8x64xf32>
    %1772 = vector.broadcast %8 : vector<1x64xf32> to vector<8x64xf32>
    %1773 = arith.mulf %1771, %1772 : vector<8x64xf32>
    %1774 = arith.addf %1769, %1773 : vector<8x64xf32>
    %1775 = vector.broadcast %9 : vector<1x64xf32> to vector<8x64xf32>
    %1776 = arith.addf %1774, %1775 : vector<8x64xf32>
    %cst_166 = arith.constant 0.000000e+00 : f32
    %1777 = vector.broadcast %cst_166 : f32 to vector<8x64xf32>
    %1778 = arith.maximumf %1776, %1777 : vector<8x64xf32>
    %1779 = arith.maximumf %1760, %1778 : vector<8x64xf32>
    %c0_i32_167 = arith.constant 0 : i32
    %1780 = arith.cmpi sgt, %1631, %c0_i32_167 : i32
    %1781 = arith.extui %1780 : i1 to i32
    %1782 = arith.sitofp %1781 : i32 to f32
    %1783 = vector.broadcast %1782 : f32 to vector<8x64xf32>
    %1784 = arith.mulf %1668, %1783 : vector<8x64xf32>
    %c15_i32_168 = arith.constant 15 : i32
    %1785 = arith.cmpi slt, %1631, %c15_i32_168 : i32
    %1786 = arith.extui %1785 : i1 to i32
    %1787 = arith.sitofp %1786 : i32 to f32
    %1788 = vector.broadcast %1787 : f32 to vector<8x64xf32>
    %1789 = arith.mulf %1779, %1788 : vector<8x64xf32>
    %1790 = arith.truncf %1784 : vector<8x64xf32> to vector<8x64xbf16>
    %1791 = arith.truncf %1705 : vector<8x64xf32> to vector<8x64xbf16>
    %1792 = arith.truncf %1742 : vector<8x64xf32> to vector<8x64xbf16>
    %1793 = arith.truncf %1789 : vector<8x64xf32> to vector<8x64xbf16>
    %1794 = tpu.concatenate %1790, %1791, %1792 in 1 : vector<8x64xbf16>, vector<8x64xbf16>, vector<8x64xbf16> -> vector<8x192xbf16>
    %cst_169 = arith.constant dense<0.000000e+00> : vector<8x128xf32>
    %1795 = tpu.matmul %1794, %10, %cst_169 {dimension_numbers = #tpu.dot_dimension_numbers<[1], [0], [0], [1], [0, 0, 1, 1], [], []>} : vector<8x192xbf16>, vector<192x128xbf16>, vector<8x128xf32> -> vector<8x128xf32>
    %1796 = vector.broadcast %11 : vector<1x128xf32> to vector<8x128xf32>
    %1797 = arith.addf %1795, %1796 : vector<8x128xf32>
    %cst_170 = arith.constant 0.000000e+00 : f32
    %1798 = vector.broadcast %cst_170 : f32 to vector<8x128xf32>
    %1799 = arith.maximumf %1797, %1798 : vector<8x128xf32>
    %1800 = tpu.concatenate %1791, %1792, %1793 in 1 : vector<8x64xbf16>, vector<8x64xbf16>, vector<8x64xbf16> -> vector<8x192xbf16>
    %cst_171 = arith.constant dense<0.000000e+00> : vector<8x128xf32>
    %1801 = tpu.matmul %1800, %10, %cst_171 {dimension_numbers = #tpu.dot_dimension_numbers<[1], [0], [0], [1], [0, 0, 1, 1], [], []>} : vector<8x192xbf16>, vector<192x128xbf16>, vector<8x128xf32> -> vector<8x128xf32>
    %1802 = vector.broadcast %11 : vector<1x128xf32> to vector<8x128xf32>
    %1803 = arith.addf %1801, %1802 : vector<8x128xf32>
    %cst_172 = arith.constant 0.000000e+00 : f32
    %1804 = vector.broadcast %cst_172 : f32 to vector<8x128xf32>
    %1805 = arith.maximumf %1803, %1804 : vector<8x128xf32>
    %1806 = arith.maximumf %1799, %1805 : vector<8x128xf32>
    %1807 = tpu.concatenate %1629, %1806 in 1 : vector<8x128xf32>, vector<8x128xf32> -> vector<8x256xf32>
    %1808 = arith.truncf %1807 : vector<8x256xf32> to vector<8x256xbf16>
    %c4 = arith.constant 4 : index
    %c0_173 = arith.constant 0 : index
    %c0_174 = arith.constant 0 : index
    %1809 = vector.load %arg6[%c4, %c0_173, %c0_174] : memref<8x256x128xbf16, #tpu.memory_space<vmem>>, vector<1x256x128xbf16>
    %1810 = vector.shape_cast %1809 : vector<1x256x128xbf16> to vector<256x128xbf16>
    %cst_175 = arith.constant dense<0.000000e+00> : vector<8x128xf32>
    %1811 = tpu.matmul %1808, %1810, %cst_175 {dimension_numbers = #tpu.dot_dimension_numbers<[1], [0], [0], [1], [0, 0, 1, 1], [], []>} : vector<8x256xbf16>, vector<256x128xbf16>, vector<8x128xf32> -> vector<8x128xf32>
    %1812 = arith.addf %1452, %1811 : vector<8x128xf32>
    %c16_i32_176 = arith.constant 16 : i32
    %1813 = arith.muli %arg1, %c16_i32_176 : i32
    %c10_i32 = arith.constant 10 : i32
    %1814 = arith.addi %1813, %c10_i32 : i32
    %1815 = vector.extract_strided_slice %4 {offsets = [0, 40], sizes = [8, 1], strides = [1, 1]} : vector<8x128xf32> to vector<8x1xf32>
    %1816 = vector.broadcast %1815 : vector<8x1xf32> to vector<8x64xf32>
    %1817 = vector.broadcast %6 : vector<1x64xf32> to vector<8x64xf32>
    %1818 = arith.mulf %1816, %1817 : vector<8x64xf32>
    %1819 = vector.extract_strided_slice %4 {offsets = [0, 41], sizes = [8, 1], strides = [1, 1]} : vector<8x128xf32> to vector<8x1xf32>
    %1820 = vector.broadcast %1819 : vector<8x1xf32> to vector<8x64xf32>
    %1821 = vector.broadcast %7 : vector<1x64xf32> to vector<8x64xf32>
    %1822 = arith.mulf %1820, %1821 : vector<8x64xf32>
    %1823 = arith.addf %1818, %1822 : vector<8x64xf32>
    %1824 = vector.extract_strided_slice %4 {offsets = [0, 42], sizes = [8, 1], strides = [1, 1]} : vector<8x128xf32> to vector<8x1xf32>
    %1825 = vector.broadcast %1824 : vector<8x1xf32> to vector<8x64xf32>
    %1826 = vector.broadcast %8 : vector<1x64xf32> to vector<8x64xf32>
    %1827 = arith.mulf %1825, %1826 : vector<8x64xf32>
    %1828 = arith.addf %1823, %1827 : vector<8x64xf32>
    %1829 = vector.broadcast %9 : vector<1x64xf32> to vector<8x64xf32>
    %1830 = arith.addf %1828, %1829 : vector<8x64xf32>
    %cst_177 = arith.constant 0.000000e+00 : f32
    %1831 = vector.broadcast %cst_177 : f32 to vector<8x64xf32>
    %1832 = arith.maximumf %1830, %1831 : vector<8x64xf32>
    %1833 = vector.extract_strided_slice %4 {offsets = [0, 41], sizes = [8, 1], strides = [1, 1]} : vector<8x128xf32> to vector<8x1xf32>
    %1834 = vector.broadcast %1833 : vector<8x1xf32> to vector<8x64xf32>
    %1835 = vector.broadcast %6 : vector<1x64xf32> to vector<8x64xf32>
    %1836 = arith.mulf %1834, %1835 : vector<8x64xf32>
    %1837 = vector.extract_strided_slice %4 {offsets = [0, 42], sizes = [8, 1], strides = [1, 1]} : vector<8x128xf32> to vector<8x1xf32>
    %1838 = vector.broadcast %1837 : vector<8x1xf32> to vector<8x64xf32>
    %1839 = vector.broadcast %7 : vector<1x64xf32> to vector<8x64xf32>
    %1840 = arith.mulf %1838, %1839 : vector<8x64xf32>
    %1841 = arith.addf %1836, %1840 : vector<8x64xf32>
    %1842 = vector.extract_strided_slice %4 {offsets = [0, 43], sizes = [8, 1], strides = [1, 1]} : vector<8x128xf32> to vector<8x1xf32>
    %1843 = vector.broadcast %1842 : vector<8x1xf32> to vector<8x64xf32>
    %1844 = vector.broadcast %8 : vector<1x64xf32> to vector<8x64xf32>
    %1845 = arith.mulf %1843, %1844 : vector<8x64xf32>
    %1846 = arith.addf %1841, %1845 : vector<8x64xf32>
    %1847 = vector.broadcast %9 : vector<1x64xf32> to vector<8x64xf32>
    %1848 = arith.addf %1846, %1847 : vector<8x64xf32>
    %cst_178 = arith.constant 0.000000e+00 : f32
    %1849 = vector.broadcast %cst_178 : f32 to vector<8x64xf32>
    %1850 = arith.maximumf %1848, %1849 : vector<8x64xf32>
    %1851 = arith.maximumf %1832, %1850 : vector<8x64xf32>
    %1852 = vector.extract_strided_slice %4 {offsets = [0, 42], sizes = [8, 1], strides = [1, 1]} : vector<8x128xf32> to vector<8x1xf32>
    %1853 = vector.broadcast %1852 : vector<8x1xf32> to vector<8x64xf32>
    %1854 = vector.broadcast %6 : vector<1x64xf32> to vector<8x64xf32>
    %1855 = arith.mulf %1853, %1854 : vector<8x64xf32>
    %1856 = vector.extract_strided_slice %4 {offsets = [0, 43], sizes = [8, 1], strides = [1, 1]} : vector<8x128xf32> to vector<8x1xf32>
    %1857 = vector.broadcast %1856 : vector<8x1xf32> to vector<8x64xf32>
    %1858 = vector.broadcast %7 : vector<1x64xf32> to vector<8x64xf32>
    %1859 = arith.mulf %1857, %1858 : vector<8x64xf32>
    %1860 = arith.addf %1855, %1859 : vector<8x64xf32>
    %1861 = vector.extract_strided_slice %4 {offsets = [0, 44], sizes = [8, 1], strides = [1, 1]} : vector<8x128xf32> to vector<8x1xf32>
    %1862 = vector.broadcast %1861 : vector<8x1xf32> to vector<8x64xf32>
    %1863 = vector.broadcast %8 : vector<1x64xf32> to vector<8x64xf32>
    %1864 = arith.mulf %1862, %1863 : vector<8x64xf32>
    %1865 = arith.addf %1860, %1864 : vector<8x64xf32>
    %1866 = vector.broadcast %9 : vector<1x64xf32> to vector<8x64xf32>
    %1867 = arith.addf %1865, %1866 : vector<8x64xf32>
    %cst_179 = arith.constant 0.000000e+00 : f32
    %1868 = vector.broadcast %cst_179 : f32 to vector<8x64xf32>
    %1869 = arith.maximumf %1867, %1868 : vector<8x64xf32>
    %1870 = vector.extract_strided_slice %4 {offsets = [0, 43], sizes = [8, 1], strides = [1, 1]} : vector<8x128xf32> to vector<8x1xf32>
    %1871 = vector.broadcast %1870 : vector<8x1xf32> to vector<8x64xf32>
    %1872 = vector.broadcast %6 : vector<1x64xf32> to vector<8x64xf32>
    %1873 = arith.mulf %1871, %1872 : vector<8x64xf32>
    %1874 = vector.extract_strided_slice %4 {offsets = [0, 44], sizes = [8, 1], strides = [1, 1]} : vector<8x128xf32> to vector<8x1xf32>
    %1875 = vector.broadcast %1874 : vector<8x1xf32> to vector<8x64xf32>
    %1876 = vector.broadcast %7 : vector<1x64xf32> to vector<8x64xf32>
    %1877 = arith.mulf %1875, %1876 : vector<8x64xf32>
    %1878 = arith.addf %1873, %1877 : vector<8x64xf32>
    %1879 = vector.extract_strided_slice %4 {offsets = [0, 45], sizes = [8, 1], strides = [1, 1]} : vector<8x128xf32> to vector<8x1xf32>
    %1880 = vector.broadcast %1879 : vector<8x1xf32> to vector<8x64xf32>
    %1881 = vector.broadcast %8 : vector<1x64xf32> to vector<8x64xf32>
    %1882 = arith.mulf %1880, %1881 : vector<8x64xf32>
    %1883 = arith.addf %1878, %1882 : vector<8x64xf32>
    %1884 = vector.broadcast %9 : vector<1x64xf32> to vector<8x64xf32>
    %1885 = arith.addf %1883, %1884 : vector<8x64xf32>
    %cst_180 = arith.constant 0.000000e+00 : f32
    %1886 = vector.broadcast %cst_180 : f32 to vector<8x64xf32>
    %1887 = arith.maximumf %1885, %1886 : vector<8x64xf32>
    %1888 = arith.maximumf %1869, %1887 : vector<8x64xf32>
    %1889 = vector.extract_strided_slice %4 {offsets = [0, 44], sizes = [8, 1], strides = [1, 1]} : vector<8x128xf32> to vector<8x1xf32>
    %1890 = vector.broadcast %1889 : vector<8x1xf32> to vector<8x64xf32>
    %1891 = vector.broadcast %6 : vector<1x64xf32> to vector<8x64xf32>
    %1892 = arith.mulf %1890, %1891 : vector<8x64xf32>
    %1893 = vector.extract_strided_slice %4 {offsets = [0, 45], sizes = [8, 1], strides = [1, 1]} : vector<8x128xf32> to vector<8x1xf32>
    %1894 = vector.broadcast %1893 : vector<8x1xf32> to vector<8x64xf32>
    %1895 = vector.broadcast %7 : vector<1x64xf32> to vector<8x64xf32>
    %1896 = arith.mulf %1894, %1895 : vector<8x64xf32>
    %1897 = arith.addf %1892, %1896 : vector<8x64xf32>
    %1898 = vector.extract_strided_slice %4 {offsets = [0, 46], sizes = [8, 1], strides = [1, 1]} : vector<8x128xf32> to vector<8x1xf32>
    %1899 = vector.broadcast %1898 : vector<8x1xf32> to vector<8x64xf32>
    %1900 = vector.broadcast %8 : vector<1x64xf32> to vector<8x64xf32>
    %1901 = arith.mulf %1899, %1900 : vector<8x64xf32>
    %1902 = arith.addf %1897, %1901 : vector<8x64xf32>
    %1903 = vector.broadcast %9 : vector<1x64xf32> to vector<8x64xf32>
    %1904 = arith.addf %1902, %1903 : vector<8x64xf32>
    %cst_181 = arith.constant 0.000000e+00 : f32
    %1905 = vector.broadcast %cst_181 : f32 to vector<8x64xf32>
    %1906 = arith.maximumf %1904, %1905 : vector<8x64xf32>
    %1907 = vector.extract_strided_slice %4 {offsets = [0, 45], sizes = [8, 1], strides = [1, 1]} : vector<8x128xf32> to vector<8x1xf32>
    %1908 = vector.broadcast %1907 : vector<8x1xf32> to vector<8x64xf32>
    %1909 = vector.broadcast %6 : vector<1x64xf32> to vector<8x64xf32>
    %1910 = arith.mulf %1908, %1909 : vector<8x64xf32>
    %1911 = vector.extract_strided_slice %4 {offsets = [0, 46], sizes = [8, 1], strides = [1, 1]} : vector<8x128xf32> to vector<8x1xf32>
    %1912 = vector.broadcast %1911 : vector<8x1xf32> to vector<8x64xf32>
    %1913 = vector.broadcast %7 : vector<1x64xf32> to vector<8x64xf32>
    %1914 = arith.mulf %1912, %1913 : vector<8x64xf32>
    %1915 = arith.addf %1910, %1914 : vector<8x64xf32>
    %1916 = vector.extract_strided_slice %4 {offsets = [0, 47], sizes = [8, 1], strides = [1, 1]} : vector<8x128xf32> to vector<8x1xf32>
    %1917 = vector.broadcast %1916 : vector<8x1xf32> to vector<8x64xf32>
    %1918 = vector.broadcast %8 : vector<1x64xf32> to vector<8x64xf32>
    %1919 = arith.mulf %1917, %1918 : vector<8x64xf32>
    %1920 = arith.addf %1915, %1919 : vector<8x64xf32>
    %1921 = vector.broadcast %9 : vector<1x64xf32> to vector<8x64xf32>
    %1922 = arith.addf %1920, %1921 : vector<8x64xf32>
    %cst_182 = arith.constant 0.000000e+00 : f32
    %1923 = vector.broadcast %cst_182 : f32 to vector<8x64xf32>
    %1924 = arith.maximumf %1922, %1923 : vector<8x64xf32>
    %1925 = arith.maximumf %1906, %1924 : vector<8x64xf32>
    %1926 = vector.extract_strided_slice %4 {offsets = [0, 46], sizes = [8, 1], strides = [1, 1]} : vector<8x128xf32> to vector<8x1xf32>
    %1927 = vector.broadcast %1926 : vector<8x1xf32> to vector<8x64xf32>
    %1928 = vector.broadcast %6 : vector<1x64xf32> to vector<8x64xf32>
    %1929 = arith.mulf %1927, %1928 : vector<8x64xf32>
    %1930 = vector.extract_strided_slice %4 {offsets = [0, 47], sizes = [8, 1], strides = [1, 1]} : vector<8x128xf32> to vector<8x1xf32>
    %1931 = vector.broadcast %1930 : vector<8x1xf32> to vector<8x64xf32>
    %1932 = vector.broadcast %7 : vector<1x64xf32> to vector<8x64xf32>
    %1933 = arith.mulf %1931, %1932 : vector<8x64xf32>
    %1934 = arith.addf %1929, %1933 : vector<8x64xf32>
    %1935 = vector.extract_strided_slice %4 {offsets = [0, 48], sizes = [8, 1], strides = [1, 1]} : vector<8x128xf32> to vector<8x1xf32>
    %1936 = vector.broadcast %1935 : vector<8x1xf32> to vector<8x64xf32>
    %1937 = vector.broadcast %8 : vector<1x64xf32> to vector<8x64xf32>
    %1938 = arith.mulf %1936, %1937 : vector<8x64xf32>
    %1939 = arith.addf %1934, %1938 : vector<8x64xf32>
    %1940 = vector.broadcast %9 : vector<1x64xf32> to vector<8x64xf32>
    %1941 = arith.addf %1939, %1940 : vector<8x64xf32>
    %cst_183 = arith.constant 0.000000e+00 : f32
    %1942 = vector.broadcast %cst_183 : f32 to vector<8x64xf32>
    %1943 = arith.maximumf %1941, %1942 : vector<8x64xf32>
    %1944 = vector.extract_strided_slice %4 {offsets = [0, 47], sizes = [8, 1], strides = [1, 1]} : vector<8x128xf32> to vector<8x1xf32>
    %1945 = vector.broadcast %1944 : vector<8x1xf32> to vector<8x64xf32>
    %1946 = vector.broadcast %6 : vector<1x64xf32> to vector<8x64xf32>
    %1947 = arith.mulf %1945, %1946 : vector<8x64xf32>
    %1948 = vector.extract_strided_slice %4 {offsets = [0, 48], sizes = [8, 1], strides = [1, 1]} : vector<8x128xf32> to vector<8x1xf32>
    %1949 = vector.broadcast %1948 : vector<8x1xf32> to vector<8x64xf32>
    %1950 = vector.broadcast %7 : vector<1x64xf32> to vector<8x64xf32>
    %1951 = arith.mulf %1949, %1950 : vector<8x64xf32>
    %1952 = arith.addf %1947, %1951 : vector<8x64xf32>
    %1953 = vector.extract_strided_slice %4 {offsets = [0, 49], sizes = [8, 1], strides = [1, 1]} : vector<8x128xf32> to vector<8x1xf32>
    %1954 = vector.broadcast %1953 : vector<8x1xf32> to vector<8x64xf32>
    %1955 = vector.broadcast %8 : vector<1x64xf32> to vector<8x64xf32>
    %1956 = arith.mulf %1954, %1955 : vector<8x64xf32>
    %1957 = arith.addf %1952, %1956 : vector<8x64xf32>
    %1958 = vector.broadcast %9 : vector<1x64xf32> to vector<8x64xf32>
    %1959 = arith.addf %1957, %1958 : vector<8x64xf32>
    %cst_184 = arith.constant 0.000000e+00 : f32
    %1960 = vector.broadcast %cst_184 : f32 to vector<8x64xf32>
    %1961 = arith.maximumf %1959, %1960 : vector<8x64xf32>
    %1962 = arith.maximumf %1943, %1961 : vector<8x64xf32>
    %c0_i32_185 = arith.constant 0 : i32
    %1963 = arith.cmpi sgt, %1814, %c0_i32_185 : i32
    %1964 = arith.extui %1963 : i1 to i32
    %1965 = arith.sitofp %1964 : i32 to f32
    %1966 = vector.broadcast %1965 : f32 to vector<8x64xf32>
    %1967 = arith.mulf %1851, %1966 : vector<8x64xf32>
    %c15_i32_186 = arith.constant 15 : i32
    %1968 = arith.cmpi slt, %1814, %c15_i32_186 : i32
    %1969 = arith.extui %1968 : i1 to i32
    %1970 = arith.sitofp %1969 : i32 to f32
    %1971 = vector.broadcast %1970 : f32 to vector<8x64xf32>
    %1972 = arith.mulf %1962, %1971 : vector<8x64xf32>
    %1973 = arith.truncf %1967 : vector<8x64xf32> to vector<8x64xbf16>
    %1974 = arith.truncf %1888 : vector<8x64xf32> to vector<8x64xbf16>
    %1975 = arith.truncf %1925 : vector<8x64xf32> to vector<8x64xbf16>
    %1976 = arith.truncf %1972 : vector<8x64xf32> to vector<8x64xbf16>
    %1977 = tpu.concatenate %1973, %1974, %1975 in 1 : vector<8x64xbf16>, vector<8x64xbf16>, vector<8x64xbf16> -> vector<8x192xbf16>
    %cst_187 = arith.constant dense<0.000000e+00> : vector<8x128xf32>
    %1978 = tpu.matmul %1977, %10, %cst_187 {dimension_numbers = #tpu.dot_dimension_numbers<[1], [0], [0], [1], [0, 0, 1, 1], [], []>} : vector<8x192xbf16>, vector<192x128xbf16>, vector<8x128xf32> -> vector<8x128xf32>
    %1979 = vector.broadcast %11 : vector<1x128xf32> to vector<8x128xf32>
    %1980 = arith.addf %1978, %1979 : vector<8x128xf32>
    %cst_188 = arith.constant 0.000000e+00 : f32
    %1981 = vector.broadcast %cst_188 : f32 to vector<8x128xf32>
    %1982 = arith.maximumf %1980, %1981 : vector<8x128xf32>
    %1983 = tpu.concatenate %1974, %1975, %1976 in 1 : vector<8x64xbf16>, vector<8x64xbf16>, vector<8x64xbf16> -> vector<8x192xbf16>
    %cst_189 = arith.constant dense<0.000000e+00> : vector<8x128xf32>
    %1984 = tpu.matmul %1983, %10, %cst_189 {dimension_numbers = #tpu.dot_dimension_numbers<[1], [0], [0], [1], [0, 0, 1, 1], [], []>} : vector<8x192xbf16>, vector<192x128xbf16>, vector<8x128xf32> -> vector<8x128xf32>
    %1985 = vector.broadcast %11 : vector<1x128xf32> to vector<8x128xf32>
    %1986 = arith.addf %1984, %1985 : vector<8x128xf32>
    %cst_190 = arith.constant 0.000000e+00 : f32
    %1987 = vector.broadcast %cst_190 : f32 to vector<8x128xf32>
    %1988 = arith.maximumf %1986, %1987 : vector<8x128xf32>
    %1989 = arith.maximumf %1982, %1988 : vector<8x128xf32>
    %c16_i32_191 = arith.constant 16 : i32
    %1990 = arith.muli %arg1, %c16_i32_191 : i32
    %c11_i32 = arith.constant 11 : i32
    %1991 = arith.addi %1990, %c11_i32 : i32
    %1992 = vector.extract_strided_slice %4 {offsets = [0, 44], sizes = [8, 1], strides = [1, 1]} : vector<8x128xf32> to vector<8x1xf32>
    %1993 = vector.broadcast %1992 : vector<8x1xf32> to vector<8x64xf32>
    %1994 = vector.broadcast %6 : vector<1x64xf32> to vector<8x64xf32>
    %1995 = arith.mulf %1993, %1994 : vector<8x64xf32>
    %1996 = vector.extract_strided_slice %4 {offsets = [0, 45], sizes = [8, 1], strides = [1, 1]} : vector<8x128xf32> to vector<8x1xf32>
    %1997 = vector.broadcast %1996 : vector<8x1xf32> to vector<8x64xf32>
    %1998 = vector.broadcast %7 : vector<1x64xf32> to vector<8x64xf32>
    %1999 = arith.mulf %1997, %1998 : vector<8x64xf32>
    %2000 = arith.addf %1995, %1999 : vector<8x64xf32>
    %2001 = vector.extract_strided_slice %4 {offsets = [0, 46], sizes = [8, 1], strides = [1, 1]} : vector<8x128xf32> to vector<8x1xf32>
    %2002 = vector.broadcast %2001 : vector<8x1xf32> to vector<8x64xf32>
    %2003 = vector.broadcast %8 : vector<1x64xf32> to vector<8x64xf32>
    %2004 = arith.mulf %2002, %2003 : vector<8x64xf32>
    %2005 = arith.addf %2000, %2004 : vector<8x64xf32>
    %2006 = vector.broadcast %9 : vector<1x64xf32> to vector<8x64xf32>
    %2007 = arith.addf %2005, %2006 : vector<8x64xf32>
    %cst_192 = arith.constant 0.000000e+00 : f32
    %2008 = vector.broadcast %cst_192 : f32 to vector<8x64xf32>
    %2009 = arith.maximumf %2007, %2008 : vector<8x64xf32>
    %2010 = vector.extract_strided_slice %4 {offsets = [0, 45], sizes = [8, 1], strides = [1, 1]} : vector<8x128xf32> to vector<8x1xf32>
    %2011 = vector.broadcast %2010 : vector<8x1xf32> to vector<8x64xf32>
    %2012 = vector.broadcast %6 : vector<1x64xf32> to vector<8x64xf32>
    %2013 = arith.mulf %2011, %2012 : vector<8x64xf32>
    %2014 = vector.extract_strided_slice %4 {offsets = [0, 46], sizes = [8, 1], strides = [1, 1]} : vector<8x128xf32> to vector<8x1xf32>
    %2015 = vector.broadcast %2014 : vector<8x1xf32> to vector<8x64xf32>
    %2016 = vector.broadcast %7 : vector<1x64xf32> to vector<8x64xf32>
    %2017 = arith.mulf %2015, %2016 : vector<8x64xf32>
    %2018 = arith.addf %2013, %2017 : vector<8x64xf32>
    %2019 = vector.extract_strided_slice %4 {offsets = [0, 47], sizes = [8, 1], strides = [1, 1]} : vector<8x128xf32> to vector<8x1xf32>
    %2020 = vector.broadcast %2019 : vector<8x1xf32> to vector<8x64xf32>
    %2021 = vector.broadcast %8 : vector<1x64xf32> to vector<8x64xf32>
    %2022 = arith.mulf %2020, %2021 : vector<8x64xf32>
    %2023 = arith.addf %2018, %2022 : vector<8x64xf32>
    %2024 = vector.broadcast %9 : vector<1x64xf32> to vector<8x64xf32>
    %2025 = arith.addf %2023, %2024 : vector<8x64xf32>
    %cst_193 = arith.constant 0.000000e+00 : f32
    %2026 = vector.broadcast %cst_193 : f32 to vector<8x64xf32>
    %2027 = arith.maximumf %2025, %2026 : vector<8x64xf32>
    %2028 = arith.maximumf %2009, %2027 : vector<8x64xf32>
    %2029 = vector.extract_strided_slice %4 {offsets = [0, 46], sizes = [8, 1], strides = [1, 1]} : vector<8x128xf32> to vector<8x1xf32>
    %2030 = vector.broadcast %2029 : vector<8x1xf32> to vector<8x64xf32>
    %2031 = vector.broadcast %6 : vector<1x64xf32> to vector<8x64xf32>
    %2032 = arith.mulf %2030, %2031 : vector<8x64xf32>
    %2033 = vector.extract_strided_slice %4 {offsets = [0, 47], sizes = [8, 1], strides = [1, 1]} : vector<8x128xf32> to vector<8x1xf32>
    %2034 = vector.broadcast %2033 : vector<8x1xf32> to vector<8x64xf32>
    %2035 = vector.broadcast %7 : vector<1x64xf32> to vector<8x64xf32>
    %2036 = arith.mulf %2034, %2035 : vector<8x64xf32>
    %2037 = arith.addf %2032, %2036 : vector<8x64xf32>
    %2038 = vector.extract_strided_slice %4 {offsets = [0, 48], sizes = [8, 1], strides = [1, 1]} : vector<8x128xf32> to vector<8x1xf32>
    %2039 = vector.broadcast %2038 : vector<8x1xf32> to vector<8x64xf32>
    %2040 = vector.broadcast %8 : vector<1x64xf32> to vector<8x64xf32>
    %2041 = arith.mulf %2039, %2040 : vector<8x64xf32>
    %2042 = arith.addf %2037, %2041 : vector<8x64xf32>
    %2043 = vector.broadcast %9 : vector<1x64xf32> to vector<8x64xf32>
    %2044 = arith.addf %2042, %2043 : vector<8x64xf32>
    %cst_194 = arith.constant 0.000000e+00 : f32
    %2045 = vector.broadcast %cst_194 : f32 to vector<8x64xf32>
    %2046 = arith.maximumf %2044, %2045 : vector<8x64xf32>
    %2047 = vector.extract_strided_slice %4 {offsets = [0, 47], sizes = [8, 1], strides = [1, 1]} : vector<8x128xf32> to vector<8x1xf32>
    %2048 = vector.broadcast %2047 : vector<8x1xf32> to vector<8x64xf32>
    %2049 = vector.broadcast %6 : vector<1x64xf32> to vector<8x64xf32>
    %2050 = arith.mulf %2048, %2049 : vector<8x64xf32>
    %2051 = vector.extract_strided_slice %4 {offsets = [0, 48], sizes = [8, 1], strides = [1, 1]} : vector<8x128xf32> to vector<8x1xf32>
    %2052 = vector.broadcast %2051 : vector<8x1xf32> to vector<8x64xf32>
    %2053 = vector.broadcast %7 : vector<1x64xf32> to vector<8x64xf32>
    %2054 = arith.mulf %2052, %2053 : vector<8x64xf32>
    %2055 = arith.addf %2050, %2054 : vector<8x64xf32>
    %2056 = vector.extract_strided_slice %4 {offsets = [0, 49], sizes = [8, 1], strides = [1, 1]} : vector<8x128xf32> to vector<8x1xf32>
    %2057 = vector.broadcast %2056 : vector<8x1xf32> to vector<8x64xf32>
    %2058 = vector.broadcast %8 : vector<1x64xf32> to vector<8x64xf32>
    %2059 = arith.mulf %2057, %2058 : vector<8x64xf32>
    %2060 = arith.addf %2055, %2059 : vector<8x64xf32>
    %2061 = vector.broadcast %9 : vector<1x64xf32> to vector<8x64xf32>
    %2062 = arith.addf %2060, %2061 : vector<8x64xf32>
    %cst_195 = arith.constant 0.000000e+00 : f32
    %2063 = vector.broadcast %cst_195 : f32 to vector<8x64xf32>
    %2064 = arith.maximumf %2062, %2063 : vector<8x64xf32>
    %2065 = arith.maximumf %2046, %2064 : vector<8x64xf32>
    %2066 = vector.extract_strided_slice %4 {offsets = [0, 48], sizes = [8, 1], strides = [1, 1]} : vector<8x128xf32> to vector<8x1xf32>
    %2067 = vector.broadcast %2066 : vector<8x1xf32> to vector<8x64xf32>
    %2068 = vector.broadcast %6 : vector<1x64xf32> to vector<8x64xf32>
    %2069 = arith.mulf %2067, %2068 : vector<8x64xf32>
    %2070 = vector.extract_strided_slice %4 {offsets = [0, 49], sizes = [8, 1], strides = [1, 1]} : vector<8x128xf32> to vector<8x1xf32>
    %2071 = vector.broadcast %2070 : vector<8x1xf32> to vector<8x64xf32>
    %2072 = vector.broadcast %7 : vector<1x64xf32> to vector<8x64xf32>
    %2073 = arith.mulf %2071, %2072 : vector<8x64xf32>
    %2074 = arith.addf %2069, %2073 : vector<8x64xf32>
    %2075 = vector.extract_strided_slice %4 {offsets = [0, 50], sizes = [8, 1], strides = [1, 1]} : vector<8x128xf32> to vector<8x1xf32>
    %2076 = vector.broadcast %2075 : vector<8x1xf32> to vector<8x64xf32>
    %2077 = vector.broadcast %8 : vector<1x64xf32> to vector<8x64xf32>
    %2078 = arith.mulf %2076, %2077 : vector<8x64xf32>
    %2079 = arith.addf %2074, %2078 : vector<8x64xf32>
    %2080 = vector.broadcast %9 : vector<1x64xf32> to vector<8x64xf32>
    %2081 = arith.addf %2079, %2080 : vector<8x64xf32>
    %cst_196 = arith.constant 0.000000e+00 : f32
    %2082 = vector.broadcast %cst_196 : f32 to vector<8x64xf32>
    %2083 = arith.maximumf %2081, %2082 : vector<8x64xf32>
    %2084 = vector.extract_strided_slice %4 {offsets = [0, 49], sizes = [8, 1], strides = [1, 1]} : vector<8x128xf32> to vector<8x1xf32>
    %2085 = vector.broadcast %2084 : vector<8x1xf32> to vector<8x64xf32>
    %2086 = vector.broadcast %6 : vector<1x64xf32> to vector<8x64xf32>
    %2087 = arith.mulf %2085, %2086 : vector<8x64xf32>
    %2088 = vector.extract_strided_slice %4 {offsets = [0, 50], sizes = [8, 1], strides = [1, 1]} : vector<8x128xf32> to vector<8x1xf32>
    %2089 = vector.broadcast %2088 : vector<8x1xf32> to vector<8x64xf32>
    %2090 = vector.broadcast %7 : vector<1x64xf32> to vector<8x64xf32>
    %2091 = arith.mulf %2089, %2090 : vector<8x64xf32>
    %2092 = arith.addf %2087, %2091 : vector<8x64xf32>
    %2093 = vector.extract_strided_slice %4 {offsets = [0, 51], sizes = [8, 1], strides = [1, 1]} : vector<8x128xf32> to vector<8x1xf32>
    %2094 = vector.broadcast %2093 : vector<8x1xf32> to vector<8x64xf32>
    %2095 = vector.broadcast %8 : vector<1x64xf32> to vector<8x64xf32>
    %2096 = arith.mulf %2094, %2095 : vector<8x64xf32>
    %2097 = arith.addf %2092, %2096 : vector<8x64xf32>
    %2098 = vector.broadcast %9 : vector<1x64xf32> to vector<8x64xf32>
    %2099 = arith.addf %2097, %2098 : vector<8x64xf32>
    %cst_197 = arith.constant 0.000000e+00 : f32
    %2100 = vector.broadcast %cst_197 : f32 to vector<8x64xf32>
    %2101 = arith.maximumf %2099, %2100 : vector<8x64xf32>
    %2102 = arith.maximumf %2083, %2101 : vector<8x64xf32>
    %2103 = vector.extract_strided_slice %4 {offsets = [0, 50], sizes = [8, 1], strides = [1, 1]} : vector<8x128xf32> to vector<8x1xf32>
    %2104 = vector.broadcast %2103 : vector<8x1xf32> to vector<8x64xf32>
    %2105 = vector.broadcast %6 : vector<1x64xf32> to vector<8x64xf32>
    %2106 = arith.mulf %2104, %2105 : vector<8x64xf32>
    %2107 = vector.extract_strided_slice %4 {offsets = [0, 51], sizes = [8, 1], strides = [1, 1]} : vector<8x128xf32> to vector<8x1xf32>
    %2108 = vector.broadcast %2107 : vector<8x1xf32> to vector<8x64xf32>
    %2109 = vector.broadcast %7 : vector<1x64xf32> to vector<8x64xf32>
    %2110 = arith.mulf %2108, %2109 : vector<8x64xf32>
    %2111 = arith.addf %2106, %2110 : vector<8x64xf32>
    %2112 = vector.extract_strided_slice %4 {offsets = [0, 52], sizes = [8, 1], strides = [1, 1]} : vector<8x128xf32> to vector<8x1xf32>
    %2113 = vector.broadcast %2112 : vector<8x1xf32> to vector<8x64xf32>
    %2114 = vector.broadcast %8 : vector<1x64xf32> to vector<8x64xf32>
    %2115 = arith.mulf %2113, %2114 : vector<8x64xf32>
    %2116 = arith.addf %2111, %2115 : vector<8x64xf32>
    %2117 = vector.broadcast %9 : vector<1x64xf32> to vector<8x64xf32>
    %2118 = arith.addf %2116, %2117 : vector<8x64xf32>
    %cst_198 = arith.constant 0.000000e+00 : f32
    %2119 = vector.broadcast %cst_198 : f32 to vector<8x64xf32>
    %2120 = arith.maximumf %2118, %2119 : vector<8x64xf32>
    %2121 = vector.extract_strided_slice %4 {offsets = [0, 51], sizes = [8, 1], strides = [1, 1]} : vector<8x128xf32> to vector<8x1xf32>
    %2122 = vector.broadcast %2121 : vector<8x1xf32> to vector<8x64xf32>
    %2123 = vector.broadcast %6 : vector<1x64xf32> to vector<8x64xf32>
    %2124 = arith.mulf %2122, %2123 : vector<8x64xf32>
    %2125 = vector.extract_strided_slice %4 {offsets = [0, 52], sizes = [8, 1], strides = [1, 1]} : vector<8x128xf32> to vector<8x1xf32>
    %2126 = vector.broadcast %2125 : vector<8x1xf32> to vector<8x64xf32>
    %2127 = vector.broadcast %7 : vector<1x64xf32> to vector<8x64xf32>
    %2128 = arith.mulf %2126, %2127 : vector<8x64xf32>
    %2129 = arith.addf %2124, %2128 : vector<8x64xf32>
    %2130 = vector.extract_strided_slice %4 {offsets = [0, 53], sizes = [8, 1], strides = [1, 1]} : vector<8x128xf32> to vector<8x1xf32>
    %2131 = vector.broadcast %2130 : vector<8x1xf32> to vector<8x64xf32>
    %2132 = vector.broadcast %8 : vector<1x64xf32> to vector<8x64xf32>
    %2133 = arith.mulf %2131, %2132 : vector<8x64xf32>
    %2134 = arith.addf %2129, %2133 : vector<8x64xf32>
    %2135 = vector.broadcast %9 : vector<1x64xf32> to vector<8x64xf32>
    %2136 = arith.addf %2134, %2135 : vector<8x64xf32>
    %cst_199 = arith.constant 0.000000e+00 : f32
    %2137 = vector.broadcast %cst_199 : f32 to vector<8x64xf32>
    %2138 = arith.maximumf %2136, %2137 : vector<8x64xf32>
    %2139 = arith.maximumf %2120, %2138 : vector<8x64xf32>
    %c0_i32_200 = arith.constant 0 : i32
    %2140 = arith.cmpi sgt, %1991, %c0_i32_200 : i32
    %2141 = arith.extui %2140 : i1 to i32
    %2142 = arith.sitofp %2141 : i32 to f32
    %2143 = vector.broadcast %2142 : f32 to vector<8x64xf32>
    %2144 = arith.mulf %2028, %2143 : vector<8x64xf32>
    %c15_i32_201 = arith.constant 15 : i32
    %2145 = arith.cmpi slt, %1991, %c15_i32_201 : i32
    %2146 = arith.extui %2145 : i1 to i32
    %2147 = arith.sitofp %2146 : i32 to f32
    %2148 = vector.broadcast %2147 : f32 to vector<8x64xf32>
    %2149 = arith.mulf %2139, %2148 : vector<8x64xf32>
    %2150 = arith.truncf %2144 : vector<8x64xf32> to vector<8x64xbf16>
    %2151 = arith.truncf %2065 : vector<8x64xf32> to vector<8x64xbf16>
    %2152 = arith.truncf %2102 : vector<8x64xf32> to vector<8x64xbf16>
    %2153 = arith.truncf %2149 : vector<8x64xf32> to vector<8x64xbf16>
    %2154 = tpu.concatenate %2150, %2151, %2152 in 1 : vector<8x64xbf16>, vector<8x64xbf16>, vector<8x64xbf16> -> vector<8x192xbf16>
    %cst_202 = arith.constant dense<0.000000e+00> : vector<8x128xf32>
    %2155 = tpu.matmul %2154, %10, %cst_202 {dimension_numbers = #tpu.dot_dimension_numbers<[1], [0], [0], [1], [0, 0, 1, 1], [], []>} : vector<8x192xbf16>, vector<192x128xbf16>, vector<8x128xf32> -> vector<8x128xf32>
    %2156 = vector.broadcast %11 : vector<1x128xf32> to vector<8x128xf32>
    %2157 = arith.addf %2155, %2156 : vector<8x128xf32>
    %cst_203 = arith.constant 0.000000e+00 : f32
    %2158 = vector.broadcast %cst_203 : f32 to vector<8x128xf32>
    %2159 = arith.maximumf %2157, %2158 : vector<8x128xf32>
    %2160 = tpu.concatenate %2151, %2152, %2153 in 1 : vector<8x64xbf16>, vector<8x64xbf16>, vector<8x64xbf16> -> vector<8x192xbf16>
    %cst_204 = arith.constant dense<0.000000e+00> : vector<8x128xf32>
    %2161 = tpu.matmul %2160, %10, %cst_204 {dimension_numbers = #tpu.dot_dimension_numbers<[1], [0], [0], [1], [0, 0, 1, 1], [], []>} : vector<8x192xbf16>, vector<192x128xbf16>, vector<8x128xf32> -> vector<8x128xf32>
    %2162 = vector.broadcast %11 : vector<1x128xf32> to vector<8x128xf32>
    %2163 = arith.addf %2161, %2162 : vector<8x128xf32>
    %cst_205 = arith.constant 0.000000e+00 : f32
    %2164 = vector.broadcast %cst_205 : f32 to vector<8x128xf32>
    %2165 = arith.maximumf %2163, %2164 : vector<8x128xf32>
    %2166 = arith.maximumf %2159, %2165 : vector<8x128xf32>
    %2167 = tpu.concatenate %1989, %2166 in 1 : vector<8x128xf32>, vector<8x128xf32> -> vector<8x256xf32>
    %2168 = arith.truncf %2167 : vector<8x256xf32> to vector<8x256xbf16>
    %c5 = arith.constant 5 : index
    %c0_206 = arith.constant 0 : index
    %c0_207 = arith.constant 0 : index
    %2169 = vector.load %arg6[%c5, %c0_206, %c0_207] : memref<8x256x128xbf16, #tpu.memory_space<vmem>>, vector<1x256x128xbf16>
    %2170 = vector.shape_cast %2169 : vector<1x256x128xbf16> to vector<256x128xbf16>
    %cst_208 = arith.constant dense<0.000000e+00> : vector<8x128xf32>
    %2171 = tpu.matmul %2168, %2170, %cst_208 {dimension_numbers = #tpu.dot_dimension_numbers<[1], [0], [0], [1], [0, 0, 1, 1], [], []>} : vector<8x256xbf16>, vector<256x128xbf16>, vector<8x128xf32> -> vector<8x128xf32>
    %2172 = arith.addf %1812, %2171 : vector<8x128xf32>
    %c16_i32_209 = arith.constant 16 : i32
    %2173 = arith.muli %arg1, %c16_i32_209 : i32
    %c12_i32 = arith.constant 12 : i32
    %2174 = arith.addi %2173, %c12_i32 : i32
    %2175 = vector.extract_strided_slice %4 {offsets = [0, 48], sizes = [8, 1], strides = [1, 1]} : vector<8x128xf32> to vector<8x1xf32>
    %2176 = vector.broadcast %2175 : vector<8x1xf32> to vector<8x64xf32>
    %2177 = vector.broadcast %6 : vector<1x64xf32> to vector<8x64xf32>
    %2178 = arith.mulf %2176, %2177 : vector<8x64xf32>
    %2179 = vector.extract_strided_slice %4 {offsets = [0, 49], sizes = [8, 1], strides = [1, 1]} : vector<8x128xf32> to vector<8x1xf32>
    %2180 = vector.broadcast %2179 : vector<8x1xf32> to vector<8x64xf32>
    %2181 = vector.broadcast %7 : vector<1x64xf32> to vector<8x64xf32>
    %2182 = arith.mulf %2180, %2181 : vector<8x64xf32>
    %2183 = arith.addf %2178, %2182 : vector<8x64xf32>
    %2184 = vector.extract_strided_slice %4 {offsets = [0, 50], sizes = [8, 1], strides = [1, 1]} : vector<8x128xf32> to vector<8x1xf32>
    %2185 = vector.broadcast %2184 : vector<8x1xf32> to vector<8x64xf32>
    %2186 = vector.broadcast %8 : vector<1x64xf32> to vector<8x64xf32>
    %2187 = arith.mulf %2185, %2186 : vector<8x64xf32>
    %2188 = arith.addf %2183, %2187 : vector<8x64xf32>
    %2189 = vector.broadcast %9 : vector<1x64xf32> to vector<8x64xf32>
    %2190 = arith.addf %2188, %2189 : vector<8x64xf32>
    %cst_210 = arith.constant 0.000000e+00 : f32
    %2191 = vector.broadcast %cst_210 : f32 to vector<8x64xf32>
    %2192 = arith.maximumf %2190, %2191 : vector<8x64xf32>
    %2193 = vector.extract_strided_slice %4 {offsets = [0, 49], sizes = [8, 1], strides = [1, 1]} : vector<8x128xf32> to vector<8x1xf32>
    %2194 = vector.broadcast %2193 : vector<8x1xf32> to vector<8x64xf32>
    %2195 = vector.broadcast %6 : vector<1x64xf32> to vector<8x64xf32>
    %2196 = arith.mulf %2194, %2195 : vector<8x64xf32>
    %2197 = vector.extract_strided_slice %4 {offsets = [0, 50], sizes = [8, 1], strides = [1, 1]} : vector<8x128xf32> to vector<8x1xf32>
    %2198 = vector.broadcast %2197 : vector<8x1xf32> to vector<8x64xf32>
    %2199 = vector.broadcast %7 : vector<1x64xf32> to vector<8x64xf32>
    %2200 = arith.mulf %2198, %2199 : vector<8x64xf32>
    %2201 = arith.addf %2196, %2200 : vector<8x64xf32>
    %2202 = vector.extract_strided_slice %4 {offsets = [0, 51], sizes = [8, 1], strides = [1, 1]} : vector<8x128xf32> to vector<8x1xf32>
    %2203 = vector.broadcast %2202 : vector<8x1xf32> to vector<8x64xf32>
    %2204 = vector.broadcast %8 : vector<1x64xf32> to vector<8x64xf32>
    %2205 = arith.mulf %2203, %2204 : vector<8x64xf32>
    %2206 = arith.addf %2201, %2205 : vector<8x64xf32>
    %2207 = vector.broadcast %9 : vector<1x64xf32> to vector<8x64xf32>
    %2208 = arith.addf %2206, %2207 : vector<8x64xf32>
    %cst_211 = arith.constant 0.000000e+00 : f32
    %2209 = vector.broadcast %cst_211 : f32 to vector<8x64xf32>
    %2210 = arith.maximumf %2208, %2209 : vector<8x64xf32>
    %2211 = arith.maximumf %2192, %2210 : vector<8x64xf32>
    %2212 = vector.extract_strided_slice %4 {offsets = [0, 50], sizes = [8, 1], strides = [1, 1]} : vector<8x128xf32> to vector<8x1xf32>
    %2213 = vector.broadcast %2212 : vector<8x1xf32> to vector<8x64xf32>
    %2214 = vector.broadcast %6 : vector<1x64xf32> to vector<8x64xf32>
    %2215 = arith.mulf %2213, %2214 : vector<8x64xf32>
    %2216 = vector.extract_strided_slice %4 {offsets = [0, 51], sizes = [8, 1], strides = [1, 1]} : vector<8x128xf32> to vector<8x1xf32>
    %2217 = vector.broadcast %2216 : vector<8x1xf32> to vector<8x64xf32>
    %2218 = vector.broadcast %7 : vector<1x64xf32> to vector<8x64xf32>
    %2219 = arith.mulf %2217, %2218 : vector<8x64xf32>
    %2220 = arith.addf %2215, %2219 : vector<8x64xf32>
    %2221 = vector.extract_strided_slice %4 {offsets = [0, 52], sizes = [8, 1], strides = [1, 1]} : vector<8x128xf32> to vector<8x1xf32>
    %2222 = vector.broadcast %2221 : vector<8x1xf32> to vector<8x64xf32>
    %2223 = vector.broadcast %8 : vector<1x64xf32> to vector<8x64xf32>
    %2224 = arith.mulf %2222, %2223 : vector<8x64xf32>
    %2225 = arith.addf %2220, %2224 : vector<8x64xf32>
    %2226 = vector.broadcast %9 : vector<1x64xf32> to vector<8x64xf32>
    %2227 = arith.addf %2225, %2226 : vector<8x64xf32>
    %cst_212 = arith.constant 0.000000e+00 : f32
    %2228 = vector.broadcast %cst_212 : f32 to vector<8x64xf32>
    %2229 = arith.maximumf %2227, %2228 : vector<8x64xf32>
    %2230 = vector.extract_strided_slice %4 {offsets = [0, 51], sizes = [8, 1], strides = [1, 1]} : vector<8x128xf32> to vector<8x1xf32>
    %2231 = vector.broadcast %2230 : vector<8x1xf32> to vector<8x64xf32>
    %2232 = vector.broadcast %6 : vector<1x64xf32> to vector<8x64xf32>
    %2233 = arith.mulf %2231, %2232 : vector<8x64xf32>
    %2234 = vector.extract_strided_slice %4 {offsets = [0, 52], sizes = [8, 1], strides = [1, 1]} : vector<8x128xf32> to vector<8x1xf32>
    %2235 = vector.broadcast %2234 : vector<8x1xf32> to vector<8x64xf32>
    %2236 = vector.broadcast %7 : vector<1x64xf32> to vector<8x64xf32>
    %2237 = arith.mulf %2235, %2236 : vector<8x64xf32>
    %2238 = arith.addf %2233, %2237 : vector<8x64xf32>
    %2239 = vector.extract_strided_slice %4 {offsets = [0, 53], sizes = [8, 1], strides = [1, 1]} : vector<8x128xf32> to vector<8x1xf32>
    %2240 = vector.broadcast %2239 : vector<8x1xf32> to vector<8x64xf32>
    %2241 = vector.broadcast %8 : vector<1x64xf32> to vector<8x64xf32>
    %2242 = arith.mulf %2240, %2241 : vector<8x64xf32>
    %2243 = arith.addf %2238, %2242 : vector<8x64xf32>
    %2244 = vector.broadcast %9 : vector<1x64xf32> to vector<8x64xf32>
    %2245 = arith.addf %2243, %2244 : vector<8x64xf32>
    %cst_213 = arith.constant 0.000000e+00 : f32
    %2246 = vector.broadcast %cst_213 : f32 to vector<8x64xf32>
    %2247 = arith.maximumf %2245, %2246 : vector<8x64xf32>
    %2248 = arith.maximumf %2229, %2247 : vector<8x64xf32>
    %2249 = vector.extract_strided_slice %4 {offsets = [0, 52], sizes = [8, 1], strides = [1, 1]} : vector<8x128xf32> to vector<8x1xf32>
    %2250 = vector.broadcast %2249 : vector<8x1xf32> to vector<8x64xf32>
    %2251 = vector.broadcast %6 : vector<1x64xf32> to vector<8x64xf32>
    %2252 = arith.mulf %2250, %2251 : vector<8x64xf32>
    %2253 = vector.extract_strided_slice %4 {offsets = [0, 53], sizes = [8, 1], strides = [1, 1]} : vector<8x128xf32> to vector<8x1xf32>
    %2254 = vector.broadcast %2253 : vector<8x1xf32> to vector<8x64xf32>
    %2255 = vector.broadcast %7 : vector<1x64xf32> to vector<8x64xf32>
    %2256 = arith.mulf %2254, %2255 : vector<8x64xf32>
    %2257 = arith.addf %2252, %2256 : vector<8x64xf32>
    %2258 = vector.extract_strided_slice %4 {offsets = [0, 54], sizes = [8, 1], strides = [1, 1]} : vector<8x128xf32> to vector<8x1xf32>
    %2259 = vector.broadcast %2258 : vector<8x1xf32> to vector<8x64xf32>
    %2260 = vector.broadcast %8 : vector<1x64xf32> to vector<8x64xf32>
    %2261 = arith.mulf %2259, %2260 : vector<8x64xf32>
    %2262 = arith.addf %2257, %2261 : vector<8x64xf32>
    %2263 = vector.broadcast %9 : vector<1x64xf32> to vector<8x64xf32>
    %2264 = arith.addf %2262, %2263 : vector<8x64xf32>
    %cst_214 = arith.constant 0.000000e+00 : f32
    %2265 = vector.broadcast %cst_214 : f32 to vector<8x64xf32>
    %2266 = arith.maximumf %2264, %2265 : vector<8x64xf32>
    %2267 = vector.extract_strided_slice %4 {offsets = [0, 53], sizes = [8, 1], strides = [1, 1]} : vector<8x128xf32> to vector<8x1xf32>
    %2268 = vector.broadcast %2267 : vector<8x1xf32> to vector<8x64xf32>
    %2269 = vector.broadcast %6 : vector<1x64xf32> to vector<8x64xf32>
    %2270 = arith.mulf %2268, %2269 : vector<8x64xf32>
    %2271 = vector.extract_strided_slice %4 {offsets = [0, 54], sizes = [8, 1], strides = [1, 1]} : vector<8x128xf32> to vector<8x1xf32>
    %2272 = vector.broadcast %2271 : vector<8x1xf32> to vector<8x64xf32>
    %2273 = vector.broadcast %7 : vector<1x64xf32> to vector<8x64xf32>
    %2274 = arith.mulf %2272, %2273 : vector<8x64xf32>
    %2275 = arith.addf %2270, %2274 : vector<8x64xf32>
    %2276 = vector.extract_strided_slice %4 {offsets = [0, 55], sizes = [8, 1], strides = [1, 1]} : vector<8x128xf32> to vector<8x1xf32>
    %2277 = vector.broadcast %2276 : vector<8x1xf32> to vector<8x64xf32>
    %2278 = vector.broadcast %8 : vector<1x64xf32> to vector<8x64xf32>
    %2279 = arith.mulf %2277, %2278 : vector<8x64xf32>
    %2280 = arith.addf %2275, %2279 : vector<8x64xf32>
    %2281 = vector.broadcast %9 : vector<1x64xf32> to vector<8x64xf32>
    %2282 = arith.addf %2280, %2281 : vector<8x64xf32>
    %cst_215 = arith.constant 0.000000e+00 : f32
    %2283 = vector.broadcast %cst_215 : f32 to vector<8x64xf32>
    %2284 = arith.maximumf %2282, %2283 : vector<8x64xf32>
    %2285 = arith.maximumf %2266, %2284 : vector<8x64xf32>
    %2286 = vector.extract_strided_slice %4 {offsets = [0, 54], sizes = [8, 1], strides = [1, 1]} : vector<8x128xf32> to vector<8x1xf32>
    %2287 = vector.broadcast %2286 : vector<8x1xf32> to vector<8x64xf32>
    %2288 = vector.broadcast %6 : vector<1x64xf32> to vector<8x64xf32>
    %2289 = arith.mulf %2287, %2288 : vector<8x64xf32>
    %2290 = vector.extract_strided_slice %4 {offsets = [0, 55], sizes = [8, 1], strides = [1, 1]} : vector<8x128xf32> to vector<8x1xf32>
    %2291 = vector.broadcast %2290 : vector<8x1xf32> to vector<8x64xf32>
    %2292 = vector.broadcast %7 : vector<1x64xf32> to vector<8x64xf32>
    %2293 = arith.mulf %2291, %2292 : vector<8x64xf32>
    %2294 = arith.addf %2289, %2293 : vector<8x64xf32>
    %2295 = vector.extract_strided_slice %4 {offsets = [0, 56], sizes = [8, 1], strides = [1, 1]} : vector<8x128xf32> to vector<8x1xf32>
    %2296 = vector.broadcast %2295 : vector<8x1xf32> to vector<8x64xf32>
    %2297 = vector.broadcast %8 : vector<1x64xf32> to vector<8x64xf32>
    %2298 = arith.mulf %2296, %2297 : vector<8x64xf32>
    %2299 = arith.addf %2294, %2298 : vector<8x64xf32>
    %2300 = vector.broadcast %9 : vector<1x64xf32> to vector<8x64xf32>
    %2301 = arith.addf %2299, %2300 : vector<8x64xf32>
    %cst_216 = arith.constant 0.000000e+00 : f32
    %2302 = vector.broadcast %cst_216 : f32 to vector<8x64xf32>
    %2303 = arith.maximumf %2301, %2302 : vector<8x64xf32>
    %2304 = vector.extract_strided_slice %4 {offsets = [0, 55], sizes = [8, 1], strides = [1, 1]} : vector<8x128xf32> to vector<8x1xf32>
    %2305 = vector.broadcast %2304 : vector<8x1xf32> to vector<8x64xf32>
    %2306 = vector.broadcast %6 : vector<1x64xf32> to vector<8x64xf32>
    %2307 = arith.mulf %2305, %2306 : vector<8x64xf32>
    %2308 = vector.extract_strided_slice %4 {offsets = [0, 56], sizes = [8, 1], strides = [1, 1]} : vector<8x128xf32> to vector<8x1xf32>
    %2309 = vector.broadcast %2308 : vector<8x1xf32> to vector<8x64xf32>
    %2310 = vector.broadcast %7 : vector<1x64xf32> to vector<8x64xf32>
    %2311 = arith.mulf %2309, %2310 : vector<8x64xf32>
    %2312 = arith.addf %2307, %2311 : vector<8x64xf32>
    %2313 = vector.extract_strided_slice %4 {offsets = [0, 57], sizes = [8, 1], strides = [1, 1]} : vector<8x128xf32> to vector<8x1xf32>
    %2314 = vector.broadcast %2313 : vector<8x1xf32> to vector<8x64xf32>
    %2315 = vector.broadcast %8 : vector<1x64xf32> to vector<8x64xf32>
    %2316 = arith.mulf %2314, %2315 : vector<8x64xf32>
    %2317 = arith.addf %2312, %2316 : vector<8x64xf32>
    %2318 = vector.broadcast %9 : vector<1x64xf32> to vector<8x64xf32>
    %2319 = arith.addf %2317, %2318 : vector<8x64xf32>
    %cst_217 = arith.constant 0.000000e+00 : f32
    %2320 = vector.broadcast %cst_217 : f32 to vector<8x64xf32>
    %2321 = arith.maximumf %2319, %2320 : vector<8x64xf32>
    %2322 = arith.maximumf %2303, %2321 : vector<8x64xf32>
    %c0_i32_218 = arith.constant 0 : i32
    %2323 = arith.cmpi sgt, %2174, %c0_i32_218 : i32
    %2324 = arith.extui %2323 : i1 to i32
    %2325 = arith.sitofp %2324 : i32 to f32
    %2326 = vector.broadcast %2325 : f32 to vector<8x64xf32>
    %2327 = arith.mulf %2211, %2326 : vector<8x64xf32>
    %c15_i32_219 = arith.constant 15 : i32
    %2328 = arith.cmpi slt, %2174, %c15_i32_219 : i32
    %2329 = arith.extui %2328 : i1 to i32
    %2330 = arith.sitofp %2329 : i32 to f32
    %2331 = vector.broadcast %2330 : f32 to vector<8x64xf32>
    %2332 = arith.mulf %2322, %2331 : vector<8x64xf32>
    %2333 = arith.truncf %2327 : vector<8x64xf32> to vector<8x64xbf16>
    %2334 = arith.truncf %2248 : vector<8x64xf32> to vector<8x64xbf16>
    %2335 = arith.truncf %2285 : vector<8x64xf32> to vector<8x64xbf16>
    %2336 = arith.truncf %2332 : vector<8x64xf32> to vector<8x64xbf16>
    %2337 = tpu.concatenate %2333, %2334, %2335 in 1 : vector<8x64xbf16>, vector<8x64xbf16>, vector<8x64xbf16> -> vector<8x192xbf16>
    %cst_220 = arith.constant dense<0.000000e+00> : vector<8x128xf32>
    %2338 = tpu.matmul %2337, %10, %cst_220 {dimension_numbers = #tpu.dot_dimension_numbers<[1], [0], [0], [1], [0, 0, 1, 1], [], []>} : vector<8x192xbf16>, vector<192x128xbf16>, vector<8x128xf32> -> vector<8x128xf32>
    %2339 = vector.broadcast %11 : vector<1x128xf32> to vector<8x128xf32>
    %2340 = arith.addf %2338, %2339 : vector<8x128xf32>
    %cst_221 = arith.constant 0.000000e+00 : f32
    %2341 = vector.broadcast %cst_221 : f32 to vector<8x128xf32>
    %2342 = arith.maximumf %2340, %2341 : vector<8x128xf32>
    %2343 = tpu.concatenate %2334, %2335, %2336 in 1 : vector<8x64xbf16>, vector<8x64xbf16>, vector<8x64xbf16> -> vector<8x192xbf16>
    %cst_222 = arith.constant dense<0.000000e+00> : vector<8x128xf32>
    %2344 = tpu.matmul %2343, %10, %cst_222 {dimension_numbers = #tpu.dot_dimension_numbers<[1], [0], [0], [1], [0, 0, 1, 1], [], []>} : vector<8x192xbf16>, vector<192x128xbf16>, vector<8x128xf32> -> vector<8x128xf32>
    %2345 = vector.broadcast %11 : vector<1x128xf32> to vector<8x128xf32>
    %2346 = arith.addf %2344, %2345 : vector<8x128xf32>
    %cst_223 = arith.constant 0.000000e+00 : f32
    %2347 = vector.broadcast %cst_223 : f32 to vector<8x128xf32>
    %2348 = arith.maximumf %2346, %2347 : vector<8x128xf32>
    %2349 = arith.maximumf %2342, %2348 : vector<8x128xf32>
    %c16_i32_224 = arith.constant 16 : i32
    %2350 = arith.muli %arg1, %c16_i32_224 : i32
    %c13_i32 = arith.constant 13 : i32
    %2351 = arith.addi %2350, %c13_i32 : i32
    %2352 = vector.extract_strided_slice %4 {offsets = [0, 52], sizes = [8, 1], strides = [1, 1]} : vector<8x128xf32> to vector<8x1xf32>
    %2353 = vector.broadcast %2352 : vector<8x1xf32> to vector<8x64xf32>
    %2354 = vector.broadcast %6 : vector<1x64xf32> to vector<8x64xf32>
    %2355 = arith.mulf %2353, %2354 : vector<8x64xf32>
    %2356 = vector.extract_strided_slice %4 {offsets = [0, 53], sizes = [8, 1], strides = [1, 1]} : vector<8x128xf32> to vector<8x1xf32>
    %2357 = vector.broadcast %2356 : vector<8x1xf32> to vector<8x64xf32>
    %2358 = vector.broadcast %7 : vector<1x64xf32> to vector<8x64xf32>
    %2359 = arith.mulf %2357, %2358 : vector<8x64xf32>
    %2360 = arith.addf %2355, %2359 : vector<8x64xf32>
    %2361 = vector.extract_strided_slice %4 {offsets = [0, 54], sizes = [8, 1], strides = [1, 1]} : vector<8x128xf32> to vector<8x1xf32>
    %2362 = vector.broadcast %2361 : vector<8x1xf32> to vector<8x64xf32>
    %2363 = vector.broadcast %8 : vector<1x64xf32> to vector<8x64xf32>
    %2364 = arith.mulf %2362, %2363 : vector<8x64xf32>
    %2365 = arith.addf %2360, %2364 : vector<8x64xf32>
    %2366 = vector.broadcast %9 : vector<1x64xf32> to vector<8x64xf32>
    %2367 = arith.addf %2365, %2366 : vector<8x64xf32>
    %cst_225 = arith.constant 0.000000e+00 : f32
    %2368 = vector.broadcast %cst_225 : f32 to vector<8x64xf32>
    %2369 = arith.maximumf %2367, %2368 : vector<8x64xf32>
    %2370 = vector.extract_strided_slice %4 {offsets = [0, 53], sizes = [8, 1], strides = [1, 1]} : vector<8x128xf32> to vector<8x1xf32>
    %2371 = vector.broadcast %2370 : vector<8x1xf32> to vector<8x64xf32>
    %2372 = vector.broadcast %6 : vector<1x64xf32> to vector<8x64xf32>
    %2373 = arith.mulf %2371, %2372 : vector<8x64xf32>
    %2374 = vector.extract_strided_slice %4 {offsets = [0, 54], sizes = [8, 1], strides = [1, 1]} : vector<8x128xf32> to vector<8x1xf32>
    %2375 = vector.broadcast %2374 : vector<8x1xf32> to vector<8x64xf32>
    %2376 = vector.broadcast %7 : vector<1x64xf32> to vector<8x64xf32>
    %2377 = arith.mulf %2375, %2376 : vector<8x64xf32>
    %2378 = arith.addf %2373, %2377 : vector<8x64xf32>
    %2379 = vector.extract_strided_slice %4 {offsets = [0, 55], sizes = [8, 1], strides = [1, 1]} : vector<8x128xf32> to vector<8x1xf32>
    %2380 = vector.broadcast %2379 : vector<8x1xf32> to vector<8x64xf32>
    %2381 = vector.broadcast %8 : vector<1x64xf32> to vector<8x64xf32>
    %2382 = arith.mulf %2380, %2381 : vector<8x64xf32>
    %2383 = arith.addf %2378, %2382 : vector<8x64xf32>
    %2384 = vector.broadcast %9 : vector<1x64xf32> to vector<8x64xf32>
    %2385 = arith.addf %2383, %2384 : vector<8x64xf32>
    %cst_226 = arith.constant 0.000000e+00 : f32
    %2386 = vector.broadcast %cst_226 : f32 to vector<8x64xf32>
    %2387 = arith.maximumf %2385, %2386 : vector<8x64xf32>
    %2388 = arith.maximumf %2369, %2387 : vector<8x64xf32>
    %2389 = vector.extract_strided_slice %4 {offsets = [0, 54], sizes = [8, 1], strides = [1, 1]} : vector<8x128xf32> to vector<8x1xf32>
    %2390 = vector.broadcast %2389 : vector<8x1xf32> to vector<8x64xf32>
    %2391 = vector.broadcast %6 : vector<1x64xf32> to vector<8x64xf32>
    %2392 = arith.mulf %2390, %2391 : vector<8x64xf32>
    %2393 = vector.extract_strided_slice %4 {offsets = [0, 55], sizes = [8, 1], strides = [1, 1]} : vector<8x128xf32> to vector<8x1xf32>
    %2394 = vector.broadcast %2393 : vector<8x1xf32> to vector<8x64xf32>
    %2395 = vector.broadcast %7 : vector<1x64xf32> to vector<8x64xf32>
    %2396 = arith.mulf %2394, %2395 : vector<8x64xf32>
    %2397 = arith.addf %2392, %2396 : vector<8x64xf32>
    %2398 = vector.extract_strided_slice %4 {offsets = [0, 56], sizes = [8, 1], strides = [1, 1]} : vector<8x128xf32> to vector<8x1xf32>
    %2399 = vector.broadcast %2398 : vector<8x1xf32> to vector<8x64xf32>
    %2400 = vector.broadcast %8 : vector<1x64xf32> to vector<8x64xf32>
    %2401 = arith.mulf %2399, %2400 : vector<8x64xf32>
    %2402 = arith.addf %2397, %2401 : vector<8x64xf32>
    %2403 = vector.broadcast %9 : vector<1x64xf32> to vector<8x64xf32>
    %2404 = arith.addf %2402, %2403 : vector<8x64xf32>
    %cst_227 = arith.constant 0.000000e+00 : f32
    %2405 = vector.broadcast %cst_227 : f32 to vector<8x64xf32>
    %2406 = arith.maximumf %2404, %2405 : vector<8x64xf32>
    %2407 = vector.extract_strided_slice %4 {offsets = [0, 55], sizes = [8, 1], strides = [1, 1]} : vector<8x128xf32> to vector<8x1xf32>
    %2408 = vector.broadcast %2407 : vector<8x1xf32> to vector<8x64xf32>
    %2409 = vector.broadcast %6 : vector<1x64xf32> to vector<8x64xf32>
    %2410 = arith.mulf %2408, %2409 : vector<8x64xf32>
    %2411 = vector.extract_strided_slice %4 {offsets = [0, 56], sizes = [8, 1], strides = [1, 1]} : vector<8x128xf32> to vector<8x1xf32>
    %2412 = vector.broadcast %2411 : vector<8x1xf32> to vector<8x64xf32>
    %2413 = vector.broadcast %7 : vector<1x64xf32> to vector<8x64xf32>
    %2414 = arith.mulf %2412, %2413 : vector<8x64xf32>
    %2415 = arith.addf %2410, %2414 : vector<8x64xf32>
    %2416 = vector.extract_strided_slice %4 {offsets = [0, 57], sizes = [8, 1], strides = [1, 1]} : vector<8x128xf32> to vector<8x1xf32>
    %2417 = vector.broadcast %2416 : vector<8x1xf32> to vector<8x64xf32>
    %2418 = vector.broadcast %8 : vector<1x64xf32> to vector<8x64xf32>
    %2419 = arith.mulf %2417, %2418 : vector<8x64xf32>
    %2420 = arith.addf %2415, %2419 : vector<8x64xf32>
    %2421 = vector.broadcast %9 : vector<1x64xf32> to vector<8x64xf32>
    %2422 = arith.addf %2420, %2421 : vector<8x64xf32>
    %cst_228 = arith.constant 0.000000e+00 : f32
    %2423 = vector.broadcast %cst_228 : f32 to vector<8x64xf32>
    %2424 = arith.maximumf %2422, %2423 : vector<8x64xf32>
    %2425 = arith.maximumf %2406, %2424 : vector<8x64xf32>
    %2426 = vector.extract_strided_slice %4 {offsets = [0, 56], sizes = [8, 1], strides = [1, 1]} : vector<8x128xf32> to vector<8x1xf32>
    %2427 = vector.broadcast %2426 : vector<8x1xf32> to vector<8x64xf32>
    %2428 = vector.broadcast %6 : vector<1x64xf32> to vector<8x64xf32>
    %2429 = arith.mulf %2427, %2428 : vector<8x64xf32>
    %2430 = vector.extract_strided_slice %4 {offsets = [0, 57], sizes = [8, 1], strides = [1, 1]} : vector<8x128xf32> to vector<8x1xf32>
    %2431 = vector.broadcast %2430 : vector<8x1xf32> to vector<8x64xf32>
    %2432 = vector.broadcast %7 : vector<1x64xf32> to vector<8x64xf32>
    %2433 = arith.mulf %2431, %2432 : vector<8x64xf32>
    %2434 = arith.addf %2429, %2433 : vector<8x64xf32>
    %2435 = vector.extract_strided_slice %4 {offsets = [0, 58], sizes = [8, 1], strides = [1, 1]} : vector<8x128xf32> to vector<8x1xf32>
    %2436 = vector.broadcast %2435 : vector<8x1xf32> to vector<8x64xf32>
    %2437 = vector.broadcast %8 : vector<1x64xf32> to vector<8x64xf32>
    %2438 = arith.mulf %2436, %2437 : vector<8x64xf32>
    %2439 = arith.addf %2434, %2438 : vector<8x64xf32>
    %2440 = vector.broadcast %9 : vector<1x64xf32> to vector<8x64xf32>
    %2441 = arith.addf %2439, %2440 : vector<8x64xf32>
    %cst_229 = arith.constant 0.000000e+00 : f32
    %2442 = vector.broadcast %cst_229 : f32 to vector<8x64xf32>
    %2443 = arith.maximumf %2441, %2442 : vector<8x64xf32>
    %2444 = vector.extract_strided_slice %4 {offsets = [0, 57], sizes = [8, 1], strides = [1, 1]} : vector<8x128xf32> to vector<8x1xf32>
    %2445 = vector.broadcast %2444 : vector<8x1xf32> to vector<8x64xf32>
    %2446 = vector.broadcast %6 : vector<1x64xf32> to vector<8x64xf32>
    %2447 = arith.mulf %2445, %2446 : vector<8x64xf32>
    %2448 = vector.extract_strided_slice %4 {offsets = [0, 58], sizes = [8, 1], strides = [1, 1]} : vector<8x128xf32> to vector<8x1xf32>
    %2449 = vector.broadcast %2448 : vector<8x1xf32> to vector<8x64xf32>
    %2450 = vector.broadcast %7 : vector<1x64xf32> to vector<8x64xf32>
    %2451 = arith.mulf %2449, %2450 : vector<8x64xf32>
    %2452 = arith.addf %2447, %2451 : vector<8x64xf32>
    %2453 = vector.extract_strided_slice %4 {offsets = [0, 59], sizes = [8, 1], strides = [1, 1]} : vector<8x128xf32> to vector<8x1xf32>
    %2454 = vector.broadcast %2453 : vector<8x1xf32> to vector<8x64xf32>
    %2455 = vector.broadcast %8 : vector<1x64xf32> to vector<8x64xf32>
    %2456 = arith.mulf %2454, %2455 : vector<8x64xf32>
    %2457 = arith.addf %2452, %2456 : vector<8x64xf32>
    %2458 = vector.broadcast %9 : vector<1x64xf32> to vector<8x64xf32>
    %2459 = arith.addf %2457, %2458 : vector<8x64xf32>
    %cst_230 = arith.constant 0.000000e+00 : f32
    %2460 = vector.broadcast %cst_230 : f32 to vector<8x64xf32>
    %2461 = arith.maximumf %2459, %2460 : vector<8x64xf32>
    %2462 = arith.maximumf %2443, %2461 : vector<8x64xf32>
    %2463 = vector.extract_strided_slice %4 {offsets = [0, 58], sizes = [8, 1], strides = [1, 1]} : vector<8x128xf32> to vector<8x1xf32>
    %2464 = vector.broadcast %2463 : vector<8x1xf32> to vector<8x64xf32>
    %2465 = vector.broadcast %6 : vector<1x64xf32> to vector<8x64xf32>
    %2466 = arith.mulf %2464, %2465 : vector<8x64xf32>
    %2467 = vector.extract_strided_slice %4 {offsets = [0, 59], sizes = [8, 1], strides = [1, 1]} : vector<8x128xf32> to vector<8x1xf32>
    %2468 = vector.broadcast %2467 : vector<8x1xf32> to vector<8x64xf32>
    %2469 = vector.broadcast %7 : vector<1x64xf32> to vector<8x64xf32>
    %2470 = arith.mulf %2468, %2469 : vector<8x64xf32>
    %2471 = arith.addf %2466, %2470 : vector<8x64xf32>
    %2472 = vector.extract_strided_slice %4 {offsets = [0, 60], sizes = [8, 1], strides = [1, 1]} : vector<8x128xf32> to vector<8x1xf32>
    %2473 = vector.broadcast %2472 : vector<8x1xf32> to vector<8x64xf32>
    %2474 = vector.broadcast %8 : vector<1x64xf32> to vector<8x64xf32>
    %2475 = arith.mulf %2473, %2474 : vector<8x64xf32>
    %2476 = arith.addf %2471, %2475 : vector<8x64xf32>
    %2477 = vector.broadcast %9 : vector<1x64xf32> to vector<8x64xf32>
    %2478 = arith.addf %2476, %2477 : vector<8x64xf32>
    %cst_231 = arith.constant 0.000000e+00 : f32
    %2479 = vector.broadcast %cst_231 : f32 to vector<8x64xf32>
    %2480 = arith.maximumf %2478, %2479 : vector<8x64xf32>
    %2481 = vector.extract_strided_slice %4 {offsets = [0, 59], sizes = [8, 1], strides = [1, 1]} : vector<8x128xf32> to vector<8x1xf32>
    %2482 = vector.broadcast %2481 : vector<8x1xf32> to vector<8x64xf32>
    %2483 = vector.broadcast %6 : vector<1x64xf32> to vector<8x64xf32>
    %2484 = arith.mulf %2482, %2483 : vector<8x64xf32>
    %2485 = vector.extract_strided_slice %4 {offsets = [0, 60], sizes = [8, 1], strides = [1, 1]} : vector<8x128xf32> to vector<8x1xf32>
    %2486 = vector.broadcast %2485 : vector<8x1xf32> to vector<8x64xf32>
    %2487 = vector.broadcast %7 : vector<1x64xf32> to vector<8x64xf32>
    %2488 = arith.mulf %2486, %2487 : vector<8x64xf32>
    %2489 = arith.addf %2484, %2488 : vector<8x64xf32>
    %2490 = vector.extract_strided_slice %4 {offsets = [0, 61], sizes = [8, 1], strides = [1, 1]} : vector<8x128xf32> to vector<8x1xf32>
    %2491 = vector.broadcast %2490 : vector<8x1xf32> to vector<8x64xf32>
    %2492 = vector.broadcast %8 : vector<1x64xf32> to vector<8x64xf32>
    %2493 = arith.mulf %2491, %2492 : vector<8x64xf32>
    %2494 = arith.addf %2489, %2493 : vector<8x64xf32>
    %2495 = vector.broadcast %9 : vector<1x64xf32> to vector<8x64xf32>
    %2496 = arith.addf %2494, %2495 : vector<8x64xf32>
    %cst_232 = arith.constant 0.000000e+00 : f32
    %2497 = vector.broadcast %cst_232 : f32 to vector<8x64xf32>
    %2498 = arith.maximumf %2496, %2497 : vector<8x64xf32>
    %2499 = arith.maximumf %2480, %2498 : vector<8x64xf32>
    %c0_i32_233 = arith.constant 0 : i32
    %2500 = arith.cmpi sgt, %2351, %c0_i32_233 : i32
    %2501 = arith.extui %2500 : i1 to i32
    %2502 = arith.sitofp %2501 : i32 to f32
    %2503 = vector.broadcast %2502 : f32 to vector<8x64xf32>
    %2504 = arith.mulf %2388, %2503 : vector<8x64xf32>
    %c15_i32_234 = arith.constant 15 : i32
    %2505 = arith.cmpi slt, %2351, %c15_i32_234 : i32
    %2506 = arith.extui %2505 : i1 to i32
    %2507 = arith.sitofp %2506 : i32 to f32
    %2508 = vector.broadcast %2507 : f32 to vector<8x64xf32>
    %2509 = arith.mulf %2499, %2508 : vector<8x64xf32>
    %2510 = arith.truncf %2504 : vector<8x64xf32> to vector<8x64xbf16>
    %2511 = arith.truncf %2425 : vector<8x64xf32> to vector<8x64xbf16>
    %2512 = arith.truncf %2462 : vector<8x64xf32> to vector<8x64xbf16>
    %2513 = arith.truncf %2509 : vector<8x64xf32> to vector<8x64xbf16>
    %2514 = tpu.concatenate %2510, %2511, %2512 in 1 : vector<8x64xbf16>, vector<8x64xbf16>, vector<8x64xbf16> -> vector<8x192xbf16>
    %cst_235 = arith.constant dense<0.000000e+00> : vector<8x128xf32>
    %2515 = tpu.matmul %2514, %10, %cst_235 {dimension_numbers = #tpu.dot_dimension_numbers<[1], [0], [0], [1], [0, 0, 1, 1], [], []>} : vector<8x192xbf16>, vector<192x128xbf16>, vector<8x128xf32> -> vector<8x128xf32>
    %2516 = vector.broadcast %11 : vector<1x128xf32> to vector<8x128xf32>
    %2517 = arith.addf %2515, %2516 : vector<8x128xf32>
    %cst_236 = arith.constant 0.000000e+00 : f32
    %2518 = vector.broadcast %cst_236 : f32 to vector<8x128xf32>
    %2519 = arith.maximumf %2517, %2518 : vector<8x128xf32>
    %2520 = tpu.concatenate %2511, %2512, %2513 in 1 : vector<8x64xbf16>, vector<8x64xbf16>, vector<8x64xbf16> -> vector<8x192xbf16>
    %cst_237 = arith.constant dense<0.000000e+00> : vector<8x128xf32>
    %2521 = tpu.matmul %2520, %10, %cst_237 {dimension_numbers = #tpu.dot_dimension_numbers<[1], [0], [0], [1], [0, 0, 1, 1], [], []>} : vector<8x192xbf16>, vector<192x128xbf16>, vector<8x128xf32> -> vector<8x128xf32>
    %2522 = vector.broadcast %11 : vector<1x128xf32> to vector<8x128xf32>
    %2523 = arith.addf %2521, %2522 : vector<8x128xf32>
    %cst_238 = arith.constant 0.000000e+00 : f32
    %2524 = vector.broadcast %cst_238 : f32 to vector<8x128xf32>
    %2525 = arith.maximumf %2523, %2524 : vector<8x128xf32>
    %2526 = arith.maximumf %2519, %2525 : vector<8x128xf32>
    %2527 = tpu.concatenate %2349, %2526 in 1 : vector<8x128xf32>, vector<8x128xf32> -> vector<8x256xf32>
    %2528 = arith.truncf %2527 : vector<8x256xf32> to vector<8x256xbf16>
    %c6 = arith.constant 6 : index
    %c0_239 = arith.constant 0 : index
    %c0_240 = arith.constant 0 : index
    %2529 = vector.load %arg6[%c6, %c0_239, %c0_240] : memref<8x256x128xbf16, #tpu.memory_space<vmem>>, vector<1x256x128xbf16>
    %2530 = vector.shape_cast %2529 : vector<1x256x128xbf16> to vector<256x128xbf16>
    %cst_241 = arith.constant dense<0.000000e+00> : vector<8x128xf32>
    %2531 = tpu.matmul %2528, %2530, %cst_241 {dimension_numbers = #tpu.dot_dimension_numbers<[1], [0], [0], [1], [0, 0, 1, 1], [], []>} : vector<8x256xbf16>, vector<256x128xbf16>, vector<8x128xf32> -> vector<8x128xf32>
    %2532 = arith.addf %2172, %2531 : vector<8x128xf32>
    %c16_i32_242 = arith.constant 16 : i32
    %2533 = arith.muli %arg1, %c16_i32_242 : i32
    %c14_i32 = arith.constant 14 : i32
    %2534 = arith.addi %2533, %c14_i32 : i32
    %2535 = vector.extract_strided_slice %4 {offsets = [0, 56], sizes = [8, 1], strides = [1, 1]} : vector<8x128xf32> to vector<8x1xf32>
    %2536 = vector.broadcast %2535 : vector<8x1xf32> to vector<8x64xf32>
    %2537 = vector.broadcast %6 : vector<1x64xf32> to vector<8x64xf32>
    %2538 = arith.mulf %2536, %2537 : vector<8x64xf32>
    %2539 = vector.extract_strided_slice %4 {offsets = [0, 57], sizes = [8, 1], strides = [1, 1]} : vector<8x128xf32> to vector<8x1xf32>
    %2540 = vector.broadcast %2539 : vector<8x1xf32> to vector<8x64xf32>
    %2541 = vector.broadcast %7 : vector<1x64xf32> to vector<8x64xf32>
    %2542 = arith.mulf %2540, %2541 : vector<8x64xf32>
    %2543 = arith.addf %2538, %2542 : vector<8x64xf32>
    %2544 = vector.extract_strided_slice %4 {offsets = [0, 58], sizes = [8, 1], strides = [1, 1]} : vector<8x128xf32> to vector<8x1xf32>
    %2545 = vector.broadcast %2544 : vector<8x1xf32> to vector<8x64xf32>
    %2546 = vector.broadcast %8 : vector<1x64xf32> to vector<8x64xf32>
    %2547 = arith.mulf %2545, %2546 : vector<8x64xf32>
    %2548 = arith.addf %2543, %2547 : vector<8x64xf32>
    %2549 = vector.broadcast %9 : vector<1x64xf32> to vector<8x64xf32>
    %2550 = arith.addf %2548, %2549 : vector<8x64xf32>
    %cst_243 = arith.constant 0.000000e+00 : f32
    %2551 = vector.broadcast %cst_243 : f32 to vector<8x64xf32>
    %2552 = arith.maximumf %2550, %2551 : vector<8x64xf32>
    %2553 = vector.extract_strided_slice %4 {offsets = [0, 57], sizes = [8, 1], strides = [1, 1]} : vector<8x128xf32> to vector<8x1xf32>
    %2554 = vector.broadcast %2553 : vector<8x1xf32> to vector<8x64xf32>
    %2555 = vector.broadcast %6 : vector<1x64xf32> to vector<8x64xf32>
    %2556 = arith.mulf %2554, %2555 : vector<8x64xf32>
    %2557 = vector.extract_strided_slice %4 {offsets = [0, 58], sizes = [8, 1], strides = [1, 1]} : vector<8x128xf32> to vector<8x1xf32>
    %2558 = vector.broadcast %2557 : vector<8x1xf32> to vector<8x64xf32>
    %2559 = vector.broadcast %7 : vector<1x64xf32> to vector<8x64xf32>
    %2560 = arith.mulf %2558, %2559 : vector<8x64xf32>
    %2561 = arith.addf %2556, %2560 : vector<8x64xf32>
    %2562 = vector.extract_strided_slice %4 {offsets = [0, 59], sizes = [8, 1], strides = [1, 1]} : vector<8x128xf32> to vector<8x1xf32>
    %2563 = vector.broadcast %2562 : vector<8x1xf32> to vector<8x64xf32>
    %2564 = vector.broadcast %8 : vector<1x64xf32> to vector<8x64xf32>
    %2565 = arith.mulf %2563, %2564 : vector<8x64xf32>
    %2566 = arith.addf %2561, %2565 : vector<8x64xf32>
    %2567 = vector.broadcast %9 : vector<1x64xf32> to vector<8x64xf32>
    %2568 = arith.addf %2566, %2567 : vector<8x64xf32>
    %cst_244 = arith.constant 0.000000e+00 : f32
    %2569 = vector.broadcast %cst_244 : f32 to vector<8x64xf32>
    %2570 = arith.maximumf %2568, %2569 : vector<8x64xf32>
    %2571 = arith.maximumf %2552, %2570 : vector<8x64xf32>
    %2572 = vector.extract_strided_slice %4 {offsets = [0, 58], sizes = [8, 1], strides = [1, 1]} : vector<8x128xf32> to vector<8x1xf32>
    %2573 = vector.broadcast %2572 : vector<8x1xf32> to vector<8x64xf32>
    %2574 = vector.broadcast %6 : vector<1x64xf32> to vector<8x64xf32>
    %2575 = arith.mulf %2573, %2574 : vector<8x64xf32>
    %2576 = vector.extract_strided_slice %4 {offsets = [0, 59], sizes = [8, 1], strides = [1, 1]} : vector<8x128xf32> to vector<8x1xf32>
    %2577 = vector.broadcast %2576 : vector<8x1xf32> to vector<8x64xf32>
    %2578 = vector.broadcast %7 : vector<1x64xf32> to vector<8x64xf32>
    %2579 = arith.mulf %2577, %2578 : vector<8x64xf32>
    %2580 = arith.addf %2575, %2579 : vector<8x64xf32>
    %2581 = vector.extract_strided_slice %4 {offsets = [0, 60], sizes = [8, 1], strides = [1, 1]} : vector<8x128xf32> to vector<8x1xf32>
    %2582 = vector.broadcast %2581 : vector<8x1xf32> to vector<8x64xf32>
    %2583 = vector.broadcast %8 : vector<1x64xf32> to vector<8x64xf32>
    %2584 = arith.mulf %2582, %2583 : vector<8x64xf32>
    %2585 = arith.addf %2580, %2584 : vector<8x64xf32>
    %2586 = vector.broadcast %9 : vector<1x64xf32> to vector<8x64xf32>
    %2587 = arith.addf %2585, %2586 : vector<8x64xf32>
    %cst_245 = arith.constant 0.000000e+00 : f32
    %2588 = vector.broadcast %cst_245 : f32 to vector<8x64xf32>
    %2589 = arith.maximumf %2587, %2588 : vector<8x64xf32>
    %2590 = vector.extract_strided_slice %4 {offsets = [0, 59], sizes = [8, 1], strides = [1, 1]} : vector<8x128xf32> to vector<8x1xf32>
    %2591 = vector.broadcast %2590 : vector<8x1xf32> to vector<8x64xf32>
    %2592 = vector.broadcast %6 : vector<1x64xf32> to vector<8x64xf32>
    %2593 = arith.mulf %2591, %2592 : vector<8x64xf32>
    %2594 = vector.extract_strided_slice %4 {offsets = [0, 60], sizes = [8, 1], strides = [1, 1]} : vector<8x128xf32> to vector<8x1xf32>
    %2595 = vector.broadcast %2594 : vector<8x1xf32> to vector<8x64xf32>
    %2596 = vector.broadcast %7 : vector<1x64xf32> to vector<8x64xf32>
    %2597 = arith.mulf %2595, %2596 : vector<8x64xf32>
    %2598 = arith.addf %2593, %2597 : vector<8x64xf32>
    %2599 = vector.extract_strided_slice %4 {offsets = [0, 61], sizes = [8, 1], strides = [1, 1]} : vector<8x128xf32> to vector<8x1xf32>
    %2600 = vector.broadcast %2599 : vector<8x1xf32> to vector<8x64xf32>
    %2601 = vector.broadcast %8 : vector<1x64xf32> to vector<8x64xf32>
    %2602 = arith.mulf %2600, %2601 : vector<8x64xf32>
    %2603 = arith.addf %2598, %2602 : vector<8x64xf32>
    %2604 = vector.broadcast %9 : vector<1x64xf32> to vector<8x64xf32>
    %2605 = arith.addf %2603, %2604 : vector<8x64xf32>
    %cst_246 = arith.constant 0.000000e+00 : f32
    %2606 = vector.broadcast %cst_246 : f32 to vector<8x64xf32>
    %2607 = arith.maximumf %2605, %2606 : vector<8x64xf32>
    %2608 = arith.maximumf %2589, %2607 : vector<8x64xf32>
    %2609 = vector.extract_strided_slice %4 {offsets = [0, 60], sizes = [8, 1], strides = [1, 1]} : vector<8x128xf32> to vector<8x1xf32>
    %2610 = vector.broadcast %2609 : vector<8x1xf32> to vector<8x64xf32>
    %2611 = vector.broadcast %6 : vector<1x64xf32> to vector<8x64xf32>
    %2612 = arith.mulf %2610, %2611 : vector<8x64xf32>
    %2613 = vector.extract_strided_slice %4 {offsets = [0, 61], sizes = [8, 1], strides = [1, 1]} : vector<8x128xf32> to vector<8x1xf32>
    %2614 = vector.broadcast %2613 : vector<8x1xf32> to vector<8x64xf32>
    %2615 = vector.broadcast %7 : vector<1x64xf32> to vector<8x64xf32>
    %2616 = arith.mulf %2614, %2615 : vector<8x64xf32>
    %2617 = arith.addf %2612, %2616 : vector<8x64xf32>
    %2618 = vector.extract_strided_slice %4 {offsets = [0, 62], sizes = [8, 1], strides = [1, 1]} : vector<8x128xf32> to vector<8x1xf32>
    %2619 = vector.broadcast %2618 : vector<8x1xf32> to vector<8x64xf32>
    %2620 = vector.broadcast %8 : vector<1x64xf32> to vector<8x64xf32>
    %2621 = arith.mulf %2619, %2620 : vector<8x64xf32>
    %2622 = arith.addf %2617, %2621 : vector<8x64xf32>
    %2623 = vector.broadcast %9 : vector<1x64xf32> to vector<8x64xf32>
    %2624 = arith.addf %2622, %2623 : vector<8x64xf32>
    %cst_247 = arith.constant 0.000000e+00 : f32
    %2625 = vector.broadcast %cst_247 : f32 to vector<8x64xf32>
    %2626 = arith.maximumf %2624, %2625 : vector<8x64xf32>
    %2627 = vector.extract_strided_slice %4 {offsets = [0, 61], sizes = [8, 1], strides = [1, 1]} : vector<8x128xf32> to vector<8x1xf32>
    %2628 = vector.broadcast %2627 : vector<8x1xf32> to vector<8x64xf32>
    %2629 = vector.broadcast %6 : vector<1x64xf32> to vector<8x64xf32>
    %2630 = arith.mulf %2628, %2629 : vector<8x64xf32>
    %2631 = vector.extract_strided_slice %4 {offsets = [0, 62], sizes = [8, 1], strides = [1, 1]} : vector<8x128xf32> to vector<8x1xf32>
    %2632 = vector.broadcast %2631 : vector<8x1xf32> to vector<8x64xf32>
    %2633 = vector.broadcast %7 : vector<1x64xf32> to vector<8x64xf32>
    %2634 = arith.mulf %2632, %2633 : vector<8x64xf32>
    %2635 = arith.addf %2630, %2634 : vector<8x64xf32>
    %2636 = vector.extract_strided_slice %4 {offsets = [0, 63], sizes = [8, 1], strides = [1, 1]} : vector<8x128xf32> to vector<8x1xf32>
    %2637 = vector.broadcast %2636 : vector<8x1xf32> to vector<8x64xf32>
    %2638 = vector.broadcast %8 : vector<1x64xf32> to vector<8x64xf32>
    %2639 = arith.mulf %2637, %2638 : vector<8x64xf32>
    %2640 = arith.addf %2635, %2639 : vector<8x64xf32>
    %2641 = vector.broadcast %9 : vector<1x64xf32> to vector<8x64xf32>
    %2642 = arith.addf %2640, %2641 : vector<8x64xf32>
    %cst_248 = arith.constant 0.000000e+00 : f32
    %2643 = vector.broadcast %cst_248 : f32 to vector<8x64xf32>
    %2644 = arith.maximumf %2642, %2643 : vector<8x64xf32>
    %2645 = arith.maximumf %2626, %2644 : vector<8x64xf32>
    %2646 = vector.extract_strided_slice %4 {offsets = [0, 62], sizes = [8, 1], strides = [1, 1]} : vector<8x128xf32> to vector<8x1xf32>
    %2647 = vector.broadcast %2646 : vector<8x1xf32> to vector<8x64xf32>
    %2648 = vector.broadcast %6 : vector<1x64xf32> to vector<8x64xf32>
    %2649 = arith.mulf %2647, %2648 : vector<8x64xf32>
    %2650 = vector.extract_strided_slice %4 {offsets = [0, 63], sizes = [8, 1], strides = [1, 1]} : vector<8x128xf32> to vector<8x1xf32>
    %2651 = vector.broadcast %2650 : vector<8x1xf32> to vector<8x64xf32>
    %2652 = vector.broadcast %7 : vector<1x64xf32> to vector<8x64xf32>
    %2653 = arith.mulf %2651, %2652 : vector<8x64xf32>
    %2654 = arith.addf %2649, %2653 : vector<8x64xf32>
    %2655 = vector.extract_strided_slice %4 {offsets = [0, 64], sizes = [8, 1], strides = [1, 1]} : vector<8x128xf32> to vector<8x1xf32>
    %2656 = vector.broadcast %2655 : vector<8x1xf32> to vector<8x64xf32>
    %2657 = vector.broadcast %8 : vector<1x64xf32> to vector<8x64xf32>
    %2658 = arith.mulf %2656, %2657 : vector<8x64xf32>
    %2659 = arith.addf %2654, %2658 : vector<8x64xf32>
    %2660 = vector.broadcast %9 : vector<1x64xf32> to vector<8x64xf32>
    %2661 = arith.addf %2659, %2660 : vector<8x64xf32>
    %cst_249 = arith.constant 0.000000e+00 : f32
    %2662 = vector.broadcast %cst_249 : f32 to vector<8x64xf32>
    %2663 = arith.maximumf %2661, %2662 : vector<8x64xf32>
    %2664 = vector.extract_strided_slice %4 {offsets = [0, 63], sizes = [8, 1], strides = [1, 1]} : vector<8x128xf32> to vector<8x1xf32>
    %2665 = vector.broadcast %2664 : vector<8x1xf32> to vector<8x64xf32>
    %2666 = vector.broadcast %6 : vector<1x64xf32> to vector<8x64xf32>
    %2667 = arith.mulf %2665, %2666 : vector<8x64xf32>
    %2668 = vector.extract_strided_slice %4 {offsets = [0, 64], sizes = [8, 1], strides = [1, 1]} : vector<8x128xf32> to vector<8x1xf32>
    %2669 = vector.broadcast %2668 : vector<8x1xf32> to vector<8x64xf32>
    %2670 = vector.broadcast %7 : vector<1x64xf32> to vector<8x64xf32>
    %2671 = arith.mulf %2669, %2670 : vector<8x64xf32>
    %2672 = arith.addf %2667, %2671 : vector<8x64xf32>
    %2673 = vector.extract_strided_slice %4 {offsets = [0, 65], sizes = [8, 1], strides = [1, 1]} : vector<8x128xf32> to vector<8x1xf32>
    %2674 = vector.broadcast %2673 : vector<8x1xf32> to vector<8x64xf32>
    %2675 = vector.broadcast %8 : vector<1x64xf32> to vector<8x64xf32>
    %2676 = arith.mulf %2674, %2675 : vector<8x64xf32>
    %2677 = arith.addf %2672, %2676 : vector<8x64xf32>
    %2678 = vector.broadcast %9 : vector<1x64xf32> to vector<8x64xf32>
    %2679 = arith.addf %2677, %2678 : vector<8x64xf32>
    %cst_250 = arith.constant 0.000000e+00 : f32
    %2680 = vector.broadcast %cst_250 : f32 to vector<8x64xf32>
    %2681 = arith.maximumf %2679, %2680 : vector<8x64xf32>
    %2682 = arith.maximumf %2663, %2681 : vector<8x64xf32>
    %c0_i32_251 = arith.constant 0 : i32
    %2683 = arith.cmpi sgt, %2534, %c0_i32_251 : i32
    %2684 = arith.extui %2683 : i1 to i32
    %2685 = arith.sitofp %2684 : i32 to f32
    %2686 = vector.broadcast %2685 : f32 to vector<8x64xf32>
    %2687 = arith.mulf %2571, %2686 : vector<8x64xf32>
    %c15_i32_252 = arith.constant 15 : i32
    %2688 = arith.cmpi slt, %2534, %c15_i32_252 : i32
    %2689 = arith.extui %2688 : i1 to i32
    %2690 = arith.sitofp %2689 : i32 to f32
    %2691 = vector.broadcast %2690 : f32 to vector<8x64xf32>
    %2692 = arith.mulf %2682, %2691 : vector<8x64xf32>
    %2693 = arith.truncf %2687 : vector<8x64xf32> to vector<8x64xbf16>
    %2694 = arith.truncf %2608 : vector<8x64xf32> to vector<8x64xbf16>
    %2695 = arith.truncf %2645 : vector<8x64xf32> to vector<8x64xbf16>
    %2696 = arith.truncf %2692 : vector<8x64xf32> to vector<8x64xbf16>
    %2697 = tpu.concatenate %2693, %2694, %2695 in 1 : vector<8x64xbf16>, vector<8x64xbf16>, vector<8x64xbf16> -> vector<8x192xbf16>
    %cst_253 = arith.constant dense<0.000000e+00> : vector<8x128xf32>
    %2698 = tpu.matmul %2697, %10, %cst_253 {dimension_numbers = #tpu.dot_dimension_numbers<[1], [0], [0], [1], [0, 0, 1, 1], [], []>} : vector<8x192xbf16>, vector<192x128xbf16>, vector<8x128xf32> -> vector<8x128xf32>
    %2699 = vector.broadcast %11 : vector<1x128xf32> to vector<8x128xf32>
    %2700 = arith.addf %2698, %2699 : vector<8x128xf32>
    %cst_254 = arith.constant 0.000000e+00 : f32
    %2701 = vector.broadcast %cst_254 : f32 to vector<8x128xf32>
    %2702 = arith.maximumf %2700, %2701 : vector<8x128xf32>
    %2703 = tpu.concatenate %2694, %2695, %2696 in 1 : vector<8x64xbf16>, vector<8x64xbf16>, vector<8x64xbf16> -> vector<8x192xbf16>
    %cst_255 = arith.constant dense<0.000000e+00> : vector<8x128xf32>
    %2704 = tpu.matmul %2703, %10, %cst_255 {dimension_numbers = #tpu.dot_dimension_numbers<[1], [0], [0], [1], [0, 0, 1, 1], [], []>} : vector<8x192xbf16>, vector<192x128xbf16>, vector<8x128xf32> -> vector<8x128xf32>
    %2705 = vector.broadcast %11 : vector<1x128xf32> to vector<8x128xf32>
    %2706 = arith.addf %2704, %2705 : vector<8x128xf32>
    %cst_256 = arith.constant 0.000000e+00 : f32
    %2707 = vector.broadcast %cst_256 : f32 to vector<8x128xf32>
    %2708 = arith.maximumf %2706, %2707 : vector<8x128xf32>
    %2709 = arith.maximumf %2702, %2708 : vector<8x128xf32>
    %c16_i32_257 = arith.constant 16 : i32
    %2710 = arith.muli %arg1, %c16_i32_257 : i32
    %c15_i32_258 = arith.constant 15 : i32
    %2711 = arith.addi %2710, %c15_i32_258 : i32
    %2712 = vector.extract_strided_slice %4 {offsets = [0, 60], sizes = [8, 1], strides = [1, 1]} : vector<8x128xf32> to vector<8x1xf32>
    %2713 = vector.broadcast %2712 : vector<8x1xf32> to vector<8x64xf32>
    %2714 = vector.broadcast %6 : vector<1x64xf32> to vector<8x64xf32>
    %2715 = arith.mulf %2713, %2714 : vector<8x64xf32>
    %2716 = vector.extract_strided_slice %4 {offsets = [0, 61], sizes = [8, 1], strides = [1, 1]} : vector<8x128xf32> to vector<8x1xf32>
    %2717 = vector.broadcast %2716 : vector<8x1xf32> to vector<8x64xf32>
    %2718 = vector.broadcast %7 : vector<1x64xf32> to vector<8x64xf32>
    %2719 = arith.mulf %2717, %2718 : vector<8x64xf32>
    %2720 = arith.addf %2715, %2719 : vector<8x64xf32>
    %2721 = vector.extract_strided_slice %4 {offsets = [0, 62], sizes = [8, 1], strides = [1, 1]} : vector<8x128xf32> to vector<8x1xf32>
    %2722 = vector.broadcast %2721 : vector<8x1xf32> to vector<8x64xf32>
    %2723 = vector.broadcast %8 : vector<1x64xf32> to vector<8x64xf32>
    %2724 = arith.mulf %2722, %2723 : vector<8x64xf32>
    %2725 = arith.addf %2720, %2724 : vector<8x64xf32>
    %2726 = vector.broadcast %9 : vector<1x64xf32> to vector<8x64xf32>
    %2727 = arith.addf %2725, %2726 : vector<8x64xf32>
    %cst_259 = arith.constant 0.000000e+00 : f32
    %2728 = vector.broadcast %cst_259 : f32 to vector<8x64xf32>
    %2729 = arith.maximumf %2727, %2728 : vector<8x64xf32>
    %2730 = vector.extract_strided_slice %4 {offsets = [0, 61], sizes = [8, 1], strides = [1, 1]} : vector<8x128xf32> to vector<8x1xf32>
    %2731 = vector.broadcast %2730 : vector<8x1xf32> to vector<8x64xf32>
    %2732 = vector.broadcast %6 : vector<1x64xf32> to vector<8x64xf32>
    %2733 = arith.mulf %2731, %2732 : vector<8x64xf32>
    %2734 = vector.extract_strided_slice %4 {offsets = [0, 62], sizes = [8, 1], strides = [1, 1]} : vector<8x128xf32> to vector<8x1xf32>
    %2735 = vector.broadcast %2734 : vector<8x1xf32> to vector<8x64xf32>
    %2736 = vector.broadcast %7 : vector<1x64xf32> to vector<8x64xf32>
    %2737 = arith.mulf %2735, %2736 : vector<8x64xf32>
    %2738 = arith.addf %2733, %2737 : vector<8x64xf32>
    %2739 = vector.extract_strided_slice %4 {offsets = [0, 63], sizes = [8, 1], strides = [1, 1]} : vector<8x128xf32> to vector<8x1xf32>
    %2740 = vector.broadcast %2739 : vector<8x1xf32> to vector<8x64xf32>
    %2741 = vector.broadcast %8 : vector<1x64xf32> to vector<8x64xf32>
    %2742 = arith.mulf %2740, %2741 : vector<8x64xf32>
    %2743 = arith.addf %2738, %2742 : vector<8x64xf32>
    %2744 = vector.broadcast %9 : vector<1x64xf32> to vector<8x64xf32>
    %2745 = arith.addf %2743, %2744 : vector<8x64xf32>
    %cst_260 = arith.constant 0.000000e+00 : f32
    %2746 = vector.broadcast %cst_260 : f32 to vector<8x64xf32>
    %2747 = arith.maximumf %2745, %2746 : vector<8x64xf32>
    %2748 = arith.maximumf %2729, %2747 : vector<8x64xf32>
    %2749 = vector.extract_strided_slice %4 {offsets = [0, 62], sizes = [8, 1], strides = [1, 1]} : vector<8x128xf32> to vector<8x1xf32>
    %2750 = vector.broadcast %2749 : vector<8x1xf32> to vector<8x64xf32>
    %2751 = vector.broadcast %6 : vector<1x64xf32> to vector<8x64xf32>
    %2752 = arith.mulf %2750, %2751 : vector<8x64xf32>
    %2753 = vector.extract_strided_slice %4 {offsets = [0, 63], sizes = [8, 1], strides = [1, 1]} : vector<8x128xf32> to vector<8x1xf32>
    %2754 = vector.broadcast %2753 : vector<8x1xf32> to vector<8x64xf32>
    %2755 = vector.broadcast %7 : vector<1x64xf32> to vector<8x64xf32>
    %2756 = arith.mulf %2754, %2755 : vector<8x64xf32>
    %2757 = arith.addf %2752, %2756 : vector<8x64xf32>
    %2758 = vector.extract_strided_slice %4 {offsets = [0, 64], sizes = [8, 1], strides = [1, 1]} : vector<8x128xf32> to vector<8x1xf32>
    %2759 = vector.broadcast %2758 : vector<8x1xf32> to vector<8x64xf32>
    %2760 = vector.broadcast %8 : vector<1x64xf32> to vector<8x64xf32>
    %2761 = arith.mulf %2759, %2760 : vector<8x64xf32>
    %2762 = arith.addf %2757, %2761 : vector<8x64xf32>
    %2763 = vector.broadcast %9 : vector<1x64xf32> to vector<8x64xf32>
    %2764 = arith.addf %2762, %2763 : vector<8x64xf32>
    %cst_261 = arith.constant 0.000000e+00 : f32
    %2765 = vector.broadcast %cst_261 : f32 to vector<8x64xf32>
    %2766 = arith.maximumf %2764, %2765 : vector<8x64xf32>
    %2767 = vector.extract_strided_slice %4 {offsets = [0, 63], sizes = [8, 1], strides = [1, 1]} : vector<8x128xf32> to vector<8x1xf32>
    %2768 = vector.broadcast %2767 : vector<8x1xf32> to vector<8x64xf32>
    %2769 = vector.broadcast %6 : vector<1x64xf32> to vector<8x64xf32>
    %2770 = arith.mulf %2768, %2769 : vector<8x64xf32>
    %2771 = vector.extract_strided_slice %4 {offsets = [0, 64], sizes = [8, 1], strides = [1, 1]} : vector<8x128xf32> to vector<8x1xf32>
    %2772 = vector.broadcast %2771 : vector<8x1xf32> to vector<8x64xf32>
    %2773 = vector.broadcast %7 : vector<1x64xf32> to vector<8x64xf32>
    %2774 = arith.mulf %2772, %2773 : vector<8x64xf32>
    %2775 = arith.addf %2770, %2774 : vector<8x64xf32>
    %2776 = vector.extract_strided_slice %4 {offsets = [0, 65], sizes = [8, 1], strides = [1, 1]} : vector<8x128xf32> to vector<8x1xf32>
    %2777 = vector.broadcast %2776 : vector<8x1xf32> to vector<8x64xf32>
    %2778 = vector.broadcast %8 : vector<1x64xf32> to vector<8x64xf32>
    %2779 = arith.mulf %2777, %2778 : vector<8x64xf32>
    %2780 = arith.addf %2775, %2779 : vector<8x64xf32>
    %2781 = vector.broadcast %9 : vector<1x64xf32> to vector<8x64xf32>
    %2782 = arith.addf %2780, %2781 : vector<8x64xf32>
    %cst_262 = arith.constant 0.000000e+00 : f32
    %2783 = vector.broadcast %cst_262 : f32 to vector<8x64xf32>
    %2784 = arith.maximumf %2782, %2783 : vector<8x64xf32>
    %2785 = arith.maximumf %2766, %2784 : vector<8x64xf32>
    %2786 = vector.extract_strided_slice %4 {offsets = [0, 64], sizes = [8, 1], strides = [1, 1]} : vector<8x128xf32> to vector<8x1xf32>
    %2787 = vector.broadcast %2786 : vector<8x1xf32> to vector<8x64xf32>
    %2788 = vector.broadcast %6 : vector<1x64xf32> to vector<8x64xf32>
    %2789 = arith.mulf %2787, %2788 : vector<8x64xf32>
    %2790 = vector.extract_strided_slice %4 {offsets = [0, 65], sizes = [8, 1], strides = [1, 1]} : vector<8x128xf32> to vector<8x1xf32>
    %2791 = vector.broadcast %2790 : vector<8x1xf32> to vector<8x64xf32>
    %2792 = vector.broadcast %7 : vector<1x64xf32> to vector<8x64xf32>
    %2793 = arith.mulf %2791, %2792 : vector<8x64xf32>
    %2794 = arith.addf %2789, %2793 : vector<8x64xf32>
    %2795 = vector.extract_strided_slice %4 {offsets = [0, 66], sizes = [8, 1], strides = [1, 1]} : vector<8x128xf32> to vector<8x1xf32>
    %2796 = vector.broadcast %2795 : vector<8x1xf32> to vector<8x64xf32>
    %2797 = vector.broadcast %8 : vector<1x64xf32> to vector<8x64xf32>
    %2798 = arith.mulf %2796, %2797 : vector<8x64xf32>
    %2799 = arith.addf %2794, %2798 : vector<8x64xf32>
    %2800 = vector.broadcast %9 : vector<1x64xf32> to vector<8x64xf32>
    %2801 = arith.addf %2799, %2800 : vector<8x64xf32>
    %cst_263 = arith.constant 0.000000e+00 : f32
    %2802 = vector.broadcast %cst_263 : f32 to vector<8x64xf32>
    %2803 = arith.maximumf %2801, %2802 : vector<8x64xf32>
    %2804 = vector.extract_strided_slice %4 {offsets = [0, 65], sizes = [8, 1], strides = [1, 1]} : vector<8x128xf32> to vector<8x1xf32>
    %2805 = vector.broadcast %2804 : vector<8x1xf32> to vector<8x64xf32>
    %2806 = vector.broadcast %6 : vector<1x64xf32> to vector<8x64xf32>
    %2807 = arith.mulf %2805, %2806 : vector<8x64xf32>
    %2808 = vector.extract_strided_slice %4 {offsets = [0, 66], sizes = [8, 1], strides = [1, 1]} : vector<8x128xf32> to vector<8x1xf32>
    %2809 = vector.broadcast %2808 : vector<8x1xf32> to vector<8x64xf32>
    %2810 = vector.broadcast %7 : vector<1x64xf32> to vector<8x64xf32>
    %2811 = arith.mulf %2809, %2810 : vector<8x64xf32>
    %2812 = arith.addf %2807, %2811 : vector<8x64xf32>
    %2813 = vector.extract_strided_slice %4 {offsets = [0, 67], sizes = [8, 1], strides = [1, 1]} : vector<8x128xf32> to vector<8x1xf32>
    %2814 = vector.broadcast %2813 : vector<8x1xf32> to vector<8x64xf32>
    %2815 = vector.broadcast %8 : vector<1x64xf32> to vector<8x64xf32>
    %2816 = arith.mulf %2814, %2815 : vector<8x64xf32>
    %2817 = arith.addf %2812, %2816 : vector<8x64xf32>
    %2818 = vector.broadcast %9 : vector<1x64xf32> to vector<8x64xf32>
    %2819 = arith.addf %2817, %2818 : vector<8x64xf32>
    %cst_264 = arith.constant 0.000000e+00 : f32
    %2820 = vector.broadcast %cst_264 : f32 to vector<8x64xf32>
    %2821 = arith.maximumf %2819, %2820 : vector<8x64xf32>
    %2822 = arith.maximumf %2803, %2821 : vector<8x64xf32>
    %2823 = vector.extract_strided_slice %4 {offsets = [0, 66], sizes = [8, 1], strides = [1, 1]} : vector<8x128xf32> to vector<8x1xf32>
    %2824 = vector.broadcast %2823 : vector<8x1xf32> to vector<8x64xf32>
    %2825 = vector.broadcast %6 : vector<1x64xf32> to vector<8x64xf32>
    %2826 = arith.mulf %2824, %2825 : vector<8x64xf32>
    %2827 = vector.extract_strided_slice %4 {offsets = [0, 67], sizes = [8, 1], strides = [1, 1]} : vector<8x128xf32> to vector<8x1xf32>
    %2828 = vector.broadcast %2827 : vector<8x1xf32> to vector<8x64xf32>
    %2829 = vector.broadcast %7 : vector<1x64xf32> to vector<8x64xf32>
    %2830 = arith.mulf %2828, %2829 : vector<8x64xf32>
    %2831 = arith.addf %2826, %2830 : vector<8x64xf32>
    %2832 = vector.extract_strided_slice %4 {offsets = [0, 68], sizes = [8, 1], strides = [1, 1]} : vector<8x128xf32> to vector<8x1xf32>
    %2833 = vector.broadcast %2832 : vector<8x1xf32> to vector<8x64xf32>
    %2834 = vector.broadcast %8 : vector<1x64xf32> to vector<8x64xf32>
    %2835 = arith.mulf %2833, %2834 : vector<8x64xf32>
    %2836 = arith.addf %2831, %2835 : vector<8x64xf32>
    %2837 = vector.broadcast %9 : vector<1x64xf32> to vector<8x64xf32>
    %2838 = arith.addf %2836, %2837 : vector<8x64xf32>
    %cst_265 = arith.constant 0.000000e+00 : f32
    %2839 = vector.broadcast %cst_265 : f32 to vector<8x64xf32>
    %2840 = arith.maximumf %2838, %2839 : vector<8x64xf32>
    %2841 = vector.extract_strided_slice %4 {offsets = [0, 67], sizes = [8, 1], strides = [1, 1]} : vector<8x128xf32> to vector<8x1xf32>
    %2842 = vector.broadcast %2841 : vector<8x1xf32> to vector<8x64xf32>
    %2843 = vector.broadcast %6 : vector<1x64xf32> to vector<8x64xf32>
    %2844 = arith.mulf %2842, %2843 : vector<8x64xf32>
    %2845 = vector.extract_strided_slice %4 {offsets = [0, 68], sizes = [8, 1], strides = [1, 1]} : vector<8x128xf32> to vector<8x1xf32>
    %2846 = vector.broadcast %2845 : vector<8x1xf32> to vector<8x64xf32>
    %2847 = vector.broadcast %7 : vector<1x64xf32> to vector<8x64xf32>
    %2848 = arith.mulf %2846, %2847 : vector<8x64xf32>
    %2849 = arith.addf %2844, %2848 : vector<8x64xf32>
    %2850 = vector.extract_strided_slice %4 {offsets = [0, 69], sizes = [8, 1], strides = [1, 1]} : vector<8x128xf32> to vector<8x1xf32>
    %2851 = vector.broadcast %2850 : vector<8x1xf32> to vector<8x64xf32>
    %2852 = vector.broadcast %8 : vector<1x64xf32> to vector<8x64xf32>
    %2853 = arith.mulf %2851, %2852 : vector<8x64xf32>
    %2854 = arith.addf %2849, %2853 : vector<8x64xf32>
    %2855 = vector.broadcast %9 : vector<1x64xf32> to vector<8x64xf32>
    %2856 = arith.addf %2854, %2855 : vector<8x64xf32>
    %cst_266 = arith.constant 0.000000e+00 : f32
    %2857 = vector.broadcast %cst_266 : f32 to vector<8x64xf32>
    %2858 = arith.maximumf %2856, %2857 : vector<8x64xf32>
    %2859 = arith.maximumf %2840, %2858 : vector<8x64xf32>
    %c0_i32_267 = arith.constant 0 : i32
    %2860 = arith.cmpi sgt, %2711, %c0_i32_267 : i32
    %2861 = arith.extui %2860 : i1 to i32
    %2862 = arith.sitofp %2861 : i32 to f32
    %2863 = vector.broadcast %2862 : f32 to vector<8x64xf32>
    %2864 = arith.mulf %2748, %2863 : vector<8x64xf32>
    %c15_i32_268 = arith.constant 15 : i32
    %2865 = arith.cmpi slt, %2711, %c15_i32_268 : i32
    %2866 = arith.extui %2865 : i1 to i32
    %2867 = arith.sitofp %2866 : i32 to f32
    %2868 = vector.broadcast %2867 : f32 to vector<8x64xf32>
    %2869 = arith.mulf %2859, %2868 : vector<8x64xf32>
    %2870 = arith.truncf %2864 : vector<8x64xf32> to vector<8x64xbf16>
    %2871 = arith.truncf %2785 : vector<8x64xf32> to vector<8x64xbf16>
    %2872 = arith.truncf %2822 : vector<8x64xf32> to vector<8x64xbf16>
    %2873 = arith.truncf %2869 : vector<8x64xf32> to vector<8x64xbf16>
    %2874 = tpu.concatenate %2870, %2871, %2872 in 1 : vector<8x64xbf16>, vector<8x64xbf16>, vector<8x64xbf16> -> vector<8x192xbf16>
    %cst_269 = arith.constant dense<0.000000e+00> : vector<8x128xf32>
    %2875 = tpu.matmul %2874, %10, %cst_269 {dimension_numbers = #tpu.dot_dimension_numbers<[1], [0], [0], [1], [0, 0, 1, 1], [], []>} : vector<8x192xbf16>, vector<192x128xbf16>, vector<8x128xf32> -> vector<8x128xf32>
    %2876 = vector.broadcast %11 : vector<1x128xf32> to vector<8x128xf32>
    %2877 = arith.addf %2875, %2876 : vector<8x128xf32>
    %cst_270 = arith.constant 0.000000e+00 : f32
    %2878 = vector.broadcast %cst_270 : f32 to vector<8x128xf32>
    %2879 = arith.maximumf %2877, %2878 : vector<8x128xf32>
    %2880 = tpu.concatenate %2871, %2872, %2873 in 1 : vector<8x64xbf16>, vector<8x64xbf16>, vector<8x64xbf16> -> vector<8x192xbf16>
    %cst_271 = arith.constant dense<0.000000e+00> : vector<8x128xf32>
    %2881 = tpu.matmul %2880, %10, %cst_271 {dimension_numbers = #tpu.dot_dimension_numbers<[1], [0], [0], [1], [0, 0, 1, 1], [], []>} : vector<8x192xbf16>, vector<192x128xbf16>, vector<8x128xf32> -> vector<8x128xf32>
    %2882 = vector.broadcast %11 : vector<1x128xf32> to vector<8x128xf32>
    %2883 = arith.addf %2881, %2882 : vector<8x128xf32>
    %cst_272 = arith.constant 0.000000e+00 : f32
    %2884 = vector.broadcast %cst_272 : f32 to vector<8x128xf32>
    %2885 = arith.maximumf %2883, %2884 : vector<8x128xf32>
    %2886 = arith.maximumf %2879, %2885 : vector<8x128xf32>
    %2887 = tpu.concatenate %2709, %2886 in 1 : vector<8x128xf32>, vector<8x128xf32> -> vector<8x256xf32>
    %2888 = arith.truncf %2887 : vector<8x256xf32> to vector<8x256xbf16>
    %c7 = arith.constant 7 : index
    %c0_273 = arith.constant 0 : index
    %c0_274 = arith.constant 0 : index
    %2889 = vector.load %arg6[%c7, %c0_273, %c0_274] : memref<8x256x128xbf16, #tpu.memory_space<vmem>>, vector<1x256x128xbf16>
    %2890 = vector.shape_cast %2889 : vector<1x256x128xbf16> to vector<256x128xbf16>
    %cst_275 = arith.constant dense<0.000000e+00> : vector<8x128xf32>
    %2891 = tpu.matmul %2888, %2890, %cst_275 {dimension_numbers = #tpu.dot_dimension_numbers<[1], [0], [0], [1], [0, 0, 1, 1], [], []>} : vector<8x256xbf16>, vector<256x128xbf16>, vector<8x128xf32> -> vector<8x128xf32>
    %2892 = arith.addf %2532, %2891 : vector<8x128xf32>
    %c0_276 = arith.constant 0 : index
    %c0_277 = arith.constant 0 : index
    %2893 = vector.load %arg11[%c0_276, %c0_277] : memref<8x128xf32, #tpu.memory_space<vmem>>, vector<8x128xf32>
    tpu.vector_store %arg11[%c0_276, %c0_277], %2892 {strides = array<i32>} : memref<8x128xf32, #tpu.memory_space<vmem>>, vector<8x128xf32>,
    %c0_i32_278 = arith.constant 0 : i32
    %2894 = arith.cmpi eq, %arg1, %c0_i32_278 : i32
    %2895 = arith.extui %2894 : i1 to i32
    %c0_i32_279 = arith.constant 0 : i32
    %2896 = arith.cmpi ne, %2895, %c0_i32_279 : i32
    scf.if %2896 {
      %c0_280 = arith.constant 0 : index
      %c0_281 = arith.constant 0 : index
      %2897 = vector.load %arg7[%c0_280, %c0_281] : memref<1x128xf32, #tpu.memory_space<vmem>>, vector<1x128xf32>
      %2898 = vector.broadcast %2897 : vector<1x128xf32> to vector<8x128xf32>
      %2899 = arith.addf %2892, %2898 : vector<8x128xf32>
      %cst_282 = arith.constant 0.000000e+00 : f32
      %2900 = vector.broadcast %cst_282 : f32 to vector<8x128xf32>
      %2901 = arith.maximumf %2899, %2900 : vector<8x128xf32>
      %2902 = arith.truncf %2901 : vector<8x128xf32> to vector<8x128xbf16>
      %c0_283 = arith.constant 0 : index
      %c0_284 = arith.constant 0 : index
      %2903 = vector.load %arg8[%c0_283, %c0_284] : memref<128x128xbf16, #tpu.memory_space<vmem>>, vector<128x128xbf16>
      %cst_285 = arith.constant dense<0.000000e+00> : vector<8x128xf32>
      %2904 = tpu.matmul %2902, %2903, %cst_285 {dimension_numbers = #tpu.dot_dimension_numbers<[1], [0], [0], [1], [0, 0, 1, 1], [], []>} : vector<8x128xbf16>, vector<128x128xbf16>, vector<8x128xf32> -> vector<8x128xf32>
      %c0_286 = arith.constant 0 : index
      %c0_287 = arith.constant 0 : index
      %2905 = vector.load %arg9[%c0_286, %c0_287] : memref<1x128xf32, #tpu.memory_space<vmem>>, vector<1x128xf32>
      %2906 = vector.broadcast %2905 : vector<1x128xf32> to vector<8x128xf32>
      %2907 = arith.addf %2904, %2906 : vector<8x128xf32>
      %c0_288 = arith.constant 0 : index
      %c0_289 = arith.constant 0 : index
      %2908 = vector.load %arg10[%c0_288, %c0_289] : memref<8x128xf32, #tpu.memory_space<vmem>>, vector<8x128xf32>
      tpu.vector_store %arg10[%c0_288, %c0_289], %2907 {strides = array<i32>} : memref<8x128xf32, #tpu.memory_space<vmem>>, vector<8x128xf32>,
    } else {
    }
    return
  }
  func.func @transform_0(%arg0: i32, %arg1: i32) -> (i32, i32, i32, i32) {
    %c0_i32 = arith.constant 0 : i32
    %c0_i32_0 = arith.constant 0 : i32
    %c0_i32_1 = arith.constant 0 : i32
    return %arg0, %arg1, %c0_i32, %c0_i32_0 : i32, i32, i32, i32
  }
  func.func @transform_1(%arg0: i32, %arg1: i32) -> (i32, i32) {
    %c0_i32 = arith.constant 0 : i32
    %c0_i32_0 = arith.constant 0 : i32
    %c0_i32_1 = arith.constant 0 : i32
    return %c0_i32, %c0_i32_0 : i32, i32
  }
  func.func @transform_2(%arg0: i32, %arg1: i32) -> (i32, i32) {
    %c0_i32 = arith.constant 0 : i32
    %c0_i32_0 = arith.constant 0 : i32
    %c0_i32_1 = arith.constant 0 : i32
    return %c0_i32, %c0_i32_0 : i32, i32
  }
  func.func @transform_3(%arg0: i32, %arg1: i32) -> (i32, i32) {
    %c0_i32 = arith.constant 0 : i32
    %c0_i32_0 = arith.constant 0 : i32
    %c0_i32_1 = arith.constant 0 : i32
    return %c0_i32, %c0_i32_0 : i32, i32
  }
  func.func @transform_4(%arg0: i32, %arg1: i32) -> (i32, i32, i32) {
    %c0_i32 = arith.constant 0 : i32
    %c0_i32_0 = arith.constant 0 : i32
    %c0_i32_1 = arith.constant 0 : i32
    return %arg1, %c0_i32, %c0_i32_0 : i32, i32, i32
  }
  func.func @transform_5(%arg0: i32, %arg1: i32) -> (i32, i32) {
    %c0_i32 = arith.constant 0 : i32
    %c0_i32_0 = arith.constant 0 : i32
    %c0_i32_1 = arith.constant 0 : i32
    return %c0_i32, %c0_i32_0 : i32, i32
  }
  func.func @transform_6(%arg0: i32, %arg1: i32) -> (i32, i32) {
    %c0_i32 = arith.constant 0 : i32
    %c0_i32_0 = arith.constant 0 : i32
    %c0_i32_1 = arith.constant 0 : i32
    return %c0_i32, %c0_i32_0 : i32, i32
  }
  func.func @transform_7(%arg0: i32, %arg1: i32) -> (i32, i32) {
    %c0_i32 = arith.constant 0 : i32
    %c0_i32_0 = arith.constant 0 : i32
    %c0_i32_1 = arith.constant 0 : i32
    return %c0_i32, %c0_i32_0 : i32, i32
  }
  func.func @transform_8(%arg0: i32, %arg1: i32) -> (i32, i32) {
    %c0_i32 = arith.constant 0 : i32
    %c0_i32_0 = arith.constant 0 : i32
    return %arg0, %c0_i32 : i32, i32
  }
}

</mosaic_0001>

<llo_original>
// kernel: tpu_custom_call.1
$region0: #{tpu_custom_call.1}
  #allocation0 [shape = 'u32[]', space=smem, size = 0x4, offset = 0x4, fixed_abs, tag = 'smem constant byte address 0x4 - core index']
  #allocation1 [shape = 'u32[72,128]{1,0:T(1,128)}', space=vmem, size = 0x9000, scoped, tag = 'internal scratch']
  #allocation2 [shape = 'f32[8,128]{1,0:T(8,128)}', space=vmem, size = 0x1000, scoped, tag = 'scratch operand']
  %s0 = inlined_call_operand.hbm [shape: f32[1,1,8,128], index: 0, kind: input, shape index: {}]
  %s1 = inlined_call_operand.hbm [shape: f32[4,64], index: 1, kind: input, shape index: {}]
  %s2 = inlined_call_operand.hbm [shape: bf16[192,128], index: 2, kind: input, shape index: {}]
  %s3 = inlined_call_operand.vmem [shape: f32[1,128], index: 3, kind: input, shape index: {}]
  %s4 = inlined_call_operand.hbm [shape: bf16[8,256,128], index: 4, kind: input, shape index: {}]
  %s5 = inlined_call_operand.vmem [shape: f32[1,128], index: 5, kind: input, shape index: {}]
  %s6 = inlined_call_operand.hbm [shape: bf16[128,128], index: 6, kind: input, shape index: {}]
  %s7 = inlined_call_operand.vmem [shape: f32[1,128], index: 7, kind: input, shape index: {}]
  %s8 = inlined_call_operand.hbm [shape: f32[8,128], index: 8, kind: output, shape index: {}]
  %s9 = sld [smem:[#allocation0]]
  $region70: #{tpu_custom_call.1} parent=0
    _
  %s11 = ssub.s32 1, %s9
  %s12 = scalar_select 0, %s11, %s9
  $region1: #{tpu_custom_call.1} parent=0
    #allocation3 [shape = 'u8[4096]{0}', space=vmem, size = 0x1000, scoped, tag = 'input window, operand 0, single buffered']
    #allocation4 [shape = 's32[1]{0}', space=sflag, size = 0x4, scoped, tag = 'scoped memory for tpu_custom_call.1']
    #allocation5 [shape = 's32[1]{0}', space=sflag, size = 0x4, scoped, tag = 'scoped memory for tpu_custom_call.1']
    #allocation6 [shape = 'u8[2048]{0}', space=vmem, size = 0x800, scoped, tag = 'input window, operand 1, single buffered']
    #allocation7 [shape = 's32[1]{0}', space=sflag, size = 0x4, scoped, tag = 'scoped memory for tpu_custom_call.1']
    #allocation8 [shape = 'u8[49152]{0}', space=vmem, size = 0xc000, scoped, tag = 'input window, operand 2, single buffered']
    #allocation9 [shape = 'u8[524288]{0}', space=vmem, size = 0x80000, scoped, tag = 'input window, operand 4, single buffered']
    #allocation10 [shape = 's32[1]{0}', space=sflag, size = 0x4, scoped, tag = 'scoped memory for tpu_custom_call.1']
    #allocation11 [shape = 'u8[32768]{0}', space=vmem, size = 0x8000, scoped, tag = 'input window, operand 6, single buffered']
    #allocation12 [shape = 'u8[4096]{0}', space=vmem, size = 0x1000, scoped, tag = 'output window, operand 0, single buffered']
    %13 = vsyncpa [#allocation4], 0
    %14 = vsyncpa [#allocation7], 0
    %15 = vsyncpa [#allocation10], 0
    %16 = vsyncpa [#allocation5], 0
    // Predicated region
    $region2: #{tpu_custom_call.1} parent=1 // pred_check
      _
    $region3: #{tpu_custom_call.1} parent=1 // pred_check_branch
      %18 = sbr.rel (0) target = $region5
    $region4: #{tpu_custom_call.1} parent=1 // pred_region
      %20 = vsyncadd [#allocation4], 0
      %s22 = sshll.u32 %s0, 4
      %s23 = int_to_ptr.hbm [resolvable:$true] %s22
      %s24 = sshll.u32 [#allocation3], 4
      %s25 = int_to_ptr.vmem [resolvable:$true] %s24
      %27 = dma.hbm_to_vmem [thread:$0]  %s23, 128, %s25, [#allocation4]
    $region5: #{tpu_custom_call.1} parent=1 // pred_fallthru
      _
    // Predicated region
    $region6: #{tpu_custom_call.1} parent=1 // pred_check
      _
    $region7: #{tpu_custom_call.1} parent=1 // pred_check_branch
      %29 = sbr.rel (0) target = $region9
    $region8: #{tpu_custom_call.1} parent=1 // pred_region
      %31 = vsyncadd [#allocation7], 0
      %s33 = sshll.u32 %s1, 4
      %s34 = int_to_ptr.hbm [resolvable:$true] %s33
      %s35 = sshll.u32 [#allocation6], 4
      %s36 = int_to_ptr.vmem [resolvable:$true] %s35
      %38 = dma.hbm_to_vmem [thread:$0]  %s34, 64, %s36, [#allocation7]
    $region9: #{tpu_custom_call.1} parent=1 // pred_fallthru
      _
    // Predicated region
    $region10: #{tpu_custom_call.1} parent=1 // pred_check
      _
    $region11: #{tpu_custom_call.1} parent=1 // pred_check_branch
      %40 = sbr.rel (0) target = $region13
    $region12: #{tpu_custom_call.1} parent=1 // pred_region
      %42 = vsyncadd [#allocation7], 0
      %s43 = sshll.u32 %s2, 4
      %s44 = int_to_ptr.hbm [resolvable:$true] %s43
      %s45 = sshll.u32 [#allocation8], 4
      %s46 = int_to_ptr.vmem [resolvable:$true] %s45
      %51 = dma.hbm_to_vmem [thread:$0]  %s44, 1536, %s46, [#allocation7], 64, 64, 4
    $region13: #{tpu_custom_call.1} parent=1 // pred_fallthru
      _
    // Predicated region
    $region14: #{tpu_custom_call.1} parent=1 // pred_check
      _
    $region15: #{tpu_custom_call.1} parent=1 // pred_check_branch
      %53 = sbr.rel (0) target = $region17
    $region16: #{tpu_custom_call.1} parent=1 // pred_region
      _
    $region17: #{tpu_custom_call.1} parent=1 // pred_fallthru
      _
    // Predicated region
    $region18: #{tpu_custom_call.1} parent=1 // pred_check
      _
    $region19: #{tpu_custom_call.1} parent=1 // pred_check_branch
      %55 = sbr.rel (0) target = $region21
    $region20: #{tpu_custom_call.1} parent=1 // pred_region
      %57 = vsyncadd [#allocation10], 0
      %s58 = sshll.u32 %s4, 4
      %s59 = int_to_ptr.hbm [resolvable:$true] %s58
      %s60 = sshll.u32 [#allocation9], 4
      %s61 = int_to_ptr.vmem [resolvable:$true] %s60
      %66 = dma.hbm_to_vmem [thread:$0]  %s59, 16384, %s61, [#allocation10], 64, 64, 4
    $region21: #{tpu_custom_call.1} parent=1 // pred_fallthru
      _
    // Predicated region
    $region22: #{tpu_custom_call.1} parent=1 // pred_check
      _
    $region23: #{tpu_custom_call.1} parent=1 // pred_check_branch
      %68 = sbr.rel (0) target = $region25
    $region24: #{tpu_custom_call.1} parent=1 // pred_region
      _
    $region25: #{tpu_custom_call.1} parent=1 // pred_fallthru
      _
    // Predicated region
    $region26: #{tpu_custom_call.1} parent=1 // pred_check
      _
    $region27: #{tpu_custom_call.1} parent=1 // pred_check_branch
      %70 = sbr.rel (0) target = $region29
    $region28: #{tpu_custom_call.1} parent=1 // pred_region
      %72 = vsyncadd [#allocation10], 0
      %s73 = sshll.u32 %s6, 4
      %s74 = int_to_ptr.hbm [resolvable:$true] %s73
      %s75 = sshll.u32 [#allocation11], 4
      %s76 = int_to_ptr.vmem [resolvable:$true] %s75
      %81 = dma.hbm_to_vmem [thread:$0]  %s74, 1024, %s76, [#allocation10], 64, 64, 4
    $region29: #{tpu_custom_call.1} parent=1 // pred_fallthru
      _
    // Predicated region
    $region30: #{tpu_custom_call.1} parent=1 // pred_check
      _
    $region31: #{tpu_custom_call.1} parent=1 // pred_check_branch
      %83 = sbr.rel (0) target = $region33
    $region32: #{tpu_custom_call.1} parent=1 // pred_region
      _
    $region33: #{tpu_custom_call.1} parent=1 // pred_fallthru
      _
    // Predicated region
    $region34: #{tpu_custom_call.1} parent=1 // pred_check
      _
    $region35: #{tpu_custom_call.1} parent=1 // pred_check_branch
      %85 = sbr.rel (0) target = $region37
    $region36: #{tpu_custom_call.1} parent=1 // pred_region
      %87 = dma.done [#allocation4], 128
    $region37: #{tpu_custom_call.1} parent=1 // pred_fallthru
      _
    // Predicated region
    $region38: #{tpu_custom_call.1} parent=1 // pred_check
      _
    $region39: #{tpu_custom_call.1} parent=1 // pred_check_branch
      %89 = sbr.rel (0) target = $region41
    $region40: #{tpu_custom_call.1} parent=1 // pred_region
      %91 = dma.done [#allocation7], 64
    $region41: #{tpu_custom_call.1} parent=1 // pred_fallthru
      _
    // Predicated region
    $region42: #{tpu_custom_call.1} parent=1 // pred_check
      _
    $region43: #{tpu_custom_call.1} parent=1 // pred_check_branch
      %93 = sbr.rel (0) target = $region45
    $region44: #{tpu_custom_call.1} parent=1 // pred_region
      %95 = dma.done [#allocation7], 1536
    $region45: #{tpu_custom_call.1} parent=1 // pred_fallthru
      _
    // Predicated region
    $region46: #{tpu_custom_call.1} parent=1 // pred_check
      _
    $region47: #{tpu_custom_call.1} parent=1 // pred_check_branch
      %97 = sbr.rel (0) target = $region49
    $region48: #{tpu_custom_call.1} parent=1 // pred_region
      %99 = dma.done [#allocation10], 16384
    $region49: #{tpu_custom_call.1} parent=1 // pred_fallthru
      _
    // Predicated region
    $region50: #{tpu_custom_call.1} parent=1 // pred_check
      _
    $region51: #{tpu_custom_call.1} parent=1 // pred_check_branch
      %101 = sbr.rel (0) target = $region53
    $region52: #{tpu_custom_call.1} parent=1 // pred_region
      %103 = dma.done [#allocation10], 1024
    $region53: #{tpu_custom_call.1} parent=1 // pred_fallthru
      _
    %p105 = scmp.eq.s32.totalorder 0, 0
    // Predicated region
    $region54: #{tpu_custom_call.1} parent=1 // pred_check
      %p106 = pneg %p105
    $region55: #{tpu_custom_call.1} parent=1 // pred_check_branch
      %108 = sbr.rel (%p106) target = $region57
    $region56: #{tpu_custom_call.1} parent=1 // pred_region
      %109 = vst [vmem:[#allocation2] sm:$0xff] 0.0
    $region57: #{tpu_custom_call.1} parent=1 // pred_fallthru
      _
    %v110 = vld [vmem:[#allocation3] sm:$0xff]
    %v111 = vld [vmem:[#allocation6] sm:$0xf]
    %v112 = vld [vmem:[#allocation8] sm:$0xf]
    %v113 = vld [vmem:[#allocation8 + $0x4] sm:$0xf]
    %v114 = vld [vmem:[#allocation8 + $0x8] sm:$0xf]
    %v115 = vld [vmem:[#allocation8 + $0xc] sm:$0xf]
    %v116 = vld [vmem:[#allocation8 + $0x10] sm:$0xf]
    %v117 = vld [vmem:[#allocation8 + $0x14] sm:$0xf]
    %v118 = vld [vmem:[#allocation8 + $0x18] sm:$0xf]
    %v119 = vld [vmem:[#allocation8 + $0x1c] sm:$0xf]
    %v120 = vld [vmem:[#allocation8 + $0x20] sm:$0xf]
    %v121 = vld [vmem:[#allocation8 + $0x24] sm:$0xf]
    %v122 = vld [vmem:[#allocation8 + $0x28] sm:$0xf]
    %v123 = vld [vmem:[#allocation8 + $0x2c] sm:$0xf]
    %v124 = vld [vmem:[#allocation8 + $0x30] sm:$0xf]
    %v125 = vld [vmem:[#allocation8 + $0x34] sm:$0xf]
    %v126 = vld [vmem:[#allocation8 + $0x38] sm:$0xf]
    %v127 = vld [vmem:[#allocation8 + $0x3c] sm:$0xf]
    %v128 = vld [vmem:[#allocation8 + $0x40] sm:$0xf]
    %v129 = vld [vmem:[#allocation8 + $0x44] sm:$0xf]
    %v130 = vld [vmem:[#allocation8 + $0x48] sm:$0xf]
    %v131 = vld [vmem:[#allocation8 + $0x4c] sm:$0xf]
    %v132 = vld [vmem:[#allocation8 + $0x50] sm:$0xf]
    %v133 = vld [vmem:[#allocation8 + $0x54] sm:$0xf]
    %v134 = vld [vmem:[#allocation8 + $0x58] sm:$0xf]
    %v135 = vld [vmem:[#allocation8 + $0x5c] sm:$0xf]
    %v136 = vld [vmem:[%s3] sm:$0x1]
    %v137 = vld [vmem:[#allocation2] sm:$0xff]
    %s138 = smul.u32 0, 16
    %140 = vset.pattern.permute.xlu0 0
    %141 = vperm.xlu0 %140, %v110
    %v142 = vpop.permute.xlu0 %141
    %v144 = vperm.slane %v111, 0
    %v145 = vmul.f32 %v142, %v144
    %146 = vset.pattern.permute.xlu0 1
    %147 = vperm.xlu0 %146, %v110
    %v148 = vpop.permute.xlu0 %147
    %v150 = vperm.slane %v111, 1
    %v151 = vmul.f32 %v148, %v150
    %v152 = vadd.f32 %v145, %v151
    %153 = vset.pattern.permute.xlu0 2
    %154 = vperm.xlu0 %153, %v110
    %v155 = vpop.permute.xlu0 %154
    %v157 = vperm.slane %v111, 2
    %v158 = vmul.f32 %v155, %v157
    %v159 = vadd.f32 %v152, %v158
    %v160 = vperm.slane %v111, 3
    %v161 = vadd.f32 %v159, %v160
    %v162 = vmax.f32 %v161, 0.0
    %v163 = vmul.f32 %v148, %v144
    %v164 = vmul.f32 %v155, %v150
    %v165 = vadd.f32 %v163, %v164
    %166 = vset.pattern.permute.xlu0 3
    %167 = vperm.xlu0 %166, %v110
    %v168 = vpop.permute.xlu0 %167
    %v170 = vmul.f32 %v168, %v157
    %v171 = vadd.f32 %v165, %v170
    %v172 = vadd.f32 %v171, %v160
    %v173 = vmax.f32 %v172, 0.0
    %v174 = vmax.f32 %v162, %v173
    %v175 = vmul.f32 %v155, %v144
    %v176 = vmul.f32 %v168, %v150
    %v177 = vadd.f32 %v175, %v176
    %178 = vset.pattern.permute.xlu0 4
    %179 = vperm.xlu0 %178, %v110
    %v180 = vpop.permute.xlu0 %179
    %v182 = vmul.f32 %v180, %v157
    %v183 = vadd.f32 %v177, %v182
    %v184 = vadd.f32 %v183, %v160
    %v185 = vmax.f32 %v184, 0.0
    %v186 = vmul.f32 %v168, %v144
    %v187 = vmul.f32 %v180, %v150
    %v188 = vadd.f32 %v186, %v187
    %189 = vset.pattern.permute.xlu0 5
    %190 = vperm.xlu0 %189, %v110
    %v191 = vpop.permute.xlu0 %190
    %v193 = vmul.f32 %v191, %v157
    %v194 = vadd.f32 %v188, %v193
    %v195 = vadd.f32 %v194, %v160
    %v196 = vmax.f32 %v195, 0.0
    %v197 = vmax.f32 %v185, %v196
    %v198 = vmul.f32 %v180, %v144
    %v199 = vmul.f32 %v191, %v150
    %v200 = vadd.f32 %v198, %v199
    %201 = vset.pattern.permute.xlu0 6
    %202 = vperm.xlu0 %201, %v110
    %v203 = vpop.permute.xlu0 %202
    %v205 = vmul.f32 %v203, %v157
    %v206 = vadd.f32 %v200, %v205
    %v207 = vadd.f32 %v206, %v160
    %v208 = vmax.f32 %v207, 0.0
    %v209 = vmul.f32 %v191, %v144
    %v210 = vmul.f32 %v203, %v150
    %v211 = vadd.f32 %v209, %v210
    %212 = vset.pattern.permute.xlu0 7
    %213 = vperm.xlu0 %212, %v110
    %v214 = vpop.permute.xlu0 %213
    %v216 = vmul.f32 %v214, %v157
    %v217 = vadd.f32 %v211, %v216
    %v218 = vadd.f32 %v217, %v160
    %v219 = vmax.f32 %v218, 0.0
    %v220 = vmax.f32 %v208, %v219
    %v221 = vmul.f32 %v203, %v144
    %v222 = vmul.f32 %v214, %v150
    %v223 = vadd.f32 %v221, %v222
    %224 = vset.pattern.permute.xlu0 8
    %225 = vperm.xlu0 %224, %v110
    %v226 = vpop.permute.xlu0 %225
    %v228 = vmul.f32 %v226, %v157
    %v229 = vadd.f32 %v223, %v228
    %v230 = vadd.f32 %v229, %v160
    %v231 = vmax.f32 %v230, 0.0
    %v232 = vmul.f32 %v214, %v144
    %v233 = vmul.f32 %v226, %v150
    %v234 = vadd.f32 %v232, %v233
    %235 = vset.pattern.permute.xlu0 9
    %236 = vperm.xlu0 %235, %v110
    %v237 = vpop.permute.xlu0 %236
    %v239 = vmul.f32 %v237, %v157
    %v240 = vadd.f32 %v234, %v239
    %v241 = vadd.f32 %v240, %v160
    %v242 = vmax.f32 %v241, 0.0
    %v243 = vmax.f32 %v231, %v242
    %p244 = scmp.gt.s32.totalorder %s138, 0
    %s245 = scalar_select %p244, 1, 0
    %s246 = scvt.s32.f32 %s245
    %v247 = vstv %s246
    %v248 = vmul.f32 %v174, %v247
    %p249 = scmp.lt.s32.totalorder %s138, 15
    %s250 = scalar_select %p249, 1, 0
    %s251 = scvt.s32.f32 %s250
    %v252 = vstv %s251
    %v253 = vmul.f32 %v243, %v252
    %v254 = vpack.c.bf16 %v248, %v248
    %v255 = vpack.c.bf16 %v197, %v197
    %v256 = vpack.c.bf16 %v220, %v220
    %v257 = vpack.c.bf16 %v253, %v253
    %v259 = vunpack.c.l.b16 %v255
    %v260 = vpack.c.b16 %v259, %v259
    %261 = vrot.lane.b32.xlu0 %v260, 64
    %v262 = vpop.permute.xlu0 %261
    %vm263 = vcmask 523264
    %v266 = vsel %vm263, %v254, %v262
    %v269 = vperm.slane %v136, 0
    %v295 = vunpack.c.l.b16 %v112
    %v296 = vunpack.c.l.b16 %v113
    %v297 = vunpack.c.l.b16 %v114
    %v298 = vunpack.c.l.b16 %v115
    %v299 = vunpack.c.l.b16 %v116
    %v300 = vunpack.c.l.b16 %v117
    %v301 = vunpack.c.l.b16 %v118
    %v302 = vunpack.c.l.b16 %v119
    %v303 = vunpack.c.l.b16 %v120
    %v304 = vunpack.c.l.b16 %v121
    %v305 = vunpack.c.l.b16 %v122
    %v306 = vunpack.c.l.b16 %v123
    %v307 = vunpack.c.l.b16 %v124
    %v308 = vunpack.c.l.b16 %v125
    %v309 = vunpack.c.l.b16 %v126
    %v310 = vunpack.c.l.b16 %v127
    %v311 = vunpack.c.l.b16 %v128
    %v312 = vunpack.c.l.b16 %v129
    %v313 = vunpack.c.l.b16 %v130
    %v314 = vunpack.c.l.b16 %v131
    %v315 = vunpack.c.l.b16 %v132
    %v316 = vunpack.c.l.b16 %v133
    %v317 = vunpack.c.l.b16 %v134
    %v318 = vunpack.c.l.b16 %v135
    %v319 = vpack.c.b16 %v296, %v295
    %v320 = vpack.c.b16 %v298, %v297
    %v321 = vpack.c.b16 %v300, %v299
    %v322 = vpack.c.b16 %v302, %v301
    %v323 = vpack.c.b16 %v304, %v303
    %v324 = vpack.c.b16 %v306, %v305
    %v325 = vpack.c.b16 %v308, %v307
    %v326 = vpack.c.b16 %v310, %v309
    %v327 = vpack.c.b16 %v312, %v311
    %v328 = vpack.c.b16 %v314, %v313
    %v329 = vpack.c.b16 %v316, %v315
    %v330 = vpack.c.b16 %v318, %v317
    %v344 = vsel %vm263, %v256, 0
    %346 = vmatpush.bf16.msra.mxu0 %v326
    %347 = vmatpush.bf16.msra.mxu0 %v325
    %348 = vmatpush.bf16.msra.mxu0 %v324
    %349 = vmatpush.bf16.msra.mxu0 %v323
    %350 = vmatpush.bf16.msra.mxu0 %v322
    %351 = vmatpush.bf16.msra.mxu0 %v321
    %352 = vmatpush.bf16.msra.mxu0 %v320
    %353 = vmatpush.bf16.msra.mxu0 %v319
    %354 = vmatmul.bf16.gmra.mxu0 %v266
    %v355 = vpop.f32.mrf.mxu0
    %v356 = vadd.f32 %v269, %v355
    %v357 = vpop.f32.mrf.mxu0
    %358 = vdwg.mxu0
    %359 = vmatpush.bf16.msra.mxu0 0
    %360 = vmatpush.bf16.msra.mxu0 0
    %361 = vmatpush.bf16.msra.mxu0 0
    %362 = vmatpush.bf16.msra.mxu0 0
    %363 = vmatpush.bf16.msra.mxu0 %v330
    %364 = vmatpush.bf16.msra.mxu0 %v329
    %365 = vmatpush.bf16.msra.mxu0 %v328
    %366 = vmatpush.bf16.msra.mxu0 %v327
    %367 = vmatmul.bf16.gmra.mxu0 %v344
    %v368 = vpop.f32.mrf.mxu0
    %v369 = vadd.f32 %v356, %v368
    %v370 = vpop.f32.mrf.mxu0
    %371 = vdwg.mxu0
    %v372 = vmax.f32 %v369, 0.0
    %v374 = vunpack.c.l.b16 %v256
    %v375 = vpack.c.b16 %v374, %v374
    %376 = vrot.lane.b32.xlu0 %v375, 64
    %v377 = vpop.permute.xlu0 %376
    %v380 = vsel %vm263, %v255, %v377
    %v383 = vsel %vm263, %v257, 0
    %385 = vmatpush.bf16.msra.mxu0 %v326
    %386 = vmatpush.bf16.msra.mxu0 %v325
    %387 = vmatpush.bf16.msra.mxu0 %v324
    %388 = vmatpush.bf16.msra.mxu0 %v323
    %389 = vmatpush.bf16.msra.mxu0 %v322
    %390 = vmatpush.bf16.msra.mxu0 %v321
    %391 = vmatpush.bf16.msra.mxu0 %v320
    %392 = vmatpush.bf16.msra.mxu0 %v319
    %393 = vmatmul.bf16.gmra.mxu0 %v380
    %v394 = vpop.f32.mrf.mxu0
    %v395 = vadd.f32 %v269, %v394
    %v396 = vpop.f32.mrf.mxu0
    %397 = vdwg.mxu0
    %398 = vmatpush.bf16.msra.mxu0 0
    %399 = vmatpush.bf16.msra.mxu0 0
    %400 = vmatpush.bf16.msra.mxu0 0
    %401 = vmatpush.bf16.msra.mxu0 0
    %402 = vmatpush.bf16.msra.mxu0 %v330
    %403 = vmatpush.bf16.msra.mxu0 %v329
    %404 = vmatpush.bf16.msra.mxu0 %v328
    %405 = vmatpush.bf16.msra.mxu0 %v327
    %406 = vmatmul.bf16.gmra.mxu0 %v383
    %v407 = vpop.f32.mrf.mxu0
    %v408 = vadd.f32 %v395, %v407
    %v409 = vpop.f32.mrf.mxu0
    %410 = vdwg.mxu0
    %v411 = vmax.f32 %v408, 0.0
    %v412 = vmax.f32 %v372, %v411
    %s413 = sadd.s32 %s138, 1
    %v414 = vmul.f32 %v226, %v144
    %v415 = vmul.f32 %v237, %v150
    %v416 = vadd.f32 %v414, %v415
    %417 = vset.pattern.permute.xlu0 10
    %418 = vperm.xlu0 %417, %v110
    %v419 = vpop.permute.xlu0 %418
    %v421 = vmul.f32 %v419, %v157
    %v422 = vadd.f32 %v416, %v421
    %v423 = vadd.f32 %v422, %v160
    %v424 = vmax.f32 %v423, 0.0
    %v425 = vmul.f32 %v237, %v144
    %v426 = vmul.f32 %v419, %v150
    %v427 = vadd.f32 %v425, %v426
    %428 = vset.pattern.permute.xlu0 11
    %429 = vperm.xlu0 %428, %v110
    %v430 = vpop.permute.xlu0 %429
    %v432 = vmul.f32 %v430, %v157
    %v433 = vadd.f32 %v427, %v432
    %v434 = vadd.f32 %v433, %v160
    %v435 = vmax.f32 %v434, 0.0
    %v436 = vmax.f32 %v424, %v435
    %v437 = vmul.f32 %v419, %v144
    %v438 = vmul.f32 %v430, %v150
    %v439 = vadd.f32 %v437, %v438
    %440 = vset.pattern.permute.xlu0 12
    %441 = vperm.xlu0 %440, %v110
    %v442 = vpop.permute.xlu0 %441
    %v444 = vmul.f32 %v442, %v157
    %v445 = vadd.f32 %v439, %v444
    %v446 = vadd.f32 %v445, %v160
    %v447 = vmax.f32 %v446, 0.0
    %v448 = vmul.f32 %v430, %v144
    %v449 = vmul.f32 %v442, %v150
    %v450 = vadd.f32 %v448, %v449
    %451 = vset.pattern.permute.xlu0 13
    %452 = vperm.xlu0 %451, %v110
    %v453 = vpop.permute.xlu0 %452
    %v455 = vmul.f32 %v453, %v157
    %v456 = vadd.f32 %v450, %v455
    %v457 = vadd.f32 %v456, %v160
    %v458 = vmax.f32 %v457, 0.0
    %v459 = vmax.f32 %v447, %v458
    %p460 = scmp.gt.s32.totalorder %s413, 0
    %s461 = scalar_select %p460, 1, 0
    %s462 = scvt.s32.f32 %s461
    %v463 = vstv %s462
    %v464 = vmul.f32 %v220, %v463
    %p465 = scmp.lt.s32.totalorder %s413, 15
    %s466 = scalar_select %p465, 1, 0
    %s467 = scvt.s32.f32 %s466
    %v468 = vstv %s467
    %v469 = vmul.f32 %v459, %v468
    %v470 = vpack.c.bf16 %v464, %v464
    %v471 = vpack.c.bf16 %v243, %v243
    %v472 = vpack.c.bf16 %v436, %v436
    %v473 = vpack.c.bf16 %v469, %v469
    %v475 = vunpack.c.l.b16 %v471
    %v476 = vpack.c.b16 %v475, %v475
    %477 = vrot.lane.b32.xlu0 %v476, 64
    %v478 = vpop.permute.xlu0 %477
    %v481 = vsel %vm263, %v470, %v478
    %v484 = vsel %vm263, %v472, 0
    %486 = vmatpush.bf16.msra.mxu0 %v326
    %487 = vmatpush.bf16.msra.mxu0 %v325
    %488 = vmatpush.bf16.msra.mxu0 %v324
    %489 = vmatpush.bf16.msra.mxu0 %v323
    %490 = vmatpush.bf16.msra.mxu0 %v322
    %491 = vmatpush.bf16.msra.mxu0 %v321
    %492 = vmatpush.bf16.msra.mxu0 %v320
    %493 = vmatpush.bf16.msra.mxu0 %v319
    %494 = vmatmul.bf16.gmra.mxu0 %v481
    %v495 = vpop.f32.mrf.mxu0
    %v496 = vadd.f32 %v269, %v495
    %v497 = vpop.f32.mrf.mxu0
    %498 = vdwg.mxu0
    %499 = vmatpush.bf16.msra.mxu0 0
    %500 = vmatpush.bf16.msra.mxu0 0
    %501 = vmatpush.bf16.msra.mxu0 0
    %502 = vmatpush.bf16.msra.mxu0 0
    %503 = vmatpush.bf16.msra.mxu0 %v330
    %504 = vmatpush.bf16.msra.mxu0 %v329
    %505 = vmatpush.bf16.msra.mxu0 %v328
    %506 = vmatpush.bf16.msra.mxu0 %v327
    %507 = vmatmul.bf16.gmra.mxu0 %v484
    %v508 = vpop.f32.mrf.mxu0
    %v509 = vadd.f32 %v496, %v508
    %v510 = vpop.f32.mrf.mxu0
    %511 = vdwg.mxu0
    %v512 = vmax.f32 %v509, 0.0
    %v514 = vunpack.c.l.b16 %v472
    %v515 = vpack.c.b16 %v514, %v514
    %516 = vrot.lane.b32.xlu0 %v515, 64
    %v517 = vpop.permute.xlu0 %516
    %v520 = vsel %vm263, %v471, %v517
    %v523 = vsel %vm263, %v473, 0
    %525 = vmatpush.bf16.msra.mxu0 %v326
    %526 = vmatpush.bf16.msra.mxu0 %v325
    %527 = vmatpush.bf16.msra.mxu0 %v324
    %528 = vmatpush.bf16.msra.mxu0 %v323
    %529 = vmatpush.bf16.msra.mxu0 %v322
    %530 = vmatpush.bf16.msra.mxu0 %v321
    %531 = vmatpush.bf16.msra.mxu0 %v320
    %532 = vmatpush.bf16.msra.mxu0 %v319
    %533 = vmatmul.bf16.gmra.mxu0 %v520
    %v534 = vpop.f32.mrf.mxu0
    %v535 = vadd.f32 %v269, %v534
    %v536 = vpop.f32.mrf.mxu0
    %537 = vdwg.mxu0
    %538 = vmatpush.bf16.msra.mxu0 0
    %539 = vmatpush.bf16.msra.mxu0 0
    %540 = vmatpush.bf16.msra.mxu0 0
    %541 = vmatpush.bf16.msra.mxu0 0
    %542 = vmatpush.bf16.msra.mxu0 %v330
    %543 = vmatpush.bf16.msra.mxu0 %v329
    %544 = vmatpush.bf16.msra.mxu0 %v328
    %545 = vmatpush.bf16.msra.mxu0 %v327
    %546 = vmatmul.bf16.gmra.mxu0 %v523
    %v547 = vpop.f32.mrf.mxu0
    %v548 = vadd.f32 %v535, %v547
    %v549 = vpop.f32.mrf.mxu0
    %550 = vdwg.mxu0
    %v551 = vmax.f32 %v548, 0.0
    %v552 = vmax.f32 %v512, %v551
    %v553 = vpack.c.bf16 %v412, %v412
    %v554 = vpack.c.bf16 %v552, %v552
    %v555 = vld [vmem:[#allocation9] sm:$0xf]
    %v556 = vld [vmem:[#allocation9 + $0x4] sm:$0xf]
    %v557 = vld [vmem:[#allocation9 + $0x8] sm:$0xf]
    %v558 = vld [vmem:[#allocation9 + $0xc] sm:$0xf]
    %v559 = vld [vmem:[#allocation9 + $0x10] sm:$0xf]
    %v560 = vld [vmem:[#allocation9 + $0x14] sm:$0xf]
    %v561 = vld [vmem:[#allocation9 + $0x18] sm:$0xf]
    %v562 = vld [vmem:[#allocation9 + $0x1c] sm:$0xf]
    %v563 = vld [vmem:[#allocation9 + $0x20] sm:$0xf]
    %v564 = vld [vmem:[#allocation9 + $0x24] sm:$0xf]
    %v565 = vld [vmem:[#allocation9 + $0x28] sm:$0xf]
    %v566 = vld [vmem:[#allocation9 + $0x2c] sm:$0xf]
    %v567 = vld [vmem:[#allocation9 + $0x30] sm:$0xf]
    %v568 = vld [vmem:[#allocation9 + $0x34] sm:$0xf]
    %v569 = vld [vmem:[#allocation9 + $0x38] sm:$0xf]
    %v570 = vld [vmem:[#allocation9 + $0x3c] sm:$0xf]
    %v571 = vld [vmem:[#allocation9 + $0x40] sm:$0xf]
    %v572 = vld [vmem:[#allocation9 + $0x44] sm:$0xf]
    %v573 = vld [vmem:[#allocation9 + $0x48] sm:$0xf]
    %v574 = vld [vmem:[#allocation9 + $0x4c] sm:$0xf]
    %v575 = vld [vmem:[#allocation9 + $0x50] sm:$0xf]
    %v576 = vld [vmem:[#allocation9 + $0x54] sm:$0xf]
    %v577 = vld [vmem:[#allocation9 + $0x58] sm:$0xf]
    %v578 = vld [vmem:[#allocation9 + $0x5c] sm:$0xf]
    %v579 = vld [vmem:[#allocation9 + $0x60] sm:$0xf]
    %v580 = vld [vmem:[#allocation9 + $0x64] sm:$0xf]
    %v581 = vld [vmem:[#allocation9 + $0x68] sm:$0xf]
    %v582 = vld [vmem:[#allocation9 + $0x6c] sm:$0xf]
    %v583 = vld [vmem:[#allocation9 + $0x70] sm:$0xf]
    %v584 = vld [vmem:[#allocation9 + $0x74] sm:$0xf]
    %v585 = vld [vmem:[#allocation9 + $0x78] sm:$0xf]
    %v586 = vld [vmem:[#allocation9 + $0x7c] sm:$0xf]
    %v619 = vunpack.c.l.b16 %v555
    %v620 = vunpack.c.l.b16 %v556
    %v621 = vunpack.c.l.b16 %v557
    %v622 = vunpack.c.l.b16 %v558
    %v623 = vunpack.c.l.b16 %v559
    %v624 = vunpack.c.l.b16 %v560
    %v625 = vunpack.c.l.b16 %v561
    %v626 = vunpack.c.l.b16 %v562
    %v627 = vunpack.c.l.b16 %v563
    %v628 = vunpack.c.l.b16 %v564
    %v629 = vunpack.c.l.b16 %v565
    %v630 = vunpack.c.l.b16 %v566
    %v631 = vunpack.c.l.b16 %v567
    %v632 = vunpack.c.l.b16 %v568
    %v633 = vunpack.c.l.b16 %v569
    %v634 = vunpack.c.l.b16 %v570
    %v635 = vunpack.c.l.b16 %v571
    %v636 = vunpack.c.l.b16 %v572
    %v637 = vunpack.c.l.b16 %v573
    %v638 = vunpack.c.l.b16 %v574
    %v639 = vunpack.c.l.b16 %v575
    %v640 = vunpack.c.l.b16 %v576
    %v641 = vunpack.c.l.b16 %v577
    %v642 = vunpack.c.l.b16 %v578
    %v643 = vunpack.c.l.b16 %v579
    %v644 = vunpack.c.l.b16 %v580
    %v645 = vunpack.c.l.b16 %v581
    %v646 = vunpack.c.l.b16 %v582
    %v647 = vunpack.c.l.b16 %v583
    %v648 = vunpack.c.l.b16 %v584
    %v649 = vunpack.c.l.b16 %v585
    %v650 = vunpack.c.l.b16 %v586
    %v651 = vpack.c.b16 %v620, %v619
    %v652 = vpack.c.b16 %v622, %v621
    %v653 = vpack.c.b16 %v624, %v623
    %v654 = vpack.c.b16 %v626, %v625
    %v655 = vpack.c.b16 %v628, %v627
    %v656 = vpack.c.b16 %v630, %v629
    %v657 = vpack.c.b16 %v632, %v631
    %v658 = vpack.c.b16 %v634, %v633
    %v659 = vpack.c.b16 %v636, %v635
    %v660 = vpack.c.b16 %v638, %v637
    %v661 = vpack.c.b16 %v640, %v639
    %v662 = vpack.c.b16 %v642, %v641
    %v663 = vpack.c.b16 %v644, %v643
    %v664 = vpack.c.b16 %v646, %v645
    %v665 = vpack.c.b16 %v648, %v647
    %v666 = vpack.c.b16 %v650, %v649
    %683 = vmatpush.bf16.msra.mxu0 %v658
    %684 = vmatpush.bf16.msra.mxu0 %v657
    %685 = vmatpush.bf16.msra.mxu0 %v656
    %686 = vmatpush.bf16.msra.mxu0 %v655
    %687 = vmatpush.bf16.msra.mxu0 %v654
    %688 = vmatpush.bf16.msra.mxu0 %v653
    %689 = vmatpush.bf16.msra.mxu0 %v652
    %690 = vmatpush.bf16.msra.mxu0 %v651
    %691 = vmatmul.bf16.gmra.mxu0 %v553
    %v692 = vpop.f32.mrf.mxu0
    %v693 = vadd.f32 0.0, %v692
    %v694 = vpop.f32.mrf.mxu0
    %695 = vdwg.mxu0
    %696 = vmatpush.bf16.msra.mxu0 %v666
    %697 = vmatpush.bf16.msra.mxu0 %v665
    %698 = vmatpush.bf16.msra.mxu0 %v664
    %699 = vmatpush.bf16.msra.mxu0 %v663
    %700 = vmatpush.bf16.msra.mxu0 %v662
    %701 = vmatpush.bf16.msra.mxu0 %v661
    %702 = vmatpush.bf16.msra.mxu0 %v660
    %703 = vmatpush.bf16.msra.mxu0 %v659
    %704 = vmatmul.bf16.gmra.mxu0 %v554
    %v705 = vpop.f32.mrf.mxu0
    %v706 = vadd.f32 %v693, %v705
    %v707 = vpop.f32.mrf.mxu0
    %708 = vdwg.mxu0
    %v709 = vadd.f32 %v137, %v706
    %s710 = sadd.s32 %s138, 2
    %v711 = vmul.f32 %v442, %v144
    %v712 = vmul.f32 %v453, %v150
    %v713 = vadd.f32 %v711, %v712
    %714 = vset.pattern.permute.xlu0 14
    %715 = vperm.xlu0 %714, %v110
    %v716 = vpop.permute.xlu0 %715
    %v718 = vmul.f32 %v716, %v157
    %v719 = vadd.f32 %v713, %v718
    %v720 = vadd.f32 %v719, %v160
    %v721 = vmax.f32 %v720, 0.0
    %v722 = vmul.f32 %v453, %v144
    %v723 = vmul.f32 %v716, %v150
    %v724 = vadd.f32 %v722, %v723
    %725 = vset.pattern.permute.xlu0 15
    %726 = vperm.xlu0 %725, %v110
    %v727 = vpop.permute.xlu0 %726
    %v729 = vmul.f32 %v727, %v157
    %v730 = vadd.f32 %v724, %v729
    %v731 = vadd.f32 %v730, %v160
    %v732 = vmax.f32 %v731, 0.0
    %v733 = vmax.f32 %v721, %v732
    %v734 = vmul.f32 %v716, %v144
    %v735 = vmul.f32 %v727, %v150
    %v736 = vadd.f32 %v734, %v735
    %737 = vset.pattern.permute.xlu0 16
    %738 = vperm.xlu0 %737, %v110
    %v739 = vpop.permute.xlu0 %738
    %v741 = vmul.f32 %v739, %v157
    %v742 = vadd.f32 %v736, %v741
    %v743 = vadd.f32 %v742, %v160
    %v744 = vmax.f32 %v743, 0.0
    %v745 = vmul.f32 %v727, %v144
    %v746 = vmul.f32 %v739, %v150
    %v747 = vadd.f32 %v745, %v746
    %748 = vset.pattern.permute.xlu0 17
    %749 = vperm.xlu0 %748, %v110
    %v750 = vpop.permute.xlu0 %749
    %v752 = vmul.f32 %v750, %v157
    %v753 = vadd.f32 %v747, %v752
    %v754 = vadd.f32 %v753, %v160
    %v755 = vmax.f32 %v754, 0.0
    %v756 = vmax.f32 %v744, %v755
    %p757 = scmp.gt.s32.totalorder %s710, 0
    %s758 = scalar_select %p757, 1, 0
    %s759 = scvt.s32.f32 %s758
    %v760 = vstv %s759
    %v761 = vmul.f32 %v436, %v760
    %p762 = scmp.lt.s32.totalorder %s710, 15
    %s763 = scalar_select %p762, 1, 0
    %s764 = scvt.s32.f32 %s763
    %v765 = vstv %s764
    %v766 = vmul.f32 %v756, %v765
    %v767 = vpack.c.bf16 %v761, %v761
    %v768 = vpack.c.bf16 %v459, %v459
    %v769 = vpack.c.bf16 %v733, %v733
    %v770 = vpack.c.bf16 %v766, %v766
    %v772 = vunpack.c.l.b16 %v768
    %v773 = vpack.c.b16 %v772, %v772
    %774 = vrot.lane.b32.xlu0 %v773, 64
    %v775 = vpop.permute.xlu0 %774
    %v778 = vsel %vm263, %v767, %v775
    %v781 = vsel %vm263, %v769, 0
    %783 = vmatpush.bf16.msra.mxu0 %v326
    %784 = vmatpush.bf16.msra.mxu0 %v325
    %785 = vmatpush.bf16.msra.mxu0 %v324
    %786 = vmatpush.bf16.msra.mxu0 %v323
    %787 = vmatpush.bf16.msra.mxu0 %v322
    %788 = vmatpush.bf16.msra.mxu0 %v321
    %789 = vmatpush.bf16.msra.mxu0 %v320
    %790 = vmatpush.bf16.msra.mxu0 %v319
    %791 = vmatmul.bf16.gmra.mxu0 %v778
    %v792 = vpop.f32.mrf.mxu0
    %v793 = vadd.f32 %v269, %v792
    %v794 = vpop.f32.mrf.mxu0
    %795 = vdwg.mxu0
    %796 = vmatpush.bf16.msra.mxu0 0
    %797 = vmatpush.bf16.msra.mxu0 0
    %798 = vmatpush.bf16.msra.mxu0 0
    %799 = vmatpush.bf16.msra.mxu0 0
    %800 = vmatpush.bf16.msra.mxu0 %v330
    %801 = vmatpush.bf16.msra.mxu0 %v329
    %802 = vmatpush.bf16.msra.mxu0 %v328
    %803 = vmatpush.bf16.msra.mxu0 %v327
    %804 = vmatmul.bf16.gmra.mxu0 %v781
    %v805 = vpop.f32.mrf.mxu0
    %v806 = vadd.f32 %v793, %v805
    %v807 = vpop.f32.mrf.mxu0
    %808 = vdwg.mxu0
    %v809 = vmax.f32 %v806, 0.0
    %v811 = vunpack.c.l.b16 %v769
    %v812 = vpack.c.b16 %v811, %v811
    %813 = vrot.lane.b32.xlu0 %v812, 64
    %v814 = vpop.permute.xlu0 %813
    %v817 = vsel %vm263, %v768, %v814
    %v820 = vsel %vm263, %v770, 0
    %822 = vmatpush.bf16.msra.mxu0 %v326
    %823 = vmatpush.bf16.msra.mxu0 %v325
    %824 = vmatpush.bf16.msra.mxu0 %v324
    %825 = vmatpush.bf16.msra.mxu0 %v323
    %826 = vmatpush.bf16.msra.mxu0 %v322
    %827 = vmatpush.bf16.msra.mxu0 %v321
    %828 = vmatpush.bf16.msra.mxu0 %v320
    %829 = vmatpush.bf16.msra.mxu0 %v319
    %830 = vmatmul.bf16.gmra.mxu0 %v817
    %v831 = vpop.f32.mrf.mxu0
    %v832 = vadd.f32 %v269, %v831
    %v833 = vpop.f32.mrf.mxu0
    %834 = vdwg.mxu0
    %835 = vmatpush.bf16.msra.mxu0 0
    %836 = vmatpush.bf16.msra.mxu0 0
    %837 = vmatpush.bf16.msra.mxu0 0
    %838 = vmatpush.bf16.msra.mxu0 0
    %839 = vmatpush.bf16.msra.mxu0 %v330
    %840 = vmatpush.bf16.msra.mxu0 %v329
    %841 = vmatpush.bf16.msra.mxu0 %v328
    %842 = vmatpush.bf16.msra.mxu0 %v327
    %843 = vmatmul.bf16.gmra.mxu0 %v820
    %v844 = vpop.f32.mrf.mxu0
    %v845 = vadd.f32 %v832, %v844
    %v846 = vpop.f32.mrf.mxu0
    %847 = vdwg.mxu0
    %v848 = vmax.f32 %v845, 0.0
    %v849 = vmax.f32 %v809, %v848
    %s850 = sadd.s32 %s138, 3
    %v851 = vmul.f32 %v739, %v144
    %v852 = vmul.f32 %v750, %v150
    %v853 = vadd.f32 %v851, %v852
    %854 = vset.pattern.permute.xlu0 18
    %855 = vperm.xlu0 %854, %v110
    %v856 = vpop.permute.xlu0 %855
    %v858 = vmul.f32 %v856, %v157
    %v859 = vadd.f32 %v853, %v858
    %v860 = vadd.f32 %v859, %v160
    %v861 = vmax.f32 %v860, 0.0
    %v862 = vmul.f32 %v750, %v144
    %v863 = vmul.f32 %v856, %v150
    %v864 = vadd.f32 %v862, %v863
    %865 = vset.pattern.permute.xlu0 19
    %866 = vperm.xlu0 %865, %v110
    %v867 = vpop.permute.xlu0 %866
    %v869 = vmul.f32 %v867, %v157
    %v870 = vadd.f32 %v864, %v869
    %v871 = vadd.f32 %v870, %v160
    %v872 = vmax.f32 %v871, 0.0
    %v873 = vmax.f32 %v861, %v872
    %v874 = vmul.f32 %v856, %v144
    %v875 = vmul.f32 %v867, %v150
    %v876 = vadd.f32 %v874, %v875
    %877 = vset.pattern.permute.xlu0 20
    %878 = vperm.xlu0 %877, %v110
    %v879 = vpop.permute.xlu0 %878
    %v881 = vmul.f32 %v879, %v157
    %v882 = vadd.f32 %v876, %v881
    %v883 = vadd.f32 %v882, %v160
    %v884 = vmax.f32 %v883, 0.0
    %v885 = vmul.f32 %v867, %v144
    %v886 = vmul.f32 %v879, %v150
    %v887 = vadd.f32 %v885, %v886
    %888 = vset.pattern.permute.xlu0 21
    %889 = vperm.xlu0 %888, %v110
    %v890 = vpop.permute.xlu0 %889
    %v892 = vmul.f32 %v890, %v157
    %v893 = vadd.f32 %v887, %v892
    %v894 = vadd.f32 %v893, %v160
    %v895 = vmax.f32 %v894, 0.0
    %v896 = vmax.f32 %v884, %v895
    %p897 = scmp.gt.s32.totalorder %s850, 0
    %s898 = scalar_select %p897, 1, 0
    %s899 = scvt.s32.f32 %s898
    %v900 = vstv %s899
    %v901 = vmul.f32 %v733, %v900
    %p902 = scmp.lt.s32.totalorder %s850, 15
    %s903 = scalar_select %p902, 1, 0
    %s904 = scvt.s32.f32 %s903
    %v905 = vstv %s904
    %v906 = vmul.f32 %v896, %v905
    %v907 = vpack.c.bf16 %v901, %v901
    %v908 = vpack.c.bf16 %v756, %v756
    %v909 = vpack.c.bf16 %v873, %v873
    %v910 = vpack.c.bf16 %v906, %v906
    %v912 = vunpack.c.l.b16 %v908
    %v913 = vpack.c.b16 %v912, %v912
    %914 = vrot.lane.b32.xlu0 %v913, 64
    %v915 = vpop.permute.xlu0 %914
    %v918 = vsel %vm263, %v907, %v915
    %v921 = vsel %vm263, %v909, 0
    %923 = vmatpush.bf16.msra.mxu0 %v326
    %924 = vmatpush.bf16.msra.mxu0 %v325
    %925 = vmatpush.bf16.msra.mxu0 %v324
    %926 = vmatpush.bf16.msra.mxu0 %v323
    %927 = vmatpush.bf16.msra.mxu0 %v322
    %928 = vmatpush.bf16.msra.mxu0 %v321
    %929 = vmatpush.bf16.msra.mxu0 %v320
    %930 = vmatpush.bf16.msra.mxu0 %v319
    %931 = vmatmul.bf16.gmra.mxu0 %v918
    %v932 = vpop.f32.mrf.mxu0
    %v933 = vadd.f32 %v269, %v932
    %v934 = vpop.f32.mrf.mxu0
    %935 = vdwg.mxu0
    %936 = vmatpush.bf16.msra.mxu0 0
    %937 = vmatpush.bf16.msra.mxu0 0
    %938 = vmatpush.bf16.msra.mxu0 0
    %939 = vmatpush.bf16.msra.mxu0 0
    %940 = vmatpush.bf16.msra.mxu0 %v330
    %941 = vmatpush.bf16.msra.mxu0 %v329
    %942 = vmatpush.bf16.msra.mxu0 %v328
    %943 = vmatpush.bf16.msra.mxu0 %v327
    %944 = vmatmul.bf16.gmra.mxu0 %v921
    %v945 = vpop.f32.mrf.mxu0
    %v946 = vadd.f32 %v933, %v945
    %v947 = vpop.f32.mrf.mxu0
    %948 = vdwg.mxu0
    %v949 = vmax.f32 %v946, 0.0
    %v951 = vunpack.c.l.b16 %v909
    %v952 = vpack.c.b16 %v951, %v951
    %953 = vrot.lane.b32.xlu0 %v952, 64
    %v954 = vpop.permute.xlu0 %953
    %v957 = vsel %vm263, %v908, %v954
    %v960 = vsel %vm263, %v910, 0
    %962 = vmatpush.bf16.msra.mxu0 %v326
    %963 = vmatpush.bf16.msra.mxu0 %v325
    %964 = vmatpush.bf16.msra.mxu0 %v324
    %965 = vmatpush.bf16.msra.mxu0 %v323
    %966 = vmatpush.bf16.msra.mxu0 %v322
    %967 = vmatpush.bf16.msra.mxu0 %v321
    %968 = vmatpush.bf16.msra.mxu0 %v320
    %969 = vmatpush.bf16.msra.mxu0 %v319
    %970 = vmatmul.bf16.gmra.mxu0 %v957
    %v971 = vpop.f32.mrf.mxu0
    %v972 = vadd.f32 %v269, %v971
    %v973 = vpop.f32.mrf.mxu0
    %974 = vdwg.mxu0
    %975 = vmatpush.bf16.msra.mxu0 0
    %976 = vmatpush.bf16.msra.mxu0 0
    %977 = vmatpush.bf16.msra.mxu0 0
    %978 = vmatpush.bf16.msra.mxu0 0
    %979 = vmatpush.bf16.msra.mxu0 %v330
    %980 = vmatpush.bf16.msra.mxu0 %v329
    %981 = vmatpush.bf16.msra.mxu0 %v328
    %982 = vmatpush.bf16.msra.mxu0 %v327
    %983 = vmatmul.bf16.gmra.mxu0 %v960
    %v984 = vpop.f32.mrf.mxu0
    %v985 = vadd.f32 %v972, %v984
    %v986 = vpop.f32.mrf.mxu0
    %987 = vdwg.mxu0
    %v988 = vmax.f32 %v985, 0.0
    %v989 = vmax.f32 %v949, %v988
    %v990 = vpack.c.bf16 %v849, %v849
    %v991 = vpack.c.bf16 %v989, %v989
    %s992 = scalar_lea.vmem [#allocation9], 128
    %v993 = vld [vmem:[%s992] sm:$0xf]
    %v994 = vld [vmem:[%s992 + $0x4] sm:$0xf]
    %v995 = vld [vmem:[%s992 + $0x8] sm:$0xf]
    %v996 = vld [vmem:[%s992 + $0xc] sm:$0xf]
    %v997 = vld [vmem:[%s992 + $0x10] sm:$0xf]
    %v998 = vld [vmem:[%s992 + $0x14] sm:$0xf]
    %v999 = vld [vmem:[%s992 + $0x18] sm:$0xf]
    %v1000 = vld [vmem:[%s992 + $0x1c] sm:$0xf]
    %v1001 = vld [vmem:[%s992 + $0x20] sm:$0xf]
    %v1002 = vld [vmem:[%s992 + $0x24] sm:$0xf]
    %v1003 = vld [vmem:[%s992 + $0x28] sm:$0xf]
    %v1004 = vld [vmem:[%s992 + $0x2c] sm:$0xf]
    %v1005 = vld [vmem:[%s992 + $0x30] sm:$0xf]
    %v1006 = vld [vmem:[%s992 + $0x34] sm:$0xf]
    %v1007 = vld [vmem:[%s992 + $0x38] sm:$0xf]
    %v1008 = vld [vmem:[%s992 + $0x3c] sm:$0xf]
    %v1009 = vld [vmem:[%s992 + $0x40] sm:$0xf]
    %v1010 = vld [vmem:[%s992 + $0x44] sm:$0xf]
    %v1011 = vld [vmem:[%s992 + $0x48] sm:$0xf]
    %v1012 = vld [vmem:[%s992 + $0x4c] sm:$0xf]
    %v1013 = vld [vmem:[%s992 + $0x50] sm:$0xf]
    %v1014 = vld [vmem:[%s992 + $0x54] sm:$0xf]
    %v1015 = vld [vmem:[%s992 + $0x58] sm:$0xf]
    %v1016 = vld [vmem:[%s992 + $0x5c] sm:$0xf]
    %v1017 = vld [vmem:[%s992 + $0x60] sm:$0xf]
    %v1018 = vld [vmem:[%s992 + $0x64] sm:$0xf]
    %v1019 = vld [vmem:[%s992 + $0x68] sm:$0xf]
    %v1020 = vld [vmem:[%s992 + $0x6c] sm:$0xf]
    %v1021 = vld [vmem:[%s992 + $0x70] sm:$0xf]
    %v1022 = vld [vmem:[%s992 + $0x74] sm:$0xf]
    %v1023 = vld [vmem:[%s992 + $0x78] sm:$0xf]
    %v1024 = vld [vmem:[%s992 + $0x7c] sm:$0xf]
    %v1057 = vunpack.c.l.b16 %v993
    %v1058 = vunpack.c.l.b16 %v994
    %v1059 = vunpack.c.l.b16 %v995
    %v1060 = vunpack.c.l.b16 %v996
    %v1061 = vunpack.c.l.b16 %v997
    %v1062 = vunpack.c.l.b16 %v998
    %v1063 = vunpack.c.l.b16 %v999
    %v1064 = vunpack.c.l.b16 %v1000
    %v1065 = vunpack.c.l.b16 %v1001
    %v1066 = vunpack.c.l.b16 %v1002
    %v1067 = vunpack.c.l.b16 %v1003
    %v1068 = vunpack.c.l.b16 %v1004
    %v1069 = vunpack.c.l.b16 %v1005
    %v1070 = vunpack.c.l.b16 %v1006
    %v1071 = vunpack.c.l.b16 %v1007
    %v1072 = vunpack.c.l.b16 %v1008
    %v1073 = vunpack.c.l.b16 %v1009
    %v1074 = vunpack.c.l.b16 %v1010
    %v1075 = vunpack.c.l.b16 %v1011
    %v1076 = vunpack.c.l.b16 %v1012
    %v1077 = vunpack.c.l.b16 %v1013
    %v1078 = vunpack.c.l.b16 %v1014
    %v1079 = vunpack.c.l.b16 %v1015
    %v1080 = vunpack.c.l.b16 %v1016
    %v1081 = vunpack.c.l.b16 %v1017
    %v1082 = vunpack.c.l.b16 %v1018
    %v1083 = vunpack.c.l.b16 %v1019
    %v1084 = vunpack.c.l.b16 %v1020
    %v1085 = vunpack.c.l.b16 %v1021
    %v1086 = vunpack.c.l.b16 %v1022
    %v1087 = vunpack.c.l.b16 %v1023
    %v1088 = vunpack.c.l.b16 %v1024
    %v1089 = vpack.c.b16 %v1058, %v1057
    %v1090 = vpack.c.b16 %v1060, %v1059
    %v1091 = vpack.c.b16 %v1062, %v1061
    %v1092 = vpack.c.b16 %v1064, %v1063
    %v1093 = vpack.c.b16 %v1066, %v1065
    %v1094 = vpack.c.b16 %v1068, %v1067
    %v1095 = vpack.c.b16 %v1070, %v1069
    %v1096 = vpack.c.b16 %v1072, %v1071
    %v1097 = vpack.c.b16 %v1074, %v1073
    %v1098 = vpack.c.b16 %v1076, %v1075
    %v1099 = vpack.c.b16 %v1078, %v1077
    %v1100 = vpack.c.b16 %v1080, %v1079
    %v1101 = vpack.c.b16 %v1082, %v1081
    %v1102 = vpack.c.b16 %v1084, %v1083
    %v1103 = vpack.c.b16 %v1086, %v1085
    %v1104 = vpack.c.b16 %v1088, %v1087
    %1121 = vmatpush.bf16.msra.mxu0 %v1096
    %1122 = vmatpush.bf16.msra.mxu0 %v1095
    %1123 = vmatpush.bf16.msra.mxu0 %v1094
    %1124 = vmatpush.bf16.msra.mxu0 %v1093
    %1125 = vmatpush.bf16.msra.mxu0 %v1092
    %1126 = vmatpush.bf16.msra.mxu0 %v1091
    %1127 = vmatpush.bf16.msra.mxu0 %v1090
    %1128 = vmatpush.bf16.msra.mxu0 %v1089
    %1129 = vmatmul.bf16.gmra.mxu0 %v990
    %v1130 = vpop.f32.mrf.mxu0
    %v1131 = vadd.f32 0.0, %v1130
    %v1132 = vpop.f32.mrf.mxu0
    %1133 = vdwg.mxu0
    %1134 = vmatpush.bf16.msra.mxu0 %v1104
    %1135 = vmatpush.bf16.msra.mxu0 %v1103
    %1136 = vmatpush.bf16.msra.mxu0 %v1102
    %1137 = vmatpush.bf16.msra.mxu0 %v1101
    %1138 = vmatpush.bf16.msra.mxu0 %v1100
    %1139 = vmatpush.bf16.msra.mxu0 %v1099
    %1140 = vmatpush.bf16.msra.mxu0 %v1098
    %1141 = vmatpush.bf16.msra.mxu0 %v1097
    %1142 = vmatmul.bf16.gmra.mxu0 %v991
    %v1143 = vpop.f32.mrf.mxu0
    %v1144 = vadd.f32 %v1131, %v1143
    %v1145 = vpop.f32.mrf.mxu0
    %1146 = vdwg.mxu0
    %v1147 = vadd.f32 %v709, %v1144
    %s1148 = sadd.s32 %s138, 4
    %v1149 = vmul.f32 %v879, %v144
    %v1150 = vmul.f32 %v890, %v150
    %v1151 = vadd.f32 %v1149, %v1150
    %1152 = vset.pattern.permute.xlu0 22
    %1153 = vperm.xlu0 %1152, %v110
    %v1154 = vpop.permute.xlu0 %1153
    %v1156 = vmul.f32 %v1154, %v157
    %v1157 = vadd.f32 %v1151, %v1156
    %v1158 = vadd.f32 %v1157, %v160
    %v1159 = vmax.f32 %v1158, 0.0
    %v1160 = vmul.f32 %v890, %v144
    %v1161 = vmul.f32 %v1154, %v150
    %v1162 = vadd.f32 %v1160, %v1161
    %1163 = vset.pattern.permute.xlu0 23
    %1164 = vperm.xlu0 %1163, %v110
    %v1165 = vpop.permute.xlu0 %1164
    %v1167 = vmul.f32 %v1165, %v157
    %v1168 = vadd.f32 %v1162, %v1167
    %v1169 = vadd.f32 %v1168, %v160
    %v1170 = vmax.f32 %v1169, 0.0
    %v1171 = vmax.f32 %v1159, %v1170
    %v1172 = vmul.f32 %v1154, %v144
    %v1173 = vmul.f32 %v1165, %v150
    %v1174 = vadd.f32 %v1172, %v1173
    %1175 = vset.pattern.permute.xlu0 24
    %1176 = vperm.xlu0 %1175, %v110
    %v1177 = vpop.permute.xlu0 %1176
    %v1179 = vmul.f32 %v1177, %v157
    %v1180 = vadd.f32 %v1174, %v1179
    %v1181 = vadd.f32 %v1180, %v160
    %v1182 = vmax.f32 %v1181, 0.0
    %v1183 = vmul.f32 %v1165, %v144
    %v1184 = vmul.f32 %v1177, %v150
    %v1185 = vadd.f32 %v1183, %v1184
    %1186 = vset.pattern.permute.xlu0 25
    %1187 = vperm.xlu0 %1186, %v110
    %v1188 = vpop.permute.xlu0 %1187
    %v1190 = vmul.f32 %v1188, %v157
    %v1191 = vadd.f32 %v1185, %v1190
    %v1192 = vadd.f32 %v1191, %v160
    %v1193 = vmax.f32 %v1192, 0.0
    %v1194 = vmax.f32 %v1182, %v1193
    %p1195 = scmp.gt.s32.totalorder %s1148, 0
    %s1196 = scalar_select %p1195, 1, 0
    %s1197 = scvt.s32.f32 %s1196
    %v1198 = vstv %s1197
    %v1199 = vmul.f32 %v873, %v1198
    %p1200 = scmp.lt.s32.totalorder %s1148, 15
    %s1201 = scalar_select %p1200, 1, 0
    %s1202 = scvt.s32.f32 %s1201
    %v1203 = vstv %s1202
    %v1204 = vmul.f32 %v1194, %v1203
    %v1205 = vpack.c.bf16 %v1199, %v1199
    %v1206 = vpack.c.bf16 %v896, %v896
    %v1207 = vpack.c.bf16 %v1171, %v1171
    %v1208 = vpack.c.bf16 %v1204, %v1204
    %v1210 = vunpack.c.l.b16 %v1206
    %v1211 = vpack.c.b16 %v1210, %v1210
    %1212 = vrot.lane.b32.xlu0 %v1211, 64
    %v1213 = vpop.permute.xlu0 %1212
    %v1216 = vsel %vm263, %v1205, %v1213
    %v1219 = vsel %vm263, %v1207, 0
    %1221 = vmatpush.bf16.msra.mxu0 %v326
    %1222 = vmatpush.bf16.msra.mxu0 %v325
    %1223 = vmatpush.bf16.msra.mxu0 %v324
    %1224 = vmatpush.bf16.msra.mxu0 %v323
    %1225 = vmatpush.bf16.msra.mxu0 %v322
    %1226 = vmatpush.bf16.msra.mxu0 %v321
    %1227 = vmatpush.bf16.msra.mxu0 %v320
    %1228 = vmatpush.bf16.msra.mxu0 %v319
    %1229 = vmatmul.bf16.gmra.mxu0 %v1216
    %v1230 = vpop.f32.mrf.mxu0
    %v1231 = vadd.f32 %v269, %v1230
    %v1232 = vpop.f32.mrf.mxu0
    %1233 = vdwg.mxu0
    %1234 = vmatpush.bf16.msra.mxu0 0
    %1235 = vmatpush.bf16.msra.mxu0 0
    %1236 = vmatpush.bf16.msra.mxu0 0
    %1237 = vmatpush.bf16.msra.mxu0 0
    %1238 = vmatpush.bf16.msra.mxu0 %v330
    %1239 = vmatpush.bf16.msra.mxu0 %v329
    %1240 = vmatpush.bf16.msra.mxu0 %v328
    %1241 = vmatpush.bf16.msra.mxu0 %v327
    %1242 = vmatmul.bf16.gmra.mxu0 %v1219
    %v1243 = vpop.f32.mrf.mxu0
    %v1244 = vadd.f32 %v1231, %v1243
    %v1245 = vpop.f32.mrf.mxu0
    %1246 = vdwg.mxu0
    %v1247 = vmax.f32 %v1244, 0.0
    %v1249 = vunpack.c.l.b16 %v1207
    %v1250 = vpack.c.b16 %v1249, %v1249
    %1251 = vrot.lane.b32.xlu0 %v1250, 64
    %v1252 = vpop.permute.xlu0 %1251
    %v1255 = vsel %vm263, %v1206, %v1252
    %v1258 = vsel %vm263, %v1208, 0
    %1260 = vmatpush.bf16.msra.mxu0 %v326
    %1261 = vmatpush.bf16.msra.mxu0 %v325
    %1262 = vmatpush.bf16.msra.mxu0 %v324
    %1263 = vmatpush.bf16.msra.mxu0 %v323
    %1264 = vmatpush.bf16.msra.mxu0 %v322
    %1265 = vmatpush.bf16.msra.mxu0 %v321
    %1266 = vmatpush.bf16.msra.mxu0 %v320
    %1267 = vmatpush.bf16.msra.mxu0 %v319
    %1268 = vmatmul.bf16.gmra.mxu0 %v1255
    %v1269 = vpop.f32.mrf.mxu0
    %v1270 = vadd.f32 %v269, %v1269
    %v1271 = vpop.f32.mrf.mxu0
    %1272 = vdwg.mxu0
    %1273 = vmatpush.bf16.msra.mxu0 0
    %1274 = vmatpush.bf16.msra.mxu0 0
    %1275 = vmatpush.bf16.msra.mxu0 0
    %1276 = vmatpush.bf16.msra.mxu0 0
    %1277 = vmatpush.bf16.msra.mxu0 %v330
    %1278 = vmatpush.bf16.msra.mxu0 %v329
    %1279 = vmatpush.bf16.msra.mxu0 %v328
    %1280 = vmatpush.bf16.msra.mxu0 %v327
    %1281 = vmatmul.bf16.gmra.mxu0 %v1258
    %v1282 = vpop.f32.mrf.mxu0
    %v1283 = vadd.f32 %v1270, %v1282
    %v1284 = vpop.f32.mrf.mxu0
    %1285 = vdwg.mxu0
    %v1286 = vmax.f32 %v1283, 0.0
    %v1287 = vmax.f32 %v1247, %v1286
    %s1288 = sadd.s32 %s138, 5
    %v1289 = vmul.f32 %v1177, %v144
    %v1290 = vmul.f32 %v1188, %v150
    %v1291 = vadd.f32 %v1289, %v1290
    %1292 = vset.pattern.permute.xlu0 26
    %1293 = vperm.xlu0 %1292, %v110
    %v1294 = vpop.permute.xlu0 %1293
    %v1296 = vmul.f32 %v1294, %v157
    %v1297 = vadd.f32 %v1291, %v1296
    %v1298 = vadd.f32 %v1297, %v160
    %v1299 = vmax.f32 %v1298, 0.0
    %v1300 = vmul.f32 %v1188, %v144
    %v1301 = vmul.f32 %v1294, %v150
    %v1302 = vadd.f32 %v1300, %v1301
    %1303 = vset.pattern.permute.xlu0 27
    %1304 = vperm.xlu0 %1303, %v110
    %v1305 = vpop.permute.xlu0 %1304
    %v1307 = vmul.f32 %v1305, %v157
    %v1308 = vadd.f32 %v1302, %v1307
    %v1309 = vadd.f32 %v1308, %v160
    %v1310 = vmax.f32 %v1309, 0.0
    %v1311 = vmax.f32 %v1299, %v1310
    %v1312 = vmul.f32 %v1294, %v144
    %v1313 = vmul.f32 %v1305, %v150
    %v1314 = vadd.f32 %v1312, %v1313
    %1315 = vset.pattern.permute.xlu0 28
    %1316 = vperm.xlu0 %1315, %v110
    %v1317 = vpop.permute.xlu0 %1316
    %v1319 = vmul.f32 %v1317, %v157
    %v1320 = vadd.f32 %v1314, %v1319
    %v1321 = vadd.f32 %v1320, %v160
    %v1322 = vmax.f32 %v1321, 0.0
    %v1323 = vmul.f32 %v1305, %v144
    %v1324 = vmul.f32 %v1317, %v150
    %v1325 = vadd.f32 %v1323, %v1324
    %1326 = vset.pattern.permute.xlu0 29
    %1327 = vperm.xlu0 %1326, %v110
    %v1328 = vpop.permute.xlu0 %1327
    %v1330 = vmul.f32 %v1328, %v157
    %v1331 = vadd.f32 %v1325, %v1330
    %v1332 = vadd.f32 %v1331, %v160
    %v1333 = vmax.f32 %v1332, 0.0
    %v1334 = vmax.f32 %v1322, %v1333
    %p1335 = scmp.gt.s32.totalorder %s1288, 0
    %s1336 = scalar_select %p1335, 1, 0
    %s1337 = scvt.s32.f32 %s1336
    %v1338 = vstv %s1337
    %v1339 = vmul.f32 %v1171, %v1338
    %p1340 = scmp.lt.s32.totalorder %s1288, 15
    %s1341 = scalar_select %p1340, 1, 0
    %s1342 = scvt.s32.f32 %s1341
    %v1343 = vstv %s1342
    %v1344 = vmul.f32 %v1334, %v1343
    %v1345 = vpack.c.bf16 %v1339, %v1339
    %v1346 = vpack.c.bf16 %v1194, %v1194
    %v1347 = vpack.c.bf16 %v1311, %v1311
    %v1348 = vpack.c.bf16 %v1344, %v1344
    %v1350 = vunpack.c.l.b16 %v1346
    %v1351 = vpack.c.b16 %v1350, %v1350
    %1352 = vrot.lane.b32.xlu0 %v1351, 64
    %v1353 = vpop.permute.xlu0 %1352
    %v1356 = vsel %vm263, %v1345, %v1353
    %v1359 = vsel %vm263, %v1347, 0
    %1361 = vmatpush.bf16.msra.mxu0 %v326
    %1362 = vmatpush.bf16.msra.mxu0 %v325
    %1363 = vmatpush.bf16.msra.mxu0 %v324
    %1364 = vmatpush.bf16.msra.mxu0 %v323
    %1365 = vmatpush.bf16.msra.mxu0 %v322
    %1366 = vmatpush.bf16.msra.mxu0 %v321
    %1367 = vmatpush.bf16.msra.mxu0 %v320
    %1368 = vmatpush.bf16.msra.mxu0 %v319
    %1369 = vmatmul.bf16.gmra.mxu0 %v1356
    %v1370 = vpop.f32.mrf.mxu0
    %v1371 = vadd.f32 %v269, %v1370
    %v1372 = vpop.f32.mrf.mxu0
    %1373 = vdwg.mxu0
    %1374 = vmatpush.bf16.msra.mxu0 0
    %1375 = vmatpush.bf16.msra.mxu0 0
    %1376 = vmatpush.bf16.msra.mxu0 0
    %1377 = vmatpush.bf16.msra.mxu0 0
    %1378 = vmatpush.bf16.msra.mxu0 %v330
    %1379 = vmatpush.bf16.msra.mxu0 %v329
    %1380 = vmatpush.bf16.msra.mxu0 %v328
    %1381 = vmatpush.bf16.msra.mxu0 %v327
    %1382 = vmatmul.bf16.gmra.mxu0 %v1359
    %v1383 = vpop.f32.mrf.mxu0
    %v1384 = vadd.f32 %v1371, %v1383
    %v1385 = vpop.f32.mrf.mxu0
    %1386 = vdwg.mxu0
    %v1387 = vmax.f32 %v1384, 0.0
    %v1389 = vunpack.c.l.b16 %v1347
    %v1390 = vpack.c.b16 %v1389, %v1389
    %1391 = vrot.lane.b32.xlu0 %v1390, 64
    %v1392 = vpop.permute.xlu0 %1391
    %v1395 = vsel %vm263, %v1346, %v1392
    %v1398 = vsel %vm263, %v1348, 0
    %1400 = vmatpush.bf16.msra.mxu0 %v326
    %1401 = vmatpush.bf16.msra.mxu0 %v325
    %1402 = vmatpush.bf16.msra.mxu0 %v324
    %1403 = vmatpush.bf16.msra.mxu0 %v323
    %1404 = vmatpush.bf16.msra.mxu0 %v322
    %1405 = vmatpush.bf16.msra.mxu0 %v321
    %1406 = vmatpush.bf16.msra.mxu0 %v320
    %1407 = vmatpush.bf16.msra.mxu0 %v319
    %1408 = vmatmul.bf16.gmra.mxu0 %v1395
    %v1409 = vpop.f32.mrf.mxu0
    %v1410 = vadd.f32 %v269, %v1409
    %v1411 = vpop.f32.mrf.mxu0
    %1412 = vdwg.mxu0
    %1413 = vmatpush.bf16.msra.mxu0 0
    %1414 = vmatpush.bf16.msra.mxu0 0
    %1415 = vmatpush.bf16.msra.mxu0 0
    %1416 = vmatpush.bf16.msra.mxu0 0
    %1417 = vmatpush.bf16.msra.mxu0 %v330
    %1418 = vmatpush.bf16.msra.mxu0 %v329
    %1419 = vmatpush.bf16.msra.mxu0 %v328
    %1420 = vmatpush.bf16.msra.mxu0 %v327
    %1421 = vmatmul.bf16.gmra.mxu0 %v1398
    %v1422 = vpop.f32.mrf.mxu0
    %v1423 = vadd.f32 %v1410, %v1422
    %v1424 = vpop.f32.mrf.mxu0
    %1425 = vdwg.mxu0
    %v1426 = vmax.f32 %v1423, 0.0
    %v1427 = vmax.f32 %v1387, %v1426
    %v1428 = vpack.c.bf16 %v1287, %v1287
    %v1429 = vpack.c.bf16 %v1427, %v1427
    %s1430 = scalar_lea.vmem [#allocation9], 256
    %v1431 = vld [vmem:[%s1430] sm:$0xf]
    %v1432 = vld [vmem:[%s1430 + $0x4] sm:$0xf]
    %v1433 = vld [vmem:[%s1430 + $0x8] sm:$0xf]
    %v1434 = vld [vmem:[%s1430 + $0xc] sm:$0xf]
    %v1435 = vld [vmem:[%s1430 + $0x10] sm:$0xf]
    %v1436 = vld [vmem:[%s1430 + $0x14] sm:$0xf]
    %v1437 = vld [vmem:[%s1430 + $0x18] sm:$0xf]
    %v1438 = vld [vmem:[%s1430 + $0x1c] sm:$0xf]
    %v1439 = vld [vmem:[%s1430 + $0x20] sm:$0xf]
    %v1440 = vld [vmem:[%s1430 + $0x24] sm:$0xf]
    %v1441 = vld [vmem:[%s1430 + $0x28] sm:$0xf]
    %v1442 = vld [vmem:[%s1430 + $0x2c] sm:$0xf]
    %v1443 = vld [vmem:[%s1430 + $0x30] sm:$0xf]
    %v1444 = vld [vmem:[%s1430 + $0x34] sm:$0xf]
    %v1445 = vld [vmem:[%s1430 + $0x38] sm:$0xf]
    %v1446 = vld [vmem:[%s1430 + $0x3c] sm:$0xf]
    %v1447 = vld [vmem:[%s1430 + $0x40] sm:$0xf]
    %v1448 = vld [vmem:[%s1430 + $0x44] sm:$0xf]
    %v1449 = vld [vmem:[%s1430 + $0x48] sm:$0xf]
    %v1450 = vld [vmem:[%s1430 + $0x4c] sm:$0xf]
    %v1451 = vld [vmem:[%s1430 + $0x50] sm:$0xf]
    %v1452 = vld [vmem:[%s1430 + $0x54] sm:$0xf]
    %v1453 = vld [vmem:[%s1430 + $0x58] sm:$0xf]
    %v1454 = vld [vmem:[%s1430 + $0x5c] sm:$0xf]
    %v1455 = vld [vmem:[%s1430 + $0x60] sm:$0xf]
    %v1456 = vld [vmem:[%s1430 + $0x64] sm:$0xf]
    %v1457 = vld [vmem:[%s1430 + $0x68] sm:$0xf]
    %v1458 = vld [vmem:[%s1430 + $0x6c] sm:$0xf]
    %v1459 = vld [vmem:[%s1430 + $0x70] sm:$0xf]
    %v1460 = vld [vmem:[%s1430 + $0x74] sm:$0xf]
    %v1461 = vld [vmem:[%s1430 + $0x78] sm:$0xf]
    %v1462 = vld [vmem:[%s1430 + $0x7c] sm:$0xf]
    %v1495 = vunpack.c.l.b16 %v1431
    %v1496 = vunpack.c.l.b16 %v1432
    %v1497 = vunpack.c.l.b16 %v1433
    %v1498 = vunpack.c.l.b16 %v1434
    %v1499 = vunpack.c.l.b16 %v1435
    %v1500 = vunpack.c.l.b16 %v1436
    %v1501 = vunpack.c.l.b16 %v1437
    %v1502 = vunpack.c.l.b16 %v1438
    %v1503 = vunpack.c.l.b16 %v1439
    %v1504 = vunpack.c.l.b16 %v1440
    %v1505 = vunpack.c.l.b16 %v1441
    %v1506 = vunpack.c.l.b16 %v1442
    %v1507 = vunpack.c.l.b16 %v1443
    %v1508 = vunpack.c.l.b16 %v1444
    %v1509 = vunpack.c.l.b16 %v1445
    %v1510 = vunpack.c.l.b16 %v1446
    %v1511 = vunpack.c.l.b16 %v1447
    %v1512 = vunpack.c.l.b16 %v1448
    %v1513 = vunpack.c.l.b16 %v1449
    %v1514 = vunpack.c.l.b16 %v1450
    %v1515 = vunpack.c.l.b16 %v1451
    %v1516 = vunpack.c.l.b16 %v1452
    %v1517 = vunpack.c.l.b16 %v1453
    %v1518 = vunpack.c.l.b16 %v1454
    %v1519 = vunpack.c.l.b16 %v1455
    %v1520 = vunpack.c.l.b16 %v1456
    %v1521 = vunpack.c.l.b16 %v1457
    %v1522 = vunpack.c.l.b16 %v1458
    %v1523 = vunpack.c.l.b16 %v1459
    %v1524 = vunpack.c.l.b16 %v1460
    %v1525 = vunpack.c.l.b16 %v1461
    %v1526 = vunpack.c.l.b16 %v1462
    %v1527 = vpack.c.b16 %v1496, %v1495
    %v1528 = vpack.c.b16 %v1498, %v1497
    %v1529 = vpack.c.b16 %v1500, %v1499
    %v1530 = vpack.c.b16 %v1502, %v1501
    %v1531 = vpack.c.b16 %v1504, %v1503
    %v1532 = vpack.c.b16 %v1506, %v1505
    %v1533 = vpack.c.b16 %v1508, %v1507
    %v1534 = vpack.c.b16 %v1510, %v1509
    %v1535 = vpack.c.b16 %v1512, %v1511
    %v1536 = vpack.c.b16 %v1514, %v1513
    %v1537 = vpack.c.b16 %v1516, %v1515
    %v1538 = vpack.c.b16 %v1518, %v1517
    %v1539 = vpack.c.b16 %v1520, %v1519
    %v1540 = vpack.c.b16 %v1522, %v1521
    %v1541 = vpack.c.b16 %v1524, %v1523
    %v1542 = vpack.c.b16 %v1526, %v1525
    %1559 = vmatpush.bf16.msra.mxu0 %v1534
    %1560 = vmatpush.bf16.msra.mxu0 %v1533
    %1561 = vmatpush.bf16.msra.mxu0 %v1532
    %1562 = vmatpush.bf16.msra.mxu0 %v1531
    %1563 = vmatpush.bf16.msra.mxu0 %v1530
    %1564 = vmatpush.bf16.msra.mxu0 %v1529
    %1565 = vmatpush.bf16.msra.mxu0 %v1528
    %1566 = vmatpush.bf16.msra.mxu0 %v1527
    %1567 = vmatmul.bf16.gmra.mxu0 %v1428
    %v1568 = vpop.f32.mrf.mxu0
    %v1569 = vadd.f32 0.0, %v1568
    %v1570 = vpop.f32.mrf.mxu0
    %1571 = vdwg.mxu0
    %1572 = vmatpush.bf16.msra.mxu0 %v1542
    %1573 = vmatpush.bf16.msra.mxu0 %v1541
    %1574 = vmatpush.bf16.msra.mxu0 %v1540
    %1575 = vmatpush.bf16.msra.mxu0 %v1539
    %1576 = vmatpush.bf16.msra.mxu0 %v1538
    %1577 = vmatpush.bf16.msra.mxu0 %v1537
    %1578 = vmatpush.bf16.msra.mxu0 %v1536
    %1579 = vmatpush.bf16.msra.mxu0 %v1535
    %1580 = vmatmul.bf16.gmra.mxu0 %v1429
    %v1581 = vpop.f32.mrf.mxu0
    %v1582 = vadd.f32 %v1569, %v1581
    %v1583 = vpop.f32.mrf.mxu0
    %1584 = vdwg.mxu0
    %v1585 = vadd.f32 %v1147, %v1582
    %s1586 = sadd.s32 %s138, 6
    %v1587 = vmul.f32 %v1317, %v144
    %v1588 = vmul.f32 %v1328, %v150
    %v1589 = vadd.f32 %v1587, %v1588
    %1590 = vset.pattern.permute.xlu0 30
    %1591 = vperm.xlu0 %1590, %v110
    %v1592 = vpop.permute.xlu0 %1591
    %v1594 = vmul.f32 %v1592, %v157
    %v1595 = vadd.f32 %v1589, %v1594
    %v1596 = vadd.f32 %v1595, %v160
    %v1597 = vmax.f32 %v1596, 0.0
    %v1598 = vmul.f32 %v1328, %v144
    %v1599 = vmul.f32 %v1592, %v150
    %v1600 = vadd.f32 %v1598, %v1599
    %1601 = vset.pattern.permute.xlu0 31
    %1602 = vperm.xlu0 %1601, %v110
    %v1603 = vpop.permute.xlu0 %1602
    %v1605 = vmul.f32 %v1603, %v157
    %v1606 = vadd.f32 %v1600, %v1605
    %v1607 = vadd.f32 %v1606, %v160
    %v1608 = vmax.f32 %v1607, 0.0
    %v1609 = vmax.f32 %v1597, %v1608
    %v1610 = vmul.f32 %v1592, %v144
    %v1611 = vmul.f32 %v1603, %v150
    %v1612 = vadd.f32 %v1610, %v1611
    %1613 = vset.pattern.permute.xlu0 32
    %1614 = vperm.xlu0 %1613, %v110
    %v1615 = vpop.permute.xlu0 %1614
    %v1617 = vmul.f32 %v1615, %v157
    %v1618 = vadd.f32 %v1612, %v1617
    %v1619 = vadd.f32 %v1618, %v160
    %v1620 = vmax.f32 %v1619, 0.0
    %v1621 = vmul.f32 %v1603, %v144
    %v1622 = vmul.f32 %v1615, %v150
    %v1623 = vadd.f32 %v1621, %v1622
    %1624 = vset.pattern.permute.xlu0 33
    %1625 = vperm.xlu0 %1624, %v110
    %v1626 = vpop.permute.xlu0 %1625
    %v1628 = vmul.f32 %v1626, %v157
    %v1629 = vadd.f32 %v1623, %v1628
    %v1630 = vadd.f32 %v1629, %v160
    %v1631 = vmax.f32 %v1630, 0.0
    %v1632 = vmax.f32 %v1620, %v1631
    %p1633 = scmp.gt.s32.totalorder %s1586, 0
    %s1634 = scalar_select %p1633, 1, 0
    %s1635 = scvt.s32.f32 %s1634
    %v1636 = vstv %s1635
    %v1637 = vmul.f32 %v1311, %v1636
    %p1638 = scmp.lt.s32.totalorder %s1586, 15
    %s1639 = scalar_select %p1638, 1, 0
    %s1640 = scvt.s32.f32 %s1639
    %v1641 = vstv %s1640
    %v1642 = vmul.f32 %v1632, %v1641
    %v1643 = vpack.c.bf16 %v1637, %v1637
    %v1644 = vpack.c.bf16 %v1334, %v1334
    %v1645 = vpack.c.bf16 %v1609, %v1609
    %v1646 = vpack.c.bf16 %v1642, %v1642
    %v1648 = vunpack.c.l.b16 %v1644
    %v1649 = vpack.c.b16 %v1648, %v1648
    %1650 = vrot.lane.b32.xlu0 %v1649, 64
    %v1651 = vpop.permute.xlu0 %1650
    %v1654 = vsel %vm263, %v1643, %v1651
    %v1657 = vsel %vm263, %v1645, 0
    %1659 = vmatpush.bf16.msra.mxu0 %v326
    %1660 = vmatpush.bf16.msra.mxu0 %v325
    %1661 = vmatpush.bf16.msra.mxu0 %v324
    %1662 = vmatpush.bf16.msra.mxu0 %v323
    %1663 = vmatpush.bf16.msra.mxu0 %v322
    %1664 = vmatpush.bf16.msra.mxu0 %v321
    %1665 = vmatpush.bf16.msra.mxu0 %v320
    %1666 = vmatpush.bf16.msra.mxu0 %v319
    %1667 = vmatmul.bf16.gmra.mxu0 %v1654
    %v1668 = vpop.f32.mrf.mxu0
    %v1669 = vadd.f32 %v269, %v1668
    %v1670 = vpop.f32.mrf.mxu0
    %1671 = vdwg.mxu0
    %1672 = vmatpush.bf16.msra.mxu0 0
    %1673 = vmatpush.bf16.msra.mxu0 0
    %1674 = vmatpush.bf16.msra.mxu0 0
    %1675 = vmatpush.bf16.msra.mxu0 0
    %1676 = vmatpush.bf16.msra.mxu0 %v330
    %1677 = vmatpush.bf16.msra.mxu0 %v329
    %1678 = vmatpush.bf16.msra.mxu0 %v328
    %1679 = vmatpush.bf16.msra.mxu0 %v327
    %1680 = vmatmul.bf16.gmra.mxu0 %v1657
    %v1681 = vpop.f32.mrf.mxu0
    %v1682 = vadd.f32 %v1669, %v1681
    %v1683 = vpop.f32.mrf.mxu0
    %1684 = vdwg.mxu0
    %v1685 = vmax.f32 %v1682, 0.0
    %v1687 = vunpack.c.l.b16 %v1645
    %v1688 = vpack.c.b16 %v1687, %v1687
    %1689 = vrot.lane.b32.xlu0 %v1688, 64
    %v1690 = vpop.permute.xlu0 %1689
    %v1693 = vsel %vm263, %v1644, %v1690
    %v1696 = vsel %vm263, %v1646, 0
    %1698 = vmatpush.bf16.msra.mxu0 %v326
    %1699 = vmatpush.bf16.msra.mxu0 %v325
    %1700 = vmatpush.bf16.msra.mxu0 %v324
    %1701 = vmatpush.bf16.msra.mxu0 %v323
    %1702 = vmatpush.bf16.msra.mxu0 %v322
    %1703 = vmatpush.bf16.msra.mxu0 %v321
    %1704 = vmatpush.bf16.msra.mxu0 %v320
    %1705 = vmatpush.bf16.msra.mxu0 %v319
    %1706 = vmatmul.bf16.gmra.mxu0 %v1693
    %v1707 = vpop.f32.mrf.mxu0
    %v1708 = vadd.f32 %v269, %v1707
    %v1709 = vpop.f32.mrf.mxu0
    %1710 = vdwg.mxu0
    %1711 = vmatpush.bf16.msra.mxu0 0
    %1712 = vmatpush.bf16.msra.mxu0 0
    %1713 = vmatpush.bf16.msra.mxu0 0
    %1714 = vmatpush.bf16.msra.mxu0 0
    %1715 = vmatpush.bf16.msra.mxu0 %v330
    %1716 = vmatpush.bf16.msra.mxu0 %v329
    %1717 = vmatpush.bf16.msra.mxu0 %v328
    %1718 = vmatpush.bf16.msra.mxu0 %v327
    %1719 = vmatmul.bf16.gmra.mxu0 %v1696
    %v1720 = vpop.f32.mrf.mxu0
    %v1721 = vadd.f32 %v1708, %v1720
    %v1722 = vpop.f32.mrf.mxu0
    %1723 = vdwg.mxu0
    %v1724 = vmax.f32 %v1721, 0.0
    %v1725 = vmax.f32 %v1685, %v1724
    %s1726 = sadd.s32 %s138, 7
    %v1727 = vmul.f32 %v1615, %v144
    %v1728 = vmul.f32 %v1626, %v150
    %v1729 = vadd.f32 %v1727, %v1728
    %1730 = vset.pattern.permute.xlu0 34
    %1731 = vperm.xlu0 %1730, %v110
    %v1732 = vpop.permute.xlu0 %1731
    %v1734 = vmul.f32 %v1732, %v157
    %v1735 = vadd.f32 %v1729, %v1734
    %v1736 = vadd.f32 %v1735, %v160
    %v1737 = vmax.f32 %v1736, 0.0
    %v1738 = vmul.f32 %v1626, %v144
    %v1739 = vmul.f32 %v1732, %v150
    %v1740 = vadd.f32 %v1738, %v1739
    %1741 = vset.pattern.permute.xlu0 35
    %1742 = vperm.xlu0 %1741, %v110
    %v1743 = vpop.permute.xlu0 %1742
    %v1745 = vmul.f32 %v1743, %v157
    %v1746 = vadd.f32 %v1740, %v1745
    %v1747 = vadd.f32 %v1746, %v160
    %v1748 = vmax.f32 %v1747, 0.0
    %v1749 = vmax.f32 %v1737, %v1748
    %v1750 = vmul.f32 %v1732, %v144
    %v1751 = vmul.f32 %v1743, %v150
    %v1752 = vadd.f32 %v1750, %v1751
    %1753 = vset.pattern.permute.xlu0 36
    %1754 = vperm.xlu0 %1753, %v110
    %v1755 = vpop.permute.xlu0 %1754
    %v1757 = vmul.f32 %v1755, %v157
    %v1758 = vadd.f32 %v1752, %v1757
    %v1759 = vadd.f32 %v1758, %v160
    %v1760 = vmax.f32 %v1759, 0.0
    %v1761 = vmul.f32 %v1743, %v144
    %v1762 = vmul.f32 %v1755, %v150
    %v1763 = vadd.f32 %v1761, %v1762
    %1764 = vset.pattern.permute.xlu0 37
    %1765 = vperm.xlu0 %1764, %v110
    %v1766 = vpop.permute.xlu0 %1765
    %v1768 = vmul.f32 %v1766, %v157
    %v1769 = vadd.f32 %v1763, %v1768
    %v1770 = vadd.f32 %v1769, %v160
    %v1771 = vmax.f32 %v1770, 0.0
    %v1772 = vmax.f32 %v1760, %v1771
    %p1773 = scmp.gt.s32.totalorder %s1726, 0
    %s1774 = scalar_select %p1773, 1, 0
    %s1775 = scvt.s32.f32 %s1774
    %v1776 = vstv %s1775
    %v1777 = vmul.f32 %v1609, %v1776
    %p1778 = scmp.lt.s32.totalorder %s1726, 15
    %s1779 = scalar_select %p1778, 1, 0
    %s1780 = scvt.s32.f32 %s1779
    %v1781 = vstv %s1780
    %v1782 = vmul.f32 %v1772, %v1781
    %v1783 = vpack.c.bf16 %v1777, %v1777
    %v1784 = vpack.c.bf16 %v1632, %v1632
    %v1785 = vpack.c.bf16 %v1749, %v1749
    %v1786 = vpack.c.bf16 %v1782, %v1782
    %v1788 = vunpack.c.l.b16 %v1784
    %v1789 = vpack.c.b16 %v1788, %v1788
    %1790 = vrot.lane.b32.xlu0 %v1789, 64
    %v1791 = vpop.permute.xlu0 %1790
    %v1794 = vsel %vm263, %v1783, %v1791
    %v1797 = vsel %vm263, %v1785, 0
    %1799 = vmatpush.bf16.msra.mxu0 %v326
    %1800 = vmatpush.bf16.msra.mxu0 %v325
    %1801 = vmatpush.bf16.msra.mxu0 %v324
    %1802 = vmatpush.bf16.msra.mxu0 %v323
    %1803 = vmatpush.bf16.msra.mxu0 %v322
    %1804 = vmatpush.bf16.msra.mxu0 %v321
    %1805 = vmatpush.bf16.msra.mxu0 %v320
    %1806 = vmatpush.bf16.msra.mxu0 %v319
    %1807 = vmatmul.bf16.gmra.mxu0 %v1794
    %v1808 = vpop.f32.mrf.mxu0
    %v1809 = vadd.f32 %v269, %v1808
    %v1810 = vpop.f32.mrf.mxu0
    %1811 = vdwg.mxu0
    %1812 = vmatpush.bf16.msra.mxu0 0
    %1813 = vmatpush.bf16.msra.mxu0 0
    %1814 = vmatpush.bf16.msra.mxu0 0
    %1815 = vmatpush.bf16.msra.mxu0 0
    %1816 = vmatpush.bf16.msra.mxu0 %v330
    %1817 = vmatpush.bf16.msra.mxu0 %v329
    %1818 = vmatpush.bf16.msra.mxu0 %v328
    %1819 = vmatpush.bf16.msra.mxu0 %v327
    %1820 = vmatmul.bf16.gmra.mxu0 %v1797
    %v1821 = vpop.f32.mrf.mxu0
    %v1822 = vadd.f32 %v1809, %v1821
    %v1823 = vpop.f32.mrf.mxu0
    %1824 = vdwg.mxu0
    %v1825 = vmax.f32 %v1822, 0.0
    %v1827 = vunpack.c.l.b16 %v1785
    %v1828 = vpack.c.b16 %v1827, %v1827
    %1829 = vrot.lane.b32.xlu0 %v1828, 64
    %v1830 = vpop.permute.xlu0 %1829
    %v1833 = vsel %vm263, %v1784, %v1830
    %v1836 = vsel %vm263, %v1786, 0
    %1838 = vmatpush.bf16.msra.mxu0 %v326
    %1839 = vmatpush.bf16.msra.mxu0 %v325
    %1840 = vmatpush.bf16.msra.mxu0 %v324
    %1841 = vmatpush.bf16.msra.mxu0 %v323
    %1842 = vmatpush.bf16.msra.mxu0 %v322
    %1843 = vmatpush.bf16.msra.mxu0 %v321
    %1844 = vmatpush.bf16.msra.mxu0 %v320
    %1845 = vmatpush.bf16.msra.mxu0 %v319
    %1846 = vmatmul.bf16.gmra.mxu0 %v1833
    %v1847 = vpop.f32.mrf.mxu0
    %v1848 = vadd.f32 %v269, %v1847
    %v1849 = vpop.f32.mrf.mxu0
    %1850 = vdwg.mxu0
    %1851 = vmatpush.bf16.msra.mxu0 0
    %1852 = vmatpush.bf16.msra.mxu0 0
    %1853 = vmatpush.bf16.msra.mxu0 0
    %1854 = vmatpush.bf16.msra.mxu0 0
    %1855 = vmatpush.bf16.msra.mxu0 %v330
    %1856 = vmatpush.bf16.msra.mxu0 %v329
    %1857 = vmatpush.bf16.msra.mxu0 %v328
    %1858 = vmatpush.bf16.msra.mxu0 %v327
    %1859 = vmatmul.bf16.gmra.mxu0 %v1836
    %v1860 = vpop.f32.mrf.mxu0
    %v1861 = vadd.f32 %v1848, %v1860
    %v1862 = vpop.f32.mrf.mxu0
    %1863 = vdwg.mxu0
    %v1864 = vmax.f32 %v1861, 0.0
    %v1865 = vmax.f32 %v1825, %v1864
    %v1866 = vpack.c.bf16 %v1725, %v1725
    %v1867 = vpack.c.bf16 %v1865, %v1865
    %s1868 = scalar_lea.vmem [#allocation9], 384
    %v1869 = vld [vmem:[%s1868] sm:$0xf]
    %v1870 = vld [vmem:[%s1868 + $0x4] sm:$0xf]
    %v1871 = vld [vmem:[%s1868 + $0x8] sm:$0xf]
    %v1872 = vld [vmem:[%s1868 + $0xc] sm:$0xf]
    %v1873 = vld [vmem:[%s1868 + $0x10] sm:$0xf]
    %v1874 = vld [vmem:[%s1868 + $0x14] sm:$0xf]
    %v1875 = vld [vmem:[%s1868 + $0x18] sm:$0xf]
    %v1876 = vld [vmem:[%s1868 + $0x1c] sm:$0xf]
    %v1877 = vld [vmem:[%s1868 + $0x20] sm:$0xf]
    %v1878 = vld [vmem:[%s1868 + $0x24] sm:$0xf]
    %v1879 = vld [vmem:[%s1868 + $0x28] sm:$0xf]
    %v1880 = vld [vmem:[%s1868 + $0x2c] sm:$0xf]
    %v1881 = vld [vmem:[%s1868 + $0x30] sm:$0xf]
    %v1882 = vld [vmem:[%s1868 + $0x34] sm:$0xf]
    %v1883 = vld [vmem:[%s1868 + $0x38] sm:$0xf]
    %v1884 = vld [vmem:[%s1868 + $0x3c] sm:$0xf]
    %v1885 = vld [vmem:[%s1868 + $0x40] sm:$0xf]
    %v1886 = vld [vmem:[%s1868 + $0x44] sm:$0xf]
    %v1887 = vld [vmem:[%s1868 + $0x48] sm:$0xf]
    %v1888 = vld [vmem:[%s1868 + $0x4c] sm:$0xf]
    %v1889 = vld [vmem:[%s1868 + $0x50] sm:$0xf]
    %v1890 = vld [vmem:[%s1868 + $0x54] sm:$0xf]
    %v1891 = vld [vmem:[%s1868 + $0x58] sm:$0xf]
    %v1892 = vld [vmem:[%s1868 + $0x5c] sm:$0xf]
    %v1893 = vld [vmem:[%s1868 + $0x60] sm:$0xf]
    %v1894 = vld [vmem:[%s1868 + $0x64] sm:$0xf]
    %v1895 = vld [vmem:[%s1868 + $0x68] sm:$0xf]
    %v1896 = vld [vmem:[%s1868 + $0x6c] sm:$0xf]
    %v1897 = vld [vmem:[%s1868 + $0x70] sm:$0xf]
    %v1898 = vld [vmem:[%s1868 + $0x74] sm:$0xf]
    %v1899 = vld [vmem:[%s1868 + $0x78] sm:$0xf]
    %v1900 = vld [vmem:[%s1868 + $0x7c] sm:$0xf]
    %v1933 = vunpack.c.l.b16 %v1869
    %v1934 = vunpack.c.l.b16 %v1870
    %v1935 = vunpack.c.l.b16 %v1871
    %v1936 = vunpack.c.l.b16 %v1872
    %v1937 = vunpack.c.l.b16 %v1873
    %v1938 = vunpack.c.l.b16 %v1874
    %v1939 = vunpack.c.l.b16 %v1875
    %v1940 = vunpack.c.l.b16 %v1876
    %v1941 = vunpack.c.l.b16 %v1877
    %v1942 = vunpack.c.l.b16 %v1878
    %v1943 = vunpack.c.l.b16 %v1879
    %v1944 = vunpack.c.l.b16 %v1880
    %v1945 = vunpack.c.l.b16 %v1881
    %v1946 = vunpack.c.l.b16 %v1882
    %v1947 = vunpack.c.l.b16 %v1883
    %v1948 = vunpack.c.l.b16 %v1884
    %v1949 = vunpack.c.l.b16 %v1885
    %v1950 = vunpack.c.l.b16 %v1886
    %v1951 = vunpack.c.l.b16 %v1887
    %v1952 = vunpack.c.l.b16 %v1888
    %v1953 = vunpack.c.l.b16 %v1889
    %v1954 = vunpack.c.l.b16 %v1890
    %v1955 = vunpack.c.l.b16 %v1891
    %v1956 = vunpack.c.l.b16 %v1892
    %v1957 = vunpack.c.l.b16 %v1893
    %v1958 = vunpack.c.l.b16 %v1894
    %v1959 = vunpack.c.l.b16 %v1895
    %v1960 = vunpack.c.l.b16 %v1896
    %v1961 = vunpack.c.l.b16 %v1897
    %v1962 = vunpack.c.l.b16 %v1898
    %v1963 = vunpack.c.l.b16 %v1899
    %v1964 = vunpack.c.l.b16 %v1900
    %v1965 = vpack.c.b16 %v1934, %v1933
    %v1966 = vpack.c.b16 %v1936, %v1935
    %v1967 = vpack.c.b16 %v1938, %v1937
    %v1968 = vpack.c.b16 %v1940, %v1939
    %v1969 = vpack.c.b16 %v1942, %v1941
    %v1970 = vpack.c.b16 %v1944, %v1943
    %v1971 = vpack.c.b16 %v1946, %v1945
    %v1972 = vpack.c.b16 %v1948, %v1947
    %v1973 = vpack.c.b16 %v1950, %v1949
    %v1974 = vpack.c.b16 %v1952, %v1951
    %v1975 = vpack.c.b16 %v1954, %v1953
    %v1976 = vpack.c.b16 %v1956, %v1955
    %v1977 = vpack.c.b16 %v1958, %v1957
    %v1978 = vpack.c.b16 %v1960, %v1959
    %v1979 = vpack.c.b16 %v1962, %v1961
    %v1980 = vpack.c.b16 %v1964, %v1963
    %1997 = vmatpush.bf16.msra.mxu0 %v1972
    %1998 = vmatpush.bf16.msra.mxu0 %v1971
    %1999 = vmatpush.bf16.msra.mxu0 %v1970
    %2000 = vmatpush.bf16.msra.mxu0 %v1969
    %2001 = vmatpush.bf16.msra.mxu0 %v1968
    %2002 = vmatpush.bf16.msra.mxu0 %v1967
    %2003 = vmatpush.bf16.msra.mxu0 %v1966
    %2004 = vmatpush.bf16.msra.mxu0 %v1965
    %2005 = vmatmul.bf16.gmra.mxu0 %v1866
    %v2006 = vpop.f32.mrf.mxu0
    %v2007 = vadd.f32 0.0, %v2006
    %v2008 = vpop.f32.mrf.mxu0
    %2009 = vdwg.mxu0
    %2010 = vmatpush.bf16.msra.mxu0 %v1980
    %2011 = vmatpush.bf16.msra.mxu0 %v1979
    %2012 = vmatpush.bf16.msra.mxu0 %v1978
    %2013 = vmatpush.bf16.msra.mxu0 %v1977
    %2014 = vmatpush.bf16.msra.mxu0 %v1976
    %2015 = vmatpush.bf16.msra.mxu0 %v1975
    %2016 = vmatpush.bf16.msra.mxu0 %v1974
    %2017 = vmatpush.bf16.msra.mxu0 %v1973
    %2018 = vmatmul.bf16.gmra.mxu0 %v1867
    %v2019 = vpop.f32.mrf.mxu0
    %v2020 = vadd.f32 %v2007, %v2019
    %v2021 = vpop.f32.mrf.mxu0
    %2022 = vdwg.mxu0
    %v2023 = vadd.f32 %v1585, %v2020
    %s2024 = sadd.s32 %s138, 8
    %v2025 = vmul.f32 %v1755, %v144
    %v2026 = vmul.f32 %v1766, %v150
    %v2027 = vadd.f32 %v2025, %v2026
    %2028 = vset.pattern.permute.xlu0 38
    %2029 = vperm.xlu0 %2028, %v110
    %v2030 = vpop.permute.xlu0 %2029
    %v2032 = vmul.f32 %v2030, %v157
    %v2033 = vadd.f32 %v2027, %v2032
    %v2034 = vadd.f32 %v2033, %v160
    %v2035 = vmax.f32 %v2034, 0.0
    %v2036 = vmul.f32 %v1766, %v144
    %v2037 = vmul.f32 %v2030, %v150
    %v2038 = vadd.f32 %v2036, %v2037
    %2039 = vset.pattern.permute.xlu0 39
    %2040 = vperm.xlu0 %2039, %v110
    %v2041 = vpop.permute.xlu0 %2040
    %v2043 = vmul.f32 %v2041, %v157
    %v2044 = vadd.f32 %v2038, %v2043
    %v2045 = vadd.f32 %v2044, %v160
    %v2046 = vmax.f32 %v2045, 0.0
    %v2047 = vmax.f32 %v2035, %v2046
    %v2048 = vmul.f32 %v2030, %v144
    %v2049 = vmul.f32 %v2041, %v150
    %v2050 = vadd.f32 %v2048, %v2049
    %2051 = vset.pattern.permute.xlu0 40
    %2052 = vperm.xlu0 %2051, %v110
    %v2053 = vpop.permute.xlu0 %2052
    %v2055 = vmul.f32 %v2053, %v157
    %v2056 = vadd.f32 %v2050, %v2055
    %v2057 = vadd.f32 %v2056, %v160
    %v2058 = vmax.f32 %v2057, 0.0
    %v2059 = vmul.f32 %v2041, %v144
    %v2060 = vmul.f32 %v2053, %v150
    %v2061 = vadd.f32 %v2059, %v2060
    %2062 = vset.pattern.permute.xlu0 41
    %2063 = vperm.xlu0 %2062, %v110
    %v2064 = vpop.permute.xlu0 %2063
    %v2066 = vmul.f32 %v2064, %v157
    %v2067 = vadd.f32 %v2061, %v2066
    %v2068 = vadd.f32 %v2067, %v160
    %v2069 = vmax.f32 %v2068, 0.0
    %v2070 = vmax.f32 %v2058, %v2069
    %p2071 = scmp.gt.s32.totalorder %s2024, 0
    %s2072 = scalar_select %p2071, 1, 0
    %s2073 = scvt.s32.f32 %s2072
    %v2074 = vstv %s2073
    %v2075 = vmul.f32 %v1749, %v2074
    %p2076 = scmp.lt.s32.totalorder %s2024, 15
    %s2077 = scalar_select %p2076, 1, 0
    %s2078 = scvt.s32.f32 %s2077
    %v2079 = vstv %s2078
    %v2080 = vmul.f32 %v2070, %v2079
    %v2081 = vpack.c.bf16 %v2075, %v2075
    %v2082 = vpack.c.bf16 %v1772, %v1772
    %v2083 = vpack.c.bf16 %v2047, %v2047
    %v2084 = vpack.c.bf16 %v2080, %v2080
    %v2086 = vunpack.c.l.b16 %v2082
    %v2087 = vpack.c.b16 %v2086, %v2086
    %2088 = vrot.lane.b32.xlu0 %v2087, 64
    %v2089 = vpop.permute.xlu0 %2088
    %v2092 = vsel %vm263, %v2081, %v2089
    %v2095 = vsel %vm263, %v2083, 0
    %2097 = vmatpush.bf16.msra.mxu0 %v326
    %2098 = vmatpush.bf16.msra.mxu0 %v325
    %2099 = vmatpush.bf16.msra.mxu0 %v324
    %2100 = vmatpush.bf16.msra.mxu0 %v323
    %2101 = vmatpush.bf16.msra.mxu0 %v322
    %2102 = vmatpush.bf16.msra.mxu0 %v321
    %2103 = vmatpush.bf16.msra.mxu0 %v320
    %2104 = vmatpush.bf16.msra.mxu0 %v319
    %2105 = vmatmul.bf16.gmra.mxu0 %v2092
    %v2106 = vpop.f32.mrf.mxu0
    %v2107 = vadd.f32 %v269, %v2106
    %v2108 = vpop.f32.mrf.mxu0
    %2109 = vdwg.mxu0
    %2110 = vmatpush.bf16.msra.mxu0 0
    %2111 = vmatpush.bf16.msra.mxu0 0
    %2112 = vmatpush.bf16.msra.mxu0 0
    %2113 = vmatpush.bf16.msra.mxu0 0
    %2114 = vmatpush.bf16.msra.mxu0 %v330
    %2115 = vmatpush.bf16.msra.mxu0 %v329
    %2116 = vmatpush.bf16.msra.mxu0 %v328
    %2117 = vmatpush.bf16.msra.mxu0 %v327
    %2118 = vmatmul.bf16.gmra.mxu0 %v2095
    %v2119 = vpop.f32.mrf.mxu0
    %v2120 = vadd.f32 %v2107, %v2119
    %v2121 = vpop.f32.mrf.mxu0
    %2122 = vdwg.mxu0
    %v2123 = vmax.f32 %v2120, 0.0
    %v2125 = vunpack.c.l.b16 %v2083
    %v2126 = vpack.c.b16 %v2125, %v2125
    %2127 = vrot.lane.b32.xlu0 %v2126, 64
    %v2128 = vpop.permute.xlu0 %2127
    %v2131 = vsel %vm263, %v2082, %v2128
    %v2134 = vsel %vm263, %v2084, 0
    %2136 = vmatpush.bf16.msra.mxu0 %v326
    %2137 = vmatpush.bf16.msra.mxu0 %v325
    %2138 = vmatpush.bf16.msra.mxu0 %v324
    %2139 = vmatpush.bf16.msra.mxu0 %v323
    %2140 = vmatpush.bf16.msra.mxu0 %v322
    %2141 = vmatpush.bf16.msra.mxu0 %v321
    %2142 = vmatpush.bf16.msra.mxu0 %v320
    %2143 = vmatpush.bf16.msra.mxu0 %v319
    %2144 = vmatmul.bf16.gmra.mxu0 %v2131
    %v2145 = vpop.f32.mrf.mxu0
    %v2146 = vadd.f32 %v269, %v2145
    %v2147 = vpop.f32.mrf.mxu0
    %2148 = vdwg.mxu0
    %2149 = vmatpush.bf16.msra.mxu0 0
    %2150 = vmatpush.bf16.msra.mxu0 0
    %2151 = vmatpush.bf16.msra.mxu0 0
    %2152 = vmatpush.bf16.msra.mxu0 0
    %2153 = vmatpush.bf16.msra.mxu0 %v330
    %2154 = vmatpush.bf16.msra.mxu0 %v329
    %2155 = vmatpush.bf16.msra.mxu0 %v328
    %2156 = vmatpush.bf16.msra.mxu0 %v327
    %2157 = vmatmul.bf16.gmra.mxu0 %v2134
    %v2158 = vpop.f32.mrf.mxu0
    %v2159 = vadd.f32 %v2146, %v2158
    %v2160 = vpop.f32.mrf.mxu0
    %2161 = vdwg.mxu0
    %v2162 = vmax.f32 %v2159, 0.0
    %v2163 = vmax.f32 %v2123, %v2162
    %s2164 = sadd.s32 %s138, 9
    %v2165 = vmul.f32 %v2053, %v144
    %v2166 = vmul.f32 %v2064, %v150
    %v2167 = vadd.f32 %v2165, %v2166
    %2168 = vset.pattern.permute.xlu0 42
    %2169 = vperm.xlu0 %2168, %v110
    %v2170 = vpop.permute.xlu0 %2169
    %v2172 = vmul.f32 %v2170, %v157
    %v2173 = vadd.f32 %v2167, %v2172
    %v2174 = vadd.f32 %v2173, %v160
    %v2175 = vmax.f32 %v2174, 0.0
    %v2176 = vmul.f32 %v2064, %v144
    %v2177 = vmul.f32 %v2170, %v150
    %v2178 = vadd.f32 %v2176, %v2177
    %2179 = vset.pattern.permute.xlu0 43
    %2180 = vperm.xlu0 %2179, %v110
    %v2181 = vpop.permute.xlu0 %2180
    %v2183 = vmul.f32 %v2181, %v157
    %v2184 = vadd.f32 %v2178, %v2183
    %v2185 = vadd.f32 %v2184, %v160
    %v2186 = vmax.f32 %v2185, 0.0
    %v2187 = vmax.f32 %v2175, %v2186
    %v2188 = vmul.f32 %v2170, %v144
    %v2189 = vmul.f32 %v2181, %v150
    %v2190 = vadd.f32 %v2188, %v2189
    %2191 = vset.pattern.permute.xlu0 44
    %2192 = vperm.xlu0 %2191, %v110
    %v2193 = vpop.permute.xlu0 %2192
    %v2195 = vmul.f32 %v2193, %v157
    %v2196 = vadd.f32 %v2190, %v2195
    %v2197 = vadd.f32 %v2196, %v160
    %v2198 = vmax.f32 %v2197, 0.0
    %v2199 = vmul.f32 %v2181, %v144
    %v2200 = vmul.f32 %v2193, %v150
    %v2201 = vadd.f32 %v2199, %v2200
    %2202 = vset.pattern.permute.xlu0 45
    %2203 = vperm.xlu0 %2202, %v110
    %v2204 = vpop.permute.xlu0 %2203
    %v2206 = vmul.f32 %v2204, %v157
    %v2207 = vadd.f32 %v2201, %v2206
    %v2208 = vadd.f32 %v2207, %v160
    %v2209 = vmax.f32 %v2208, 0.0
    %v2210 = vmax.f32 %v2198, %v2209
    %p2211 = scmp.gt.s32.totalorder %s2164, 0
    %s2212 = scalar_select %p2211, 1, 0
    %s2213 = scvt.s32.f32 %s2212
    %v2214 = vstv %s2213
    %v2215 = vmul.f32 %v2047, %v2214
    %p2216 = scmp.lt.s32.totalorder %s2164, 15
    %s2217 = scalar_select %p2216, 1, 0
    %s2218 = scvt.s32.f32 %s2217
    %v2219 = vstv %s2218
    %v2220 = vmul.f32 %v2210, %v2219
    %v2221 = vpack.c.bf16 %v2215, %v2215
    %v2222 = vpack.c.bf16 %v2070, %v2070
    %v2223 = vpack.c.bf16 %v2187, %v2187
    %v2224 = vpack.c.bf16 %v2220, %v2220
    %v2226 = vunpack.c.l.b16 %v2222
    %v2227 = vpack.c.b16 %v2226, %v2226
    %2228 = vrot.lane.b32.xlu0 %v2227, 64
    %v2229 = vpop.permute.xlu0 %2228
    %v2232 = vsel %vm263, %v2221, %v2229
    %v2235 = vsel %vm263, %v2223, 0
    %2237 = vmatpush.bf16.msra.mxu0 %v326
    %2238 = vmatpush.bf16.msra.mxu0 %v325
    %2239 = vmatpush.bf16.msra.mxu0 %v324
    %2240 = vmatpush.bf16.msra.mxu0 %v323
    %2241 = vmatpush.bf16.msra.mxu0 %v322
    %2242 = vmatpush.bf16.msra.mxu0 %v321
    %2243 = vmatpush.bf16.msra.mxu0 %v320
    %2244 = vmatpush.bf16.msra.mxu0 %v319
    %2245 = vmatmul.bf16.gmra.mxu0 %v2232
    %v2246 = vpop.f32.mrf.mxu0
    %v2247 = vadd.f32 %v269, %v2246
    %v2248 = vpop.f32.mrf.mxu0
    %2249 = vdwg.mxu0
    %2250 = vmatpush.bf16.msra.mxu0 0
    %2251 = vmatpush.bf16.msra.mxu0 0
    %2252 = vmatpush.bf16.msra.mxu0 0
    %2253 = vmatpush.bf16.msra.mxu0 0
    %2254 = vmatpush.bf16.msra.mxu0 %v330
    %2255 = vmatpush.bf16.msra.mxu0 %v329
    %2256 = vmatpush.bf16.msra.mxu0 %v328
    %2257 = vmatpush.bf16.msra.mxu0 %v327
    %2258 = vmatmul.bf16.gmra.mxu0 %v2235
    %v2259 = vpop.f32.mrf.mxu0
    %v2260 = vadd.f32 %v2247, %v2259
    %v2261 = vpop.f32.mrf.mxu0
    %2262 = vdwg.mxu0
    %v2263 = vmax.f32 %v2260, 0.0
    %v2265 = vunpack.c.l.b16 %v2223
    %v2266 = vpack.c.b16 %v2265, %v2265
    %2267 = vrot.lane.b32.xlu0 %v2266, 64
    %v2268 = vpop.permute.xlu0 %2267
    %v2271 = vsel %vm263, %v2222, %v2268
    %v2274 = vsel %vm263, %v2224, 0
    %2276 = vmatpush.bf16.msra.mxu0 %v326
    %2277 = vmatpush.bf16.msra.mxu0 %v325
    %2278 = vmatpush.bf16.msra.mxu0 %v324
    %2279 = vmatpush.bf16.msra.mxu0 %v323
    %2280 = vmatpush.bf16.msra.mxu0 %v322
    %2281 = vmatpush.bf16.msra.mxu0 %v321
    %2282 = vmatpush.bf16.msra.mxu0 %v320
    %2283 = vmatpush.bf16.msra.mxu0 %v319
    %2284 = vmatmul.bf16.gmra.mxu0 %v2271
    %v2285 = vpop.f32.mrf.mxu0
    %v2286 = vadd.f32 %v269, %v2285
    %v2287 = vpop.f32.mrf.mxu0
    %2288 = vdwg.mxu0
    %2289 = vmatpush.bf16.msra.mxu0 0
    %2290 = vmatpush.bf16.msra.mxu0 0
    %2291 = vmatpush.bf16.msra.mxu0 0
    %2292 = vmatpush.bf16.msra.mxu0 0
    %2293 = vmatpush.bf16.msra.mxu0 %v330
    %2294 = vmatpush.bf16.msra.mxu0 %v329
    %2295 = vmatpush.bf16.msra.mxu0 %v328
    %2296 = vmatpush.bf16.msra.mxu0 %v327
    %2297 = vmatmul.bf16.gmra.mxu0 %v2274
    %v2298 = vpop.f32.mrf.mxu0
    %v2299 = vadd.f32 %v2286, %v2298
    %v2300 = vpop.f32.mrf.mxu0
    %2301 = vdwg.mxu0
    %v2302 = vmax.f32 %v2299, 0.0
    %v2303 = vmax.f32 %v2263, %v2302
    %v2304 = vpack.c.bf16 %v2163, %v2163
    %v2305 = vpack.c.bf16 %v2303, %v2303
    %s2306 = scalar_lea.vmem [#allocation9], 512
    %v2307 = vld [vmem:[%s2306] sm:$0xf]
    %v2308 = vld [vmem:[%s2306 + $0x4] sm:$0xf]
    %v2309 = vld [vmem:[%s2306 + $0x8] sm:$0xf]
    %v2310 = vld [vmem:[%s2306 + $0xc] sm:$0xf]
    %v2311 = vld [vmem:[%s2306 + $0x10] sm:$0xf]
    %v2312 = vld [vmem:[%s2306 + $0x14] sm:$0xf]
    %v2313 = vld [vmem:[%s2306 + $0x18] sm:$0xf]
    %v2314 = vld [vmem:[%s2306 + $0x1c] sm:$0xf]
    %v2315 = vld [vmem:[%s2306 + $0x20] sm:$0xf]
    %v2316 = vld [vmem:[%s2306 + $0x24] sm:$0xf]
    %v2317 = vld [vmem:[%s2306 + $0x28] sm:$0xf]
    %v2318 = vld [vmem:[%s2306 + $0x2c] sm:$0xf]
    %v2319 = vld [vmem:[%s2306 + $0x30] sm:$0xf]
    %v2320 = vld [vmem:[%s2306 + $0x34] sm:$0xf]
    %v2321 = vld [vmem:[%s2306 + $0x38] sm:$0xf]
    %v2322 = vld [vmem:[%s2306 + $0x3c] sm:$0xf]
    %v2323 = vld [vmem:[%s2306 + $0x40] sm:$0xf]
    %v2324 = vld [vmem:[%s2306 + $0x44] sm:$0xf]
    %v2325 = vld [vmem:[%s2306 + $0x48] sm:$0xf]
    %v2326 = vld [vmem:[%s2306 + $0x4c] sm:$0xf]
    %v2327 = vld [vmem:[%s2306 + $0x50] sm:$0xf]
    %v2328 = vld [vmem:[%s2306 + $0x54] sm:$0xf]
    %v2329 = vld [vmem:[%s2306 + $0x58] sm:$0xf]
    %v2330 = vld [vmem:[%s2306 + $0x5c] sm:$0xf]
    %v2331 = vld [vmem:[%s2306 + $0x60] sm:$0xf]
    %v2332 = vld [vmem:[%s2306 + $0x64] sm:$0xf]
    %v2333 = vld [vmem:[%s2306 + $0x68] sm:$0xf]
    %v2334 = vld [vmem:[%s2306 + $0x6c] sm:$0xf]
    %v2335 = vld [vmem:[%s2306 + $0x70] sm:$0xf]
    %v2336 = vld [vmem:[%s2306 + $0x74] sm:$0xf]
    %v2337 = vld [vmem:[%s2306 + $0x78] sm:$0xf]
    %v2338 = vld [vmem:[%s2306 + $0x7c] sm:$0xf]
    %v2371 = vunpack.c.l.b16 %v2307
    %v2372 = vunpack.c.l.b16 %v2308
    %v2373 = vunpack.c.l.b16 %v2309
    %v2374 = vunpack.c.l.b16 %v2310
    %v2375 = vunpack.c.l.b16 %v2311
    %v2376 = vunpack.c.l.b16 %v2312
    %v2377 = vunpack.c.l.b16 %v2313
    %v2378 = vunpack.c.l.b16 %v2314
    %v2379 = vunpack.c.l.b16 %v2315
    %v2380 = vunpack.c.l.b16 %v2316
    %v2381 = vunpack.c.l.b16 %v2317
    %v2382 = vunpack.c.l.b16 %v2318
    %v2383 = vunpack.c.l.b16 %v2319
    %v2384 = vunpack.c.l.b16 %v2320
    %v2385 = vunpack.c.l.b16 %v2321
    %v2386 = vunpack.c.l.b16 %v2322
    %v2387 = vunpack.c.l.b16 %v2323
    %v2388 = vunpack.c.l.b16 %v2324
    %v2389 = vunpack.c.l.b16 %v2325
    %v2390 = vunpack.c.l.b16 %v2326
    %v2391 = vunpack.c.l.b16 %v2327
    %v2392 = vunpack.c.l.b16 %v2328
    %v2393 = vunpack.c.l.b16 %v2329
    %v2394 = vunpack.c.l.b16 %v2330
    %v2395 = vunpack.c.l.b16 %v2331
    %v2396 = vunpack.c.l.b16 %v2332
    %v2397 = vunpack.c.l.b16 %v2333
    %v2398 = vunpack.c.l.b16 %v2334
    %v2399 = vunpack.c.l.b16 %v2335
    %v2400 = vunpack.c.l.b16 %v2336
    %v2401 = vunpack.c.l.b16 %v2337
    %v2402 = vunpack.c.l.b16 %v2338
    %v2403 = vpack.c.b16 %v2372, %v2371
    %v2404 = vpack.c.b16 %v2374, %v2373
    %v2405 = vpack.c.b16 %v2376, %v2375
    %v2406 = vpack.c.b16 %v2378, %v2377
    %v2407 = vpack.c.b16 %v2380, %v2379
    %v2408 = vpack.c.b16 %v2382, %v2381
    %v2409 = vpack.c.b16 %v2384, %v2383
    %v2410 = vpack.c.b16 %v2386, %v2385
    %v2411 = vpack.c.b16 %v2388, %v2387
    %v2412 = vpack.c.b16 %v2390, %v2389
    %v2413 = vpack.c.b16 %v2392, %v2391
    %v2414 = vpack.c.b16 %v2394, %v2393
    %v2415 = vpack.c.b16 %v2396, %v2395
    %v2416 = vpack.c.b16 %v2398, %v2397
    %v2417 = vpack.c.b16 %v2400, %v2399
    %v2418 = vpack.c.b16 %v2402, %v2401
    %2435 = vmatpush.bf16.msra.mxu0 %v2410
    %2436 = vmatpush.bf16.msra.mxu0 %v2409
    %2437 = vmatpush.bf16.msra.mxu0 %v2408
    %2438 = vmatpush.bf16.msra.mxu0 %v2407
    %2439 = vmatpush.bf16.msra.mxu0 %v2406
    %2440 = vmatpush.bf16.msra.mxu0 %v2405
    %2441 = vmatpush.bf16.msra.mxu0 %v2404
    %2442 = vmatpush.bf16.msra.mxu0 %v2403
    %2443 = vmatmul.bf16.gmra.mxu0 %v2304
    %v2444 = vpop.f32.mrf.mxu0
    %v2445 = vadd.f32 0.0, %v2444
    %v2446 = vpop.f32.mrf.mxu0
    %2447 = vdwg.mxu0
    %2448 = vmatpush.bf16.msra.mxu0 %v2418
    %2449 = vmatpush.bf16.msra.mxu0 %v2417
    %2450 = vmatpush.bf16.msra.mxu0 %v2416
    %2451 = vmatpush.bf16.msra.mxu0 %v2415
    %2452 = vmatpush.bf16.msra.mxu0 %v2414
    %2453 = vmatpush.bf16.msra.mxu0 %v2413
    %2454 = vmatpush.bf16.msra.mxu0 %v2412
    %2455 = vmatpush.bf16.msra.mxu0 %v2411
    %2456 = vmatmul.bf16.gmra.mxu0 %v2305
    %v2457 = vpop.f32.mrf.mxu0
    %v2458 = vadd.f32 %v2445, %v2457
    %v2459 = vpop.f32.mrf.mxu0
    %2460 = vdwg.mxu0
    %v2461 = vadd.f32 %v2023, %v2458
    %s2462 = sadd.s32 %s138, 10
    %v2463 = vmul.f32 %v2193, %v144
    %v2464 = vmul.f32 %v2204, %v150
    %v2465 = vadd.f32 %v2463, %v2464
    %2466 = vset.pattern.permute.xlu0 46
    %2467 = vperm.xlu0 %2466, %v110
    %v2468 = vpop.permute.xlu0 %2467
    %v2470 = vmul.f32 %v2468, %v157
    %v2471 = vadd.f32 %v2465, %v2470
    %v2472 = vadd.f32 %v2471, %v160
    %v2473 = vmax.f32 %v2472, 0.0
    %v2474 = vmul.f32 %v2204, %v144
    %v2475 = vmul.f32 %v2468, %v150
    %v2476 = vadd.f32 %v2474, %v2475
    %2477 = vset.pattern.permute.xlu0 47
    %2478 = vperm.xlu0 %2477, %v110
    %v2479 = vpop.permute.xlu0 %2478
    %v2481 = vmul.f32 %v2479, %v157
    %v2482 = vadd.f32 %v2476, %v2481
    %v2483 = vadd.f32 %v2482, %v160
    %v2484 = vmax.f32 %v2483, 0.0
    %v2485 = vmax.f32 %v2473, %v2484
    %v2486 = vmul.f32 %v2468, %v144
    %v2487 = vmul.f32 %v2479, %v150
    %v2488 = vadd.f32 %v2486, %v2487
    %2489 = vset.pattern.permute.xlu0 48
    %2490 = vperm.xlu0 %2489, %v110
    %v2491 = vpop.permute.xlu0 %2490
    %v2493 = vmul.f32 %v2491, %v157
    %v2494 = vadd.f32 %v2488, %v2493
    %v2495 = vadd.f32 %v2494, %v160
    %v2496 = vmax.f32 %v2495, 0.0
    %v2497 = vmul.f32 %v2479, %v144
    %v2498 = vmul.f32 %v2491, %v150
    %v2499 = vadd.f32 %v2497, %v2498
    %2500 = vset.pattern.permute.xlu0 49
    %2501 = vperm.xlu0 %2500, %v110
    %v2502 = vpop.permute.xlu0 %2501
    %v2504 = vmul.f32 %v2502, %v157
    %v2505 = vadd.f32 %v2499, %v2504
    %v2506 = vadd.f32 %v2505, %v160
    %v2507 = vmax.f32 %v2506, 0.0
    %v2508 = vmax.f32 %v2496, %v2507
    %p2509 = scmp.gt.s32.totalorder %s2462, 0
    %s2510 = scalar_select %p2509, 1, 0
    %s2511 = scvt.s32.f32 %s2510
    %v2512 = vstv %s2511
    %v2513 = vmul.f32 %v2187, %v2512
    %p2514 = scmp.lt.s32.totalorder %s2462, 15
    %s2515 = scalar_select %p2514, 1, 0
    %s2516 = scvt.s32.f32 %s2515
    %v2517 = vstv %s2516
    %v2518 = vmul.f32 %v2508, %v2517
    %v2519 = vpack.c.bf16 %v2513, %v2513
    %v2520 = vpack.c.bf16 %v2210, %v2210
    %v2521 = vpack.c.bf16 %v2485, %v2485
    %v2522 = vpack.c.bf16 %v2518, %v2518
    %v2524 = vunpack.c.l.b16 %v2520
    %v2525 = vpack.c.b16 %v2524, %v2524
    %2526 = vrot.lane.b32.xlu0 %v2525, 64
    %v2527 = vpop.permute.xlu0 %2526
    %v2530 = vsel %vm263, %v2519, %v2527
    %v2533 = vsel %vm263, %v2521, 0
    %2535 = vmatpush.bf16.msra.mxu0 %v326
    %2536 = vmatpush.bf16.msra.mxu0 %v325
    %2537 = vmatpush.bf16.msra.mxu0 %v324
    %2538 = vmatpush.bf16.msra.mxu0 %v323
    %2539 = vmatpush.bf16.msra.mxu0 %v322
    %2540 = vmatpush.bf16.msra.mxu0 %v321
    %2541 = vmatpush.bf16.msra.mxu0 %v320
    %2542 = vmatpush.bf16.msra.mxu0 %v319
    %2543 = vmatmul.bf16.gmra.mxu0 %v2530
    %v2544 = vpop.f32.mrf.mxu0
    %v2545 = vadd.f32 %v269, %v2544
    %v2546 = vpop.f32.mrf.mxu0
    %2547 = vdwg.mxu0
    %2548 = vmatpush.bf16.msra.mxu0 0
    %2549 = vmatpush.bf16.msra.mxu0 0
    %2550 = vmatpush.bf16.msra.mxu0 0
    %2551 = vmatpush.bf16.msra.mxu0 0
    %2552 = vmatpush.bf16.msra.mxu0 %v330
    %2553 = vmatpush.bf16.msra.mxu0 %v329
    %2554 = vmatpush.bf16.msra.mxu0 %v328
    %2555 = vmatpush.bf16.msra.mxu0 %v327
    %2556 = vmatmul.bf16.gmra.mxu0 %v2533
    %v2557 = vpop.f32.mrf.mxu0
    %v2558 = vadd.f32 %v2545, %v2557
    %v2559 = vpop.f32.mrf.mxu0
    %2560 = vdwg.mxu0
    %v2561 = vmax.f32 %v2558, 0.0
    %v2563 = vunpack.c.l.b16 %v2521
    %v2564 = vpack.c.b16 %v2563, %v2563
    %2565 = vrot.lane.b32.xlu0 %v2564, 64
    %v2566 = vpop.permute.xlu0 %2565
    %v2569 = vsel %vm263, %v2520, %v2566
    %v2572 = vsel %vm263, %v2522, 0
    %2574 = vmatpush.bf16.msra.mxu0 %v326
    %2575 = vmatpush.bf16.msra.mxu0 %v325
    %2576 = vmatpush.bf16.msra.mxu0 %v324
    %2577 = vmatpush.bf16.msra.mxu0 %v323
    %2578 = vmatpush.bf16.msra.mxu0 %v322
    %2579 = vmatpush.bf16.msra.mxu0 %v321
    %2580 = vmatpush.bf16.msra.mxu0 %v320
    %2581 = vmatpush.bf16.msra.mxu0 %v319
    %2582 = vmatmul.bf16.gmra.mxu0 %v2569
    %v2583 = vpop.f32.mrf.mxu0
    %v2584 = vadd.f32 %v269, %v2583
    %v2585 = vpop.f32.mrf.mxu0
    %2586 = vdwg.mxu0
    %2587 = vmatpush.bf16.msra.mxu0 0
    %2588 = vmatpush.bf16.msra.mxu0 0
    %2589 = vmatpush.bf16.msra.mxu0 0
    %2590 = vmatpush.bf16.msra.mxu0 0
    %2591 = vmatpush.bf16.msra.mxu0 %v330
    %2592 = vmatpush.bf16.msra.mxu0 %v329
    %2593 = vmatpush.bf16.msra.mxu0 %v328
    %2594 = vmatpush.bf16.msra.mxu0 %v327
    %2595 = vmatmul.bf16.gmra.mxu0 %v2572
    %v2596 = vpop.f32.mrf.mxu0
    %v2597 = vadd.f32 %v2584, %v2596
    %v2598 = vpop.f32.mrf.mxu0
    %2599 = vdwg.mxu0
    %v2600 = vmax.f32 %v2597, 0.0
    %v2601 = vmax.f32 %v2561, %v2600
    %s2602 = sadd.s32 %s138, 11
    %v2603 = vmul.f32 %v2491, %v144
    %v2604 = vmul.f32 %v2502, %v150
    %v2605 = vadd.f32 %v2603, %v2604
    %2606 = vset.pattern.permute.xlu0 50
    %2607 = vperm.xlu0 %2606, %v110
    %v2608 = vpop.permute.xlu0 %2607
    %v2610 = vmul.f32 %v2608, %v157
    %v2611 = vadd.f32 %v2605, %v2610
    %v2612 = vadd.f32 %v2611, %v160
    %v2613 = vmax.f32 %v2612, 0.0
    %v2614 = vmul.f32 %v2502, %v144
    %v2615 = vmul.f32 %v2608, %v150
    %v2616 = vadd.f32 %v2614, %v2615
    %2617 = vset.pattern.permute.xlu0 51
    %2618 = vperm.xlu0 %2617, %v110
    %v2619 = vpop.permute.xlu0 %2618
    %v2621 = vmul.f32 %v2619, %v157
    %v2622 = vadd.f32 %v2616, %v2621
    %v2623 = vadd.f32 %v2622, %v160
    %v2624 = vmax.f32 %v2623, 0.0
    %v2625 = vmax.f32 %v2613, %v2624
    %v2626 = vmul.f32 %v2608, %v144
    %v2627 = vmul.f32 %v2619, %v150
    %v2628 = vadd.f32 %v2626, %v2627
    %2629 = vset.pattern.permute.xlu0 52
    %2630 = vperm.xlu0 %2629, %v110
    %v2631 = vpop.permute.xlu0 %2630
    %v2633 = vmul.f32 %v2631, %v157
    %v2634 = vadd.f32 %v2628, %v2633
    %v2635 = vadd.f32 %v2634, %v160
    %v2636 = vmax.f32 %v2635, 0.0
    %v2637 = vmul.f32 %v2619, %v144
    %v2638 = vmul.f32 %v2631, %v150
    %v2639 = vadd.f32 %v2637, %v2638
    %2640 = vset.pattern.permute.xlu0 53
    %2641 = vperm.xlu0 %2640, %v110
    %v2642 = vpop.permute.xlu0 %2641
    %v2644 = vmul.f32 %v2642, %v157
    %v2645 = vadd.f32 %v2639, %v2644
    %v2646 = vadd.f32 %v2645, %v160
    %v2647 = vmax.f32 %v2646, 0.0
    %v2648 = vmax.f32 %v2636, %v2647
    %p2649 = scmp.gt.s32.totalorder %s2602, 0
    %s2650 = scalar_select %p2649, 1, 0
    %s2651 = scvt.s32.f32 %s2650
    %v2652 = vstv %s2651
    %v2653 = vmul.f32 %v2485, %v2652
    %p2654 = scmp.lt.s32.totalorder %s2602, 15
    %s2655 = scalar_select %p2654, 1, 0
    %s2656 = scvt.s32.f32 %s2655
    %v2657 = vstv %s2656
    %v2658 = vmul.f32 %v2648, %v2657
    %v2659 = vpack.c.bf16 %v2653, %v2653
    %v2660 = vpack.c.bf16 %v2508, %v2508
    %v2661 = vpack.c.bf16 %v2625, %v2625
    %v2662 = vpack.c.bf16 %v2658, %v2658
    %v2664 = vunpack.c.l.b16 %v2660
    %v2665 = vpack.c.b16 %v2664, %v2664
    %2666 = vrot.lane.b32.xlu0 %v2665, 64
    %v2667 = vpop.permute.xlu0 %2666
    %v2670 = vsel %vm263, %v2659, %v2667
    %v2673 = vsel %vm263, %v2661, 0
    %2675 = vmatpush.bf16.msra.mxu0 %v326
    %2676 = vmatpush.bf16.msra.mxu0 %v325
    %2677 = vmatpush.bf16.msra.mxu0 %v324
    %2678 = vmatpush.bf16.msra.mxu0 %v323
    %2679 = vmatpush.bf16.msra.mxu0 %v322
    %2680 = vmatpush.bf16.msra.mxu0 %v321
    %2681 = vmatpush.bf16.msra.mxu0 %v320
    %2682 = vmatpush.bf16.msra.mxu0 %v319
    %2683 = vmatmul.bf16.gmra.mxu0 %v2670
    %v2684 = vpop.f32.mrf.mxu0
    %v2685 = vadd.f32 %v269, %v2684
    %v2686 = vpop.f32.mrf.mxu0
    %2687 = vdwg.mxu0
    %2688 = vmatpush.bf16.msra.mxu0 0
    %2689 = vmatpush.bf16.msra.mxu0 0
    %2690 = vmatpush.bf16.msra.mxu0 0
    %2691 = vmatpush.bf16.msra.mxu0 0
    %2692 = vmatpush.bf16.msra.mxu0 %v330
    %2693 = vmatpush.bf16.msra.mxu0 %v329
    %2694 = vmatpush.bf16.msra.mxu0 %v328
    %2695 = vmatpush.bf16.msra.mxu0 %v327
    %2696 = vmatmul.bf16.gmra.mxu0 %v2673
    %v2697 = vpop.f32.mrf.mxu0
    %v2698 = vadd.f32 %v2685, %v2697
    %v2699 = vpop.f32.mrf.mxu0
    %2700 = vdwg.mxu0
    %v2701 = vmax.f32 %v2698, 0.0
    %v2703 = vunpack.c.l.b16 %v2661
    %v2704 = vpack.c.b16 %v2703, %v2703
    %2705 = vrot.lane.b32.xlu0 %v2704, 64
    %v2706 = vpop.permute.xlu0 %2705
    %v2709 = vsel %vm263, %v2660, %v2706
    %v2712 = vsel %vm263, %v2662, 0
    %2714 = vmatpush.bf16.msra.mxu0 %v326
    %2715 = vmatpush.bf16.msra.mxu0 %v325
    %2716 = vmatpush.bf16.msra.mxu0 %v324
    %2717 = vmatpush.bf16.msra.mxu0 %v323
    %2718 = vmatpush.bf16.msra.mxu0 %v322
    %2719 = vmatpush.bf16.msra.mxu0 %v321
    %2720 = vmatpush.bf16.msra.mxu0 %v320
    %2721 = vmatpush.bf16.msra.mxu0 %v319
    %2722 = vmatmul.bf16.gmra.mxu0 %v2709
    %v2723 = vpop.f32.mrf.mxu0
    %v2724 = vadd.f32 %v269, %v2723
    %v2725 = vpop.f32.mrf.mxu0
    %2726 = vdwg.mxu0
    %2727 = vmatpush.bf16.msra.mxu0 0
    %2728 = vmatpush.bf16.msra.mxu0 0
    %2729 = vmatpush.bf16.msra.mxu0 0
    %2730 = vmatpush.bf16.msra.mxu0 0
    %2731 = vmatpush.bf16.msra.mxu0 %v330
    %2732 = vmatpush.bf16.msra.mxu0 %v329
    %2733 = vmatpush.bf16.msra.mxu0 %v328
    %2734 = vmatpush.bf16.msra.mxu0 %v327
    %2735 = vmatmul.bf16.gmra.mxu0 %v2712
    %v2736 = vpop.f32.mrf.mxu0
    %v2737 = vadd.f32 %v2724, %v2736
    %v2738 = vpop.f32.mrf.mxu0
    %2739 = vdwg.mxu0
    %v2740 = vmax.f32 %v2737, 0.0
    %v2741 = vmax.f32 %v2701, %v2740
    %v2742 = vpack.c.bf16 %v2601, %v2601
    %v2743 = vpack.c.bf16 %v2741, %v2741
    %s2744 = scalar_lea.vmem [#allocation9], 640
    %v2745 = vld [vmem:[%s2744] sm:$0xf]
    %v2746 = vld [vmem:[%s2744 + $0x4] sm:$0xf]
    %v2747 = vld [vmem:[%s2744 + $0x8] sm:$0xf]
    %v2748 = vld [vmem:[%s2744 + $0xc] sm:$0xf]
    %v2749 = vld [vmem:[%s2744 + $0x10] sm:$0xf]
    %v2750 = vld [vmem:[%s2744 + $0x14] sm:$0xf]
    %v2751 = vld [vmem:[%s2744 + $0x18] sm:$0xf]
    %v2752 = vld [vmem:[%s2744 + $0x1c] sm:$0xf]
    %v2753 = vld [vmem:[%s2744 + $0x20] sm:$0xf]
    %v2754 = vld [vmem:[%s2744 + $0x24] sm:$0xf]
    %v2755 = vld [vmem:[%s2744 + $0x28] sm:$0xf]
    %v2756 = vld [vmem:[%s2744 + $0x2c] sm:$0xf]
    %v2757 = vld [vmem:[%s2744 + $0x30] sm:$0xf]
    %v2758 = vld [vmem:[%s2744 + $0x34] sm:$0xf]
    %v2759 = vld [vmem:[%s2744 + $0x38] sm:$0xf]
    %v2760 = vld [vmem:[%s2744 + $0x3c] sm:$0xf]
    %v2761 = vld [vmem:[%s2744 + $0x40] sm:$0xf]
    %v2762 = vld [vmem:[%s2744 + $0x44] sm:$0xf]
    %v2763 = vld [vmem:[%s2744 + $0x48] sm:$0xf]
    %v2764 = vld [vmem:[%s2744 + $0x4c] sm:$0xf]
    %v2765 = vld [vmem:[%s2744 + $0x50] sm:$0xf]
    %v2766 = vld [vmem:[%s2744 + $0x54] sm:$0xf]
    %v2767 = vld [vmem:[%s2744 + $0x58] sm:$0xf]
    %v2768 = vld [vmem:[%s2744 + $0x5c] sm:$0xf]
    %v2769 = vld [vmem:[%s2744 + $0x60] sm:$0xf]
    %v2770 = vld [vmem:[%s2744 + $0x64] sm:$0xf]
    %v2771 = vld [vmem:[%s2744 + $0x68] sm:$0xf]
    %v2772 = vld [vmem:[%s2744 + $0x6c] sm:$0xf]
    %v2773 = vld [vmem:[%s2744 + $0x70] sm:$0xf]
    %v2774 = vld [vmem:[%s2744 + $0x74] sm:$0xf]
    %v2775 = vld [vmem:[%s2744 + $0x78] sm:$0xf]
    %v2776 = vld [vmem:[%s2744 + $0x7c] sm:$0xf]
    %v2809 = vunpack.c.l.b16 %v2745
    %v2810 = vunpack.c.l.b16 %v2746
    %v2811 = vunpack.c.l.b16 %v2747
    %v2812 = vunpack.c.l.b16 %v2748
    %v2813 = vunpack.c.l.b16 %v2749
    %v2814 = vunpack.c.l.b16 %v2750
    %v2815 = vunpack.c.l.b16 %v2751
    %v2816 = vunpack.c.l.b16 %v2752
    %v2817 = vunpack.c.l.b16 %v2753
    %v2818 = vunpack.c.l.b16 %v2754
    %v2819 = vunpack.c.l.b16 %v2755
    %v2820 = vunpack.c.l.b16 %v2756
    %v2821 = vunpack.c.l.b16 %v2757
    %v2822 = vunpack.c.l.b16 %v2758
    %v2823 = vunpack.c.l.b16 %v2759
    %v2824 = vunpack.c.l.b16 %v2760
    %v2825 = vunpack.c.l.b16 %v2761
    %v2826 = vunpack.c.l.b16 %v2762
    %v2827 = vunpack.c.l.b16 %v2763
    %v2828 = vunpack.c.l.b16 %v2764
    %v2829 = vunpack.c.l.b16 %v2765
    %v2830 = vunpack.c.l.b16 %v2766
    %v2831 = vunpack.c.l.b16 %v2767
    %v2832 = vunpack.c.l.b16 %v2768
    %v2833 = vunpack.c.l.b16 %v2769
    %v2834 = vunpack.c.l.b16 %v2770
    %v2835 = vunpack.c.l.b16 %v2771
    %v2836 = vunpack.c.l.b16 %v2772
    %v2837 = vunpack.c.l.b16 %v2773
    %v2838 = vunpack.c.l.b16 %v2774
    %v2839 = vunpack.c.l.b16 %v2775
    %v2840 = vunpack.c.l.b16 %v2776
    %v2841 = vpack.c.b16 %v2810, %v2809
    %v2842 = vpack.c.b16 %v2812, %v2811
    %v2843 = vpack.c.b16 %v2814, %v2813
    %v2844 = vpack.c.b16 %v2816, %v2815
    %v2845 = vpack.c.b16 %v2818, %v2817
    %v2846 = vpack.c.b16 %v2820, %v2819
    %v2847 = vpack.c.b16 %v2822, %v2821
    %v2848 = vpack.c.b16 %v2824, %v2823
    %v2849 = vpack.c.b16 %v2826, %v2825
    %v2850 = vpack.c.b16 %v2828, %v2827
    %v2851 = vpack.c.b16 %v2830, %v2829
    %v2852 = vpack.c.b16 %v2832, %v2831
    %v2853 = vpack.c.b16 %v2834, %v2833
    %v2854 = vpack.c.b16 %v2836, %v2835
    %v2855 = vpack.c.b16 %v2838, %v2837
    %v2856 = vpack.c.b16 %v2840, %v2839
    %2873 = vmatpush.bf16.msra.mxu0 %v2848
    %2874 = vmatpush.bf16.msra.mxu0 %v2847
    %2875 = vmatpush.bf16.msra.mxu0 %v2846
    %2876 = vmatpush.bf16.msra.mxu0 %v2845
    %2877 = vmatpush.bf16.msra.mxu0 %v2844
    %2878 = vmatpush.bf16.msra.mxu0 %v2843
    %2879 = vmatpush.bf16.msra.mxu0 %v2842
    %2880 = vmatpush.bf16.msra.mxu0 %v2841
    %2881 = vmatmul.bf16.gmra.mxu0 %v2742
    %v2882 = vpop.f32.mrf.mxu0
    %v2883 = vadd.f32 0.0, %v2882
    %v2884 = vpop.f32.mrf.mxu0
    %2885 = vdwg.mxu0
    %2886 = vmatpush.bf16.msra.mxu0 %v2856
    %2887 = vmatpush.bf16.msra.mxu0 %v2855
    %2888 = vmatpush.bf16.msra.mxu0 %v2854
    %2889 = vmatpush.bf16.msra.mxu0 %v2853
    %2890 = vmatpush.bf16.msra.mxu0 %v2852
    %2891 = vmatpush.bf16.msra.mxu0 %v2851
    %2892 = vmatpush.bf16.msra.mxu0 %v2850
    %2893 = vmatpush.bf16.msra.mxu0 %v2849
    %2894 = vmatmul.bf16.gmra.mxu0 %v2743
    %v2895 = vpop.f32.mrf.mxu0
    %v2896 = vadd.f32 %v2883, %v2895
    %v2897 = vpop.f32.mrf.mxu0
    %2898 = vdwg.mxu0
    %v2899 = vadd.f32 %v2461, %v2896
    %s2900 = sadd.s32 %s138, 12
    %v2901 = vmul.f32 %v2631, %v144
    %v2902 = vmul.f32 %v2642, %v150
    %v2903 = vadd.f32 %v2901, %v2902
    %2904 = vset.pattern.permute.xlu0 54
    %2905 = vperm.xlu0 %2904, %v110
    %v2906 = vpop.permute.xlu0 %2905
    %v2908 = vmul.f32 %v2906, %v157
    %v2909 = vadd.f32 %v2903, %v2908
    %v2910 = vadd.f32 %v2909, %v160
    %v2911 = vmax.f32 %v2910, 0.0
    %v2912 = vmul.f32 %v2642, %v144
    %v2913 = vmul.f32 %v2906, %v150
    %v2914 = vadd.f32 %v2912, %v2913
    %2915 = vset.pattern.permute.xlu0 55
    %2916 = vperm.xlu0 %2915, %v110
    %v2917 = vpop.permute.xlu0 %2916
    %v2919 = vmul.f32 %v2917, %v157
    %v2920 = vadd.f32 %v2914, %v2919
    %v2921 = vadd.f32 %v2920, %v160
    %v2922 = vmax.f32 %v2921, 0.0
    %v2923 = vmax.f32 %v2911, %v2922
    %v2924 = vmul.f32 %v2906, %v144
    %v2925 = vmul.f32 %v2917, %v150
    %v2926 = vadd.f32 %v2924, %v2925
    %2927 = vset.pattern.permute.xlu0 56
    %2928 = vperm.xlu0 %2927, %v110
    %v2929 = vpop.permute.xlu0 %2928
    %v2931 = vmul.f32 %v2929, %v157
    %v2932 = vadd.f32 %v2926, %v2931
    %v2933 = vadd.f32 %v2932, %v160
    %v2934 = vmax.f32 %v2933, 0.0
    %v2935 = vmul.f32 %v2917, %v144
    %v2936 = vmul.f32 %v2929, %v150
    %v2937 = vadd.f32 %v2935, %v2936
    %2938 = vset.pattern.permute.xlu0 57
    %2939 = vperm.xlu0 %2938, %v110
    %v2940 = vpop.permute.xlu0 %2939
    %v2942 = vmul.f32 %v2940, %v157
    %v2943 = vadd.f32 %v2937, %v2942
    %v2944 = vadd.f32 %v2943, %v160
    %v2945 = vmax.f32 %v2944, 0.0
    %v2946 = vmax.f32 %v2934, %v2945
    %p2947 = scmp.gt.s32.totalorder %s2900, 0
    %s2948 = scalar_select %p2947, 1, 0
    %s2949 = scvt.s32.f32 %s2948
    %v2950 = vstv %s2949
    %v2951 = vmul.f32 %v2625, %v2950
    %p2952 = scmp.lt.s32.totalorder %s2900, 15
    %s2953 = scalar_select %p2952, 1, 0
    %s2954 = scvt.s32.f32 %s2953
    %v2955 = vstv %s2954
    %v2956 = vmul.f32 %v2946, %v2955
    %v2957 = vpack.c.bf16 %v2951, %v2951
    %v2958 = vpack.c.bf16 %v2648, %v2648
    %v2959 = vpack.c.bf16 %v2923, %v2923
    %v2960 = vpack.c.bf16 %v2956, %v2956
    %v2962 = vunpack.c.l.b16 %v2958
    %v2963 = vpack.c.b16 %v2962, %v2962
    %2964 = vrot.lane.b32.xlu0 %v2963, 64
    %v2965 = vpop.permute.xlu0 %2964
    %v2968 = vsel %vm263, %v2957, %v2965
    %v2971 = vsel %vm263, %v2959, 0
    %2973 = vmatpush.bf16.msra.mxu0 %v326
    %2974 = vmatpush.bf16.msra.mxu0 %v325
    %2975 = vmatpush.bf16.msra.mxu0 %v324
    %2976 = vmatpush.bf16.msra.mxu0 %v323
    %2977 = vmatpush.bf16.msra.mxu0 %v322
    %2978 = vmatpush.bf16.msra.mxu0 %v321
    %2979 = vmatpush.bf16.msra.mxu0 %v320
    %2980 = vmatpush.bf16.msra.mxu0 %v319
    %2981 = vmatmul.bf16.gmra.mxu0 %v2968
    %v2982 = vpop.f32.mrf.mxu0
    %v2983 = vadd.f32 %v269, %v2982
    %v2984 = vpop.f32.mrf.mxu0
    %2985 = vdwg.mxu0
    %2986 = vmatpush.bf16.msra.mxu0 0
    %2987 = vmatpush.bf16.msra.mxu0 0
    %2988 = vmatpush.bf16.msra.mxu0 0
    %2989 = vmatpush.bf16.msra.mxu0 0
    %2990 = vmatpush.bf16.msra.mxu0 %v330
    %2991 = vmatpush.bf16.msra.mxu0 %v329
    %2992 = vmatpush.bf16.msra.mxu0 %v328
    %2993 = vmatpush.bf16.msra.mxu0 %v327
    %2994 = vmatmul.bf16.gmra.mxu0 %v2971
    %v2995 = vpop.f32.mrf.mxu0
    %v2996 = vadd.f32 %v2983, %v2995
    %v2997 = vpop.f32.mrf.mxu0
    %2998 = vdwg.mxu0
    %v2999 = vmax.f32 %v2996, 0.0
    %v3001 = vunpack.c.l.b16 %v2959
    %v3002 = vpack.c.b16 %v3001, %v3001
    %3003 = vrot.lane.b32.xlu0 %v3002, 64
    %v3004 = vpop.permute.xlu0 %3003
    %v3007 = vsel %vm263, %v2958, %v3004
    %v3010 = vsel %vm263, %v2960, 0
    %3012 = vmatpush.bf16.msra.mxu0 %v326
    %3013 = vmatpush.bf16.msra.mxu0 %v325
    %3014 = vmatpush.bf16.msra.mxu0 %v324
    %3015 = vmatpush.bf16.msra.mxu0 %v323
    %3016 = vmatpush.bf16.msra.mxu0 %v322
    %3017 = vmatpush.bf16.msra.mxu0 %v321
    %3018 = vmatpush.bf16.msra.mxu0 %v320
    %3019 = vmatpush.bf16.msra.mxu0 %v319
    %3020 = vmatmul.bf16.gmra.mxu0 %v3007
    %v3021 = vpop.f32.mrf.mxu0
    %v3022 = vadd.f32 %v269, %v3021
    %v3023 = vpop.f32.mrf.mxu0
    %3024 = vdwg.mxu0
    %3025 = vmatpush.bf16.msra.mxu0 0
    %3026 = vmatpush.bf16.msra.mxu0 0
    %3027 = vmatpush.bf16.msra.mxu0 0
    %3028 = vmatpush.bf16.msra.mxu0 0
    %3029 = vmatpush.bf16.msra.mxu0 %v330
    %3030 = vmatpush.bf16.msra.mxu0 %v329
    %3031 = vmatpush.bf16.msra.mxu0 %v328
    %3032 = vmatpush.bf16.msra.mxu0 %v327
    %3033 = vmatmul.bf16.gmra.mxu0 %v3010
    %v3034 = vpop.f32.mrf.mxu0
    %v3035 = vadd.f32 %v3022, %v3034
    %v3036 = vpop.f32.mrf.mxu0
    %3037 = vdwg.mxu0
    %v3038 = vmax.f32 %v3035, 0.0
    %v3039 = vmax.f32 %v2999, %v3038
    %s3040 = sadd.s32 %s138, 13
    %v3041 = vmul.f32 %v2929, %v144
    %v3042 = vmul.f32 %v2940, %v150
    %v3043 = vadd.f32 %v3041, %v3042
    %3044 = vset.pattern.permute.xlu0 58
    %3045 = vperm.xlu0 %3044, %v110
    %v3046 = vpop.permute.xlu0 %3045
    %v3048 = vmul.f32 %v3046, %v157
    %v3049 = vadd.f32 %v3043, %v3048
    %v3050 = vadd.f32 %v3049, %v160
    %v3051 = vmax.f32 %v3050, 0.0
    %v3052 = vmul.f32 %v2940, %v144
    %v3053 = vmul.f32 %v3046, %v150
    %v3054 = vadd.f32 %v3052, %v3053
    %3055 = vset.pattern.permute.xlu0 59
    %3056 = vperm.xlu0 %3055, %v110
    %v3057 = vpop.permute.xlu0 %3056
    %v3059 = vmul.f32 %v3057, %v157
    %v3060 = vadd.f32 %v3054, %v3059
    %v3061 = vadd.f32 %v3060, %v160
    %v3062 = vmax.f32 %v3061, 0.0
    %v3063 = vmax.f32 %v3051, %v3062
    %v3064 = vmul.f32 %v3046, %v144
    %v3065 = vmul.f32 %v3057, %v150
    %v3066 = vadd.f32 %v3064, %v3065
    %3067 = vset.pattern.permute.xlu0 60
    %3068 = vperm.xlu0 %3067, %v110
    %v3069 = vpop.permute.xlu0 %3068
    %v3071 = vmul.f32 %v3069, %v157
    %v3072 = vadd.f32 %v3066, %v3071
    %v3073 = vadd.f32 %v3072, %v160
    %v3074 = vmax.f32 %v3073, 0.0
    %v3075 = vmul.f32 %v3057, %v144
    %v3076 = vmul.f32 %v3069, %v150
    %v3077 = vadd.f32 %v3075, %v3076
    %3078 = vset.pattern.permute.xlu0 61
    %3079 = vperm.xlu0 %3078, %v110
    %v3080 = vpop.permute.xlu0 %3079
    %v3082 = vmul.f32 %v3080, %v157
    %v3083 = vadd.f32 %v3077, %v3082
    %v3084 = vadd.f32 %v3083, %v160
    %v3085 = vmax.f32 %v3084, 0.0
    %v3086 = vmax.f32 %v3074, %v3085
    %p3087 = scmp.gt.s32.totalorder %s3040, 0
    %s3088 = scalar_select %p3087, 1, 0
    %s3089 = scvt.s32.f32 %s3088
    %v3090 = vstv %s3089
    %v3091 = vmul.f32 %v2923, %v3090
    %p3092 = scmp.lt.s32.totalorder %s3040, 15
    %s3093 = scalar_select %p3092, 1, 0
    %s3094 = scvt.s32.f32 %s3093
    %v3095 = vstv %s3094
    %v3096 = vmul.f32 %v3086, %v3095
    %v3097 = vpack.c.bf16 %v3091, %v3091
    %v3098 = vpack.c.bf16 %v2946, %v2946
    %v3099 = vpack.c.bf16 %v3063, %v3063
    %v3100 = vpack.c.bf16 %v3096, %v3096
    %v3102 = vunpack.c.l.b16 %v3098
    %v3103 = vpack.c.b16 %v3102, %v3102
    %3104 = vrot.lane.b32.xlu0 %v3103, 64
    %v3105 = vpop.permute.xlu0 %3104
    %v3108 = vsel %vm263, %v3097, %v3105
    %v3111 = vsel %vm263, %v3099, 0
    %3113 = vmatpush.bf16.msra.mxu0 %v326
    %3114 = vmatpush.bf16.msra.mxu0 %v325
    %3115 = vmatpush.bf16.msra.mxu0 %v324
    %3116 = vmatpush.bf16.msra.mxu0 %v323
    %3117 = vmatpush.bf16.msra.mxu0 %v322
    %3118 = vmatpush.bf16.msra.mxu0 %v321
    %3119 = vmatpush.bf16.msra.mxu0 %v320
    %3120 = vmatpush.bf16.msra.mxu0 %v319
    %3121 = vmatmul.bf16.gmra.mxu0 %v3108
    %v3122 = vpop.f32.mrf.mxu0
    %v3123 = vadd.f32 %v269, %v3122
    %v3124 = vpop.f32.mrf.mxu0
    %3125 = vdwg.mxu0
    %3126 = vmatpush.bf16.msra.mxu0 0
    %3127 = vmatpush.bf16.msra.mxu0 0
    %3128 = vmatpush.bf16.msra.mxu0 0
    %3129 = vmatpush.bf16.msra.mxu0 0
    %3130 = vmatpush.bf16.msra.mxu0 %v330
    %3131 = vmatpush.bf16.msra.mxu0 %v329
    %3132 = vmatpush.bf16.msra.mxu0 %v328
    %3133 = vmatpush.bf16.msra.mxu0 %v327
    %3134 = vmatmul.bf16.gmra.mxu0 %v3111
    %v3135 = vpop.f32.mrf.mxu0
    %v3136 = vadd.f32 %v3123, %v3135
    %v3137 = vpop.f32.mrf.mxu0
    %3138 = vdwg.mxu0
    %v3139 = vmax.f32 %v3136, 0.0
    %v3141 = vunpack.c.l.b16 %v3099
    %v3142 = vpack.c.b16 %v3141, %v3141
    %3143 = vrot.lane.b32.xlu0 %v3142, 64
    %v3144 = vpop.permute.xlu0 %3143
    %v3147 = vsel %vm263, %v3098, %v3144
    %v3150 = vsel %vm263, %v3100, 0
    %3152 = vmatpush.bf16.msra.mxu0 %v326
    %3153 = vmatpush.bf16.msra.mxu0 %v325
    %3154 = vmatpush.bf16.msra.mxu0 %v324
    %3155 = vmatpush.bf16.msra.mxu0 %v323
    %3156 = vmatpush.bf16.msra.mxu0 %v322
    %3157 = vmatpush.bf16.msra.mxu0 %v321
    %3158 = vmatpush.bf16.msra.mxu0 %v320
    %3159 = vmatpush.bf16.msra.mxu0 %v319
    %3160 = vmatmul.bf16.gmra.mxu0 %v3147
    %v3161 = vpop.f32.mrf.mxu0
    %v3162 = vadd.f32 %v269, %v3161
    %v3163 = vpop.f32.mrf.mxu0
    %3164 = vdwg.mxu0
    %3165 = vmatpush.bf16.msra.mxu0 0
    %3166 = vmatpush.bf16.msra.mxu0 0
    %3167 = vmatpush.bf16.msra.mxu0 0
    %3168 = vmatpush.bf16.msra.mxu0 0
    %3169 = vmatpush.bf16.msra.mxu0 %v330
    %3170 = vmatpush.bf16.msra.mxu0 %v329
    %3171 = vmatpush.bf16.msra.mxu0 %v328
    %3172 = vmatpush.bf16.msra.mxu0 %v327
    %3173 = vmatmul.bf16.gmra.mxu0 %v3150
    %v3174 = vpop.f32.mrf.mxu0
    %v3175 = vadd.f32 %v3162, %v3174
    %v3176 = vpop.f32.mrf.mxu0
    %3177 = vdwg.mxu0
    %v3178 = vmax.f32 %v3175, 0.0
    %v3179 = vmax.f32 %v3139, %v3178
    %v3180 = vpack.c.bf16 %v3039, %v3039
    %v3181 = vpack.c.bf16 %v3179, %v3179
    %s3182 = scalar_lea.vmem [#allocation9], 768
    %v3183 = vld [vmem:[%s3182] sm:$0xf]
    %v3184 = vld [vmem:[%s3182 + $0x4] sm:$0xf]
    %v3185 = vld [vmem:[%s3182 + $0x8] sm:$0xf]
    %v3186 = vld [vmem:[%s3182 + $0xc] sm:$0xf]
    %v3187 = vld [vmem:[%s3182 + $0x10] sm:$0xf]
    %v3188 = vld [vmem:[%s3182 + $0x14] sm:$0xf]
    %v3189 = vld [vmem:[%s3182 + $0x18] sm:$0xf]
    %v3190 = vld [vmem:[%s3182 + $0x1c] sm:$0xf]
    %v3191 = vld [vmem:[%s3182 + $0x20] sm:$0xf]
    %v3192 = vld [vmem:[%s3182 + $0x24] sm:$0xf]
    %v3193 = vld [vmem:[%s3182 + $0x28] sm:$0xf]
    %v3194 = vld [vmem:[%s3182 + $0x2c] sm:$0xf]
    %v3195 = vld [vmem:[%s3182 + $0x30] sm:$0xf]
    %v3196 = vld [vmem:[%s3182 + $0x34] sm:$0xf]
    %v3197 = vld [vmem:[%s3182 + $0x38] sm:$0xf]
    %v3198 = vld [vmem:[%s3182 + $0x3c] sm:$0xf]
    %v3199 = vld [vmem:[%s3182 + $0x40] sm:$0xf]
    %v3200 = vld [vmem:[%s3182 + $0x44] sm:$0xf]
    %v3201 = vld [vmem:[%s3182 + $0x48] sm:$0xf]
    %v3202 = vld [vmem:[%s3182 + $0x4c] sm:$0xf]
    %v3203 = vld [vmem:[%s3182 + $0x50] sm:$0xf]
    %v3204 = vld [vmem:[%s3182 + $0x54] sm:$0xf]
    %v3205 = vld [vmem:[%s3182 + $0x58] sm:$0xf]
    %v3206 = vld [vmem:[%s3182 + $0x5c] sm:$0xf]
    %v3207 = vld [vmem:[%s3182 + $0x60] sm:$0xf]
    %v3208 = vld [vmem:[%s3182 + $0x64] sm:$0xf]
    %v3209 = vld [vmem:[%s3182 + $0x68] sm:$0xf]
    %v3210 = vld [vmem:[%s3182 + $0x6c] sm:$0xf]
    %v3211 = vld [vmem:[%s3182 + $0x70] sm:$0xf]
    %v3212 = vld [vmem:[%s3182 + $0x74] sm:$0xf]
    %v3213 = vld [vmem:[%s3182 + $0x78] sm:$0xf]
    %v3214 = vld [vmem:[%s3182 + $0x7c] sm:$0xf]
    %v3247 = vunpack.c.l.b16 %v3183
    %v3248 = vunpack.c.l.b16 %v3184
    %v3249 = vunpack.c.l.b16 %v3185
    %v3250 = vunpack.c.l.b16 %v3186
    %v3251 = vunpack.c.l.b16 %v3187
    %v3252 = vunpack.c.l.b16 %v3188
    %v3253 = vunpack.c.l.b16 %v3189
    %v3254 = vunpack.c.l.b16 %v3190
    %v3255 = vunpack.c.l.b16 %v3191
    %v3256 = vunpack.c.l.b16 %v3192
    %v3257 = vunpack.c.l.b16 %v3193
    %v3258 = vunpack.c.l.b16 %v3194
    %v3259 = vunpack.c.l.b16 %v3195
    %v3260 = vunpack.c.l.b16 %v3196
    %v3261 = vunpack.c.l.b16 %v3197
    %v3262 = vunpack.c.l.b16 %v3198
    %v3263 = vunpack.c.l.b16 %v3199
    %v3264 = vunpack.c.l.b16 %v3200
    %v3265 = vunpack.c.l.b16 %v3201
    %v3266 = vunpack.c.l.b16 %v3202
    %v3267 = vunpack.c.l.b16 %v3203
    %v3268 = vunpack.c.l.b16 %v3204
    %v3269 = vunpack.c.l.b16 %v3205
    %v3270 = vunpack.c.l.b16 %v3206
    %v3271 = vunpack.c.l.b16 %v3207
    %v3272 = vunpack.c.l.b16 %v3208
    %v3273 = vunpack.c.l.b16 %v3209
    %v3274 = vunpack.c.l.b16 %v3210
    %v3275 = vunpack.c.l.b16 %v3211
    %v3276 = vunpack.c.l.b16 %v3212
    %v3277 = vunpack.c.l.b16 %v3213
    %v3278 = vunpack.c.l.b16 %v3214
    %v3279 = vpack.c.b16 %v3248, %v3247
    %v3280 = vpack.c.b16 %v3250, %v3249
    %v3281 = vpack.c.b16 %v3252, %v3251
    %v3282 = vpack.c.b16 %v3254, %v3253
    %v3283 = vpack.c.b16 %v3256, %v3255
    %v3284 = vpack.c.b16 %v3258, %v3257
    %v3285 = vpack.c.b16 %v3260, %v3259
    %v3286 = vpack.c.b16 %v3262, %v3261
    %v3287 = vpack.c.b16 %v3264, %v3263
    %v3288 = vpack.c.b16 %v3266, %v3265
    %v3289 = vpack.c.b16 %v3268, %v3267
    %v3290 = vpack.c.b16 %v3270, %v3269
    %v3291 = vpack.c.b16 %v3272, %v3271
    %v3292 = vpack.c.b16 %v3274, %v3273
    %v3293 = vpack.c.b16 %v3276, %v3275
    %v3294 = vpack.c.b16 %v3278, %v3277
    %3311 = vmatpush.bf16.msra.mxu0 %v3286
    %3312 = vmatpush.bf16.msra.mxu0 %v3285
    %3313 = vmatpush.bf16.msra.mxu0 %v3284
    %3314 = vmatpush.bf16.msra.mxu0 %v3283
    %3315 = vmatpush.bf16.msra.mxu0 %v3282
    %3316 = vmatpush.bf16.msra.mxu0 %v3281
    %3317 = vmatpush.bf16.msra.mxu0 %v3280
    %3318 = vmatpush.bf16.msra.mxu0 %v3279
    %3319 = vmatmul.bf16.gmra.mxu0 %v3180
    %v3320 = vpop.f32.mrf.mxu0
    %v3321 = vadd.f32 0.0, %v3320
    %v3322 = vpop.f32.mrf.mxu0
    %3323 = vdwg.mxu0
    %3324 = vmatpush.bf16.msra.mxu0 %v3294
    %3325 = vmatpush.bf16.msra.mxu0 %v3293
    %3326 = vmatpush.bf16.msra.mxu0 %v3292
    %3327 = vmatpush.bf16.msra.mxu0 %v3291
    %3328 = vmatpush.bf16.msra.mxu0 %v3290
    %3329 = vmatpush.bf16.msra.mxu0 %v3289
    %3330 = vmatpush.bf16.msra.mxu0 %v3288
    %3331 = vmatpush.bf16.msra.mxu0 %v3287
    %3332 = vmatmul.bf16.gmra.mxu0 %v3181
    %v3333 = vpop.f32.mrf.mxu0
    %v3334 = vadd.f32 %v3321, %v3333
    %v3335 = vpop.f32.mrf.mxu0
    %3336 = vdwg.mxu0
    %v3337 = vadd.f32 %v2899, %v3334
    %s3338 = sadd.s32 %s138, 14
    %v3339 = vmul.f32 %v3069, %v144
    %v3340 = vmul.f32 %v3080, %v150
    %v3341 = vadd.f32 %v3339, %v3340
    %3342 = vset.pattern.permute.xlu0 62
    %3343 = vperm.xlu0 %3342, %v110
    %v3344 = vpop.permute.xlu0 %3343
    %v3346 = vmul.f32 %v3344, %v157
    %v3347 = vadd.f32 %v3341, %v3346
    %v3348 = vadd.f32 %v3347, %v160
    %v3349 = vmax.f32 %v3348, 0.0
    %v3350 = vmul.f32 %v3080, %v144
    %v3351 = vmul.f32 %v3344, %v150
    %v3352 = vadd.f32 %v3350, %v3351
    %3353 = vset.pattern.permute.xlu0 63
    %3354 = vperm.xlu0 %3353, %v110
    %v3355 = vpop.permute.xlu0 %3354
    %v3357 = vmul.f32 %v3355, %v157
    %v3358 = vadd.f32 %v3352, %v3357
    %v3359 = vadd.f32 %v3358, %v160
    %v3360 = vmax.f32 %v3359, 0.0
    %v3361 = vmax.f32 %v3349, %v3360
    %v3362 = vmul.f32 %v3344, %v144
    %v3363 = vmul.f32 %v3355, %v150
    %v3364 = vadd.f32 %v3362, %v3363
    %3365 = vset.pattern.permute.xlu0 64
    %3366 = vperm.xlu0 %3365, %v110
    %v3367 = vpop.permute.xlu0 %3366
    %v3369 = vmul.f32 %v3367, %v157
    %v3370 = vadd.f32 %v3364, %v3369
    %v3371 = vadd.f32 %v3370, %v160
    %v3372 = vmax.f32 %v3371, 0.0
    %v3373 = vmul.f32 %v3355, %v144
    %v3374 = vmul.f32 %v3367, %v150
    %v3375 = vadd.f32 %v3373, %v3374
    %3376 = vset.pattern.permute.xlu0 65
    %3377 = vperm.xlu0 %3376, %v110
    %v3378 = vpop.permute.xlu0 %3377
    %v3380 = vmul.f32 %v3378, %v157
    %v3381 = vadd.f32 %v3375, %v3380
    %v3382 = vadd.f32 %v3381, %v160
    %v3383 = vmax.f32 %v3382, 0.0
    %v3384 = vmax.f32 %v3372, %v3383
    %p3385 = scmp.gt.s32.totalorder %s3338, 0
    %s3386 = scalar_select %p3385, 1, 0
    %s3387 = scvt.s32.f32 %s3386
    %v3388 = vstv %s3387
    %v3389 = vmul.f32 %v3063, %v3388
    %p3390 = scmp.lt.s32.totalorder %s3338, 15
    %s3391 = scalar_select %p3390, 1, 0
    %s3392 = scvt.s32.f32 %s3391
    %v3393 = vstv %s3392
    %v3394 = vmul.f32 %v3384, %v3393
    %v3395 = vpack.c.bf16 %v3389, %v3389
    %v3396 = vpack.c.bf16 %v3086, %v3086
    %v3397 = vpack.c.bf16 %v3361, %v3361
    %v3398 = vpack.c.bf16 %v3394, %v3394
    %v3400 = vunpack.c.l.b16 %v3396
    %v3401 = vpack.c.b16 %v3400, %v3400
    %3402 = vrot.lane.b32.xlu0 %v3401, 64
    %v3403 = vpop.permute.xlu0 %3402
    %v3406 = vsel %vm263, %v3395, %v3403
    %v3409 = vsel %vm263, %v3397, 0
    %3411 = vmatpush.bf16.msra.mxu0 %v326
    %3412 = vmatpush.bf16.msra.mxu0 %v325
    %3413 = vmatpush.bf16.msra.mxu0 %v324
    %3414 = vmatpush.bf16.msra.mxu0 %v323
    %3415 = vmatpush.bf16.msra.mxu0 %v322
    %3416 = vmatpush.bf16.msra.mxu0 %v321
    %3417 = vmatpush.bf16.msra.mxu0 %v320
    %3418 = vmatpush.bf16.msra.mxu0 %v319
    %3419 = vmatmul.bf16.gmra.mxu0 %v3406
    %v3420 = vpop.f32.mrf.mxu0
    %v3421 = vadd.f32 %v269, %v3420
    %v3422 = vpop.f32.mrf.mxu0
    %3423 = vdwg.mxu0
    %3424 = vmatpush.bf16.msra.mxu0 0
    %3425 = vmatpush.bf16.msra.mxu0 0
    %3426 = vmatpush.bf16.msra.mxu0 0
    %3427 = vmatpush.bf16.msra.mxu0 0
    %3428 = vmatpush.bf16.msra.mxu0 %v330
    %3429 = vmatpush.bf16.msra.mxu0 %v329
    %3430 = vmatpush.bf16.msra.mxu0 %v328
    %3431 = vmatpush.bf16.msra.mxu0 %v327
    %3432 = vmatmul.bf16.gmra.mxu0 %v3409
    %v3433 = vpop.f32.mrf.mxu0
    %v3434 = vadd.f32 %v3421, %v3433
    %v3435 = vpop.f32.mrf.mxu0
    %3436 = vdwg.mxu0
    %v3437 = vmax.f32 %v3434, 0.0
    %v3439 = vunpack.c.l.b16 %v3397
    %v3440 = vpack.c.b16 %v3439, %v3439
    %3441 = vrot.lane.b32.xlu0 %v3440, 64
    %v3442 = vpop.permute.xlu0 %3441
    %v3445 = vsel %vm263, %v3396, %v3442
    %v3448 = vsel %vm263, %v3398, 0
    %3450 = vmatpush.bf16.msra.mxu0 %v326
    %3451 = vmatpush.bf16.msra.mxu0 %v325
    %3452 = vmatpush.bf16.msra.mxu0 %v324
    %3453 = vmatpush.bf16.msra.mxu0 %v323
    %3454 = vmatpush.bf16.msra.mxu0 %v322
    %3455 = vmatpush.bf16.msra.mxu0 %v321
    %3456 = vmatpush.bf16.msra.mxu0 %v320
    %3457 = vmatpush.bf16.msra.mxu0 %v319
    %3458 = vmatmul.bf16.gmra.mxu0 %v3445
    %v3459 = vpop.f32.mrf.mxu0
    %v3460 = vadd.f32 %v269, %v3459
    %v3461 = vpop.f32.mrf.mxu0
    %3462 = vdwg.mxu0
    %3463 = vmatpush.bf16.msra.mxu0 0
    %3464 = vmatpush.bf16.msra.mxu0 0
    %3465 = vmatpush.bf16.msra.mxu0 0
    %3466 = vmatpush.bf16.msra.mxu0 0
    %3467 = vmatpush.bf16.msra.mxu0 %v330
    %3468 = vmatpush.bf16.msra.mxu0 %v329
    %3469 = vmatpush.bf16.msra.mxu0 %v328
    %3470 = vmatpush.bf16.msra.mxu0 %v327
    %3471 = vmatmul.bf16.gmra.mxu0 %v3448
    %v3472 = vpop.f32.mrf.mxu0
    %v3473 = vadd.f32 %v3460, %v3472
    %v3474 = vpop.f32.mrf.mxu0
    %3475 = vdwg.mxu0
    %v3476 = vmax.f32 %v3473, 0.0
    %v3477 = vmax.f32 %v3437, %v3476
    %s3478 = sadd.s32 %s138, 15
    %v3479 = vmul.f32 %v3367, %v144
    %v3480 = vmul.f32 %v3378, %v150
    %v3481 = vadd.f32 %v3479, %v3480
    %3482 = vset.pattern.permute.xlu0 66
    %3483 = vperm.xlu0 %3482, %v110
    %v3484 = vpop.permute.xlu0 %3483
    %v3486 = vmul.f32 %v3484, %v157
    %v3487 = vadd.f32 %v3481, %v3486
    %v3488 = vadd.f32 %v3487, %v160
    %v3489 = vmax.f32 %v3488, 0.0
    %v3490 = vmul.f32 %v3378, %v144
    %v3491 = vmul.f32 %v3484, %v150
    %v3492 = vadd.f32 %v3490, %v3491
    %3493 = vset.pattern.permute.xlu0 67
    %3494 = vperm.xlu0 %3493, %v110
    %v3495 = vpop.permute.xlu0 %3494
    %v3497 = vmul.f32 %v3495, %v157
    %v3498 = vadd.f32 %v3492, %v3497
    %v3499 = vadd.f32 %v3498, %v160
    %v3500 = vmax.f32 %v3499, 0.0
    %v3501 = vmax.f32 %v3489, %v3500
    %v3502 = vmul.f32 %v3484, %v144
    %v3503 = vmul.f32 %v3495, %v150
    %v3504 = vadd.f32 %v3502, %v3503
    %3505 = vset.pattern.permute.xlu0 68
    %3506 = vperm.xlu0 %3505, %v110
    %v3507 = vpop.permute.xlu0 %3506
    %v3509 = vmul.f32 %v3507, %v157
    %v3510 = vadd.f32 %v3504, %v3509
    %v3511 = vadd.f32 %v3510, %v160
    %v3512 = vmax.f32 %v3511, 0.0
    %v3513 = vmul.f32 %v3495, %v144
    %v3514 = vmul.f32 %v3507, %v150
    %v3515 = vadd.f32 %v3513, %v3514
    %3516 = vset.pattern.permute.xlu0 69
    %3517 = vperm.xlu0 %3516, %v110
    %v3518 = vpop.permute.xlu0 %3517
    %v3520 = vmul.f32 %v3518, %v157
    %v3521 = vadd.f32 %v3515, %v3520
    %v3522 = vadd.f32 %v3521, %v160
    %v3523 = vmax.f32 %v3522, 0.0
    %v3524 = vmax.f32 %v3512, %v3523
    %p3525 = scmp.gt.s32.totalorder %s3478, 0
    %s3526 = scalar_select %p3525, 1, 0
    %s3527 = scvt.s32.f32 %s3526
    %v3528 = vstv %s3527
    %v3529 = vmul.f32 %v3361, %v3528
    %p3530 = scmp.lt.s32.totalorder %s3478, 15
    %s3531 = scalar_select %p3530, 1, 0
    %s3532 = scvt.s32.f32 %s3531
    %v3533 = vstv %s3532
    %v3534 = vmul.f32 %v3524, %v3533
    %v3535 = vpack.c.bf16 %v3529, %v3529
    %v3536 = vpack.c.bf16 %v3384, %v3384
    %v3537 = vpack.c.bf16 %v3501, %v3501
    %v3538 = vpack.c.bf16 %v3534, %v3534
    %v3540 = vunpack.c.l.b16 %v3536
    %v3541 = vpack.c.b16 %v3540, %v3540
    %3542 = vrot.lane.b32.xlu0 %v3541, 64
    %v3543 = vpop.permute.xlu0 %3542
    %v3546 = vsel %vm263, %v3535, %v3543
    %v3549 = vsel %vm263, %v3537, 0
    %3551 = vmatpush.bf16.msra.mxu0 %v326
    %3552 = vmatpush.bf16.msra.mxu0 %v325
    %3553 = vmatpush.bf16.msra.mxu0 %v324
    %3554 = vmatpush.bf16.msra.mxu0 %v323
    %3555 = vmatpush.bf16.msra.mxu0 %v322
    %3556 = vmatpush.bf16.msra.mxu0 %v321
    %3557 = vmatpush.bf16.msra.mxu0 %v320
    %3558 = vmatpush.bf16.msra.mxu0 %v319
    %3559 = vmatmul.bf16.gmra.mxu0 %v3546
    %v3560 = vpop.f32.mrf.mxu0
    %v3561 = vadd.f32 %v269, %v3560
    %v3562 = vpop.f32.mrf.mxu0
    %3563 = vdwg.mxu0
    %3564 = vmatpush.bf16.msra.mxu0 0
    %3565 = vmatpush.bf16.msra.mxu0 0
    %3566 = vmatpush.bf16.msra.mxu0 0
    %3567 = vmatpush.bf16.msra.mxu0 0
    %3568 = vmatpush.bf16.msra.mxu0 %v330
    %3569 = vmatpush.bf16.msra.mxu0 %v329
    %3570 = vmatpush.bf16.msra.mxu0 %v328
    %3571 = vmatpush.bf16.msra.mxu0 %v327
    %3572 = vmatmul.bf16.gmra.mxu0 %v3549
    %v3573 = vpop.f32.mrf.mxu0
    %v3574 = vadd.f32 %v3561, %v3573
    %v3575 = vpop.f32.mrf.mxu0
    %3576 = vdwg.mxu0
    %v3577 = vmax.f32 %v3574, 0.0
    %v3579 = vunpack.c.l.b16 %v3537
    %v3580 = vpack.c.b16 %v3579, %v3579
    %3581 = vrot.lane.b32.xlu0 %v3580, 64
    %v3582 = vpop.permute.xlu0 %3581
    %v3585 = vsel %vm263, %v3536, %v3582
    %v3588 = vsel %vm263, %v3538, 0
    %3590 = vmatpush.bf16.msra.mxu0 %v326
    %3591 = vmatpush.bf16.msra.mxu0 %v325
    %3592 = vmatpush.bf16.msra.mxu0 %v324
    %3593 = vmatpush.bf16.msra.mxu0 %v323
    %3594 = vmatpush.bf16.msra.mxu0 %v322
    %3595 = vmatpush.bf16.msra.mxu0 %v321
    %3596 = vmatpush.bf16.msra.mxu0 %v320
    %3597 = vmatpush.bf16.msra.mxu0 %v319
    %3598 = vmatmul.bf16.gmra.mxu0 %v3585
    %v3599 = vpop.f32.mrf.mxu0
    %v3600 = vadd.f32 %v269, %v3599
    %v3601 = vpop.f32.mrf.mxu0
    %3602 = vdwg.mxu0
    %3603 = vmatpush.bf16.msra.mxu0 0
    %3604 = vmatpush.bf16.msra.mxu0 0
    %3605 = vmatpush.bf16.msra.mxu0 0
    %3606 = vmatpush.bf16.msra.mxu0 0
    %3607 = vmatpush.bf16.msra.mxu0 %v330
    %3608 = vmatpush.bf16.msra.mxu0 %v329
    %3609 = vmatpush.bf16.msra.mxu0 %v328
    %3610 = vmatpush.bf16.msra.mxu0 %v327
    %3611 = vmatmul.bf16.gmra.mxu0 %v3588
    %v3612 = vpop.f32.mrf.mxu0
    %v3613 = vadd.f32 %v3600, %v3612
    %v3614 = vpop.f32.mrf.mxu0
    %3615 = vdwg.mxu0
    %v3616 = vmax.f32 %v3613, 0.0
    %v3617 = vmax.f32 %v3577, %v3616
    %v3618 = vpack.c.bf16 %v3477, %v3477
    %v3619 = vpack.c.bf16 %v3617, %v3617
    %s3620 = scalar_lea.vmem [#allocation9], 896
    %v3621 = vld [vmem:[%s3620] sm:$0xf]
    %v3622 = vld [vmem:[%s3620 + $0x4] sm:$0xf]
    %v3623 = vld [vmem:[%s3620 + $0x8] sm:$0xf]
    %v3624 = vld [vmem:[%s3620 + $0xc] sm:$0xf]
    %v3625 = vld [vmem:[%s3620 + $0x10] sm:$0xf]
    %v3626 = vld [vmem:[%s3620 + $0x14] sm:$0xf]
    %v3627 = vld [vmem:[%s3620 + $0x18] sm:$0xf]
    %v3628 = vld [vmem:[%s3620 + $0x1c] sm:$0xf]
    %v3629 = vld [vmem:[%s3620 + $0x20] sm:$0xf]
    %v3630 = vld [vmem:[%s3620 + $0x24] sm:$0xf]
    %v3631 = vld [vmem:[%s3620 + $0x28] sm:$0xf]
    %v3632 = vld [vmem:[%s3620 + $0x2c] sm:$0xf]
    %v3633 = vld [vmem:[%s3620 + $0x30] sm:$0xf]
    %v3634 = vld [vmem:[%s3620 + $0x34] sm:$0xf]
    %v3635 = vld [vmem:[%s3620 + $0x38] sm:$0xf]
    %v3636 = vld [vmem:[%s3620 + $0x3c] sm:$0xf]
    %v3637 = vld [vmem:[%s3620 + $0x40] sm:$0xf]
    %v3638 = vld [vmem:[%s3620 + $0x44] sm:$0xf]
    %v3639 = vld [vmem:[%s3620 + $0x48] sm:$0xf]
    %v3640 = vld [vmem:[%s3620 + $0x4c] sm:$0xf]
    %v3641 = vld [vmem:[%s3620 + $0x50] sm:$0xf]
    %v3642 = vld [vmem:[%s3620 + $0x54] sm:$0xf]
    %v3643 = vld [vmem:[%s3620 + $0x58] sm:$0xf]
    %v3644 = vld [vmem:[%s3620 + $0x5c] sm:$0xf]
    %v3645 = vld [vmem:[%s3620 + $0x60] sm:$0xf]
    %v3646 = vld [vmem:[%s3620 + $0x64] sm:$0xf]
    %v3647 = vld [vmem:[%s3620 + $0x68] sm:$0xf]
    %v3648 = vld [vmem:[%s3620 + $0x6c] sm:$0xf]
    %v3649 = vld [vmem:[%s3620 + $0x70] sm:$0xf]
    %v3650 = vld [vmem:[%s3620 + $0x74] sm:$0xf]
    %v3651 = vld [vmem:[%s3620 + $0x78] sm:$0xf]
    %v3652 = vld [vmem:[%s3620 + $0x7c] sm:$0xf]
    %v3685 = vunpack.c.l.b16 %v3621
    %v3686 = vunpack.c.l.b16 %v3622
    %v3687 = vunpack.c.l.b16 %v3623
    %v3688 = vunpack.c.l.b16 %v3624
    %v3689 = vunpack.c.l.b16 %v3625
    %v3690 = vunpack.c.l.b16 %v3626
    %v3691 = vunpack.c.l.b16 %v3627
    %v3692 = vunpack.c.l.b16 %v3628
    %v3693 = vunpack.c.l.b16 %v3629
    %v3694 = vunpack.c.l.b16 %v3630
    %v3695 = vunpack.c.l.b16 %v3631
    %v3696 = vunpack.c.l.b16 %v3632
    %v3697 = vunpack.c.l.b16 %v3633
    %v3698 = vunpack.c.l.b16 %v3634
    %v3699 = vunpack.c.l.b16 %v3635
    %v3700 = vunpack.c.l.b16 %v3636
    %v3701 = vunpack.c.l.b16 %v3637
    %v3702 = vunpack.c.l.b16 %v3638
    %v3703 = vunpack.c.l.b16 %v3639
    %v3704 = vunpack.c.l.b16 %v3640
    %v3705 = vunpack.c.l.b16 %v3641
    %v3706 = vunpack.c.l.b16 %v3642
    %v3707 = vunpack.c.l.b16 %v3643
    %v3708 = vunpack.c.l.b16 %v3644
    %v3709 = vunpack.c.l.b16 %v3645
    %v3710 = vunpack.c.l.b16 %v3646
    %v3711 = vunpack.c.l.b16 %v3647
    %v3712 = vunpack.c.l.b16 %v3648
    %v3713 = vunpack.c.l.b16 %v3649
    %v3714 = vunpack.c.l.b16 %v3650
    %v3715 = vunpack.c.l.b16 %v3651
    %v3716 = vunpack.c.l.b16 %v3652
    %v3717 = vpack.c.b16 %v3686, %v3685
    %v3718 = vpack.c.b16 %v3688, %v3687
    %v3719 = vpack.c.b16 %v3690, %v3689
    %v3720 = vpack.c.b16 %v3692, %v3691
    %v3721 = vpack.c.b16 %v3694, %v3693
    %v3722 = vpack.c.b16 %v3696, %v3695
    %v3723 = vpack.c.b16 %v3698, %v3697
    %v3724 = vpack.c.b16 %v3700, %v3699
    %v3725 = vpack.c.b16 %v3702, %v3701
    %v3726 = vpack.c.b16 %v3704, %v3703
    %v3727 = vpack.c.b16 %v3706, %v3705
    %v3728 = vpack.c.b16 %v3708, %v3707
    %v3729 = vpack.c.b16 %v3710, %v3709
    %v3730 = vpack.c.b16 %v3712, %v3711
    %v3731 = vpack.c.b16 %v3714, %v3713
    %v3732 = vpack.c.b16 %v3716, %v3715
    %3749 = vmatpush.bf16.msra.mxu0 %v3724
    %3750 = vmatpush.bf16.msra.mxu0 %v3723
    %3751 = vmatpush.bf16.msra.mxu0 %v3722
    %3752 = vmatpush.bf16.msra.mxu0 %v3721
    %3753 = vmatpush.bf16.msra.mxu0 %v3720
    %3754 = vmatpush.bf16.msra.mxu0 %v3719
    %3755 = vmatpush.bf16.msra.mxu0 %v3718
    %3756 = vmatpush.bf16.msra.mxu0 %v3717
    %3757 = vmatmul.bf16.gmra.mxu0 %v3618
    %v3758 = vpop.f32.mrf.mxu0
    %v3759 = vadd.f32 0.0, %v3758
    %v3760 = vpop.f32.mrf.mxu0
    %3761 = vdwg.mxu0
    %3762 = vmatpush.bf16.msra.mxu0 %v3732
    %3763 = vmatpush.bf16.msra.mxu0 %v3731
    %3764 = vmatpush.bf16.msra.mxu0 %v3730
    %3765 = vmatpush.bf16.msra.mxu0 %v3729
    %3766 = vmatpush.bf16.msra.mxu0 %v3728
    %3767 = vmatpush.bf16.msra.mxu0 %v3727
    %3768 = vmatpush.bf16.msra.mxu0 %v3726
    %3769 = vmatpush.bf16.msra.mxu0 %v3725
    %3770 = vmatmul.bf16.gmra.mxu0 %v3619
    %v3771 = vpop.f32.mrf.mxu0
    %v3772 = vadd.f32 %v3759, %v3771
    %v3773 = vpop.f32.mrf.mxu0
    %3774 = vdwg.mxu0
    %v3775 = vadd.f32 %v3337, %v3772
    %3776 = vst [vmem:[#allocation2] sm:$0xff] %v3775
    // Predicated region
    $region58: #{tpu_custom_call.1} parent=1 // pred_check
      %p3777 = pneg %p105
    $region59: #{tpu_custom_call.1} parent=1 // pred_check_branch
      %3779 = sbr.rel (%p3777) target = $region61
    $region60: #{tpu_custom_call.1} parent=1 // pred_region
      %v3780 = vld [vmem:[%s5] sm:$0x1]
      %v3782 = vperm.slane %v3780, 0
      %v3784 = vadd.f32 %v3775, %v3782
      %v3785 = vmax.f32 %v3784, 0.0
      %v3786 = vpack.c.bf16 %v3785, %v3785
      %v3787 = vld [vmem:[#allocation11] sm:$0xf]
      %v3788 = vld [vmem:[#allocation11 + $0x4] sm:$0xf]
      %v3789 = vld [vmem:[#allocation11 + $0x8] sm:$0xf]
      %v3790 = vld [vmem:[#allocation11 + $0xc] sm:$0xf]
      %v3791 = vld [vmem:[#allocation11 + $0x10] sm:$0xf]
      %v3792 = vld [vmem:[#allocation11 + $0x14] sm:$0xf]
      %v3793 = vld [vmem:[#allocation11 + $0x18] sm:$0xf]
      %v3794 = vld [vmem:[#allocation11 + $0x1c] sm:$0xf]
      %v3795 = vld [vmem:[#allocation11 + $0x20] sm:$0xf]
      %v3796 = vld [vmem:[#allocation11 + $0x24] sm:$0xf]
      %v3797 = vld [vmem:[#allocation11 + $0x28] sm:$0xf]
      %v3798 = vld [vmem:[#allocation11 + $0x2c] sm:$0xf]
      %v3799 = vld [vmem:[#allocation11 + $0x30] sm:$0xf]
      %v3800 = vld [vmem:[#allocation11 + $0x34] sm:$0xf]
      %v3801 = vld [vmem:[#allocation11 + $0x38] sm:$0xf]
      %v3802 = vld [vmem:[#allocation11 + $0x3c] sm:$0xf]
      %v3803 = vld [vmem:[%s7] sm:$0x1]
      %v3805 = vperm.slane %v3803, 0
      %v3823 = vunpack.c.l.b16 %v3787
      %v3824 = vunpack.c.l.b16 %v3788
      %v3825 = vunpack.c.l.b16 %v3789
      %v3826 = vunpack.c.l.b16 %v3790
      %v3827 = vunpack.c.l.b16 %v3791
      %v3828 = vunpack.c.l.b16 %v3792
      %v3829 = vunpack.c.l.b16 %v3793
      %v3830 = vunpack.c.l.b16 %v3794
      %v3831 = vunpack.c.l.b16 %v3795
      %v3832 = vunpack.c.l.b16 %v3796
      %v3833 = vunpack.c.l.b16 %v3797
      %v3834 = vunpack.c.l.b16 %v3798
      %v3835 = vunpack.c.l.b16 %v3799
      %v3836 = vunpack.c.l.b16 %v3800
      %v3837 = vunpack.c.l.b16 %v3801
      %v3838 = vunpack.c.l.b16 %v3802
      %v3839 = vpack.c.b16 %v3824, %v3823
      %v3840 = vpack.c.b16 %v3826, %v3825
      %v3841 = vpack.c.b16 %v3828, %v3827
      %v3842 = vpack.c.b16 %v3830, %v3829
      %v3843 = vpack.c.b16 %v3832, %v3831
      %v3844 = vpack.c.b16 %v3834, %v3833
      %v3845 = vpack.c.b16 %v3836, %v3835
      %v3846 = vpack.c.b16 %v3838, %v3837
      %3855 = vmatpush.bf16.msra.mxu0 %v3846
      %3856 = vmatpush.bf16.msra.mxu0 %v3845
      %3857 = vmatpush.bf16.msra.mxu0 %v3844
      %3858 = vmatpush.bf16.msra.mxu0 %v3843
      %3859 = vmatpush.bf16.msra.mxu0 %v3842
      %3860 = vmatpush.bf16.msra.mxu0 %v3841
      %3861 = vmatpush.bf16.msra.mxu0 %v3840
      %3862 = vmatpush.bf16.msra.mxu0 %v3839
      %3863 = vmatmul.bf16.gmra.mxu0 %v3786
      %v3864 = vpop.f32.mrf.mxu0
      %v3865 = vadd.f32 %v3805, %v3864
      %v3866 = vpop.f32.mrf.mxu0
      %3867 = vdwg.mxu0
      %3868 = vst [vmem:[#allocation12] sm:$0xff] %v3865
    $region61: #{tpu_custom_call.1} parent=1 // pred_fallthru
      _
    // Predicated region
    $region62: #{tpu_custom_call.1} parent=1 // pred_check
      _
    $region63: #{tpu_custom_call.1} parent=1 // pred_check_branch
      %3870 = sbr.rel (0) target = $region65
    $region64: #{tpu_custom_call.1} parent=1 // pred_region
      %3872 = vsyncadd [#allocation5], 0
      %s3874 = sshll.u32 [#allocation12], 4
      %s3875 = int_to_ptr.vmem [resolvable:$true] %s3874
      %s3876 = sshll.u32 %s8, 4
      %s3877 = int_to_ptr.hbm [resolvable:$true] %s3876
      %3879 = dma.vmem_to_hbm [thread:$0]  %s3875, 128, %s3877, [#allocation5]
    $region65: #{tpu_custom_call.1} parent=1 // pred_fallthru
      _
    // Predicated region
    $region66: #{tpu_custom_call.1} parent=1 // pred_check
      _
    $region67: #{tpu_custom_call.1} parent=1 // pred_check_branch
      %3881 = sbr.rel (0) target = $region69
    $region68: #{tpu_custom_call.1} parent=1 // pred_region
      %3883 = dma.done [#allocation5], 128
    $region69: #{tpu_custom_call.1} parent=1 // pred_fallthru
      _
    %3884 = vsyncpa [#allocation4], 1
    %3885 = vsyncpa [#allocation7], 1
    %3886 = vsyncpa [#allocation10], 1
    %3887 = vsyncpa [#allocation5], 1

</llo_original>
